<compile_context>
chip_gen: v7x
topology: tpu7x:2x2x1
jax: 0.10.0
libtpu: 0.0.40
codegen_flags: <defaults>
</compile_context>

<pallas_src>
import functools

import jax
import jax.numpy as jnp
from jax.experimental import pallas as pl
from jax.experimental.pallas import tpu as pltpu

EPS = 1e-5

CONV_CHANNELS = [(3, 32), (32, 64), (64, 128), (128, 256)]
CONV_KERNELS = [5, 5, 5, 3]
CONV_STRIDES = [2, 2, 2, 2]

# Safe scoped-VMEM cap on every generation (v5e/v6e 128 MiB, v7x 64 MiB physical).
_VMEM_LIMIT_BYTES = 48 * 1024 * 1024


# ----------------------------------------------------------------------------
# Pallas kernel: tiled batched GEMM + per-column shift (folded BN / bias) + act.
#   grid = (S, M//tm, N//tn, K//tk)   -> (stream, M-tile, N-tile, K-reduction)
# ----------------------------------------------------------------------------
def _fused_gemm_kernel(a_ref, b_ref, shift_ref, o_ref, acc_ref, *, activation):
    kk = pl.program_id(3)

    @pl.when(kk == 0)
    def _():
        acc_ref[...] = jnp.zeros_like(acc_ref)

    # bf16 x bf16 -> f32 on the MXU, accumulate in the f32 VMEM scratch.
    acc_ref[...] += jnp.dot(a_ref[0], b_ref[0], preferred_element_type=jnp.float32)

    @pl.when(kk == pl.num_programs(3) - 1)
    def _():
        y = acc_ref[...] + shift_ref[0]           # (tm, tn) + (1, tn)
        if activation == "relu":
            y = jnp.maximum(y, 0.0)
        o_ref[0] = y.astype(o_ref.dtype)


def _round_up(x, m):
    return ((x + m - 1) // m) * m


def _choose_tile(d, target, align):
    dp = _round_up(d, align)
    t = min(target, dp)
    return _round_up(dp, t), t


def _choose_k_tile(k, max_single=2048, tk_target=512):
    kp = _round_up(k, 128)
    if kp <= max_single:
        return kp, kp                 # single full-K block (fits VMEM comfortably)
    return _round_up(kp, tk_target), tk_target


def fused_gemm(a, b, shift, activation="relu", out_dtype=jnp.bfloat16,
               tm_target=256, tn_target=256):
    """y[s] = act(a[s] @ b[s] + shift[s]) for all streams s, in one tiled Pallas call.

    a: (S, M, K), b: (S, K, N), shift: (S, N).  Inputs are cast to bf16 for the MXU,
    accumulation and the shift/activation epilogue stay in f32.  M/N/K are zero-padded
    to tile multiples and the result is sliced back to (S, M, N).
    """
    S, M, K = a.shape
    S2, K2, N = b.shape
    assert S == S2 and K == K2 and shift.shape == (S, N)

    Mp, tm = _choose_tile(M, tm_target, 8)
    Np, tn = _choose_tile(N, tn_target, 128)
    Kp, tk = _choose_k_tile(K)

    a_p = jnp.pad(a.astype(jnp.bfloat16), ((0, 0), (0, Mp - M), (0, Kp - K)))
    b_p = jnp.pad(b.astype(jnp.bfloat16), ((0, 0), (0, Kp - K), (0, Np - N)))
    sh_p = jnp.pad(shift.astype(jnp.float32).reshape(S, 1, N),
                   ((0, 0), (0, 0), (0, Np - N)))

    grid = (S, Mp // tm, Np // tn, Kp // tk)
    out_itemsize = jnp.dtype(out_dtype).itemsize
    cost = pl.CostEstimate(
        flops=2 * S * Mp * Kp * Np,
        transcendentals=0,
        bytes_accessed=int(S * Mp * Kp * 2 * (Np // tn)        # A re-read per N tile
                           + S * Kp * Np * 2 * (Mp // tm)      # B re-read per M tile
                           + S * Mp * Np * out_itemsize),
    )

    out = pl.pallas_call(
        functools.partial(_fused_gemm_kernel, activation=activation),
        out_shape=jax.ShapeDtypeStruct((S, Mp, Np), out_dtype),
        grid_spec=pltpu.PrefetchScalarGridSpec(
            num_scalar_prefetch=0,
            grid=grid,
            in_specs=[
                pl.BlockSpec((1, tm, tk), lambda s, i, j, k: (s, i, k)),
                pl.BlockSpec((1, tk, tn), lambda s, i, j, k: (s, k, j)),
                pl.BlockSpec((1, 1, tn), lambda s, i, j, k: (s, 0, j)),
            ],
            out_specs=pl.BlockSpec((1, tm, tn), lambda s, i, j, k: (s, i, j)),
            scratch_shapes=[pltpu.VMEM((tm, tn), jnp.float32)],
        ),
        compiler_params=pltpu.CompilerParams(
            dimension_semantics=("parallel", "parallel", "parallel", "arbitrary"),
            vmem_limit_bytes=_VMEM_LIMIT_BYTES,
        ),
        cost_estimate=cost,
    )(a_p, b_p, sh_p)
    return out[:, :M, :N]


# ----------------------------------------------------------------------------
# Glue: im2col (slicing only, emitted in bf16), BN weight folding, stream wiring
# ----------------------------------------------------------------------------
def im2col(x, k, stride, pad):
    """x: (B, H, W, C) -> (B*Ho*Wo, k*k*C) patches; column order (di, dj, c)."""
    b, h, w, c = x.shape
    xp = jnp.pad(x, ((0, 0), (pad, pad), (pad, pad), (0, 0)))
    ho = (h + 2 * pad - k) // stride + 1
    wo = (w + 2 * pad - k) // stride + 1
    cols = []
    for di in range(k):
        for dj in range(k):
            cols.append(xp[:, di:di + stride * ho:stride, dj:dj + stride * wo:stride, :])
    patches = jnp.concatenate(cols, axis=-1)                  # (B, Ho, Wo, k*k*C)
    return patches.reshape(b * ho * wo, k * k * c), ho, wo
# TODO(synk): im2col still materializes k^2-amplified activations in HBM (bf16 halves
# it); the in-kernel per-tap accumulation variant (strided NHWC windows) is not done.


def _fold_conv_layer(stream_params, li, k):
    """Stack BN-folded weights / shifts of conv layer `li` over the 3 streams."""
    w_mats, shifts = [], []
    for sp in stream_params:
        p = sp[li]
        w = p["w"]                                  # (Cout, Cin, k, k), PyTorch layout
        cout, cin = w.shape[0], w.shape[1]
        # (kH, kW, Cin, Cout) row order matches im2col column order (di, dj, c).
        w_mat = jnp.transpose(w, (2, 3, 1, 0)).reshape(k * k * cin, cout)
        scale = p["gamma"] * jax.lax.rsqrt(p["var"] + EPS)
        w_mats.append(w_mat * scale[None, :])                       # fold BN scale
        shifts.append((p["b"] - p["mean"]) * scale + p["beta"])     # bias + BN shift
    return jnp.stack(w_mats, 0), jnp.stack(shifts, 0)


def forward(params, rgb, depth, hd_map):
    S = 3
    n = rgb.shape[0]
    stream_params = [params["rgb"], params["depth"], params["map"]]

    # NCHW -> NHWC, stack the three sensor streams along batch, compute in bf16.
    x = jnp.concatenate(
        [jnp.transpose(t, (0, 2, 3, 1)) for t in (rgb, depth, hd_map)], axis=0
    ).astype(jnp.bfloat16)                                          # (3*n, H, W, 3)

    ho = wo = x.shape[1]
    cout = x.shape[-1]
    for li, (k, s) in enumerate(zip(CONV_KERNELS, CONV_STRIDES)):
        w_stack, sh_stack = _fold_conv_layer(stream_params, li, k)
        cin = x.shape[-1]
        cout = w_stack.shape[-1]
        a, ho, wo = im2col(x, k, s, k // 2)                  # (3*n*Ho*Wo, k*k*Cin)
        a = a.reshape(S, n * ho * wo, k * k * cin)
        y = fused_gemm(a, w_stack, sh_stack, activation="relu", out_dtype=jnp.bfloat16)
        x = y.reshape(S * n, ho, wo, cout)

    # Flatten exactly like PyTorch's .view(N, -1) on NCHW feature maps, then
    # concatenate [rgb, depth, map] along features.
    feat = x.reshape(S, n, ho, wo, cout)
    feat = jnp.transpose(feat, (0, 1, 4, 2, 3)).reshape(S, n, cout * ho * wo)
    combined = jnp.transpose(feat, (1, 0, 2)).reshape(n, S * cout * ho * wo)

    # fc1 + BatchNorm1d(512) + ReLU  (BN scale folded into W, shift in-kernel).
    fc1, bn = params["fc1"], params["bn1d"]
    s1 = bn["gamma"] * jax.lax.rsqrt(bn["var"] + EPS)
    w1 = fc1["w"] * s1[None, :]
    sh1 = (fc1["b"] - bn["mean"]) * s1 + bn["beta"]
    h1 = fused_gemm(combined[None], w1[None], sh1[None], activation="relu")[0]
    # dropout(0.5): identity at inference

    fc2 = params["fc2"]
    h2 = fused_gemm(h1[None], fc2["w"][None], fc2["b"][None], activation="relu")[0]
    # dropout(0.5): identity at inference

    # fc3 (256 -> 3) + tanh/sigmoid heads in plain JAX (lane-sparse N=3 output is
    # pure masked stores; not worth a pallas_call — perf review recommendation).
    fc3 = params["fc3"]
    y = h2.astype(jnp.float32) @ fc3["w"] + fc3["b"]
    steer = jnp.tanh(y[:, 0])
    throttle = jax.nn.sigmoid(y[:, 1])
    brake = jax.nn.sigmoid(y[:, 2])
    return steer, throttle, brake


# ----------------------------------------------------------------------------
# Deterministic parameter initialization (shapes follow the PyTorch __init__)
# ----------------------------------------------------------------------------
def _init_conv_stream(key):
    layers = []
    for (cin, cout), k in zip(CONV_CHANNELS, CONV_KERNELS):
        key, k1, k2, k3, k4, k5, k6 = jax.random.split(key, 7)
        fan_in = cin * k * k
        layers.append(dict(
            w=jax.random.normal(k1, (cout, cin, k, k), jnp.float32) / jnp.sqrt(fan_in),
            b=0.01 * jax.random.normal(k2, (cout,), jnp.float32),
            gamma=1.0 + 0.1 * jax.random.normal(k3, (cout,), jnp.float32),
            beta=0.1 * jax.random.normal(k4, (cout,), jnp.float32),
            mean=0.05 * jax.random.normal(k5, (cout,), jnp.float32),
            var=1.0 + 0.1 * jax.random.uniform(k6, (cout,), jnp.float32),
        ))
    return layers, key


def init_params(key, spatial):
    # feature size after the 4 stride-2 convs
    h = spatial
    for k, s in zip(CONV_KERNELS, CONV_STRIDES):
        h = (h + 2 * (k // 2) - k) // s + 1
    feature_size = CONV_CHANNELS[-1][1] * h * h
    fusion_in = 3 * feature_size

    params = {}
    for name in ("rgb", "depth", "map"):
        params[name], key = _init_conv_stream(key)

    def linear(key, din, dout):
        key, kw, kb = jax.random.split(key, 3)
        w = jax.random.normal(kw, (din, dout), jnp.float32) / jnp.sqrt(din)
        b = 0.01 * jax.random.normal(kb, (dout,), jnp.float32)
        return dict(w=w, b=b), key

    params["fc1"], key = linear(key, fusion_in, 512)
    params["fc2"], key = linear(key, 512, 256)
    params["fc3"], key = linear(key, 256, 3)

    key, k1, k2, k3, k4 = jax.random.split(key, 5)
    params["bn1d"] = dict(
        gamma=1.0 + 0.1 * jax.random.normal(k1, (512,), jnp.float32),
        beta=0.1 * jax.random.normal(k2, (512,), jnp.float32),
        mean=0.05 * jax.random.normal(k3, (512,), jnp.float32),
        var=1.0 + 0.1 * jax.random.uniform(k4, (512,), jnp.float32),
    )
    return params


if __name__ == "__main__":
    SPATIAL = 16   # small stand-in for the 224x224 of the original module
    BATCH = 2

    params = init_params(jax.random.PRNGKey(42), SPATIAL)

    key = jax.random.PRNGKey(0)
    k_rgb, k_depth, k_map = jax.random.split(key, 3)
    rgb = jax.random.normal(k_rgb, (BATCH, 3, SPATIAL, SPATIAL), jnp.float32)
    depth = jax.random.normal(k_depth, (BATCH, 3, SPATIAL, SPATIAL), jnp.float32)
    hd_map = jax.random.normal(k_map, (BATCH, 3, SPATIAL, SPATIAL), jnp.float32)

    steer, throttle, brake = jax.jit(forward)(params, rgb, depth, hd_map)
    jax.block_until_ready((steer, throttle, brake))
    assert steer.shape == (BATCH,) and throttle.shape == (BATCH,) and brake.shape == (BATCH,)
    print("KERNEL_OK")
</pallas_src>

<mosaic_0001>
module attributes {stable_mosaic.version = 11 : i64} {
  func.func @_fused_gemm_kernel(%arg0: i32, %arg1: i32, %arg2: i32, %arg3: i32, %arg4: memref<1x128x128xbf16, #tpu.memory_space<vmem>>, %arg5: memref<1x128x128xbf16, #tpu.memory_space<vmem>>, %arg6: memref<1x1x128xf32, #tpu.memory_space<vmem>>, %arg7: memref<1x128x128xbf16, #tpu.memory_space<vmem>>, %arg8: memref<128x128xf32, #tpu.memory_space<vmem>>) attributes {dimension_semantics = [#tpu.dimension_semantics<parallel>, #tpu.dimension_semantics<parallel>, #tpu.dimension_semantics<parallel>, #tpu.dimension_semantics<arbitrary>], iteration_bounds = array<i64: 3, 1, 1, 1>, scalar_prefetch = 0 : i64, scratch_operands = 1 : i64, tpu.core_type = #tpu.core_type<tc>, window_params = [{transform_indices = @transform_0, window_bounds = array<i64: 1, 128, 128>}, {transform_indices = @transform_1, window_bounds = array<i64: 1, 128, 128>}, {transform_indices = @transform_2, window_bounds = array<i64: 1, 1, 128>}, {transform_indices = @transform_3, window_bounds = array<i64: 1, 128, 128>}]} {
    %c0_i32 = arith.constant 0 : i32
    %0 = arith.cmpi eq, %arg3, %c0_i32 : i32
    %1 = arith.extui %0 : i1 to i32
    %c0_i32_0 = arith.constant 0 : i32
    %2 = arith.cmpi ne, %1, %c0_i32_0 : i32
    scf.if %2 {
      %cst_12 = arith.constant 0.000000e+00 : f32
      %14 = vector.broadcast %cst_12 : f32 to vector<128x128xf32>
      %c0_13 = arith.constant 0 : index
      %c0_14 = arith.constant 0 : index
      %15 = vector.load %arg8[%c0_13, %c0_14] : memref<128x128xf32, #tpu.memory_space<vmem>>, vector<128x128xf32>
      tpu.vector_store %arg8[%c0_13, %c0_14], %14 {strides = array<i32>} : memref<128x128xf32, #tpu.memory_space<vmem>>, vector<128x128xf32>,
    } else {
    }
    %c0 = arith.constant 0 : index
    %c0_1 = arith.constant 0 : index
    %3 = vector.load %arg8[%c0, %c0_1] : memref<128x128xf32, #tpu.memory_space<vmem>>, vector<128x128xf32>
    %c0_2 = arith.constant 0 : index
    %c0_3 = arith.constant 0 : index
    %c0_4 = arith.constant 0 : index
    %4 = vector.load %arg4[%c0_2, %c0_3, %c0_4] : memref<1x128x128xbf16, #tpu.memory_space<vmem>>, vector<1x128x128xbf16>
    %5 = vector.shape_cast %4 : vector<1x128x128xbf16> to vector<128x128xbf16>
    %c0_5 = arith.constant 0 : index
    %c0_6 = arith.constant 0 : index
    %c0_7 = arith.constant 0 : index
    %6 = vector.load %arg5[%c0_5, %c0_6, %c0_7] : memref<1x128x128xbf16, #tpu.memory_space<vmem>>, vector<1x128x128xbf16>
    %7 = vector.shape_cast %6 : vector<1x128x128xbf16> to vector<128x128xbf16>
    %cst = arith.constant dense<0.000000e+00> : vector<128x128xf32>
    %8 = tpu.matmul %5, %7, %cst {dimension_numbers = #tpu.dot_dimension_numbers<[1], [0], [0], [1], [0, 0, 1, 1], [], []>} : vector<128x128xbf16>, vector<128x128xbf16>, vector<128x128xf32> -> vector<128x128xf32>
    %9 = arith.addf %3, %8 : vector<128x128xf32>
    %c0_8 = arith.constant 0 : index
    %c0_9 = arith.constant 0 : index
    %10 = vector.load %arg8[%c0_8, %c0_9] : memref<128x128xf32, #tpu.memory_space<vmem>>, vector<128x128xf32>
    tpu.vector_store %arg8[%c0_8, %c0_9], %9 {strides = array<i32>} : memref<128x128xf32, #tpu.memory_space<vmem>>, vector<128x128xf32>,
    %c0_i32_10 = arith.constant 0 : i32
    %11 = arith.cmpi eq, %arg3, %c0_i32_10 : i32
    %12 = arith.extui %11 : i1 to i32
    %c0_i32_11 = arith.constant 0 : i32
    %13 = arith.cmpi ne, %12, %c0_i32_11 : i32
    scf.if %13 {
      %c0_12 = arith.constant 0 : index
      %c0_13 = arith.constant 0 : index
      %14 = vector.load %arg8[%c0_12, %c0_13] : memref<128x128xf32, #tpu.memory_space<vmem>>, vector<128x128xf32>
      %c0_14 = arith.constant 0 : index
      %c0_15 = arith.constant 0 : index
      %c0_16 = arith.constant 0 : index
      %15 = vector.load %arg6[%c0_14, %c0_15, %c0_16] : memref<1x1x128xf32, #tpu.memory_space<vmem>>, vector<1x1x128xf32>
      %16 = vector.shape_cast %15 : vector<1x1x128xf32> to vector<1x128xf32>
      %17 = vector.broadcast %16 : vector<1x128xf32> to vector<128x128xf32>
      %18 = arith.addf %14, %17 : vector<128x128xf32>
      %cst_17 = arith.constant 0.000000e+00 : f32
      %19 = vector.broadcast %cst_17 : f32 to vector<128x128xf32>
      %20 = arith.maximumf %18, %19 : vector<128x128xf32>
      %21 = arith.truncf %20 : vector<128x128xf32> to vector<128x128xbf16>
      %c0_18 = arith.constant 0 : index
      %c0_19 = arith.constant 0 : index
      %c0_20 = arith.constant 0 : index
      %22 = vector.load %arg7[%c0_18, %c0_19, %c0_20] : memref<1x128x128xbf16, #tpu.memory_space<vmem>>, vector<1x128x128xbf16>
      %23 = vector.shape_cast %22 : vector<1x128x128xbf16> to vector<128x128xbf16>
      %24 = vector.shape_cast %21 : vector<128x128xbf16> to vector<1x128x128xbf16>
      tpu.vector_store %arg7[%c0_18, %c0_19, %c0_20], %24 {strides = array<i32>} : memref<1x128x128xbf16, #tpu.memory_space<vmem>>, vector<1x128x128xbf16>,
    } else {
    }
    return
  }
  func.func @transform_0(%arg0: i32, %arg1: i32, %arg2: i32, %arg3: i32) -> (i32, i32, i32) {
    %c0_i32 = arith.constant 0 : i32
    return %arg0, %arg1, %arg3 : i32, i32, i32
  }
  func.func @transform_1(%arg0: i32, %arg1: i32, %arg2: i32, %arg3: i32) -> (i32, i32, i32) {
    %c0_i32 = arith.constant 0 : i32
    return %arg0, %arg3, %arg2 : i32, i32, i32
  }
  func.func @transform_2(%arg0: i32, %arg1: i32, %arg2: i32, %arg3: i32) -> (i32, i32, i32) {
    %c0_i32 = arith.constant 0 : i32
    %c0_i32_0 = arith.constant 0 : i32
    return %arg0, %c0_i32, %arg2 : i32, i32, i32
  }
  func.func @transform_3(%arg0: i32, %arg1: i32, %arg2: i32, %arg3: i32) -> (i32, i32, i32) {
    %c0_i32 = arith.constant 0 : i32
    return %arg0, %arg1, %arg2 : i32, i32, i32
  }
}

module attributes {stable_mosaic.version = 11 : i64} {
  func.func @_fused_gemm_kernel(%arg0: i32, %arg1: i32, %arg2: i32, %arg3: i32, %arg4: memref<1x32x896xbf16, #tpu.memory_space<vmem>>, %arg5: memref<1x896x128xbf16, #tpu.memory_space<vmem>>, %arg6: memref<1x1x128xf32, #tpu.memory_space<vmem>>, %arg7: memref<1x32x128xbf16, #tpu.memory_space<vmem>>, %arg8: memref<32x128xf32, #tpu.memory_space<vmem>>) attributes {dimension_semantics = [#tpu.dimension_semantics<parallel>, #tpu.dimension_semantics<parallel>, #tpu.dimension_semantics<parallel>, #tpu.dimension_semantics<arbitrary>], iteration_bounds = array<i64: 3, 1, 1, 1>, scalar_prefetch = 0 : i64, scratch_operands = 1 : i64, tpu.core_type = #tpu.core_type<tc>, window_params = [{transform_indices = @transform_0, window_bounds = array<i64: 1, 32, 896>}, {transform_indices = @transform_1, window_bounds = array<i64: 1, 896, 128>}, {transform_indices = @transform_2, window_bounds = array<i64: 1, 1, 128>}, {transform_indices = @transform_3, window_bounds = array<i64: 1, 32, 128>}]} {
    %c0_i32 = arith.constant 0 : i32
    %0 = arith.cmpi eq, %arg3, %c0_i32 : i32
    %1 = arith.extui %0 : i1 to i32
    %c0_i32_0 = arith.constant 0 : i32
    %2 = arith.cmpi ne, %1, %c0_i32_0 : i32
    scf.if %2 {
      %cst_12 = arith.constant 0.000000e+00 : f32
      %14 = vector.broadcast %cst_12 : f32 to vector<32x128xf32>
      %c0_13 = arith.constant 0 : index
      %c0_14 = arith.constant 0 : index
      %15 = vector.load %arg8[%c0_13, %c0_14] : memref<32x128xf32, #tpu.memory_space<vmem>>, vector<32x128xf32>
      tpu.vector_store %arg8[%c0_13, %c0_14], %14 {strides = array<i32>} : memref<32x128xf32, #tpu.memory_space<vmem>>, vector<32x128xf32>,
    } else {
    }
    %c0 = arith.constant 0 : index
    %c0_1 = arith.constant 0 : index
    %3 = vector.load %arg8[%c0, %c0_1] : memref<32x128xf32, #tpu.memory_space<vmem>>, vector<32x128xf32>
    %c0_2 = arith.constant 0 : index
    %c0_3 = arith.constant 0 : index
    %c0_4 = arith.constant 0 : index
    %4 = vector.load %arg4[%c0_2, %c0_3, %c0_4] : memref<1x32x896xbf16, #tpu.memory_space<vmem>>, vector<1x32x896xbf16>
    %5 = vector.shape_cast %4 : vector<1x32x896xbf16> to vector<32x896xbf16>
    %c0_5 = arith.constant 0 : index
    %c0_6 = arith.constant 0 : index
    %c0_7 = arith.constant 0 : index
    %6 = vector.load %arg5[%c0_5, %c0_6, %c0_7] : memref<1x896x128xbf16, #tpu.memory_space<vmem>>, vector<1x896x128xbf16>
    %7 = vector.shape_cast %6 : vector<1x896x128xbf16> to vector<896x128xbf16>
    %cst = arith.constant dense<0.000000e+00> : vector<32x128xf32>
    %8 = tpu.matmul %5, %7, %cst {dimension_numbers = #tpu.dot_dimension_numbers<[1], [0], [0], [1], [0, 0, 1, 1], [], []>} : vector<32x896xbf16>, vector<896x128xbf16>, vector<32x128xf32> -> vector<32x128xf32>
    %9 = arith.addf %3, %8 : vector<32x128xf32>
    %c0_8 = arith.constant 0 : index
    %c0_9 = arith.constant 0 : index
    %10 = vector.load %arg8[%c0_8, %c0_9] : memref<32x128xf32, #tpu.memory_space<vmem>>, vector<32x128xf32>
    tpu.vector_store %arg8[%c0_8, %c0_9], %9 {strides = array<i32>} : memref<32x128xf32, #tpu.memory_space<vmem>>, vector<32x128xf32>,
    %c0_i32_10 = arith.constant 0 : i32
    %11 = arith.cmpi eq, %arg3, %c0_i32_10 : i32
    %12 = arith.extui %11 : i1 to i32
    %c0_i32_11 = arith.constant 0 : i32
    %13 = arith.cmpi ne, %12, %c0_i32_11 : i32
    scf.if %13 {
      %c0_12 = arith.constant 0 : index
      %c0_13 = arith.constant 0 : index
      %14 = vector.load %arg8[%c0_12, %c0_13] : memref<32x128xf32, #tpu.memory_space<vmem>>, vector<32x128xf32>
      %c0_14 = arith.constant 0 : index
      %c0_15 = arith.constant 0 : index
      %c0_16 = arith.constant 0 : index
      %15 = vector.load %arg6[%c0_14, %c0_15, %c0_16] : memref<1x1x128xf32, #tpu.memory_space<vmem>>, vector<1x1x128xf32>
      %16 = vector.shape_cast %15 : vector<1x1x128xf32> to vector<1x128xf32>
      %17 = vector.broadcast %16 : vector<1x128xf32> to vector<32x128xf32>
      %18 = arith.addf %14, %17 : vector<32x128xf32>
      %cst_17 = arith.constant 0.000000e+00 : f32
      %19 = vector.broadcast %cst_17 : f32 to vector<32x128xf32>
      %20 = arith.maximumf %18, %19 : vector<32x128xf32>
      %21 = arith.truncf %20 : vector<32x128xf32> to vector<32x128xbf16>
      %c0_18 = arith.constant 0 : index
      %c0_19 = arith.constant 0 : index
      %c0_20 = arith.constant 0 : index
      %22 = vector.load %arg7[%c0_18, %c0_19, %c0_20] : memref<1x32x128xbf16, #tpu.memory_space<vmem>>, vector<1x32x128xbf16>
      %23 = vector.shape_cast %22 : vector<1x32x128xbf16> to vector<32x128xbf16>
      %24 = vector.shape_cast %21 : vector<32x128xbf16> to vector<1x32x128xbf16>
      tpu.vector_store %arg7[%c0_18, %c0_19, %c0_20], %24 {strides = array<i32>} : memref<1x32x128xbf16, #tpu.memory_space<vmem>>, vector<1x32x128xbf16>,
    } else {
    }
    return
  }
  func.func @transform_0(%arg0: i32, %arg1: i32, %arg2: i32, %arg3: i32) -> (i32, i32, i32) {
    %c0_i32 = arith.constant 0 : i32
    return %arg0, %arg1, %arg3 : i32, i32, i32
  }
  func.func @transform_1(%arg0: i32, %arg1: i32, %arg2: i32, %arg3: i32) -> (i32, i32, i32) {
    %c0_i32 = arith.constant 0 : i32
    return %arg0, %arg3, %arg2 : i32, i32, i32
  }
  func.func @transform_2(%arg0: i32, %arg1: i32, %arg2: i32, %arg3: i32) -> (i32, i32, i32) {
    %c0_i32 = arith.constant 0 : i32
    %c0_i32_0 = arith.constant 0 : i32
    return %arg0, %c0_i32, %arg2 : i32, i32, i32
  }
  func.func @transform_3(%arg0: i32, %arg1: i32, %arg2: i32, %arg3: i32) -> (i32, i32, i32) {
    %c0_i32 = arith.constant 0 : i32
    return %arg0, %arg1, %arg2 : i32, i32, i32
  }
}

module attributes {stable_mosaic.version = 11 : i64} {
  func.func @_fused_gemm_kernel(%arg0: i32, %arg1: i32, %arg2: i32, %arg3: i32, %arg4: memref<1x8x1664xbf16, #tpu.memory_space<vmem>>, %arg5: memref<1x1664x128xbf16, #tpu.memory_space<vmem>>, %arg6: memref<1x1x128xf32, #tpu.memory_space<vmem>>, %arg7: memref<1x8x128xbf16, #tpu.memory_space<vmem>>, %arg8: memref<8x128xf32, #tpu.memory_space<vmem>>) attributes {dimension_semantics = [#tpu.dimension_semantics<parallel>, #tpu.dimension_semantics<parallel>, #tpu.dimension_semantics<parallel>, #tpu.dimension_semantics<arbitrary>], iteration_bounds = array<i64: 3, 1, 1, 1>, scalar_prefetch = 0 : i64, scratch_operands = 1 : i64, tpu.core_type = #tpu.core_type<tc>, window_params = [{transform_indices = @transform_0, window_bounds = array<i64: 1, 8, 1664>}, {transform_indices = @transform_1, window_bounds = array<i64: 1, 1664, 128>}, {transform_indices = @transform_2, window_bounds = array<i64: 1, 1, 128>}, {transform_indices = @transform_3, window_bounds = array<i64: 1, 8, 128>}]} {
    %c0_i32 = arith.constant 0 : i32
    %0 = arith.cmpi eq, %arg3, %c0_i32 : i32
    %1 = arith.extui %0 : i1 to i32
    %c0_i32_0 = arith.constant 0 : i32
    %2 = arith.cmpi ne, %1, %c0_i32_0 : i32
    scf.if %2 {
      %cst_12 = arith.constant 0.000000e+00 : f32
      %14 = vector.broadcast %cst_12 : f32 to vector<8x128xf32>
      %c0_13 = arith.constant 0 : index
      %c0_14 = arith.constant 0 : index
      %15 = vector.load %arg8[%c0_13, %c0_14] : memref<8x128xf32, #tpu.memory_space<vmem>>, vector<8x128xf32>
      tpu.vector_store %arg8[%c0_13, %c0_14], %14 {strides = array<i32>} : memref<8x128xf32, #tpu.memory_space<vmem>>, vector<8x128xf32>,
    } else {
    }
    %c0 = arith.constant 0 : index
    %c0_1 = arith.constant 0 : index
    %3 = vector.load %arg8[%c0, %c0_1] : memref<8x128xf32, #tpu.memory_space<vmem>>, vector<8x128xf32>
    %c0_2 = arith.constant 0 : index
    %c0_3 = arith.constant 0 : index
    %c0_4 = arith.constant 0 : index
    %4 = vector.load %arg4[%c0_2, %c0_3, %c0_4] : memref<1x8x1664xbf16, #tpu.memory_space<vmem>>, vector<1x8x1664xbf16>
    %5 = vector.shape_cast %4 : vector<1x8x1664xbf16> to vector<8x1664xbf16>
    %c0_5 = arith.constant 0 : index
    %c0_6 = arith.constant 0 : index
    %c0_7 = arith.constant 0 : index
    %6 = vector.load %arg5[%c0_5, %c0_6, %c0_7] : memref<1x1664x128xbf16, #tpu.memory_space<vmem>>, vector<1x1664x128xbf16>
    %7 = vector.shape_cast %6 : vector<1x1664x128xbf16> to vector<1664x128xbf16>
    %cst = arith.constant dense<0.000000e+00> : vector<8x128xf32>
    %8 = tpu.matmul %5, %7, %cst {dimension_numbers = #tpu.dot_dimension_numbers<[1], [0], [0], [1], [0, 0, 1, 1], [], []>} : vector<8x1664xbf16>, vector<1664x128xbf16>, vector<8x128xf32> -> vector<8x128xf32>
    %9 = arith.addf %3, %8 : vector<8x128xf32>
    %c0_8 = arith.constant 0 : index
    %c0_9 = arith.constant 0 : index
    %10 = vector.load %arg8[%c0_8, %c0_9] : memref<8x128xf32, #tpu.memory_space<vmem>>, vector<8x128xf32>
    tpu.vector_store %arg8[%c0_8, %c0_9], %9 {strides = array<i32>} : memref<8x128xf32, #tpu.memory_space<vmem>>, vector<8x128xf32>,
    %c0_i32_10 = arith.constant 0 : i32
    %11 = arith.cmpi eq, %arg3, %c0_i32_10 : i32
    %12 = arith.extui %11 : i1 to i32
    %c0_i32_11 = arith.constant 0 : i32
    %13 = arith.cmpi ne, %12, %c0_i32_11 : i32
    scf.if %13 {
      %c0_12 = arith.constant 0 : index
      %c0_13 = arith.constant 0 : index
      %14 = vector.load %arg8[%c0_12, %c0_13] : memref<8x128xf32, #tpu.memory_space<vmem>>, vector<8x128xf32>
      %c0_14 = arith.constant 0 : index
      %c0_15 = arith.constant 0 : index
      %c0_16 = arith.constant 0 : index
      %15 = vector.load %arg6[%c0_14, %c0_15, %c0_16] : memref<1x1x128xf32, #tpu.memory_space<vmem>>, vector<1x1x128xf32>
      %16 = vector.shape_cast %15 : vector<1x1x128xf32> to vector<1x128xf32>
      %17 = vector.broadcast %16 : vector<1x128xf32> to vector<8x128xf32>
      %18 = arith.addf %14, %17 : vector<8x128xf32>
      %cst_17 = arith.constant 0.000000e+00 : f32
      %19 = vector.broadcast %cst_17 : f32 to vector<8x128xf32>
      %20 = arith.maximumf %18, %19 : vector<8x128xf32>
      %21 = arith.truncf %20 : vector<8x128xf32> to vector<8x128xbf16>
      %c0_18 = arith.constant 0 : index
      %c0_19 = arith.constant 0 : index
      %c0_20 = arith.constant 0 : index
      %22 = vector.load %arg7[%c0_18, %c0_19, %c0_20] : memref<1x8x128xbf16, #tpu.memory_space<vmem>>, vector<1x8x128xbf16>
      %23 = vector.shape_cast %22 : vector<1x8x128xbf16> to vector<8x128xbf16>
      %24 = vector.shape_cast %21 : vector<8x128xbf16> to vector<1x8x128xbf16>
      tpu.vector_store %arg7[%c0_18, %c0_19, %c0_20], %24 {strides = array<i32>} : memref<1x8x128xbf16, #tpu.memory_space<vmem>>, vector<1x8x128xbf16>,
    } else {
    }
    return
  }
  func.func @transform_0(%arg0: i32, %arg1: i32, %arg2: i32, %arg3: i32) -> (i32, i32, i32) {
    %c0_i32 = arith.constant 0 : i32
    return %arg0, %arg1, %arg3 : i32, i32, i32
  }
  func.func @transform_1(%arg0: i32, %arg1: i32, %arg2: i32, %arg3: i32) -> (i32, i32, i32) {
    %c0_i32 = arith.constant 0 : i32
    return %arg0, %arg3, %arg2 : i32, i32, i32
  }
  func.func @transform_2(%arg0: i32, %arg1: i32, %arg2: i32, %arg3: i32) -> (i32, i32, i32) {
    %c0_i32 = arith.constant 0 : i32
    %c0_i32_0 = arith.constant 0 : i32
    return %arg0, %c0_i32, %arg2 : i32, i32, i32
  }
  func.func @transform_3(%arg0: i32, %arg1: i32, %arg2: i32, %arg3: i32) -> (i32, i32, i32) {
    %c0_i32 = arith.constant 0 : i32
    return %arg0, %arg1, %arg2 : i32, i32, i32
  }
}

module attributes {stable_mosaic.version = 11 : i64} {
  func.func @_fused_gemm_kernel(%arg0: i32, %arg1: i32, %arg2: i32, %arg3: i32, %arg4: memref<1x8x1152xbf16, #tpu.memory_space<vmem>>, %arg5: memref<1x1152x256xbf16, #tpu.memory_space<vmem>>, %arg6: memref<1x1x256xf32, #tpu.memory_space<vmem>>, %arg7: memref<1x8x256xbf16, #tpu.memory_space<vmem>>, %arg8: memref<8x256xf32, #tpu.memory_space<vmem>>) attributes {dimension_semantics = [#tpu.dimension_semantics<parallel>, #tpu.dimension_semantics<parallel>, #tpu.dimension_semantics<parallel>, #tpu.dimension_semantics<arbitrary>], iteration_bounds = array<i64: 3, 1, 1, 1>, scalar_prefetch = 0 : i64, scratch_operands = 1 : i64, tpu.core_type = #tpu.core_type<tc>, window_params = [{transform_indices = @transform_0, window_bounds = array<i64: 1, 8, 1152>}, {transform_indices = @transform_1, window_bounds = array<i64: 1, 1152, 256>}, {transform_indices = @transform_2, window_bounds = array<i64: 1, 1, 256>}, {transform_indices = @transform_3, window_bounds = array<i64: 1, 8, 256>}]} {
    %c0_i32 = arith.constant 0 : i32
    %0 = arith.cmpi eq, %arg3, %c0_i32 : i32
    %1 = arith.extui %0 : i1 to i32
    %c0_i32_0 = arith.constant 0 : i32
    %2 = arith.cmpi ne, %1, %c0_i32_0 : i32
    scf.if %2 {
      %cst_12 = arith.constant 0.000000e+00 : f32
      %14 = vector.broadcast %cst_12 : f32 to vector<8x256xf32>
      %c0_13 = arith.constant 0 : index
      %c0_14 = arith.constant 0 : index
      %15 = vector.load %arg8[%c0_13, %c0_14] : memref<8x256xf32, #tpu.memory_space<vmem>>, vector<8x256xf32>
      tpu.vector_store %arg8[%c0_13, %c0_14], %14 {strides = array<i32>} : memref<8x256xf32, #tpu.memory_space<vmem>>, vector<8x256xf32>,
    } else {
    }
    %c0 = arith.constant 0 : index
    %c0_1 = arith.constant 0 : index
    %3 = vector.load %arg8[%c0, %c0_1] : memref<8x256xf32, #tpu.memory_space<vmem>>, vector<8x256xf32>
    %c0_2 = arith.constant 0 : index
    %c0_3 = arith.constant 0 : index
    %c0_4 = arith.constant 0 : index
    %4 = vector.load %arg4[%c0_2, %c0_3, %c0_4] : memref<1x8x1152xbf16, #tpu.memory_space<vmem>>, vector<1x8x1152xbf16>
    %5 = vector.shape_cast %4 : vector<1x8x1152xbf16> to vector<8x1152xbf16>
    %c0_5 = arith.constant 0 : index
    %c0_6 = arith.constant 0 : index
    %c0_7 = arith.constant 0 : index
    %6 = vector.load %arg5[%c0_5, %c0_6, %c0_7] : memref<1x1152x256xbf16, #tpu.memory_space<vmem>>, vector<1x1152x256xbf16>
    %7 = vector.shape_cast %6 : vector<1x1152x256xbf16> to vector<1152x256xbf16>
    %cst = arith.constant dense<0.000000e+00> : vector<8x256xf32>
    %8 = tpu.matmul %5, %7, %cst {dimension_numbers = #tpu.dot_dimension_numbers<[1], [0], [0], [1], [0, 0, 1, 1], [], []>} : vector<8x1152xbf16>, vector<1152x256xbf16>, vector<8x256xf32> -> vector<8x256xf32>
    %9 = arith.addf %3, %8 : vector<8x256xf32>
    %c0_8 = arith.constant 0 : index
    %c0_9 = arith.constant 0 : index
    %10 = vector.load %arg8[%c0_8, %c0_9] : memref<8x256xf32, #tpu.memory_space<vmem>>, vector<8x256xf32>
    tpu.vector_store %arg8[%c0_8, %c0_9], %9 {strides = array<i32>} : memref<8x256xf32, #tpu.memory_space<vmem>>, vector<8x256xf32>,
    %c0_i32_10 = arith.constant 0 : i32
    %11 = arith.cmpi eq, %arg3, %c0_i32_10 : i32
    %12 = arith.extui %11 : i1 to i32
    %c0_i32_11 = arith.constant 0 : i32
    %13 = arith.cmpi ne, %12, %c0_i32_11 : i32
    scf.if %13 {
      %c0_12 = arith.constant 0 : index
      %c0_13 = arith.constant 0 : index
      %14 = vector.load %arg8[%c0_12, %c0_13] : memref<8x256xf32, #tpu.memory_space<vmem>>, vector<8x256xf32>
      %c0_14 = arith.constant 0 : index
      %c0_15 = arith.constant 0 : index
      %c0_16 = arith.constant 0 : index
      %15 = vector.load %arg6[%c0_14, %c0_15, %c0_16] : memref<1x1x256xf32, #tpu.memory_space<vmem>>, vector<1x1x256xf32>
      %16 = vector.shape_cast %15 : vector<1x1x256xf32> to vector<1x256xf32>
      %17 = vector.broadcast %16 : vector<1x256xf32> to vector<8x256xf32>
      %18 = arith.addf %14, %17 : vector<8x256xf32>
      %cst_17 = arith.constant 0.000000e+00 : f32
      %19 = vector.broadcast %cst_17 : f32 to vector<8x256xf32>
      %20 = arith.maximumf %18, %19 : vector<8x256xf32>
      %21 = arith.truncf %20 : vector<8x256xf32> to vector<8x256xbf16>
      %c0_18 = arith.constant 0 : index
      %c0_19 = arith.constant 0 : index
      %c0_20 = arith.constant 0 : index
      %22 = vector.load %arg7[%c0_18, %c0_19, %c0_20] : memref<1x8x256xbf16, #tpu.memory_space<vmem>>, vector<1x8x256xbf16>
      %23 = vector.shape_cast %22 : vector<1x8x256xbf16> to vector<8x256xbf16>
      %24 = vector.shape_cast %21 : vector<8x256xbf16> to vector<1x8x256xbf16>
      tpu.vector_store %arg7[%c0_18, %c0_19, %c0_20], %24 {strides = array<i32>} : memref<1x8x256xbf16, #tpu.memory_space<vmem>>, vector<1x8x256xbf16>,
    } else {
    }
    return
  }
  func.func @transform_0(%arg0: i32, %arg1: i32, %arg2: i32, %arg3: i32) -> (i32, i32, i32) {
    %c0_i32 = arith.constant 0 : i32
    return %arg0, %arg1, %arg3 : i32, i32, i32
  }
  func.func @transform_1(%arg0: i32, %arg1: i32, %arg2: i32, %arg3: i32) -> (i32, i32, i32) {
    %c0_i32 = arith.constant 0 : i32
    return %arg0, %arg3, %arg2 : i32, i32, i32
  }
  func.func @transform_2(%arg0: i32, %arg1: i32, %arg2: i32, %arg3: i32) -> (i32, i32, i32) {
    %c0_i32 = arith.constant 0 : i32
    %c0_i32_0 = arith.constant 0 : i32
    return %arg0, %c0_i32, %arg2 : i32, i32, i32
  }
  func.func @transform_3(%arg0: i32, %arg1: i32, %arg2: i32, %arg3: i32) -> (i32, i32, i32) {
    %c0_i32 = arith.constant 0 : i32
    return %arg0, %arg1, %arg2 : i32, i32, i32
  }
}

module attributes {stable_mosaic.version = 11 : i64} {
  func.func @_fused_gemm_kernel(%arg0: i32, %arg1: i32, %arg2: i32, %arg3: i32, %arg4: memref<1x8x768xbf16, #tpu.memory_space<vmem>>, %arg5: memref<1x768x256xbf16, #tpu.memory_space<vmem>>, %arg6: memref<1x1x256xf32, #tpu.memory_space<vmem>>, %arg7: memref<1x8x256xbf16, #tpu.memory_space<vmem>>, %arg8: memref<8x256xf32, #tpu.memory_space<vmem>>) attributes {dimension_semantics = [#tpu.dimension_semantics<parallel>, #tpu.dimension_semantics<parallel>, #tpu.dimension_semantics<parallel>, #tpu.dimension_semantics<arbitrary>], iteration_bounds = array<i64: 1, 1, 2, 1>, scalar_prefetch = 0 : i64, scratch_operands = 1 : i64, tpu.core_type = #tpu.core_type<tc>, window_params = [{transform_indices = @transform_0, window_bounds = array<i64: 1, 8, 768>}, {transform_indices = @transform_1, window_bounds = array<i64: 1, 768, 256>}, {transform_indices = @transform_2, window_bounds = array<i64: 1, 1, 256>}, {transform_indices = @transform_3, window_bounds = array<i64: 1, 8, 256>}]} {
    %c0_i32 = arith.constant 0 : i32
    %0 = arith.cmpi eq, %arg3, %c0_i32 : i32
    %1 = arith.extui %0 : i1 to i32
    %c0_i32_0 = arith.constant 0 : i32
    %2 = arith.cmpi ne, %1, %c0_i32_0 : i32
    scf.if %2 {
      %cst_12 = arith.constant 0.000000e+00 : f32
      %14 = vector.broadcast %cst_12 : f32 to vector<8x256xf32>
      %c0_13 = arith.constant 0 : index
      %c0_14 = arith.constant 0 : index
      %15 = vector.load %arg8[%c0_13, %c0_14] : memref<8x256xf32, #tpu.memory_space<vmem>>, vector<8x256xf32>
      tpu.vector_store %arg8[%c0_13, %c0_14], %14 {strides = array<i32>} : memref<8x256xf32, #tpu.memory_space<vmem>>, vector<8x256xf32>,
    } else {
    }
    %c0 = arith.constant 0 : index
    %c0_1 = arith.constant 0 : index
    %3 = vector.load %arg8[%c0, %c0_1] : memref<8x256xf32, #tpu.memory_space<vmem>>, vector<8x256xf32>
    %c0_2 = arith.constant 0 : index
    %c0_3 = arith.constant 0 : index
    %c0_4 = arith.constant 0 : index
    %4 = vector.load %arg4[%c0_2, %c0_3, %c0_4] : memref<1x8x768xbf16, #tpu.memory_space<vmem>>, vector<1x8x768xbf16>
    %5 = vector.shape_cast %4 : vector<1x8x768xbf16> to vector<8x768xbf16>
    %c0_5 = arith.constant 0 : index
    %c0_6 = arith.constant 0 : index
    %c0_7 = arith.constant 0 : index
    %6 = vector.load %arg5[%c0_5, %c0_6, %c0_7] : memref<1x768x256xbf16, #tpu.memory_space<vmem>>, vector<1x768x256xbf16>
    %7 = vector.shape_cast %6 : vector<1x768x256xbf16> to vector<768x256xbf16>
    %cst = arith.constant dense<0.000000e+00> : vector<8x256xf32>
    %8 = tpu.matmul %5, %7, %cst {dimension_numbers = #tpu.dot_dimension_numbers<[1], [0], [0], [1], [0, 0, 1, 1], [], []>} : vector<8x768xbf16>, vector<768x256xbf16>, vector<8x256xf32> -> vector<8x256xf32>
    %9 = arith.addf %3, %8 : vector<8x256xf32>
    %c0_8 = arith.constant 0 : index
    %c0_9 = arith.constant 0 : index
    %10 = vector.load %arg8[%c0_8, %c0_9] : memref<8x256xf32, #tpu.memory_space<vmem>>, vector<8x256xf32>
    tpu.vector_store %arg8[%c0_8, %c0_9], %9 {strides = array<i32>} : memref<8x256xf32, #tpu.memory_space<vmem>>, vector<8x256xf32>,
    %c0_i32_10 = arith.constant 0 : i32
    %11 = arith.cmpi eq, %arg3, %c0_i32_10 : i32
    %12 = arith.extui %11 : i1 to i32
    %c0_i32_11 = arith.constant 0 : i32
    %13 = arith.cmpi ne, %12, %c0_i32_11 : i32
    scf.if %13 {
      %c0_12 = arith.constant 0 : index
      %c0_13 = arith.constant 0 : index
      %14 = vector.load %arg8[%c0_12, %c0_13] : memref<8x256xf32, #tpu.memory_space<vmem>>, vector<8x256xf32>
      %c0_14 = arith.constant 0 : index
      %c0_15 = arith.constant 0 : index
      %c0_16 = arith.constant 0 : index
      %15 = vector.load %arg6[%c0_14, %c0_15, %c0_16] : memref<1x1x256xf32, #tpu.memory_space<vmem>>, vector<1x1x256xf32>
      %16 = vector.shape_cast %15 : vector<1x1x256xf32> to vector<1x256xf32>
      %17 = vector.broadcast %16 : vector<1x256xf32> to vector<8x256xf32>
      %18 = arith.addf %14, %17 : vector<8x256xf32>
      %cst_17 = arith.constant 0.000000e+00 : f32
      %19 = vector.broadcast %cst_17 : f32 to vector<8x256xf32>
      %20 = arith.maximumf %18, %19 : vector<8x256xf32>
      %21 = arith.truncf %20 : vector<8x256xf32> to vector<8x256xbf16>
      %c0_18 = arith.constant 0 : index
      %c0_19 = arith.constant 0 : index
      %c0_20 = arith.constant 0 : index
      %22 = vector.load %arg7[%c0_18, %c0_19, %c0_20] : memref<1x8x256xbf16, #tpu.memory_space<vmem>>, vector<1x8x256xbf16>
      %23 = vector.shape_cast %22 : vector<1x8x256xbf16> to vector<8x256xbf16>
      %24 = vector.shape_cast %21 : vector<8x256xbf16> to vector<1x8x256xbf16>
      tpu.vector_store %arg7[%c0_18, %c0_19, %c0_20], %24 {strides = array<i32>} : memref<1x8x256xbf16, #tpu.memory_space<vmem>>, vector<1x8x256xbf16>,
    } else {
    }
    return
  }
  func.func @transform_0(%arg0: i32, %arg1: i32, %arg2: i32, %arg3: i32) -> (i32, i32, i32) {
    %c0_i32 = arith.constant 0 : i32
    return %arg0, %arg1, %arg3 : i32, i32, i32
  }
  func.func @transform_1(%arg0: i32, %arg1: i32, %arg2: i32, %arg3: i32) -> (i32, i32, i32) {
    %c0_i32 = arith.constant 0 : i32
    return %arg0, %arg3, %arg2 : i32, i32, i32
  }
  func.func @transform_2(%arg0: i32, %arg1: i32, %arg2: i32, %arg3: i32) -> (i32, i32, i32) {
    %c0_i32 = arith.constant 0 : i32
    %c0_i32_0 = arith.constant 0 : i32
    return %arg0, %c0_i32, %arg2 : i32, i32, i32
  }
  func.func @transform_3(%arg0: i32, %arg1: i32, %arg2: i32, %arg3: i32) -> (i32, i32, i32) {
    %c0_i32 = arith.constant 0 : i32
    return %arg0, %arg1, %arg2 : i32, i32, i32
  }
}

module attributes {stable_mosaic.version = 11 : i64} {
  func.func @_fused_gemm_kernel(%arg0: i32, %arg1: i32, %arg2: i32, %arg3: i32, %arg4: memref<1x8x512xbf16, #tpu.memory_space<vmem>>, %arg5: memref<1x512x256xbf16, #tpu.memory_space<vmem>>, %arg6: memref<1x1x256xf32, #tpu.memory_space<vmem>>, %arg7: memref<1x8x256xbf16, #tpu.memory_space<vmem>>, %arg8: memref<8x256xf32, #tpu.memory_space<vmem>>) attributes {dimension_semantics = [#tpu.dimension_semantics<parallel>, #tpu.dimension_semantics<parallel>, #tpu.dimension_semantics<parallel>, #tpu.dimension_semantics<arbitrary>], iteration_bounds = array<i64: 1, 1, 1, 1>, scalar_prefetch = 0 : i64, scratch_operands = 1 : i64, tpu.core_type = #tpu.core_type<tc>, window_params = [{transform_indices = @transform_0, window_bounds = array<i64: 1, 8, 512>}, {transform_indices = @transform_1, window_bounds = array<i64: 1, 512, 256>}, {transform_indices = @transform_2, window_bounds = array<i64: 1, 1, 256>}, {transform_indices = @transform_3, window_bounds = array<i64: 1, 8, 256>}]} {
    %c0_i32 = arith.constant 0 : i32
    %0 = arith.cmpi eq, %arg3, %c0_i32 : i32
    %1 = arith.extui %0 : i1 to i32
    %c0_i32_0 = arith.constant 0 : i32
    %2 = arith.cmpi ne, %1, %c0_i32_0 : i32
    scf.if %2 {
      %cst_12 = arith.constant 0.000000e+00 : f32
      %14 = vector.broadcast %cst_12 : f32 to vector<8x256xf32>
      %c0_13 = arith.constant 0 : index
      %c0_14 = arith.constant 0 : index
      %15 = vector.load %arg8[%c0_13, %c0_14] : memref<8x256xf32, #tpu.memory_space<vmem>>, vector<8x256xf32>
      tpu.vector_store %arg8[%c0_13, %c0_14], %14 {strides = array<i32>} : memref<8x256xf32, #tpu.memory_space<vmem>>, vector<8x256xf32>,
    } else {
    }
    %c0 = arith.constant 0 : index
    %c0_1 = arith.constant 0 : index
    %3 = vector.load %arg8[%c0, %c0_1] : memref<8x256xf32, #tpu.memory_space<vmem>>, vector<8x256xf32>
    %c0_2 = arith.constant 0 : index
    %c0_3 = arith.constant 0 : index
    %c0_4 = arith.constant 0 : index
    %4 = vector.load %arg4[%c0_2, %c0_3, %c0_4] : memref<1x8x512xbf16, #tpu.memory_space<vmem>>, vector<1x8x512xbf16>
    %5 = vector.shape_cast %4 : vector<1x8x512xbf16> to vector<8x512xbf16>
    %c0_5 = arith.constant 0 : index
    %c0_6 = arith.constant 0 : index
    %c0_7 = arith.constant 0 : index
    %6 = vector.load %arg5[%c0_5, %c0_6, %c0_7] : memref<1x512x256xbf16, #tpu.memory_space<vmem>>, vector<1x512x256xbf16>
    %7 = vector.shape_cast %6 : vector<1x512x256xbf16> to vector<512x256xbf16>
    %cst = arith.constant dense<0.000000e+00> : vector<8x256xf32>
    %8 = tpu.matmul %5, %7, %cst {dimension_numbers = #tpu.dot_dimension_numbers<[1], [0], [0], [1], [0, 0, 1, 1], [], []>} : vector<8x512xbf16>, vector<512x256xbf16>, vector<8x256xf32> -> vector<8x256xf32>
    %9 = arith.addf %3, %8 : vector<8x256xf32>
    %c0_8 = arith.constant 0 : index
    %c0_9 = arith.constant 0 : index
    %10 = vector.load %arg8[%c0_8, %c0_9] : memref<8x256xf32, #tpu.memory_space<vmem>>, vector<8x256xf32>
    tpu.vector_store %arg8[%c0_8, %c0_9], %9 {strides = array<i32>} : memref<8x256xf32, #tpu.memory_space<vmem>>, vector<8x256xf32>,
    %c0_i32_10 = arith.constant 0 : i32
    %11 = arith.cmpi eq, %arg3, %c0_i32_10 : i32
    %12 = arith.extui %11 : i1 to i32
    %c0_i32_11 = arith.constant 0 : i32
    %13 = arith.cmpi ne, %12, %c0_i32_11 : i32
    scf.if %13 {
      %c0_12 = arith.constant 0 : index
      %c0_13 = arith.constant 0 : index
      %14 = vector.load %arg8[%c0_12, %c0_13] : memref<8x256xf32, #tpu.memory_space<vmem>>, vector<8x256xf32>
      %c0_14 = arith.constant 0 : index
      %c0_15 = arith.constant 0 : index
      %c0_16 = arith.constant 0 : index
      %15 = vector.load %arg6[%c0_14, %c0_15, %c0_16] : memref<1x1x256xf32, #tpu.memory_space<vmem>>, vector<1x1x256xf32>
      %16 = vector.shape_cast %15 : vector<1x1x256xf32> to vector<1x256xf32>
      %17 = vector.broadcast %16 : vector<1x256xf32> to vector<8x256xf32>
      %18 = arith.addf %14, %17 : vector<8x256xf32>
      %cst_17 = arith.constant 0.000000e+00 : f32
      %19 = vector.broadcast %cst_17 : f32 to vector<8x256xf32>
      %20 = arith.maximumf %18, %19 : vector<8x256xf32>
      %21 = arith.truncf %20 : vector<8x256xf32> to vector<8x256xbf16>
      %c0_18 = arith.constant 0 : index
      %c0_19 = arith.constant 0 : index
      %c0_20 = arith.constant 0 : index
      %22 = vector.load %arg7[%c0_18, %c0_19, %c0_20] : memref<1x8x256xbf16, #tpu.memory_space<vmem>>, vector<1x8x256xbf16>
      %23 = vector.shape_cast %22 : vector<1x8x256xbf16> to vector<8x256xbf16>
      %24 = vector.shape_cast %21 : vector<8x256xbf16> to vector<1x8x256xbf16>
      tpu.vector_store %arg7[%c0_18, %c0_19, %c0_20], %24 {strides = array<i32>} : memref<1x8x256xbf16, #tpu.memory_space<vmem>>, vector<1x8x256xbf16>,
    } else {
    }
    return
  }
  func.func @transform_0(%arg0: i32, %arg1: i32, %arg2: i32, %arg3: i32) -> (i32, i32, i32) {
    %c0_i32 = arith.constant 0 : i32
    return %arg0, %arg1, %arg3 : i32, i32, i32
  }
  func.func @transform_1(%arg0: i32, %arg1: i32, %arg2: i32, %arg3: i32) -> (i32, i32, i32) {
    %c0_i32 = arith.constant 0 : i32
    return %arg0, %arg3, %arg2 : i32, i32, i32
  }
  func.func @transform_2(%arg0: i32, %arg1: i32, %arg2: i32, %arg3: i32) -> (i32, i32, i32) {
    %c0_i32 = arith.constant 0 : i32
    %c0_i32_0 = arith.constant 0 : i32
    return %arg0, %c0_i32, %arg2 : i32, i32, i32
  }
  func.func @transform_3(%arg0: i32, %arg1: i32, %arg2: i32, %arg3: i32) -> (i32, i32, i32) {
    %c0_i32 = arith.constant 0 : i32
    return %arg0, %arg1, %arg2 : i32, i32, i32
  }
}

</mosaic_0001>

<llo_original>
// kernel: forward.6
$region0: #{forward.6}
  #allocation0 [shape = 'u32[]', space=smem, size = 0x4, offset = 0x4, fixed_abs, tag = 'smem constant byte address 0x4 - core index']
  #allocation1 [shape = 'u32[144,128]{1,0:T(1,128)}', space=vmem, size = 0x12000, scoped, tag = 'internal scratch']
  #allocation2 [shape = 'f32[128,128]{1,0:T(8,128)}', space=vmem, size = 0x10000, scoped, tag = 'scratch operand']
  %s0 = inlined_call_operand.vmem [shape: bf16[3,128,128], index: 0, kind: input, shape index: {}]
  %s1 = inlined_call_operand.vmem [shape: bf16[3,128,128], index: 1, kind: input, shape index: {}]
  %s2 = inlined_call_operand.vmem [shape: f32[3,1,128], index: 2, kind: input, shape index: {}]
  %s3 = inlined_call_operand.vmem [shape: bf16[3,128,128], index: 3, kind: output, shape index: {}]
  %s4 = sld [smem:[#allocation0]]
  $region53: #{forward.6} parent=0
    _
  %s6 = ssub.s32 1, %s4
  %s7 = scalar_select 0, %s6, %s4
  loop: start=0, step=1, limit=5
  $region2: #{forward.6} parent=0 // loop_pre_header
    _
  $region3: #{forward.6} parent=0 // loop_header
    %s9 = sphi 0, %s13
    %p10 = scmp.ge.s32.totalorder %s9, 5
    %s16 = sphi 0, %s42
    %s17 = sphi 0, %s38
    %s18 = sphi 0, %s34
    %s19 = sphi 0, %s30
    %s20 = sphi 0, %s16
    %s21 = sphi 0, %s17
    %s22 = sphi 0, %s18
    %s23 = sphi 0, %s19
    %s24 = sphi 0, %s20
    %s25 = sphi 0, %s21
    %s26 = sphi 0, %s22
    %s27 = sphi 0, %s23
    %s49 = sphi 0, %s51
    %s52 = sphi 0, %s49
    %s53 = sphi 0, %s52
    %s69 = sphi 0, %s53
    %s79 = sphi 0, %s81
    %s82 = sphi 0, %s79
    %s83 = sphi 0, %s82
    %s99 = sphi 0, %s83
    %s107 = sphi 0, %s109
    %s110 = sphi 0, %s107
    %s111 = sphi 0, %s110
    %s127 = sphi 0, %s111
    %s137 = sphi 0, %s139
    %s140 = sphi 0, %s137
    %s141 = sphi 0, %s140
    %s157 = sphi 0, %s141
  $region4: #{forward.6} parent=0 // loop_header_branch
    %12 = sbr.rel (%p10) target = $region8
  $region5: #{forward.6} parent=0 // loop_body
    %s14 = ssub.s32 %s9, 1
    %s15 = ssub.s32 %s9, 2
    %s28 = sadd.s32 1, %s19
    %p29 = scmp.ge.s32.totalorder %s28, 1
    %s30 = scalar_select %p29, 0, %s28
    %s31 = sadd.s32 1, %s18
    %s32 = scalar_select %p29, %s31, %s18
    %p33 = scmp.ge.s32.totalorder %s32, 1
    %s34 = scalar_select %p33, 0, %s32
    %s35 = sadd.s32 1, %s17
    %s36 = scalar_select %p33, %s35, %s17
    %p37 = scmp.ge.s32.totalorder %s36, 1
    %s38 = scalar_select %p37, 0, %s36
    %s39 = sadd.s32 1, %s16
    %s40 = scalar_select %p37, %s39, %s16
    %p41 = scmp.ge.s32.totalorder %s40, 3
    %s42 = scalar_select %p41, 0, %s40
    %s43 = ssub.s32 %s16, %s42
    %s44 = ssub.s32 %s17, %s38
    %s45 = sor.u32 %s43, %s44
    %s46 = ssub.s32 %s19, %s30
    %s47 = sor.u32 %s45, %s46
    %p48 = scmp.eq.s32.totalorder %s47, 0
    %s50 = sadd.s32 %s49, 1
    %s51 = scalar_select %p48, %s49, %s50
    %p54 = pneg %p48
    %p55 = scmp.eq.s32.totalorder %s9, 2
    %p56 = por %p54, %p55
    %p57 = scmp.ne.s32.totalorder %s49, %s52
    %p58 = scmp.eq.s32.totalorder %s9, 0
    %p59 = por %p57, %p58
    %p60 = scmp.ne.s32.totalorder %s49, %s52
    %p61 = scmp.eq.s32.totalorder %s14, 2
    %p62 = por %p60, %p61
    %p63 = scmp.ne.s32.totalorder %s52, %s53
    %p64 = scmp.eq.s32.totalorder %s14, 0
    %p65 = por %p63, %p64
    %p66 = scmp.ne.s32.totalorder %s52, %s53
    %p67 = scmp.eq.s32.totalorder %s15, 2
    %p68 = por %p66, %p67
    %p70 = scmp.ne.s32.totalorder %s53, %s69
    %p71 = scmp.eq.s32.totalorder %s15, 0
    %p72 = por %p70, %p71
    %s73 = ssub.s32 %s16, %s42
    %s74 = ssub.s32 %s19, %s30
    %s75 = sor.u32 %s73, %s74
    %s76 = ssub.s32 %s18, %s34
    %s77 = sor.u32 %s75, %s76
    %p78 = scmp.eq.s32.totalorder %s77, 0
    %s80 = sadd.s32 %s79, 1
    %s81 = scalar_select %p78, %s79, %s80
    %p84 = pneg %p78
    %p85 = scmp.eq.s32.totalorder %s9, 2
    %p86 = por %p84, %p85
    %p87 = scmp.ne.s32.totalorder %s79, %s82
    %p88 = scmp.eq.s32.totalorder %s9, 0
    %p89 = por %p87, %p88
    %p90 = scmp.ne.s32.totalorder %s79, %s82
    %p91 = scmp.eq.s32.totalorder %s14, 2
    %p92 = por %p90, %p91
    %p93 = scmp.ne.s32.totalorder %s82, %s83
    %p94 = scmp.eq.s32.totalorder %s14, 0
    %p95 = por %p93, %p94
    %p96 = scmp.ne.s32.totalorder %s82, %s83
    %p97 = scmp.eq.s32.totalorder %s15, 2
    %p98 = por %p96, %p97
    %p100 = scmp.ne.s32.totalorder %s83, %s99
    %p101 = scmp.eq.s32.totalorder %s15, 0
    %p102 = por %p100, %p101
    %s103 = ssub.s32 %s16, %s42
    %s104 = ssub.s32 %s18, %s34
    %s105 = sor.u32 %s103, %s104
    %p106 = scmp.eq.s32.totalorder %s105, 0
    %s108 = sadd.s32 %s107, 1
    %s109 = scalar_select %p106, %s107, %s108
    %p112 = pneg %p106
    %p113 = scmp.eq.s32.totalorder %s9, 2
    %p114 = por %p112, %p113
    %p115 = scmp.ne.s32.totalorder %s107, %s110
    %p116 = scmp.eq.s32.totalorder %s9, 0
    %p117 = por %p115, %p116
    %p118 = scmp.ne.s32.totalorder %s107, %s110
    %p119 = scmp.eq.s32.totalorder %s14, 2
    %p120 = por %p118, %p119
    %p121 = scmp.ne.s32.totalorder %s110, %s111
    %p122 = scmp.eq.s32.totalorder %s14, 0
    %p123 = por %p121, %p122
    %p124 = scmp.ne.s32.totalorder %s110, %s111
    %p125 = scmp.eq.s32.totalorder %s15, 2
    %p126 = por %p124, %p125
    %p128 = scmp.ne.s32.totalorder %s111, %s127
    %p129 = scmp.eq.s32.totalorder %s15, 0
    %p130 = por %p128, %p129
    %s131 = ssub.s32 %s16, %s42
    %s132 = ssub.s32 %s17, %s38
    %s133 = sor.u32 %s131, %s132
    %s134 = ssub.s32 %s18, %s34
    %s135 = sor.u32 %s133, %s134
    %p136 = scmp.eq.s32.totalorder %s135, 0
    %s138 = sadd.s32 %s137, 1
    %s139 = scalar_select %p136, %s137, %s138
    %p142 = pneg %p136
    %p143 = scmp.eq.s32.totalorder %s9, 2
    %p144 = por %p142, %p143
    %p145 = scmp.ne.s32.totalorder %s137, %s140
    %p146 = scmp.eq.s32.totalorder %s9, 0
    %p147 = por %p145, %p146
    %p148 = scmp.ne.s32.totalorder %s137, %s140
    %p149 = scmp.eq.s32.totalorder %s14, 2
    %p150 = por %p148, %p149
    %p151 = scmp.ne.s32.totalorder %s140, %s141
    %p152 = scmp.eq.s32.totalorder %s14, 0
    %p153 = por %p151, %p152
    %p154 = scmp.ne.s32.totalorder %s140, %s141
    %p155 = scmp.eq.s32.totalorder %s15, 2
    %p156 = por %p154, %p155
    %p158 = scmp.ne.s32.totalorder %s141, %s157
    %p159 = scmp.eq.s32.totalorder %s15, 0
    %p160 = por %p158, %p159
    %p161 = scmp.le.s32.totalorder 1, %s9
    %p162 = scmp.lt.s32.totalorder %s9, 4
    %p163 = pnand %p161, %p162
    %p164 = pneg %p163
    // Predicated region
    $region9: #{forward.6} parent=5 // pred_check
      _
    $region10: #{forward.6} parent=5 // pred_check_branch
      %166 = sbr.rel (%p163) target = $region12
    $region11: #{forward.6} parent=5 // pred_region
      %s167 = ssub.s32 %s9, 1
    $region12: #{forward.6} parent=5 // pred_fallthru
      _
    %p168 = scmp.lt.s32.totalorder %s9, 3
    // Predicated region
    $region13: #{forward.6} parent=5 // pred_check
      %p169 = pneg %p168
    $region14: #{forward.6} parent=5 // pred_check_branch
      %171 = sbr.rel (%p169) target = $region16
    $region15: #{forward.6} parent=5 // pred_region
      // Predicated region
      $region17: #{forward.6} parent=15 // pred_check
        %p172 = pneg %p59
      $region18: #{forward.6} parent=15 // pred_check_branch
        %174 = sbr.rel (%p172) target = $region20
      $region19: #{forward.6} parent=15 // pred_region
        %s175 = smul.u32 16, %s17
        %p176 = scmp.lt.s32.totalorder %s16, 2
        %s177 = scalar_select %p176, %s16, 2
        %p178 = scmp.lt.s32.totalorder %s175, 15
        %s179 = scalar_select %p178, %s175, 15
        %p180 = scmp.lt.s32.totalorder %s19, 0
        %s181 = scalar_select %p180, %s19, 0
        %s182 = sadd.s32 %s181, %s179
        %s183 = smul.addr %s177, 16
        %s184 = sadd.s32 %s182, %s183
        %s185 = smul.addr %s184, 4
        %s186 = scalar_lea.vmem %s0, %s185
        %s187 = smul.u32 16, %s17
      $region20: #{forward.6} parent=15 // pred_fallthru
        _
      // Predicated region
      $region21: #{forward.6} parent=15 // pred_check
        %p188 = pneg %p89
      $region22: #{forward.6} parent=15 // pred_check_branch
        %190 = sbr.rel (%p188) target = $region24
      $region23: #{forward.6} parent=15 // pred_region
        %s191 = smul.u32 16, %s19
        %p192 = scmp.lt.s32.totalorder %s16, 2
        %s193 = scalar_select %p192, %s16, 2
        %p194 = scmp.lt.s32.totalorder %s191, 15
        %s195 = scalar_select %p194, %s191, 15
        %p196 = scmp.lt.s32.totalorder %s18, 0
        %s197 = scalar_select %p196, %s18, 0
        %s198 = sadd.s32 %s197, %s195
        %s199 = smul.addr %s193, 16
        %s200 = sadd.s32 %s198, %s199
        %s201 = smul.addr %s200, 4
        %s202 = scalar_lea.vmem %s1, %s201
        %s203 = smul.u32 16, %s19
      $region24: #{forward.6} parent=15 // pred_fallthru
        _
      // Predicated region
      $region25: #{forward.6} parent=15 // pred_check
        %p204 = pneg %p117
      $region26: #{forward.6} parent=15 // pred_check_branch
        %206 = sbr.rel (%p204) target = $region28
      $region27: #{forward.6} parent=15 // pred_region
        %p207 = scmp.lt.s32.totalorder %s16, 2
        %s208 = scalar_select %p207, %s16, 2
        %p209 = scmp.lt.s32.totalorder %s18, 0
        %s210 = scalar_select %p209, %s18, 0
        %s211 = sadd.s32 %s210, %s208
        %s212 = scalar_lea.vmem %s2, %s211
      $region28: #{forward.6} parent=15 // pred_fallthru
        _
    $region16: #{forward.6} parent=5 // pred_fallthru
      _
    %p213 = scmp.le.s32.totalorder 1, %s9
    %p214 = scmp.lt.s32.totalorder %s9, 4
    %p215 = pnand %p213, %p214
    %p216 = pneg %p215
    // Predicated region
    $region29: #{forward.6} parent=5 // pred_check
      _
    $region30: #{forward.6} parent=5 // pred_check_branch
      %218 = sbr.rel (%p215) target = $region32
    $region31: #{forward.6} parent=5 // pred_region
      %s219 = ssub.s32 %s9, 1
      %s220 = smul.u32 16, %s21
      %p221 = scmp.lt.s32.totalorder %s20, 2
      %s222 = scalar_select %p221, %s20, 2
      %p223 = scmp.lt.s32.totalorder %s220, 15
      %s224 = scalar_select %p223, %s220, 15
      %p225 = scmp.lt.s32.totalorder %s23, 0
      %s226 = scalar_select %p225, %s23, 0
      %s227 = sadd.s32 %s226, %s224
      %s228 = smul.addr %s222, 16
      %s229 = sadd.s32 %s227, %s228
      %s230 = smul.addr %s229, 4
      %s231 = scalar_lea.vmem %s0, %s230
      %p232 = pneg %p65
      %p233 = pneg %p62
      %s234 = smul.u32 16, %s23
      %p235 = scmp.lt.s32.totalorder %s20, 2
      %s236 = scalar_select %p235, %s20, 2
      %p237 = scmp.lt.s32.totalorder %s234, 15
      %s238 = scalar_select %p237, %s234, 15
      %p239 = scmp.lt.s32.totalorder %s22, 0
      %s240 = scalar_select %p239, %s22, 0
      %s241 = sadd.s32 %s240, %s238
      %s242 = smul.addr %s236, 16
      %s243 = sadd.s32 %s241, %s242
      %s244 = smul.addr %s243, 4
      %s245 = scalar_lea.vmem %s1, %s244
      %p246 = pneg %p95
      %p247 = pneg %p92
      %p248 = scmp.lt.s32.totalorder %s20, 2
      %s249 = scalar_select %p248, %s20, 2
      %p250 = scmp.lt.s32.totalorder %s22, 0
      %s251 = scalar_select %p250, %s22, 0
      %s252 = sadd.s32 %s251, %s249
      %s253 = scalar_lea.vmem %s2, %s252
      %p254 = pneg %p123
      %p255 = pneg %p120
      %p256 = pneg %p153
      %p257 = pneg %p150
      %s258 = smul.u32 16, %s21
      %p259 = scmp.lt.s32.totalorder %s20, 2
      %s260 = scalar_select %p259, %s20, 2
      %p261 = scmp.lt.s32.totalorder %s258, 15
      %s262 = scalar_select %p261, %s258, 15
      %p263 = scmp.lt.s32.totalorder %s22, 0
      %s264 = scalar_select %p263, %s22, 0
      %s265 = sadd.s32 %s264, %s262
      %s266 = smul.addr %s260, 16
      %s267 = sadd.s32 %s265, %s266
      %s268 = smul.addr %s267, 4
      %s269 = scalar_lea.vmem %s3, %s268
      %s270 = smul.u32 16, %s21
      %p271 = scmp.lt.s32.totalorder %s20, 2
      %s272 = scalar_select %p271, %s20, 2
      %p273 = scmp.lt.s32.totalorder %s270, 15
      %s274 = scalar_select %p273, %s270, 15
      %p275 = scmp.lt.s32.totalorder %s23, 0
      %s276 = scalar_select %p275, %s23, 0
      %s277 = sadd.s32 %s276, %s274
      %s278 = smul.addr %s272, 16
      %s279 = sadd.s32 %s277, %s278
      %s280 = smul.addr %s279, 4
      %s281 = scalar_lea.vmem %s0, %s280
      %s282 = smul.u32 16, %s21
      %s283 = smul.u32 16, %s23
      %p284 = scmp.lt.s32.totalorder %s20, 2
      %s285 = scalar_select %p284, %s20, 2
      %p286 = scmp.lt.s32.totalorder %s283, 15
      %s287 = scalar_select %p286, %s283, 15
      %p288 = scmp.lt.s32.totalorder %s22, 0
      %s289 = scalar_select %p288, %s22, 0
      %s290 = sadd.s32 %s289, %s287
      %s291 = smul.addr %s285, 16
      %s292 = sadd.s32 %s290, %s291
      %s293 = smul.addr %s292, 4
      %s294 = scalar_lea.vmem %s1, %s293
      %s295 = smul.u32 16, %s23
      %p296 = scmp.lt.s32.totalorder %s20, 2
      %s297 = scalar_select %p296, %s20, 2
      %p298 = scmp.lt.s32.totalorder %s22, 0
      %s299 = scalar_select %p298, %s22, 0
      %s300 = sadd.s32 %s299, %s297
      %s301 = scalar_lea.vmem %s2, %s300
      %s302 = smul.u32 16, %s21
      %p303 = scmp.lt.s32.totalorder %s20, 2
      %s304 = scalar_select %p303, %s20, 2
      %p305 = scmp.lt.s32.totalorder %s302, 15
      %s306 = scalar_select %p305, %s302, 15
      %p307 = scmp.lt.s32.totalorder %s22, 0
      %s308 = scalar_select %p307, %s22, 0
      %s309 = sadd.s32 %s308, %s306
      %s310 = smul.addr %s304, 16
      %s311 = sadd.s32 %s309, %s310
      %s312 = smul.addr %s311, 4
      %s313 = scalar_lea.vmem %s3, %s312
      %s314 = smul.u32 16, %s21
      %p316 = scmp.eq.s32.totalorder %s23, 0
      // Predicated region
      $region33: #{forward.6} parent=31 // pred_check
        %p317 = pneg %p316
      $region34: #{forward.6} parent=31 // pred_check_branch
        %319 = sbr.rel (%p317) target = $region36
      $region35: #{forward.6} parent=31 // pred_region
        %320 = vst [vmem:[#allocation2] sm:$0xff] 0.0
        %321 = vst [vmem:[#allocation2 + $0x8] sm:$0xff] 0.0
        %322 = vst [vmem:[#allocation2 + $0x10] sm:$0xff] 0.0
        %323 = vst [vmem:[#allocation2 + $0x18] sm:$0xff] 0.0
        %324 = vst [vmem:[#allocation2 + $0x20] sm:$0xff] 0.0
        %325 = vst [vmem:[#allocation2 + $0x28] sm:$0xff] 0.0
        %326 = vst [vmem:[#allocation2 + $0x30] sm:$0xff] 0.0
        %327 = vst [vmem:[#allocation2 + $0x38] sm:$0xff] 0.0
        %328 = vst [vmem:[#allocation2 + $0x40] sm:$0xff] 0.0
        %329 = vst [vmem:[#allocation2 + $0x48] sm:$0xff] 0.0
        %330 = vst [vmem:[#allocation2 + $0x50] sm:$0xff] 0.0
        %331 = vst [vmem:[#allocation2 + $0x58] sm:$0xff] 0.0
        %332 = vst [vmem:[#allocation2 + $0x60] sm:$0xff] 0.0
        %333 = vst [vmem:[#allocation2 + $0x68] sm:$0xff] 0.0
        %334 = vst [vmem:[#allocation2 + $0x70] sm:$0xff] 0.0
        %335 = vst [vmem:[#allocation2 + $0x78] sm:$0xff] 0.0
      $region36: #{forward.6} parent=31 // pred_fallthru
        _
      %v336 = vld [vmem:[#allocation2] sm:$0xff]
      %v337 = vld [vmem:[#allocation2 + $0x8] sm:$0xff]
      %v338 = vld [vmem:[#allocation2 + $0x10] sm:$0xff]
      %v339 = vld [vmem:[#allocation2 + $0x18] sm:$0xff]
      %v340 = vld [vmem:[#allocation2 + $0x20] sm:$0xff]
      %v341 = vld [vmem:[#allocation2 + $0x28] sm:$0xff]
      %v342 = vld [vmem:[#allocation2 + $0x30] sm:$0xff]
      %v343 = vld [vmem:[#allocation2 + $0x38] sm:$0xff]
      %v344 = vld [vmem:[#allocation2 + $0x40] sm:$0xff]
      %v345 = vld [vmem:[#allocation2 + $0x48] sm:$0xff]
      %v346 = vld [vmem:[#allocation2 + $0x50] sm:$0xff]
      %v347 = vld [vmem:[#allocation2 + $0x58] sm:$0xff]
      %v348 = vld [vmem:[#allocation2 + $0x60] sm:$0xff]
      %v349 = vld [vmem:[#allocation2 + $0x68] sm:$0xff]
      %v350 = vld [vmem:[#allocation2 + $0x70] sm:$0xff]
      %v351 = vld [vmem:[#allocation2 + $0x78] sm:$0xff]
      %v352 = vld [vmem:[%s281] sm:$0xf]
      %v353 = vld [vmem:[%s281 + $0x4] sm:$0xf]
      %v354 = vld [vmem:[%s281 + $0x8] sm:$0xf]
      %v355 = vld [vmem:[%s281 + $0xc] sm:$0xf]
      %v356 = vld [vmem:[%s281 + $0x10] sm:$0xf]
      %v357 = vld [vmem:[%s281 + $0x14] sm:$0xf]
      %v358 = vld [vmem:[%s281 + $0x18] sm:$0xf]
      %v359 = vld [vmem:[%s281 + $0x1c] sm:$0xf]
      %v360 = vld [vmem:[%s281 + $0x20] sm:$0xf]
      %v361 = vld [vmem:[%s281 + $0x24] sm:$0xf]
      %v362 = vld [vmem:[%s281 + $0x28] sm:$0xf]
      %v363 = vld [vmem:[%s281 + $0x2c] sm:$0xf]
      %v364 = vld [vmem:[%s281 + $0x30] sm:$0xf]
      %v365 = vld [vmem:[%s281 + $0x34] sm:$0xf]
      %v366 = vld [vmem:[%s281 + $0x38] sm:$0xf]
      %v367 = vld [vmem:[%s281 + $0x3c] sm:$0xf]
      %v368 = vld [vmem:[%s294] sm:$0xf]
      %v369 = vld [vmem:[%s294 + $0x4] sm:$0xf]
      %v370 = vld [vmem:[%s294 + $0x8] sm:$0xf]
      %v371 = vld [vmem:[%s294 + $0xc] sm:$0xf]
      %v372 = vld [vmem:[%s294 + $0x10] sm:$0xf]
      %v373 = vld [vmem:[%s294 + $0x14] sm:$0xf]
      %v374 = vld [vmem:[%s294 + $0x18] sm:$0xf]
      %v375 = vld [vmem:[%s294 + $0x1c] sm:$0xf]
      %v376 = vld [vmem:[%s294 + $0x20] sm:$0xf]
      %v377 = vld [vmem:[%s294 + $0x24] sm:$0xf]
      %v378 = vld [vmem:[%s294 + $0x28] sm:$0xf]
      %v379 = vld [vmem:[%s294 + $0x2c] sm:$0xf]
      %v380 = vld [vmem:[%s294 + $0x30] sm:$0xf]
      %v381 = vld [vmem:[%s294 + $0x34] sm:$0xf]
      %v382 = vld [vmem:[%s294 + $0x38] sm:$0xf]
      %v383 = vld [vmem:[%s294 + $0x3c] sm:$0xf]
      %v400 = vunpack.c.l.b16 %v352
      %v401 = vunpack.c.l.b16 %v353
      %v402 = vunpack.c.l.b16 %v354
      %v403 = vunpack.c.l.b16 %v355
      %v404 = vunpack.c.l.b16 %v356
      %v405 = vunpack.c.l.b16 %v357
      %v406 = vunpack.c.l.b16 %v358
      %v407 = vunpack.c.l.b16 %v359
      %v408 = vunpack.c.l.b16 %v360
      %v409 = vunpack.c.l.b16 %v361
      %v410 = vunpack.c.l.b16 %v362
      %v411 = vunpack.c.l.b16 %v363
      %v412 = vunpack.c.l.b16 %v364
      %v413 = vunpack.c.l.b16 %v365
      %v414 = vunpack.c.l.b16 %v366
      %v415 = vunpack.c.l.b16 %v367
      %v416 = vpack.c.b16 %v401, %v400
      %v417 = vpack.c.b16 %v403, %v402
      %v418 = vpack.c.b16 %v405, %v404
      %v419 = vpack.c.b16 %v407, %v406
      %v420 = vpack.c.b16 %v409, %v408
      %v421 = vpack.c.b16 %v411, %v410
      %v422 = vpack.c.b16 %v413, %v412
      %v423 = vpack.c.b16 %v415, %v414
      %v448 = vunpack.c.l.b16 %v368
      %v449 = vunpack.c.l.b16 %v369
      %v450 = vunpack.c.l.b16 %v370
      %v451 = vunpack.c.l.b16 %v371
      %v452 = vunpack.c.l.b16 %v372
      %v453 = vunpack.c.l.b16 %v373
      %v454 = vunpack.c.l.b16 %v374
      %v455 = vunpack.c.l.b16 %v375
      %v456 = vunpack.c.l.b16 %v376
      %v457 = vunpack.c.l.b16 %v377
      %v458 = vunpack.c.l.b16 %v378
      %v459 = vunpack.c.l.b16 %v379
      %v460 = vunpack.c.l.b16 %v380
      %v461 = vunpack.c.l.b16 %v381
      %v462 = vunpack.c.l.b16 %v382
      %v463 = vunpack.c.l.b16 %v383
      %v464 = vpack.c.b16 %v449, %v448
      %v465 = vpack.c.b16 %v451, %v450
      %v466 = vpack.c.b16 %v453, %v452
      %v467 = vpack.c.b16 %v455, %v454
      %v468 = vpack.c.b16 %v457, %v456
      %v469 = vpack.c.b16 %v459, %v458
      %v470 = vpack.c.b16 %v461, %v460
      %v471 = vpack.c.b16 %v463, %v462
      %480 = vmatprep.subr.bf16.mxu0 0
      %481 = vmatpush1.bf16.msra.mxu0 %v464
      %482 = vmatprep.subr.bf16.mxu0 0
      %483 = vmatpush1.bf16.msra.mxu0 %v465
      %484 = vmatprep.subr.bf16.mxu0 0
      %485 = vmatpush1.bf16.msra.mxu0 %v466
      %486 = vmatprep.subr.bf16.mxu0 0
      %487 = vmatpush1.bf16.msra.mxu0 %v467
      %488 = vmatprep.subr.bf16.mxu0 0
      %489 = vmatpush1.bf16.msra.mxu0 %v468
      %490 = vmatprep.subr.bf16.mxu0 0
      %491 = vmatpush1.bf16.msra.mxu0 %v469
      %492 = vmatprep.subr.bf16.mxu0 0
      %493 = vmatpush1.bf16.msra.mxu0 %v470
      %494 = vmatprep.subr.bf16.mxu0 0
      %495 = vmatpush1.bf16.msra.mxu0 %v471
      %496 = vmatprep.subr.bf16.mxu0 0
      %497 = vmatpush1.bf16.msra.mxu0 0
      %498 = vmatprep.subr.bf16.mxu0 0
      %499 = vmatpush1.bf16.msra.mxu0 0
      %500 = vmatprep.subr.bf16.mxu0 0
      %501 = vmatpush1.bf16.msra.mxu0 0
      %502 = vmatprep.subr.bf16.mxu0 0
      %503 = vmatpush1.bf16.msra.mxu0 0
      %504 = vmatprep.subr.bf16.mxu0 0
      %505 = vmatpush1.bf16.msra.mxu0 0
      %506 = vmatprep.subr.bf16.mxu0 0
      %507 = vmatpush1.bf16.msra.mxu0 0
      %508 = vmatprep.subr.bf16.mxu0 0
      %509 = vmatpush1.bf16.msra.mxu0 0
      %510 = vmatprep.subr.bf16.mxu0 0
      %511 = vmatpush1.bf16.msra.mxu0 0
      %512 = vmatprep.mubr.bf16.mxu0 0
      %513 = vmatmul.mubr.bf16.gmra.mrb[0].mxu0 %v416
      %v514 = vpop.f32.mrb[0].mxu0
      %v515 = vadd.f32 0.0, %v514
      %v516 = vpop.f32.mrb[0].mxu0
      %v517 = vpop.f32.mrb[0].mxu0
      %v518 = vadd.f32 0.0, %v517
      %v519 = vpop.f32.mrb[0].mxu0
      %520 = vmatprep.mubr.bf16.mxu0 0
      %521 = vmatmul.mubr.bf16.gmra.mrb[0].mxu0 %v417
      %v522 = vpop.f32.mrb[0].mxu0
      %v523 = vadd.f32 0.0, %v522
      %v524 = vpop.f32.mrb[0].mxu0
      %v525 = vpop.f32.mrb[0].mxu0
      %v526 = vadd.f32 0.0, %v525
      %v527 = vpop.f32.mrb[0].mxu0
      %528 = vmatprep.mubr.bf16.mxu0 0
      %529 = vmatmul.mubr.bf16.gmra.mrb[0].mxu0 %v418
      %v530 = vpop.f32.mrb[0].mxu0
      %v531 = vadd.f32 0.0, %v530
      %v532 = vpop.f32.mrb[0].mxu0
      %v533 = vpop.f32.mrb[0].mxu0
      %v534 = vadd.f32 0.0, %v533
      %v535 = vpop.f32.mrb[0].mxu0
      %536 = vmatprep.mubr.bf16.mxu0 0
      %537 = vmatmul.mubr.bf16.gmra.mrb[0].mxu0 %v419
      %v538 = vpop.f32.mrb[0].mxu0
      %v539 = vadd.f32 0.0, %v538
      %v540 = vpop.f32.mrb[0].mxu0
      %v541 = vpop.f32.mrb[0].mxu0
      %v542 = vadd.f32 0.0, %v541
      %v543 = vpop.f32.mrb[0].mxu0
      %544 = vmatprep.mubr.bf16.mxu0 0
      %545 = vmatmul.mubr.bf16.gmra.mrb[0].mxu0 %v420
      %v546 = vpop.f32.mrb[0].mxu0
      %v547 = vadd.f32 0.0, %v546
      %v548 = vpop.f32.mrb[0].mxu0
      %v549 = vpop.f32.mrb[0].mxu0
      %v550 = vadd.f32 0.0, %v549
      %v551 = vpop.f32.mrb[0].mxu0
      %552 = vmatprep.mubr.bf16.mxu0 0
      %553 = vmatmul.mubr.bf16.gmra.mrb[0].mxu0 %v421
      %v554 = vpop.f32.mrb[0].mxu0
      %v555 = vadd.f32 0.0, %v554
      %v556 = vpop.f32.mrb[0].mxu0
      %v557 = vpop.f32.mrb[0].mxu0
      %v558 = vadd.f32 0.0, %v557
      %v559 = vpop.f32.mrb[0].mxu0
      %560 = vmatprep.mubr.bf16.mxu0 0
      %561 = vmatmul.mubr.bf16.gmra.mrb[0].mxu0 %v422
      %v562 = vpop.f32.mrb[0].mxu0
      %v563 = vadd.f32 0.0, %v562
      %v564 = vpop.f32.mrb[0].mxu0
      %v565 = vpop.f32.mrb[0].mxu0
      %v566 = vadd.f32 0.0, %v565
      %v567 = vpop.f32.mrb[0].mxu0
      %568 = vmatprep.mubr.bf16.mxu0 0
      %569 = vmatmul.mubr.bf16.gmra.mrb[0].mxu0 %v423
      %v570 = vpop.f32.mrb[0].mxu0
      %v571 = vadd.f32 0.0, %v570
      %v572 = vpop.f32.mrb[0].mxu0
      %v573 = vpop.f32.mrb[0].mxu0
      %v574 = vadd.f32 0.0, %v573
      %v575 = vpop.f32.mrb[0].mxu0
      %576 = vdwg.mxu0
      %v577 = vadd.f32 %v336, %v515
      %v578 = vadd.f32 %v337, %v518
      %v579 = vadd.f32 %v338, %v523
      %v580 = vadd.f32 %v339, %v526
      %v581 = vadd.f32 %v340, %v531
      %v582 = vadd.f32 %v341, %v534
      %v583 = vadd.f32 %v342, %v539
      %v584 = vadd.f32 %v343, %v542
      %v585 = vadd.f32 %v344, %v547
      %v586 = vadd.f32 %v345, %v550
      %v587 = vadd.f32 %v346, %v555
      %v588 = vadd.f32 %v347, %v558
      %v589 = vadd.f32 %v348, %v563
      %v590 = vadd.f32 %v349, %v566
      %v591 = vadd.f32 %v350, %v571
      %v592 = vadd.f32 %v351, %v574
      %593 = vst [vmem:[#allocation2] sm:$0xff] %v577
      %594 = vst [vmem:[#allocation2 + $0x8] sm:$0xff] %v578
      %595 = vst [vmem:[#allocation2 + $0x10] sm:$0xff] %v579
      %596 = vst [vmem:[#allocation2 + $0x18] sm:$0xff] %v580
      %597 = vst [vmem:[#allocation2 + $0x20] sm:$0xff] %v581
      %598 = vst [vmem:[#allocation2 + $0x28] sm:$0xff] %v582
      %599 = vst [vmem:[#allocation2 + $0x30] sm:$0xff] %v583
      %600 = vst [vmem:[#allocation2 + $0x38] sm:$0xff] %v584
      %601 = vst [vmem:[#allocation2 + $0x40] sm:$0xff] %v585
      %602 = vst [vmem:[#allocation2 + $0x48] sm:$0xff] %v586
      %603 = vst [vmem:[#allocation2 + $0x50] sm:$0xff] %v587
      %604 = vst [vmem:[#allocation2 + $0x58] sm:$0xff] %v588
      %605 = vst [vmem:[#allocation2 + $0x60] sm:$0xff] %v589
      %606 = vst [vmem:[#allocation2 + $0x68] sm:$0xff] %v590
      %607 = vst [vmem:[#allocation2 + $0x70] sm:$0xff] %v591
      %608 = vst [vmem:[#allocation2 + $0x78] sm:$0xff] %v592
      // Predicated region
      $region37: #{forward.6} parent=31 // pred_check
        %p609 = pneg %p316
      $region38: #{forward.6} parent=31 // pred_check_branch
        %611 = sbr.rel (%p609) target = $region40
      $region39: #{forward.6} parent=31 // pred_region
        %v612 = vld [vmem:[#allocation2] sm:$0xff]
        %v613 = vld [vmem:[#allocation2 + $0x8] sm:$0xff]
        %v614 = vld [vmem:[#allocation2 + $0x10] sm:$0xff]
        %v615 = vld [vmem:[#allocation2 + $0x18] sm:$0xff]
        %v616 = vld [vmem:[#allocation2 + $0x20] sm:$0xff]
        %v617 = vld [vmem:[#allocation2 + $0x28] sm:$0xff]
        %v618 = vld [vmem:[#allocation2 + $0x30] sm:$0xff]
        %v619 = vld [vmem:[#allocation2 + $0x38] sm:$0xff]
        %v620 = vld [vmem:[#allocation2 + $0x40] sm:$0xff]
        %v621 = vld [vmem:[#allocation2 + $0x48] sm:$0xff]
        %v622 = vld [vmem:[#allocation2 + $0x50] sm:$0xff]
        %v623 = vld [vmem:[#allocation2 + $0x58] sm:$0xff]
        %v624 = vld [vmem:[#allocation2 + $0x60] sm:$0xff]
        %v625 = vld [vmem:[#allocation2 + $0x68] sm:$0xff]
        %v626 = vld [vmem:[#allocation2 + $0x70] sm:$0xff]
        %v627 = vld [vmem:[#allocation2 + $0x78] sm:$0xff]
        %v628 = vld [vmem:[%s301] sm:$0x1]
        %v630 = vlaneseq
        %v631 = vshrl.u32 %v630, 7
        %v632 = vsub.s32 0, %v631
        %v633 = vrot.slane %v628, %v632
        %v635 = vadd.f32 %v612, %v633
        %v636 = vadd.f32 %v613, %v633
        %v637 = vadd.f32 %v614, %v633
        %v638 = vadd.f32 %v615, %v633
        %v639 = vadd.f32 %v616, %v633
        %v640 = vadd.f32 %v617, %v633
        %v641 = vadd.f32 %v618, %v633
        %v642 = vadd.f32 %v619, %v633
        %v643 = vadd.f32 %v620, %v633
        %v644 = vadd.f32 %v621, %v633
        %v645 = vadd.f32 %v622, %v633
        %v646 = vadd.f32 %v623, %v633
        %v647 = vadd.f32 %v624, %v633
        %v648 = vadd.f32 %v625, %v633
        %v649 = vadd.f32 %v626, %v633
        %v650 = vadd.f32 %v627, %v633
        %v651 = vmax.f32 %v635, 0.0
        %v652 = vmax.f32 %v636, 0.0
        %v653 = vmax.f32 %v637, 0.0
        %v654 = vmax.f32 %v638, 0.0
        %v655 = vmax.f32 %v639, 0.0
        %v656 = vmax.f32 %v640, 0.0
        %v657 = vmax.f32 %v641, 0.0
        %v658 = vmax.f32 %v642, 0.0
        %v659 = vmax.f32 %v643, 0.0
        %v660 = vmax.f32 %v644, 0.0
        %v661 = vmax.f32 %v645, 0.0
        %v662 = vmax.f32 %v646, 0.0
        %v663 = vmax.f32 %v647, 0.0
        %v664 = vmax.f32 %v648, 0.0
        %v665 = vmax.f32 %v649, 0.0
        %v666 = vmax.f32 %v650, 0.0
        %v667 = vpack.c.bf16 %v652, %v651
        %v668 = vpack.c.bf16 %v654, %v653
        %v669 = vpack.c.bf16 %v656, %v655
        %v670 = vpack.c.bf16 %v658, %v657
        %v671 = vpack.c.bf16 %v660, %v659
        %v672 = vpack.c.bf16 %v662, %v661
        %v673 = vpack.c.bf16 %v664, %v663
        %v674 = vpack.c.bf16 %v666, %v665
        %v683 = vunpack.c.l.b16 %v667
        %v684 = vunpack.c.h.b16 %v667
        %v685 = vunpack.c.l.b16 %v668
        %v686 = vunpack.c.h.b16 %v668
        %v687 = vunpack.c.l.b16 %v669
        %v688 = vunpack.c.h.b16 %v669
        %v689 = vunpack.c.l.b16 %v670
        %v690 = vunpack.c.h.b16 %v670
        %v691 = vunpack.c.l.b16 %v671
        %v692 = vunpack.c.h.b16 %v671
        %v693 = vunpack.c.l.b16 %v672
        %v694 = vunpack.c.h.b16 %v672
        %v695 = vunpack.c.l.b16 %v673
        %v696 = vunpack.c.h.b16 %v673
        %v697 = vunpack.c.l.b16 %v674
        %v698 = vunpack.c.h.b16 %v674
        %v699 = vpack.c.b16 %v683, %v683
        %v700 = vpack.c.b16 %v684, %v684
        %v701 = vpack.c.b16 %v685, %v685
        %v702 = vpack.c.b16 %v686, %v686
        %v703 = vpack.c.b16 %v687, %v687
        %v704 = vpack.c.b16 %v688, %v688
        %v705 = vpack.c.b16 %v689, %v689
        %v706 = vpack.c.b16 %v690, %v690
        %v707 = vpack.c.b16 %v691, %v691
        %v708 = vpack.c.b16 %v692, %v692
        %v709 = vpack.c.b16 %v693, %v693
        %v710 = vpack.c.b16 %v694, %v694
        %v711 = vpack.c.b16 %v695, %v695
        %v712 = vpack.c.b16 %v696, %v696
        %v713 = vpack.c.b16 %v697, %v697
        %v714 = vpack.c.b16 %v698, %v698
        %731 = vst [vmem:[%s313] sm:$0xf] %v699
        %732 = vst [vmem:[%s313 + $0x4] sm:$0xf] %v700
        %733 = vst [vmem:[%s313 + $0x8] sm:$0xf] %v701
        %734 = vst [vmem:[%s313 + $0xc] sm:$0xf] %v702
        %735 = vst [vmem:[%s313 + $0x10] sm:$0xf] %v703
        %736 = vst [vmem:[%s313 + $0x14] sm:$0xf] %v704
        %737 = vst [vmem:[%s313 + $0x18] sm:$0xf] %v705
        %738 = vst [vmem:[%s313 + $0x1c] sm:$0xf] %v706
        %739 = vst [vmem:[%s313 + $0x20] sm:$0xf] %v707
        %740 = vst [vmem:[%s313 + $0x24] sm:$0xf] %v708
        %741 = vst [vmem:[%s313 + $0x28] sm:$0xf] %v709
        %742 = vst [vmem:[%s313 + $0x2c] sm:$0xf] %v710
        %743 = vst [vmem:[%s313 + $0x30] sm:$0xf] %v711
        %744 = vst [vmem:[%s313 + $0x34] sm:$0xf] %v712
        %745 = vst [vmem:[%s313 + $0x38] sm:$0xf] %v713
        %746 = vst [vmem:[%s313 + $0x3c] sm:$0xf] %v714
      $region40: #{forward.6} parent=31 // pred_fallthru
        _
      %s747 = smul.u32 16, %s21
      %p748 = scmp.lt.s32.totalorder %s20, 2
      %s749 = scalar_select %p748, %s20, 2
      %p750 = scmp.lt.s32.totalorder %s747, 15
      %s751 = scalar_select %p750, %s747, 15
      %p752 = scmp.lt.s32.totalorder %s22, 0
      %s753 = scalar_select %p752, %s22, 0
      %s754 = sadd.s32 %s753, %s751
      %s755 = smul.addr %s749, 16
      %s756 = sadd.s32 %s754, %s755
      %s757 = smul.addr %s756, 4
      %s758 = scalar_lea.vmem %s3, %s757
      // Predicated region
      $region41: #{forward.6} parent=31 // pred_check
        %p759 = pneg %p150
      $region42: #{forward.6} parent=31 // pred_check_branch
        %761 = sbr.rel (%p759) target = $region44
      $region43: #{forward.6} parent=31 // pred_region
        %s762 = smul.u32 16, %s21
      $region44: #{forward.6} parent=31 // pred_fallthru
        _
    $region32: #{forward.6} parent=5 // pred_fallthru
      _
    %p763 = scmp.le.s32.totalorder 2, %s9
    // Predicated region
    $region45: #{forward.6} parent=5 // pred_check
      %p764 = pneg %p763
    $region46: #{forward.6} parent=5 // pred_check_branch
      %766 = sbr.rel (%p764) target = $region48
    $region47: #{forward.6} parent=5 // pred_region
      %s767 = ssub.s32 %s9, 2
      // Predicated region
      $region49: #{forward.6} parent=47 // pred_check
        %p768 = pneg %p156
      $region50: #{forward.6} parent=47 // pred_check_branch
        %770 = sbr.rel (%p768) target = $region52
      $region51: #{forward.6} parent=47 // pred_region
        %s771 = smul.u32 16, %s25
        %p772 = scmp.lt.s32.totalorder %s24, 2
        %s773 = scalar_select %p772, %s24, 2
        %p774 = scmp.lt.s32.totalorder %s771, 15
        %s775 = scalar_select %p774, %s771, 15
        %p776 = scmp.lt.s32.totalorder %s26, 0
        %s777 = scalar_select %p776, %s26, 0
        %s778 = sadd.s32 %s777, %s775
        %s779 = smul.addr %s773, 16
        %s780 = sadd.s32 %s778, %s779
        %s781 = smul.addr %s780, 4
        %s782 = scalar_lea.vmem %s3, %s781
      $region52: #{forward.6} parent=47 // pred_fallthru
        _
    $region48: #{forward.6} parent=5 // pred_fallthru
      _
  $region6: #{forward.6} parent=0 // loop_footer
    %s13 = sadd.s32 1, %s9
  $region7: #{forward.6} parent=0 // loop_footer_branch
    %8 = sbr.rel target = $region3
  $region8: #{forward.6} parent=0 // loop_exit
    _

// kernel: forward.7
$region0: #{forward.7}
  #allocation0 [shape = 'u32[]', space=smem, size = 0x4, offset = 0x4, fixed_abs, tag = 'smem constant byte address 0x4 - core index']
  #allocation1 [shape = 'u32[144,128]{1,0:T(1,128)}', space=vmem, size = 0x12000, scoped, tag = 'internal scratch']
  #allocation2 [shape = 'f32[32,128]{1,0:T(8,128)}', space=vmem, size = 0x4000, scoped, tag = 'scratch operand']
  %s0 = inlined_call_operand.vmem [shape: bf16[3,32,896], index: 0, kind: input, shape index: {}]
  %s1 = inlined_call_operand.vmem [shape: bf16[3,896,128], index: 1, kind: input, shape index: {}]
  %s2 = inlined_call_operand.vmem [shape: f32[3,1,128], index: 2, kind: input, shape index: {}]
  %s3 = inlined_call_operand.vmem [shape: bf16[3,32,128], index: 3, kind: output, shape index: {}]
  %s4 = sld [smem:[#allocation0]]
  $region53: #{forward.7} parent=0
    _
  %s6 = ssub.s32 1, %s4
  %s7 = scalar_select 0, %s6, %s4
  loop: start=0, step=1, limit=5
  $region2: #{forward.7} parent=0 // loop_pre_header
    _
  $region3: #{forward.7} parent=0 // loop_header
    %s9 = sphi 0, %s13
    %p10 = scmp.ge.s32.totalorder %s9, 5
    %s16 = sphi 0, %s42
    %s17 = sphi 0, %s38
    %s18 = sphi 0, %s34
    %s19 = sphi 0, %s30
    %s20 = sphi 0, %s16
    %s21 = sphi 0, %s17
    %s22 = sphi 0, %s18
    %s23 = sphi 0, %s19
    %s24 = sphi 0, %s20
    %s25 = sphi 0, %s21
    %s26 = sphi 0, %s22
    %s27 = sphi 0, %s23
    %s49 = sphi 0, %s51
    %s52 = sphi 0, %s49
    %s53 = sphi 0, %s52
    %s69 = sphi 0, %s53
    %s79 = sphi 0, %s81
    %s82 = sphi 0, %s79
    %s83 = sphi 0, %s82
    %s99 = sphi 0, %s83
    %s107 = sphi 0, %s109
    %s110 = sphi 0, %s107
    %s111 = sphi 0, %s110
    %s127 = sphi 0, %s111
    %s137 = sphi 0, %s139
    %s140 = sphi 0, %s137
    %s141 = sphi 0, %s140
    %s157 = sphi 0, %s141
  $region4: #{forward.7} parent=0 // loop_header_branch
    %12 = sbr.rel (%p10) target = $region8
  $region5: #{forward.7} parent=0 // loop_body
    %s14 = ssub.s32 %s9, 1
    %s15 = ssub.s32 %s9, 2
    %s28 = sadd.s32 1, %s19
    %p29 = scmp.ge.s32.totalorder %s28, 1
    %s30 = scalar_select %p29, 0, %s28
    %s31 = sadd.s32 1, %s18
    %s32 = scalar_select %p29, %s31, %s18
    %p33 = scmp.ge.s32.totalorder %s32, 1
    %s34 = scalar_select %p33, 0, %s32
    %s35 = sadd.s32 1, %s17
    %s36 = scalar_select %p33, %s35, %s17
    %p37 = scmp.ge.s32.totalorder %s36, 1
    %s38 = scalar_select %p37, 0, %s36
    %s39 = sadd.s32 1, %s16
    %s40 = scalar_select %p37, %s39, %s16
    %p41 = scmp.ge.s32.totalorder %s40, 3
    %s42 = scalar_select %p41, 0, %s40
    %s43 = ssub.s32 %s16, %s42
    %s44 = ssub.s32 %s17, %s38
    %s45 = sor.u32 %s43, %s44
    %s46 = ssub.s32 %s19, %s30
    %s47 = sor.u32 %s45, %s46
    %p48 = scmp.eq.s32.totalorder %s47, 0
    %s50 = sadd.s32 %s49, 1
    %s51 = scalar_select %p48, %s49, %s50
    %p54 = pneg %p48
    %p55 = scmp.eq.s32.totalorder %s9, 2
    %p56 = por %p54, %p55
    %p57 = scmp.ne.s32.totalorder %s49, %s52
    %p58 = scmp.eq.s32.totalorder %s9, 0
    %p59 = por %p57, %p58
    %p60 = scmp.ne.s32.totalorder %s49, %s52
    %p61 = scmp.eq.s32.totalorder %s14, 2
    %p62 = por %p60, %p61
    %p63 = scmp.ne.s32.totalorder %s52, %s53
    %p64 = scmp.eq.s32.totalorder %s14, 0
    %p65 = por %p63, %p64
    %p66 = scmp.ne.s32.totalorder %s52, %s53
    %p67 = scmp.eq.s32.totalorder %s15, 2
    %p68 = por %p66, %p67
    %p70 = scmp.ne.s32.totalorder %s53, %s69
    %p71 = scmp.eq.s32.totalorder %s15, 0
    %p72 = por %p70, %p71
    %s73 = ssub.s32 %s16, %s42
    %s74 = ssub.s32 %s19, %s30
    %s75 = sor.u32 %s73, %s74
    %s76 = ssub.s32 %s18, %s34
    %s77 = sor.u32 %s75, %s76
    %p78 = scmp.eq.s32.totalorder %s77, 0
    %s80 = sadd.s32 %s79, 1
    %s81 = scalar_select %p78, %s79, %s80
    %p84 = pneg %p78
    %p85 = scmp.eq.s32.totalorder %s9, 2
    %p86 = por %p84, %p85
    %p87 = scmp.ne.s32.totalorder %s79, %s82
    %p88 = scmp.eq.s32.totalorder %s9, 0
    %p89 = por %p87, %p88
    %p90 = scmp.ne.s32.totalorder %s79, %s82
    %p91 = scmp.eq.s32.totalorder %s14, 2
    %p92 = por %p90, %p91
    %p93 = scmp.ne.s32.totalorder %s82, %s83
    %p94 = scmp.eq.s32.totalorder %s14, 0
    %p95 = por %p93, %p94
    %p96 = scmp.ne.s32.totalorder %s82, %s83
    %p97 = scmp.eq.s32.totalorder %s15, 2
    %p98 = por %p96, %p97
    %p100 = scmp.ne.s32.totalorder %s83, %s99
    %p101 = scmp.eq.s32.totalorder %s15, 0
    %p102 = por %p100, %p101
    %s103 = ssub.s32 %s16, %s42
    %s104 = ssub.s32 %s18, %s34
    %s105 = sor.u32 %s103, %s104
    %p106 = scmp.eq.s32.totalorder %s105, 0
    %s108 = sadd.s32 %s107, 1
    %s109 = scalar_select %p106, %s107, %s108
    %p112 = pneg %p106
    %p113 = scmp.eq.s32.totalorder %s9, 2
    %p114 = por %p112, %p113
    %p115 = scmp.ne.s32.totalorder %s107, %s110
    %p116 = scmp.eq.s32.totalorder %s9, 0
    %p117 = por %p115, %p116
    %p118 = scmp.ne.s32.totalorder %s107, %s110
    %p119 = scmp.eq.s32.totalorder %s14, 2
    %p120 = por %p118, %p119
    %p121 = scmp.ne.s32.totalorder %s110, %s111
    %p122 = scmp.eq.s32.totalorder %s14, 0
    %p123 = por %p121, %p122
    %p124 = scmp.ne.s32.totalorder %s110, %s111
    %p125 = scmp.eq.s32.totalorder %s15, 2
    %p126 = por %p124, %p125
    %p128 = scmp.ne.s32.totalorder %s111, %s127
    %p129 = scmp.eq.s32.totalorder %s15, 0
    %p130 = por %p128, %p129
    %s131 = ssub.s32 %s16, %s42
    %s132 = ssub.s32 %s17, %s38
    %s133 = sor.u32 %s131, %s132
    %s134 = ssub.s32 %s18, %s34
    %s135 = sor.u32 %s133, %s134
    %p136 = scmp.eq.s32.totalorder %s135, 0
    %s138 = sadd.s32 %s137, 1
    %s139 = scalar_select %p136, %s137, %s138
    %p142 = pneg %p136
    %p143 = scmp.eq.s32.totalorder %s9, 2
    %p144 = por %p142, %p143
    %p145 = scmp.ne.s32.totalorder %s137, %s140
    %p146 = scmp.eq.s32.totalorder %s9, 0
    %p147 = por %p145, %p146
    %p148 = scmp.ne.s32.totalorder %s137, %s140
    %p149 = scmp.eq.s32.totalorder %s14, 2
    %p150 = por %p148, %p149
    %p151 = scmp.ne.s32.totalorder %s140, %s141
    %p152 = scmp.eq.s32.totalorder %s14, 0
    %p153 = por %p151, %p152
    %p154 = scmp.ne.s32.totalorder %s140, %s141
    %p155 = scmp.eq.s32.totalorder %s15, 2
    %p156 = por %p154, %p155
    %p158 = scmp.ne.s32.totalorder %s141, %s157
    %p159 = scmp.eq.s32.totalorder %s15, 0
    %p160 = por %p158, %p159
    %p161 = scmp.le.s32.totalorder 1, %s9
    %p162 = scmp.lt.s32.totalorder %s9, 4
    %p163 = pnand %p161, %p162
    %p164 = pneg %p163
    // Predicated region
    $region9: #{forward.7} parent=5 // pred_check
      _
    $region10: #{forward.7} parent=5 // pred_check_branch
      %166 = sbr.rel (%p163) target = $region12
    $region11: #{forward.7} parent=5 // pred_region
      %s167 = ssub.s32 %s9, 1
    $region12: #{forward.7} parent=5 // pred_fallthru
      _
    %p168 = scmp.lt.s32.totalorder %s9, 3
    // Predicated region
    $region13: #{forward.7} parent=5 // pred_check
      %p169 = pneg %p168
    $region14: #{forward.7} parent=5 // pred_check_branch
      %171 = sbr.rel (%p169) target = $region16
    $region15: #{forward.7} parent=5 // pred_region
      // Predicated region
      $region17: #{forward.7} parent=15 // pred_check
        %p172 = pneg %p59
      $region18: #{forward.7} parent=15 // pred_check_branch
        %174 = sbr.rel (%p172) target = $region20
      $region19: #{forward.7} parent=15 // pred_region
        %s175 = smul.u32 4, %s17
        %s176 = smul.u32 7, %s19
        %p177 = scmp.lt.s32.totalorder %s16, 2
        %s178 = scalar_select %p177, %s16, 2
        %p179 = scmp.lt.s32.totalorder %s175, 3
        %s180 = scalar_select %p179, %s175, 3
        %p181 = scmp.lt.s32.totalorder %s176, 6
        %s182 = scalar_select %p181, %s176, 6
        %s183 = smul.addr %s180, 7
        %s184 = sadd.s32 %s182, %s183
        %s185 = smul.addr %s178, 28
        %s186 = sadd.s32 %s184, %s185
        %s187 = smul.addr %s186, 4
        %s188 = scalar_lea.vmem %s0, %s187
        %s189 = smul.u32 4, %s17
        %s190 = smul.u32 7, %s19
      $region20: #{forward.7} parent=15 // pred_fallthru
        _
      // Predicated region
      $region21: #{forward.7} parent=15 // pred_check
        %p191 = pneg %p89
      $region22: #{forward.7} parent=15 // pred_check_branch
        %193 = sbr.rel (%p191) target = $region24
      $region23: #{forward.7} parent=15 // pred_region
        %s194 = smul.u32 112, %s19
        %p195 = scmp.lt.s32.totalorder %s16, 2
        %s196 = scalar_select %p195, %s16, 2
        %p197 = scmp.lt.s32.totalorder %s194, 111
        %s198 = scalar_select %p197, %s194, 111
        %p199 = scmp.lt.s32.totalorder %s18, 0
        %s200 = scalar_select %p199, %s18, 0
        %s201 = sadd.s32 %s200, %s198
        %s202 = smul.addr %s196, 112
        %s203 = sadd.s32 %s201, %s202
        %s204 = smul.addr %s203, 4
        %s205 = scalar_lea.vmem %s1, %s204
        %s206 = smul.u32 112, %s19
      $region24: #{forward.7} parent=15 // pred_fallthru
        _
      // Predicated region
      $region25: #{forward.7} parent=15 // pred_check
        %p207 = pneg %p117
      $region26: #{forward.7} parent=15 // pred_check_branch
        %209 = sbr.rel (%p207) target = $region28
      $region27: #{forward.7} parent=15 // pred_region
        %p210 = scmp.lt.s32.totalorder %s16, 2
        %s211 = scalar_select %p210, %s16, 2
        %p212 = scmp.lt.s32.totalorder %s18, 0
        %s213 = scalar_select %p212, %s18, 0
        %s214 = sadd.s32 %s213, %s211
        %s215 = scalar_lea.vmem %s2, %s214
      $region28: #{forward.7} parent=15 // pred_fallthru
        _
    $region16: #{forward.7} parent=5 // pred_fallthru
      _
    %p216 = scmp.le.s32.totalorder 1, %s9
    %p217 = scmp.lt.s32.totalorder %s9, 4
    %p218 = pnand %p216, %p217
    %p219 = pneg %p218
    // Predicated region
    $region29: #{forward.7} parent=5 // pred_check
      _
    $region30: #{forward.7} parent=5 // pred_check_branch
      %221 = sbr.rel (%p218) target = $region32
    $region31: #{forward.7} parent=5 // pred_region
      %s222 = ssub.s32 %s9, 1
      %s223 = smul.u32 4, %s21
      %s224 = smul.u32 7, %s23
      %p225 = scmp.lt.s32.totalorder %s20, 2
      %s226 = scalar_select %p225, %s20, 2
      %p227 = scmp.lt.s32.totalorder %s223, 3
      %s228 = scalar_select %p227, %s223, 3
      %p229 = scmp.lt.s32.totalorder %s224, 6
      %s230 = scalar_select %p229, %s224, 6
      %s231 = smul.addr %s228, 7
      %s232 = sadd.s32 %s230, %s231
      %s233 = smul.addr %s226, 28
      %s234 = sadd.s32 %s232, %s233
      %s235 = smul.addr %s234, 4
      %s236 = scalar_lea.vmem %s0, %s235
      %p237 = pneg %p65
      %p238 = pneg %p62
      %s239 = smul.u32 112, %s23
      %p240 = scmp.lt.s32.totalorder %s20, 2
      %s241 = scalar_select %p240, %s20, 2
      %p242 = scmp.lt.s32.totalorder %s239, 111
      %s243 = scalar_select %p242, %s239, 111
      %p244 = scmp.lt.s32.totalorder %s22, 0
      %s245 = scalar_select %p244, %s22, 0
      %s246 = sadd.s32 %s245, %s243
      %s247 = smul.addr %s241, 112
      %s248 = sadd.s32 %s246, %s247
      %s249 = smul.addr %s248, 4
      %s250 = scalar_lea.vmem %s1, %s249
      %p251 = pneg %p95
      %p252 = pneg %p92
      %p253 = scmp.lt.s32.totalorder %s20, 2
      %s254 = scalar_select %p253, %s20, 2
      %p255 = scmp.lt.s32.totalorder %s22, 0
      %s256 = scalar_select %p255, %s22, 0
      %s257 = sadd.s32 %s256, %s254
      %s258 = scalar_lea.vmem %s2, %s257
      %p259 = pneg %p123
      %p260 = pneg %p120
      %p261 = pneg %p153
      %p262 = pneg %p150
      %s263 = smul.u32 4, %s21
      %p264 = scmp.lt.s32.totalorder %s20, 2
      %s265 = scalar_select %p264, %s20, 2
      %p266 = scmp.lt.s32.totalorder %s263, 3
      %s267 = scalar_select %p266, %s263, 3
      %p268 = scmp.lt.s32.totalorder %s22, 0
      %s269 = scalar_select %p268, %s22, 0
      %s270 = sadd.s32 %s269, %s267
      %s271 = smul.addr %s265, 4
      %s272 = sadd.s32 %s270, %s271
      %s273 = smul.addr %s272, 4
      %s274 = scalar_lea.vmem %s3, %s273
      %s275 = smul.u32 4, %s21
      %s276 = smul.u32 7, %s23
      %p277 = scmp.lt.s32.totalorder %s20, 2
      %s278 = scalar_select %p277, %s20, 2
      %p279 = scmp.lt.s32.totalorder %s275, 3
      %s280 = scalar_select %p279, %s275, 3
      %p281 = scmp.lt.s32.totalorder %s276, 6
      %s282 = scalar_select %p281, %s276, 6
      %s283 = smul.addr %s280, 7
      %s284 = sadd.s32 %s282, %s283
      %s285 = smul.addr %s278, 28
      %s286 = sadd.s32 %s284, %s285
      %s287 = smul.addr %s286, 4
      %s288 = scalar_lea.vmem %s0, %s287
      %s289 = smul.u32 4, %s21
      %s290 = smul.u32 7, %s23
      %s291 = smul.u32 112, %s23
      %p292 = scmp.lt.s32.totalorder %s20, 2
      %s293 = scalar_select %p292, %s20, 2
      %p294 = scmp.lt.s32.totalorder %s291, 111
      %s295 = scalar_select %p294, %s291, 111
      %p296 = scmp.lt.s32.totalorder %s22, 0
      %s297 = scalar_select %p296, %s22, 0
      %s298 = sadd.s32 %s297, %s295
      %s299 = smul.addr %s293, 112
      %s300 = sadd.s32 %s298, %s299
      %s301 = smul.addr %s300, 4
      %s302 = scalar_lea.vmem %s1, %s301
      %s303 = smul.u32 112, %s23
      %p304 = scmp.lt.s32.totalorder %s20, 2
      %s305 = scalar_select %p304, %s20, 2
      %p306 = scmp.lt.s32.totalorder %s22, 0
      %s307 = scalar_select %p306, %s22, 0
      %s308 = sadd.s32 %s307, %s305
      %s309 = scalar_lea.vmem %s2, %s308
      %s310 = smul.u32 4, %s21
      %p311 = scmp.lt.s32.totalorder %s20, 2
      %s312 = scalar_select %p311, %s20, 2
      %p313 = scmp.lt.s32.totalorder %s310, 3
      %s314 = scalar_select %p313, %s310, 3
      %p315 = scmp.lt.s32.totalorder %s22, 0
      %s316 = scalar_select %p315, %s22, 0
      %s317 = sadd.s32 %s316, %s314
      %s318 = smul.addr %s312, 4
      %s319 = sadd.s32 %s317, %s318
      %s320 = smul.addr %s319, 4
      %s321 = scalar_lea.vmem %s3, %s320
      %s322 = smul.u32 4, %s21
      %p324 = scmp.eq.s32.totalorder %s23, 0
      // Predicated region
      $region33: #{forward.7} parent=31 // pred_check
        %p325 = pneg %p324
      $region34: #{forward.7} parent=31 // pred_check_branch
        %327 = sbr.rel (%p325) target = $region36
      $region35: #{forward.7} parent=31 // pred_region
        %328 = vst [vmem:[#allocation2] sm:$0xff] 0.0
        %329 = vst [vmem:[#allocation2 + $0x8] sm:$0xff] 0.0
        %330 = vst [vmem:[#allocation2 + $0x10] sm:$0xff] 0.0
        %331 = vst [vmem:[#allocation2 + $0x18] sm:$0xff] 0.0
      $region36: #{forward.7} parent=31 // pred_fallthru
        _
      %v332 = vld [vmem:[#allocation2] sm:$0xff]
      %v333 = vld [vmem:[#allocation2 + $0x8] sm:$0xff]
      %v334 = vld [vmem:[#allocation2 + $0x10] sm:$0xff]
      %v335 = vld [vmem:[#allocation2 + $0x18] sm:$0xff]
      %v336 = vld [vmem:[%s288] sm:$0xff]
      %v337 = vld [vmem:[%s288 + $0x8] sm:$0xff]
      %v338 = vld [vmem:[%s288 + $0x10] sm:$0xff]
      %v339 = vld [vmem:[%s288 + $0x18] sm:$0xf]
      %v340 = vld [vmem:[%s288 + $0x1c] sm:$0xff]
      %v341 = vld [vmem:[%s288 + $0x24] sm:$0xff]
      %v342 = vld [vmem:[%s288 + $0x2c] sm:$0xff]
      %v343 = vld [vmem:[%s288 + $0x34] sm:$0xf]
      %v344 = vld [vmem:[%s288 + $0x38] sm:$0xff]
      %v345 = vld [vmem:[%s288 + $0x40] sm:$0xff]
      %v346 = vld [vmem:[%s288 + $0x48] sm:$0xff]
      %v347 = vld [vmem:[%s288 + $0x50] sm:$0xf]
      %v348 = vld [vmem:[%s288 + $0x54] sm:$0xff]
      %v349 = vld [vmem:[%s288 + $0x5c] sm:$0xff]
      %v350 = vld [vmem:[%s288 + $0x64] sm:$0xff]
      %v351 = vld [vmem:[%s288 + $0x6c] sm:$0xf]
      %v352 = vld [vmem:[%s302] sm:$0xf]
      %v353 = vld [vmem:[%s302 + $0x4] sm:$0xf]
      %v354 = vld [vmem:[%s302 + $0x8] sm:$0xf]
      %v355 = vld [vmem:[%s302 + $0xc] sm:$0xf]
      %v356 = vld [vmem:[%s302 + $0x10] sm:$0xf]
      %v357 = vld [vmem:[%s302 + $0x14] sm:$0xf]
      %v358 = vld [vmem:[%s302 + $0x18] sm:$0xf]
      %v359 = vld [vmem:[%s302 + $0x1c] sm:$0xf]
      %v360 = vld [vmem:[%s302 + $0x20] sm:$0xf]
      %v361 = vld [vmem:[%s302 + $0x24] sm:$0xf]
      %v362 = vld [vmem:[%s302 + $0x28] sm:$0xf]
      %v363 = vld [vmem:[%s302 + $0x2c] sm:$0xf]
      %v364 = vld [vmem:[%s302 + $0x30] sm:$0xf]
      %v365 = vld [vmem:[%s302 + $0x34] sm:$0xf]
      %v366 = vld [vmem:[%s302 + $0x38] sm:$0xf]
      %v367 = vld [vmem:[%s302 + $0x3c] sm:$0xf]
      %v368 = vld [vmem:[%s302 + $0x40] sm:$0xf]
      %v369 = vld [vmem:[%s302 + $0x44] sm:$0xf]
      %v370 = vld [vmem:[%s302 + $0x48] sm:$0xf]
      %v371 = vld [vmem:[%s302 + $0x4c] sm:$0xf]
      %v372 = vld [vmem:[%s302 + $0x50] sm:$0xf]
      %v373 = vld [vmem:[%s302 + $0x54] sm:$0xf]
      %v374 = vld [vmem:[%s302 + $0x58] sm:$0xf]
      %v375 = vld [vmem:[%s302 + $0x5c] sm:$0xf]
      %v376 = vld [vmem:[%s302 + $0x60] sm:$0xf]
      %v377 = vld [vmem:[%s302 + $0x64] sm:$0xf]
      %v378 = vld [vmem:[%s302 + $0x68] sm:$0xf]
      %v379 = vld [vmem:[%s302 + $0x6c] sm:$0xf]
      %v380 = vld [vmem:[%s302 + $0x70] sm:$0xf]
      %v381 = vld [vmem:[%s302 + $0x74] sm:$0xf]
      %v382 = vld [vmem:[%s302 + $0x78] sm:$0xf]
      %v383 = vld [vmem:[%s302 + $0x7c] sm:$0xf]
      %v384 = vld [vmem:[%s302 + $0x80] sm:$0xf]
      %v385 = vld [vmem:[%s302 + $0x84] sm:$0xf]
      %v386 = vld [vmem:[%s302 + $0x88] sm:$0xf]
      %v387 = vld [vmem:[%s302 + $0x8c] sm:$0xf]
      %v388 = vld [vmem:[%s302 + $0x90] sm:$0xf]
      %v389 = vld [vmem:[%s302 + $0x94] sm:$0xf]
      %v390 = vld [vmem:[%s302 + $0x98] sm:$0xf]
      %v391 = vld [vmem:[%s302 + $0x9c] sm:$0xf]
      %v392 = vld [vmem:[%s302 + $0xa0] sm:$0xf]
      %v393 = vld [vmem:[%s302 + $0xa4] sm:$0xf]
      %v394 = vld [vmem:[%s302 + $0xa8] sm:$0xf]
      %v395 = vld [vmem:[%s302 + $0xac] sm:$0xf]
      %v396 = vld [vmem:[%s302 + $0xb0] sm:$0xf]
      %v397 = vld [vmem:[%s302 + $0xb4] sm:$0xf]
      %v398 = vld [vmem:[%s302 + $0xb8] sm:$0xf]
      %v399 = vld [vmem:[%s302 + $0xbc] sm:$0xf]
      %v400 = vld [vmem:[%s302 + $0xc0] sm:$0xf]
      %v401 = vld [vmem:[%s302 + $0xc4] sm:$0xf]
      %v402 = vld [vmem:[%s302 + $0xc8] sm:$0xf]
      %v403 = vld [vmem:[%s302 + $0xcc] sm:$0xf]
      %v404 = vld [vmem:[%s302 + $0xd0] sm:$0xf]
      %v405 = vld [vmem:[%s302 + $0xd4] sm:$0xf]
      %v406 = vld [vmem:[%s302 + $0xd8] sm:$0xf]
      %v407 = vld [vmem:[%s302 + $0xdc] sm:$0xf]
      %v408 = vld [vmem:[%s302 + $0xe0] sm:$0xf]
      %v409 = vld [vmem:[%s302 + $0xe4] sm:$0xf]
      %v410 = vld [vmem:[%s302 + $0xe8] sm:$0xf]
      %v411 = vld [vmem:[%s302 + $0xec] sm:$0xf]
      %v412 = vld [vmem:[%s302 + $0xf0] sm:$0xf]
      %v413 = vld [vmem:[%s302 + $0xf4] sm:$0xf]
      %v414 = vld [vmem:[%s302 + $0xf8] sm:$0xf]
      %v415 = vld [vmem:[%s302 + $0xfc] sm:$0xf]
      %v416 = vld [vmem:[%s302 + $0x100] sm:$0xf]
      %v417 = vld [vmem:[%s302 + $0x104] sm:$0xf]
      %v418 = vld [vmem:[%s302 + $0x108] sm:$0xf]
      %v419 = vld [vmem:[%s302 + $0x10c] sm:$0xf]
      %v420 = vld [vmem:[%s302 + $0x110] sm:$0xf]
      %v421 = vld [vmem:[%s302 + $0x114] sm:$0xf]
      %v422 = vld [vmem:[%s302 + $0x118] sm:$0xf]
      %v423 = vld [vmem:[%s302 + $0x11c] sm:$0xf]
      %v424 = vld [vmem:[%s302 + $0x120] sm:$0xf]
      %v425 = vld [vmem:[%s302 + $0x124] sm:$0xf]
      %v426 = vld [vmem:[%s302 + $0x128] sm:$0xf]
      %v427 = vld [vmem:[%s302 + $0x12c] sm:$0xf]
      %v428 = vld [vmem:[%s302 + $0x130] sm:$0xf]
      %v429 = vld [vmem:[%s302 + $0x134] sm:$0xf]
      %v430 = vld [vmem:[%s302 + $0x138] sm:$0xf]
      %v431 = vld [vmem:[%s302 + $0x13c] sm:$0xf]
      %v432 = vld [vmem:[%s302 + $0x140] sm:$0xf]
      %v433 = vld [vmem:[%s302 + $0x144] sm:$0xf]
      %v434 = vld [vmem:[%s302 + $0x148] sm:$0xf]
      %v435 = vld [vmem:[%s302 + $0x14c] sm:$0xf]
      %v436 = vld [vmem:[%s302 + $0x150] sm:$0xf]
      %v437 = vld [vmem:[%s302 + $0x154] sm:$0xf]
      %v438 = vld [vmem:[%s302 + $0x158] sm:$0xf]
      %v439 = vld [vmem:[%s302 + $0x15c] sm:$0xf]
      %v440 = vld [vmem:[%s302 + $0x160] sm:$0xf]
      %v441 = vld [vmem:[%s302 + $0x164] sm:$0xf]
      %v442 = vld [vmem:[%s302 + $0x168] sm:$0xf]
      %v443 = vld [vmem:[%s302 + $0x16c] sm:$0xf]
      %v444 = vld [vmem:[%s302 + $0x170] sm:$0xf]
      %v445 = vld [vmem:[%s302 + $0x174] sm:$0xf]
      %v446 = vld [vmem:[%s302 + $0x178] sm:$0xf]
      %v447 = vld [vmem:[%s302 + $0x17c] sm:$0xf]
      %v448 = vld [vmem:[%s302 + $0x180] sm:$0xf]
      %v449 = vld [vmem:[%s302 + $0x184] sm:$0xf]
      %v450 = vld [vmem:[%s302 + $0x188] sm:$0xf]
      %v451 = vld [vmem:[%s302 + $0x18c] sm:$0xf]
      %v452 = vld [vmem:[%s302 + $0x190] sm:$0xf]
      %v453 = vld [vmem:[%s302 + $0x194] sm:$0xf]
      %v454 = vld [vmem:[%s302 + $0x198] sm:$0xf]
      %v455 = vld [vmem:[%s302 + $0x19c] sm:$0xf]
      %v456 = vld [vmem:[%s302 + $0x1a0] sm:$0xf]
      %v457 = vld [vmem:[%s302 + $0x1a4] sm:$0xf]
      %v458 = vld [vmem:[%s302 + $0x1a8] sm:$0xf]
      %v459 = vld [vmem:[%s302 + $0x1ac] sm:$0xf]
      %v460 = vld [vmem:[%s302 + $0x1b0] sm:$0xf]
      %v461 = vld [vmem:[%s302 + $0x1b4] sm:$0xf]
      %v462 = vld [vmem:[%s302 + $0x1b8] sm:$0xf]
      %v463 = vld [vmem:[%s302 + $0x1bc] sm:$0xf]
      %v480 = vunpack.c.l.b16 %v336
      %v481 = vunpack.c.h.b16 %v336
      %v482 = vunpack.c.l.b16 %v337
      %v483 = vunpack.c.h.b16 %v337
      %v484 = vunpack.c.l.b16 %v338
      %v485 = vunpack.c.h.b16 %v338
      %v486 = vunpack.c.l.b16 %v339
      %v487 = vunpack.c.l.b16 %v340
      %v488 = vunpack.c.h.b16 %v340
      %v489 = vunpack.c.l.b16 %v341
      %v490 = vunpack.c.h.b16 %v341
      %v491 = vunpack.c.l.b16 %v342
      %v492 = vunpack.c.h.b16 %v342
      %v493 = vunpack.c.l.b16 %v343
      %v494 = vunpack.c.l.b16 %v344
      %v495 = vunpack.c.h.b16 %v344
      %v496 = vunpack.c.l.b16 %v345
      %v497 = vunpack.c.h.b16 %v345
      %v498 = vunpack.c.l.b16 %v346
      %v499 = vunpack.c.h.b16 %v346
      %v500 = vunpack.c.l.b16 %v347
      %v501 = vunpack.c.l.b16 %v348
      %v502 = vunpack.c.h.b16 %v348
      %v503 = vunpack.c.l.b16 %v349
      %v504 = vunpack.c.h.b16 %v349
      %v505 = vunpack.c.l.b16 %v350
      %v506 = vunpack.c.h.b16 %v350
      %v507 = vunpack.c.l.b16 %v351
      %v508 = vpack.c.b16 %v487, %v480
      %v509 = vpack.c.b16 %v488, %v481
      %v510 = vpack.c.b16 %v489, %v482
      %v511 = vpack.c.b16 %v490, %v483
      %v512 = vpack.c.b16 %v491, %v484
      %v513 = vpack.c.b16 %v492, %v485
      %v514 = vpack.c.b16 %v493, %v486
      %v515 = vpack.c.b16 %v501, %v494
      %v516 = vpack.c.b16 %v502, %v495
      %v517 = vpack.c.b16 %v503, %v496
      %v518 = vpack.c.b16 %v504, %v497
      %v519 = vpack.c.b16 %v505, %v498
      %v520 = vpack.c.b16 %v506, %v499
      %v521 = vpack.c.b16 %v507, %v500
      %v648 = vunpack.c.l.b16 %v352
      %v649 = vunpack.c.l.b16 %v353
      %v650 = vunpack.c.l.b16 %v354
      %v651 = vunpack.c.l.b16 %v355
      %v652 = vunpack.c.l.b16 %v356
      %v653 = vunpack.c.l.b16 %v357
      %v654 = vunpack.c.l.b16 %v358
      %v655 = vunpack.c.l.b16 %v359
      %v656 = vunpack.c.l.b16 %v360
      %v657 = vunpack.c.l.b16 %v361
      %v658 = vunpack.c.l.b16 %v362
      %v659 = vunpack.c.l.b16 %v363
      %v660 = vunpack.c.l.b16 %v364
      %v661 = vunpack.c.l.b16 %v365
      %v662 = vunpack.c.l.b16 %v366
      %v663 = vunpack.c.l.b16 %v367
      %v664 = vunpack.c.l.b16 %v368
      %v665 = vunpack.c.l.b16 %v369
      %v666 = vunpack.c.l.b16 %v370
      %v667 = vunpack.c.l.b16 %v371
      %v668 = vunpack.c.l.b16 %v372
      %v669 = vunpack.c.l.b16 %v373
      %v670 = vunpack.c.l.b16 %v374
      %v671 = vunpack.c.l.b16 %v375
      %v672 = vunpack.c.l.b16 %v376
      %v673 = vunpack.c.l.b16 %v377
      %v674 = vunpack.c.l.b16 %v378
      %v675 = vunpack.c.l.b16 %v379
      %v676 = vunpack.c.l.b16 %v380
      %v677 = vunpack.c.l.b16 %v381
      %v678 = vunpack.c.l.b16 %v382
      %v679 = vunpack.c.l.b16 %v383
      %v680 = vunpack.c.l.b16 %v384
      %v681 = vunpack.c.l.b16 %v385
      %v682 = vunpack.c.l.b16 %v386
      %v683 = vunpack.c.l.b16 %v387
      %v684 = vunpack.c.l.b16 %v388
      %v685 = vunpack.c.l.b16 %v389
      %v686 = vunpack.c.l.b16 %v390
      %v687 = vunpack.c.l.b16 %v391
      %v688 = vunpack.c.l.b16 %v392
      %v689 = vunpack.c.l.b16 %v393
      %v690 = vunpack.c.l.b16 %v394
      %v691 = vunpack.c.l.b16 %v395
      %v692 = vunpack.c.l.b16 %v396
      %v693 = vunpack.c.l.b16 %v397
      %v694 = vunpack.c.l.b16 %v398
      %v695 = vunpack.c.l.b16 %v399
      %v696 = vunpack.c.l.b16 %v400
      %v697 = vunpack.c.l.b16 %v401
      %v698 = vunpack.c.l.b16 %v402
      %v699 = vunpack.c.l.b16 %v403
      %v700 = vunpack.c.l.b16 %v404
      %v701 = vunpack.c.l.b16 %v405
      %v702 = vunpack.c.l.b16 %v406
      %v703 = vunpack.c.l.b16 %v407
      %v704 = vunpack.c.l.b16 %v408
      %v705 = vunpack.c.l.b16 %v409
      %v706 = vunpack.c.l.b16 %v410
      %v707 = vunpack.c.l.b16 %v411
      %v708 = vunpack.c.l.b16 %v412
      %v709 = vunpack.c.l.b16 %v413
      %v710 = vunpack.c.l.b16 %v414
      %v711 = vunpack.c.l.b16 %v415
      %v712 = vunpack.c.l.b16 %v416
      %v713 = vunpack.c.l.b16 %v417
      %v714 = vunpack.c.l.b16 %v418
      %v715 = vunpack.c.l.b16 %v419
      %v716 = vunpack.c.l.b16 %v420
      %v717 = vunpack.c.l.b16 %v421
      %v718 = vunpack.c.l.b16 %v422
      %v719 = vunpack.c.l.b16 %v423
      %v720 = vunpack.c.l.b16 %v424
      %v721 = vunpack.c.l.b16 %v425
      %v722 = vunpack.c.l.b16 %v426
      %v723 = vunpack.c.l.b16 %v427
      %v724 = vunpack.c.l.b16 %v428
      %v725 = vunpack.c.l.b16 %v429
      %v726 = vunpack.c.l.b16 %v430
      %v727 = vunpack.c.l.b16 %v431
      %v728 = vunpack.c.l.b16 %v432
      %v729 = vunpack.c.l.b16 %v433
      %v730 = vunpack.c.l.b16 %v434
      %v731 = vunpack.c.l.b16 %v435
      %v732 = vunpack.c.l.b16 %v436
      %v733 = vunpack.c.l.b16 %v437
      %v734 = vunpack.c.l.b16 %v438
      %v735 = vunpack.c.l.b16 %v439
      %v736 = vunpack.c.l.b16 %v440
      %v737 = vunpack.c.l.b16 %v441
      %v738 = vunpack.c.l.b16 %v442
      %v739 = vunpack.c.l.b16 %v443
      %v740 = vunpack.c.l.b16 %v444
      %v741 = vunpack.c.l.b16 %v445
      %v742 = vunpack.c.l.b16 %v446
      %v743 = vunpack.c.l.b16 %v447
      %v744 = vunpack.c.l.b16 %v448
      %v745 = vunpack.c.l.b16 %v449
      %v746 = vunpack.c.l.b16 %v450
      %v747 = vunpack.c.l.b16 %v451
      %v748 = vunpack.c.l.b16 %v452
      %v749 = vunpack.c.l.b16 %v453
      %v750 = vunpack.c.l.b16 %v454
      %v751 = vunpack.c.l.b16 %v455
      %v752 = vunpack.c.l.b16 %v456
      %v753 = vunpack.c.l.b16 %v457
      %v754 = vunpack.c.l.b16 %v458
      %v755 = vunpack.c.l.b16 %v459
      %v756 = vunpack.c.l.b16 %v460
      %v757 = vunpack.c.l.b16 %v461
      %v758 = vunpack.c.l.b16 %v462
      %v759 = vunpack.c.l.b16 %v463
      %v760 = vpack.c.b16 %v649, %v648
      %v761 = vpack.c.b16 %v651, %v650
      %v762 = vpack.c.b16 %v653, %v652
      %v763 = vpack.c.b16 %v655, %v654
      %v764 = vpack.c.b16 %v657, %v656
      %v765 = vpack.c.b16 %v659, %v658
      %v766 = vpack.c.b16 %v661, %v660
      %v767 = vpack.c.b16 %v663, %v662
      %v768 = vpack.c.b16 %v665, %v664
      %v769 = vpack.c.b16 %v667, %v666
      %v770 = vpack.c.b16 %v669, %v668
      %v771 = vpack.c.b16 %v671, %v670
      %v772 = vpack.c.b16 %v673, %v672
      %v773 = vpack.c.b16 %v675, %v674
      %v774 = vpack.c.b16 %v677, %v676
      %v775 = vpack.c.b16 %v679, %v678
      %v776 = vpack.c.b16 %v681, %v680
      %v777 = vpack.c.b16 %v683, %v682
      %v778 = vpack.c.b16 %v685, %v684
      %v779 = vpack.c.b16 %v687, %v686
      %v780 = vpack.c.b16 %v689, %v688
      %v781 = vpack.c.b16 %v691, %v690
      %v782 = vpack.c.b16 %v693, %v692
      %v783 = vpack.c.b16 %v695, %v694
      %v784 = vpack.c.b16 %v697, %v696
      %v785 = vpack.c.b16 %v699, %v698
      %v786 = vpack.c.b16 %v701, %v700
      %v787 = vpack.c.b16 %v703, %v702
      %v788 = vpack.c.b16 %v705, %v704
      %v789 = vpack.c.b16 %v707, %v706
      %v790 = vpack.c.b16 %v709, %v708
      %v791 = vpack.c.b16 %v711, %v710
      %v792 = vpack.c.b16 %v713, %v712
      %v793 = vpack.c.b16 %v715, %v714
      %v794 = vpack.c.b16 %v717, %v716
      %v795 = vpack.c.b16 %v719, %v718
      %v796 = vpack.c.b16 %v721, %v720
      %v797 = vpack.c.b16 %v723, %v722
      %v798 = vpack.c.b16 %v725, %v724
      %v799 = vpack.c.b16 %v727, %v726
      %v800 = vpack.c.b16 %v729, %v728
      %v801 = vpack.c.b16 %v731, %v730
      %v802 = vpack.c.b16 %v733, %v732
      %v803 = vpack.c.b16 %v735, %v734
      %v804 = vpack.c.b16 %v737, %v736
      %v805 = vpack.c.b16 %v739, %v738
      %v806 = vpack.c.b16 %v741, %v740
      %v807 = vpack.c.b16 %v743, %v742
      %v808 = vpack.c.b16 %v745, %v744
      %v809 = vpack.c.b16 %v747, %v746
      %v810 = vpack.c.b16 %v749, %v748
      %v811 = vpack.c.b16 %v751, %v750
      %v812 = vpack.c.b16 %v753, %v752
      %v813 = vpack.c.b16 %v755, %v754
      %v814 = vpack.c.b16 %v757, %v756
      %v815 = vpack.c.b16 %v759, %v758
      %872 = vmatprep.subr.bf16.mxu0 0
      %873 = vmatpush1.bf16.msra.mxu0 %v760
      %874 = vmatprep.subr.bf16.mxu0 0
      %875 = vmatpush1.bf16.msra.mxu0 %v761
      %876 = vmatprep.subr.bf16.mxu0 0
      %877 = vmatpush1.bf16.msra.mxu0 %v762
      %878 = vmatprep.subr.bf16.mxu0 0
      %879 = vmatpush1.bf16.msra.mxu0 %v763
      %880 = vmatprep.subr.bf16.mxu0 0
      %881 = vmatpush1.bf16.msra.mxu0 %v764
      %882 = vmatprep.subr.bf16.mxu0 0
      %883 = vmatpush1.bf16.msra.mxu0 %v765
      %884 = vmatprep.subr.bf16.mxu0 0
      %885 = vmatpush1.bf16.msra.mxu0 %v766
      %886 = vmatprep.subr.bf16.mxu0 0
      %887 = vmatpush1.bf16.msra.mxu0 %v767
      %888 = vmatprep.subr.bf16.mxu0 0
      %889 = vmatpush1.bf16.msra.mxu0 %v768
      %890 = vmatprep.subr.bf16.mxu0 0
      %891 = vmatpush1.bf16.msra.mxu0 %v769
      %892 = vmatprep.subr.bf16.mxu0 0
      %893 = vmatpush1.bf16.msra.mxu0 %v770
      %894 = vmatprep.subr.bf16.mxu0 0
      %895 = vmatpush1.bf16.msra.mxu0 %v771
      %896 = vmatprep.subr.bf16.mxu0 0
      %897 = vmatpush1.bf16.msra.mxu0 %v772
      %898 = vmatprep.subr.bf16.mxu0 0
      %899 = vmatpush1.bf16.msra.mxu0 %v773
      %900 = vmatprep.subr.bf16.mxu0 0
      %901 = vmatpush1.bf16.msra.mxu0 %v774
      %902 = vmatprep.subr.bf16.mxu0 0
      %903 = vmatpush1.bf16.msra.mxu0 %v775
      %904 = vmatprep.mubr.bf16.mxu0 %v509
      %905 = vmatmul.mubr.bf16.gmra.mrb[0].mxu0 %v508
      %v906 = vpop.f32.mrb[0].mxu0
      %v907 = vadd.f32 0.0, %v906
      %v908 = vpop.f32.mrb[0].mxu0
      %v909 = vpop.f32.mrb[0].mxu0
      %v910 = vadd.f32 0.0, %v909
      %v911 = vpop.f32.mrb[0].mxu0
      %912 = vmatprep.mubr.bf16.mxu0 %v516
      %913 = vmatmul.mubr.bf16.gmra.mrb[0].mxu0 %v515
      %v914 = vpop.f32.mrb[0].mxu0
      %v915 = vadd.f32 0.0, %v914
      %v916 = vpop.f32.mrb[0].mxu0
      %v917 = vpop.f32.mrb[0].mxu0
      %v918 = vadd.f32 0.0, %v917
      %v919 = vpop.f32.mrb[0].mxu0
      %920 = vdwg.mxu0
      %921 = vmatprep.subr.bf16.mxu0 0
      %922 = vmatpush1.bf16.msra.mxu0 %v776
      %923 = vmatprep.subr.bf16.mxu0 0
      %924 = vmatpush1.bf16.msra.mxu0 %v777
      %925 = vmatprep.subr.bf16.mxu0 0
      %926 = vmatpush1.bf16.msra.mxu0 %v778
      %927 = vmatprep.subr.bf16.mxu0 0
      %928 = vmatpush1.bf16.msra.mxu0 %v779
      %929 = vmatprep.subr.bf16.mxu0 0
      %930 = vmatpush1.bf16.msra.mxu0 %v780
      %931 = vmatprep.subr.bf16.mxu0 0
      %932 = vmatpush1.bf16.msra.mxu0 %v781
      %933 = vmatprep.subr.bf16.mxu0 0
      %934 = vmatpush1.bf16.msra.mxu0 %v782
      %935 = vmatprep.subr.bf16.mxu0 0
      %936 = vmatpush1.bf16.msra.mxu0 %v783
      %937 = vmatprep.subr.bf16.mxu0 0
      %938 = vmatpush1.bf16.msra.mxu0 %v784
      %939 = vmatprep.subr.bf16.mxu0 0
      %940 = vmatpush1.bf16.msra.mxu0 %v785
      %941 = vmatprep.subr.bf16.mxu0 0
      %942 = vmatpush1.bf16.msra.mxu0 %v786
      %943 = vmatprep.subr.bf16.mxu0 0
      %944 = vmatpush1.bf16.msra.mxu0 %v787
      %945 = vmatprep.subr.bf16.mxu0 0
      %946 = vmatpush1.bf16.msra.mxu0 %v788
      %947 = vmatprep.subr.bf16.mxu0 0
      %948 = vmatpush1.bf16.msra.mxu0 %v789
      %949 = vmatprep.subr.bf16.mxu0 0
      %950 = vmatpush1.bf16.msra.mxu0 %v790
      %951 = vmatprep.subr.bf16.mxu0 0
      %952 = vmatpush1.bf16.msra.mxu0 %v791
      %953 = vmatprep.mubr.bf16.mxu0 %v511
      %954 = vmatmul.mubr.bf16.gmra.mrb[0].mxu0 %v510
      %v955 = vpop.f32.mrb[0].mxu0
      %v956 = vadd.f32 %v907, %v955
      %v957 = vpop.f32.mrb[0].mxu0
      %v958 = vpop.f32.mrb[0].mxu0
      %v959 = vadd.f32 %v910, %v958
      %v960 = vpop.f32.mrb[0].mxu0
      %961 = vmatprep.mubr.bf16.mxu0 %v518
      %962 = vmatmul.mubr.bf16.gmra.mrb[0].mxu0 %v517
      %v963 = vpop.f32.mrb[0].mxu0
      %v964 = vadd.f32 %v915, %v963
      %v965 = vpop.f32.mrb[0].mxu0
      %v966 = vpop.f32.mrb[0].mxu0
      %v967 = vadd.f32 %v918, %v966
      %v968 = vpop.f32.mrb[0].mxu0
      %969 = vdwg.mxu0
      %970 = vmatprep.subr.bf16.mxu0 0
      %971 = vmatpush1.bf16.msra.mxu0 %v792
      %972 = vmatprep.subr.bf16.mxu0 0
      %973 = vmatpush1.bf16.msra.mxu0 %v793
      %974 = vmatprep.subr.bf16.mxu0 0
      %975 = vmatpush1.bf16.msra.mxu0 %v794
      %976 = vmatprep.subr.bf16.mxu0 0
      %977 = vmatpush1.bf16.msra.mxu0 %v795
      %978 = vmatprep.subr.bf16.mxu0 0
      %979 = vmatpush1.bf16.msra.mxu0 %v796
      %980 = vmatprep.subr.bf16.mxu0 0
      %981 = vmatpush1.bf16.msra.mxu0 %v797
      %982 = vmatprep.subr.bf16.mxu0 0
      %983 = vmatpush1.bf16.msra.mxu0 %v798
      %984 = vmatprep.subr.bf16.mxu0 0
      %985 = vmatpush1.bf16.msra.mxu0 %v799
      %986 = vmatprep.subr.bf16.mxu0 0
      %987 = vmatpush1.bf16.msra.mxu0 %v800
      %988 = vmatprep.subr.bf16.mxu0 0
      %989 = vmatpush1.bf16.msra.mxu0 %v801
      %990 = vmatprep.subr.bf16.mxu0 0
      %991 = vmatpush1.bf16.msra.mxu0 %v802
      %992 = vmatprep.subr.bf16.mxu0 0
      %993 = vmatpush1.bf16.msra.mxu0 %v803
      %994 = vmatprep.subr.bf16.mxu0 0
      %995 = vmatpush1.bf16.msra.mxu0 %v804
      %996 = vmatprep.subr.bf16.mxu0 0
      %997 = vmatpush1.bf16.msra.mxu0 %v805
      %998 = vmatprep.subr.bf16.mxu0 0
      %999 = vmatpush1.bf16.msra.mxu0 %v806
      %1000 = vmatprep.subr.bf16.mxu0 0
      %1001 = vmatpush1.bf16.msra.mxu0 %v807
      %1002 = vmatprep.mubr.bf16.mxu0 %v513
      %1003 = vmatmul.mubr.bf16.gmra.mrb[0].mxu0 %v512
      %v1004 = vpop.f32.mrb[0].mxu0
      %v1005 = vadd.f32 %v956, %v1004
      %v1006 = vpop.f32.mrb[0].mxu0
      %v1007 = vpop.f32.mrb[0].mxu0
      %v1008 = vadd.f32 %v959, %v1007
      %v1009 = vpop.f32.mrb[0].mxu0
      %1010 = vmatprep.mubr.bf16.mxu0 %v520
      %1011 = vmatmul.mubr.bf16.gmra.mrb[0].mxu0 %v519
      %v1012 = vpop.f32.mrb[0].mxu0
      %v1013 = vadd.f32 %v964, %v1012
      %v1014 = vpop.f32.mrb[0].mxu0
      %v1015 = vpop.f32.mrb[0].mxu0
      %v1016 = vadd.f32 %v967, %v1015
      %v1017 = vpop.f32.mrb[0].mxu0
      %1018 = vdwg.mxu0
      %1019 = vmatprep.subr.bf16.mxu0 0
      %1020 = vmatpush1.bf16.msra.mxu0 %v808
      %1021 = vmatprep.subr.bf16.mxu0 0
      %1022 = vmatpush1.bf16.msra.mxu0 %v809
      %1023 = vmatprep.subr.bf16.mxu0 0
      %1024 = vmatpush1.bf16.msra.mxu0 %v810
      %1025 = vmatprep.subr.bf16.mxu0 0
      %1026 = vmatpush1.bf16.msra.mxu0 %v811
      %1027 = vmatprep.subr.bf16.mxu0 0
      %1028 = vmatpush1.bf16.msra.mxu0 %v812
      %1029 = vmatprep.subr.bf16.mxu0 0
      %1030 = vmatpush1.bf16.msra.mxu0 %v813
      %1031 = vmatprep.subr.bf16.mxu0 0
      %1032 = vmatpush1.bf16.msra.mxu0 %v814
      %1033 = vmatprep.subr.bf16.mxu0 0
      %1034 = vmatpush1.bf16.msra.mxu0 %v815
      %1035 = vmatprep.subr.bf16.mxu0 0
      %1036 = vmatpush1.bf16.msra.mxu0 0
      %1037 = vmatprep.subr.bf16.mxu0 0
      %1038 = vmatpush1.bf16.msra.mxu0 0
      %1039 = vmatprep.subr.bf16.mxu0 0
      %1040 = vmatpush1.bf16.msra.mxu0 0
      %1041 = vmatprep.subr.bf16.mxu0 0
      %1042 = vmatpush1.bf16.msra.mxu0 0
      %1043 = vmatprep.subr.bf16.mxu0 0
      %1044 = vmatpush1.bf16.msra.mxu0 0
      %1045 = vmatprep.subr.bf16.mxu0 0
      %1046 = vmatpush1.bf16.msra.mxu0 0
      %1047 = vmatprep.subr.bf16.mxu0 0
      %1048 = vmatpush1.bf16.msra.mxu0 0
      %1049 = vmatprep.subr.bf16.mxu0 0
      %1050 = vmatpush1.bf16.msra.mxu0 0
      %1051 = vmatprep.mubr.bf16.mxu0 0
      %1052 = vmatmul.mubr.bf16.gmra.mrb[0].mxu0 %v514
      %v1053 = vpop.f32.mrb[0].mxu0
      %v1054 = vadd.f32 %v1005, %v1053
      %v1055 = vpop.f32.mrb[0].mxu0
      %v1056 = vpop.f32.mrb[0].mxu0
      %v1057 = vadd.f32 %v1008, %v1056
      %v1058 = vpop.f32.mrb[0].mxu0
      %1059 = vmatprep.mubr.bf16.mxu0 0
      %1060 = vmatmul.mubr.bf16.gmra.mrb[0].mxu0 %v521
      %v1061 = vpop.f32.mrb[0].mxu0
      %v1062 = vadd.f32 %v1013, %v1061
      %v1063 = vpop.f32.mrb[0].mxu0
      %v1064 = vpop.f32.mrb[0].mxu0
      %v1065 = vadd.f32 %v1016, %v1064
      %v1066 = vpop.f32.mrb[0].mxu0
      %1067 = vdwg.mxu0
      %v1068 = vadd.f32 %v332, %v1054
      %v1069 = vadd.f32 %v333, %v1057
      %v1070 = vadd.f32 %v334, %v1062
      %v1071 = vadd.f32 %v335, %v1065
      %1072 = vst [vmem:[#allocation2] sm:$0xff] %v1068
      %1073 = vst [vmem:[#allocation2 + $0x8] sm:$0xff] %v1069
      %1074 = vst [vmem:[#allocation2 + $0x10] sm:$0xff] %v1070
      %1075 = vst [vmem:[#allocation2 + $0x18] sm:$0xff] %v1071
      // Predicated region
      $region37: #{forward.7} parent=31 // pred_check
        %p1076 = pneg %p324
      $region38: #{forward.7} parent=31 // pred_check_branch
        %1078 = sbr.rel (%p1076) target = $region40
      $region39: #{forward.7} parent=31 // pred_region
        %v1079 = vld [vmem:[#allocation2] sm:$0xff]
        %v1080 = vld [vmem:[#allocation2 + $0x8] sm:$0xff]
        %v1081 = vld [vmem:[#allocation2 + $0x10] sm:$0xff]
        %v1082 = vld [vmem:[#allocation2 + $0x18] sm:$0xff]
        %v1083 = vld [vmem:[%s309] sm:$0x1]
        %v1085 = vlaneseq
        %v1086 = vshrl.u32 %v1085, 7
        %v1087 = vsub.s32 0, %v1086
        %v1088 = vrot.slane %v1083, %v1087
        %v1090 = vadd.f32 %v1079, %v1088
        %v1091 = vadd.f32 %v1080, %v1088
        %v1092 = vadd.f32 %v1081, %v1088
        %v1093 = vadd.f32 %v1082, %v1088
        %v1094 = vmax.f32 %v1090, 0.0
        %v1095 = vmax.f32 %v1091, 0.0
        %v1096 = vmax.f32 %v1092, 0.0
        %v1097 = vmax.f32 %v1093, 0.0
        %v1098 = vpack.c.bf16 %v1095, %v1094
        %v1099 = vpack.c.bf16 %v1097, %v1096
        %v1102 = vunpack.c.l.b16 %v1098
        %v1103 = vunpack.c.h.b16 %v1098
        %v1104 = vunpack.c.l.b16 %v1099
        %v1105 = vunpack.c.h.b16 %v1099
        %v1106 = vpack.c.b16 %v1102, %v1102
        %v1107 = vpack.c.b16 %v1103, %v1103
        %v1108 = vpack.c.b16 %v1104, %v1104
        %v1109 = vpack.c.b16 %v1105, %v1105
        %1114 = vst [vmem:[%s321] sm:$0xf] %v1106
        %1115 = vst [vmem:[%s321 + $0x4] sm:$0xf] %v1107
        %1116 = vst [vmem:[%s321 + $0x8] sm:$0xf] %v1108
        %1117 = vst [vmem:[%s321 + $0xc] sm:$0xf] %v1109
      $region40: #{forward.7} parent=31 // pred_fallthru
        _
      %s1118 = smul.u32 4, %s21
      %p1119 = scmp.lt.s32.totalorder %s20, 2
      %s1120 = scalar_select %p1119, %s20, 2
      %p1121 = scmp.lt.s32.totalorder %s1118, 3
      %s1122 = scalar_select %p1121, %s1118, 3
      %p1123 = scmp.lt.s32.totalorder %s22, 0
      %s1124 = scalar_select %p1123, %s22, 0
      %s1125 = sadd.s32 %s1124, %s1122
      %s1126 = smul.addr %s1120, 4
      %s1127 = sadd.s32 %s1125, %s1126
      %s1128 = smul.addr %s1127, 4
      %s1129 = scalar_lea.vmem %s3, %s1128
      // Predicated region
      $region41: #{forward.7} parent=31 // pred_check
        %p1130 = pneg %p150
      $region42: #{forward.7} parent=31 // pred_check_branch
        %1132 = sbr.rel (%p1130) target = $region44
      $region43: #{forward.7} parent=31 // pred_region
        %s1133 = smul.u32 4, %s21
      $region44: #{forward.7} parent=31 // pred_fallthru
        _
    $region32: #{forward.7} parent=5 // pred_fallthru
      _
    %p1134 = scmp.le.s32.totalorder 2, %s9
    // Predicated region
    $region45: #{forward.7} parent=5 // pred_check
      %p1135 = pneg %p1134
    $region46: #{forward.7} parent=5 // pred_check_branch
      %1137 = sbr.rel (%p1135) target = $region48
    $region47: #{forward.7} parent=5 // pred_region
      %s1138 = ssub.s32 %s9, 2
      // Predicated region
      $region49: #{forward.7} parent=47 // pred_check
        %p1139 = pneg %p156
      $region50: #{forward.7} parent=47 // pred_check_branch
        %1141 = sbr.rel (%p1139) target = $region52
      $region51: #{forward.7} parent=47 // pred_region
        %s1142 = smul.u32 4, %s25
        %p1143 = scmp.lt.s32.totalorder %s24, 2
        %s1144 = scalar_select %p1143, %s24, 2
        %p1145 = scmp.lt.s32.totalorder %s1142, 3
        %s1146 = scalar_select %p1145, %s1142, 3
        %p1147 = scmp.lt.s32.totalorder %s26, 0
        %s1148 = scalar_select %p1147, %s26, 0
        %s1149 = sadd.s32 %s1148, %s1146
        %s1150 = smul.addr %s1144, 4
        %s1151 = sadd.s32 %s1149, %s1150
        %s1152 = smul.addr %s1151, 4
        %s1153 = scalar_lea.vmem %s3, %s1152
      $region52: #{forward.7} parent=47 // pred_fallthru
        _
    $region48: #{forward.7} parent=5 // pred_fallthru
      _
  $region6: #{forward.7} parent=0 // loop_footer
    %s13 = sadd.s32 1, %s9
  $region7: #{forward.7} parent=0 // loop_footer_branch
    %8 = sbr.rel target = $region3
  $region8: #{forward.7} parent=0 // loop_exit
    _

// kernel: forward.8
$region0: #{forward.8}
  #allocation0 [shape = 'u32[]', space=smem, size = 0x4, offset = 0x4, fixed_abs, tag = 'smem constant byte address 0x4 - core index']
  #allocation1 [shape = 'u32[144,128]{1,0:T(1,128)}', space=vmem, size = 0x12000, scoped, tag = 'internal scratch']
  #allocation2 [shape = 'f32[8,128]{1,0:T(8,128)}', space=vmem, size = 0x1000, scoped, tag = 'scratch operand']
  %s0 = inlined_call_operand.vmem [shape: bf16[3,8,1664], index: 0, kind: input, shape index: {}]
  %s1 = inlined_call_operand.vmem [shape: bf16[3,1664,128], index: 1, kind: input, shape index: {}]
  %s2 = inlined_call_operand.vmem [shape: f32[3,1,128], index: 2, kind: input, shape index: {}]
  %s3 = inlined_call_operand.vmem [shape: bf16[3,8,128], index: 3, kind: output, shape index: {}]
  %s4 = sld [smem:[#allocation0]]
  $region53: #{forward.8} parent=0
    _
  %s6 = ssub.s32 1, %s4
  %s7 = scalar_select 0, %s6, %s4
  loop: start=0, step=1, limit=5
  $region2: #{forward.8} parent=0 // loop_pre_header
    _
  $region3: #{forward.8} parent=0 // loop_header
    %s9 = sphi 0, %s13
    %p10 = scmp.ge.s32.totalorder %s9, 5
    %s16 = sphi 0, %s42
    %s17 = sphi 0, %s38
    %s18 = sphi 0, %s34
    %s19 = sphi 0, %s30
    %s20 = sphi 0, %s16
    %s21 = sphi 0, %s17
    %s22 = sphi 0, %s18
    %s23 = sphi 0, %s19
    %s24 = sphi 0, %s20
    %s25 = sphi 0, %s21
    %s26 = sphi 0, %s22
    %s27 = sphi 0, %s23
    %s49 = sphi 0, %s51
    %s52 = sphi 0, %s49
    %s53 = sphi 0, %s52
    %s69 = sphi 0, %s53
    %s79 = sphi 0, %s81
    %s82 = sphi 0, %s79
    %s83 = sphi 0, %s82
    %s99 = sphi 0, %s83
    %s107 = sphi 0, %s109
    %s110 = sphi 0, %s107
    %s111 = sphi 0, %s110
    %s127 = sphi 0, %s111
    %s137 = sphi 0, %s139
    %s140 = sphi 0, %s137
    %s141 = sphi 0, %s140
    %s157 = sphi 0, %s141
  $region4: #{forward.8} parent=0 // loop_header_branch
    %12 = sbr.rel (%p10) target = $region8
  $region5: #{forward.8} parent=0 // loop_body
    %s14 = ssub.s32 %s9, 1
    %s15 = ssub.s32 %s9, 2
    %s28 = sadd.s32 1, %s19
    %p29 = scmp.ge.s32.totalorder %s28, 1
    %s30 = scalar_select %p29, 0, %s28
    %s31 = sadd.s32 1, %s18
    %s32 = scalar_select %p29, %s31, %s18
    %p33 = scmp.ge.s32.totalorder %s32, 1
    %s34 = scalar_select %p33, 0, %s32
    %s35 = sadd.s32 1, %s17
    %s36 = scalar_select %p33, %s35, %s17
    %p37 = scmp.ge.s32.totalorder %s36, 1
    %s38 = scalar_select %p37, 0, %s36
    %s39 = sadd.s32 1, %s16
    %s40 = scalar_select %p37, %s39, %s16
    %p41 = scmp.ge.s32.totalorder %s40, 3
    %s42 = scalar_select %p41, 0, %s40
    %s43 = ssub.s32 %s16, %s42
    %s44 = ssub.s32 %s17, %s38
    %s45 = sor.u32 %s43, %s44
    %s46 = ssub.s32 %s19, %s30
    %s47 = sor.u32 %s45, %s46
    %p48 = scmp.eq.s32.totalorder %s47, 0
    %s50 = sadd.s32 %s49, 1
    %s51 = scalar_select %p48, %s49, %s50
    %p54 = pneg %p48
    %p55 = scmp.eq.s32.totalorder %s9, 2
    %p56 = por %p54, %p55
    %p57 = scmp.ne.s32.totalorder %s49, %s52
    %p58 = scmp.eq.s32.totalorder %s9, 0
    %p59 = por %p57, %p58
    %p60 = scmp.ne.s32.totalorder %s49, %s52
    %p61 = scmp.eq.s32.totalorder %s14, 2
    %p62 = por %p60, %p61
    %p63 = scmp.ne.s32.totalorder %s52, %s53
    %p64 = scmp.eq.s32.totalorder %s14, 0
    %p65 = por %p63, %p64
    %p66 = scmp.ne.s32.totalorder %s52, %s53
    %p67 = scmp.eq.s32.totalorder %s15, 2
    %p68 = por %p66, %p67
    %p70 = scmp.ne.s32.totalorder %s53, %s69
    %p71 = scmp.eq.s32.totalorder %s15, 0
    %p72 = por %p70, %p71
    %s73 = ssub.s32 %s16, %s42
    %s74 = ssub.s32 %s19, %s30
    %s75 = sor.u32 %s73, %s74
    %s76 = ssub.s32 %s18, %s34
    %s77 = sor.u32 %s75, %s76
    %p78 = scmp.eq.s32.totalorder %s77, 0
    %s80 = sadd.s32 %s79, 1
    %s81 = scalar_select %p78, %s79, %s80
    %p84 = pneg %p78
    %p85 = scmp.eq.s32.totalorder %s9, 2
    %p86 = por %p84, %p85
    %p87 = scmp.ne.s32.totalorder %s79, %s82
    %p88 = scmp.eq.s32.totalorder %s9, 0
    %p89 = por %p87, %p88
    %p90 = scmp.ne.s32.totalorder %s79, %s82
    %p91 = scmp.eq.s32.totalorder %s14, 2
    %p92 = por %p90, %p91
    %p93 = scmp.ne.s32.totalorder %s82, %s83
    %p94 = scmp.eq.s32.totalorder %s14, 0
    %p95 = por %p93, %p94
    %p96 = scmp.ne.s32.totalorder %s82, %s83
    %p97 = scmp.eq.s32.totalorder %s15, 2
    %p98 = por %p96, %p97
    %p100 = scmp.ne.s32.totalorder %s83, %s99
    %p101 = scmp.eq.s32.totalorder %s15, 0
    %p102 = por %p100, %p101
    %s103 = ssub.s32 %s16, %s42
    %s104 = ssub.s32 %s18, %s34
    %s105 = sor.u32 %s103, %s104
    %p106 = scmp.eq.s32.totalorder %s105, 0
    %s108 = sadd.s32 %s107, 1
    %s109 = scalar_select %p106, %s107, %s108
    %p112 = pneg %p106
    %p113 = scmp.eq.s32.totalorder %s9, 2
    %p114 = por %p112, %p113
    %p115 = scmp.ne.s32.totalorder %s107, %s110
    %p116 = scmp.eq.s32.totalorder %s9, 0
    %p117 = por %p115, %p116
    %p118 = scmp.ne.s32.totalorder %s107, %s110
    %p119 = scmp.eq.s32.totalorder %s14, 2
    %p120 = por %p118, %p119
    %p121 = scmp.ne.s32.totalorder %s110, %s111
    %p122 = scmp.eq.s32.totalorder %s14, 0
    %p123 = por %p121, %p122
    %p124 = scmp.ne.s32.totalorder %s110, %s111
    %p125 = scmp.eq.s32.totalorder %s15, 2
    %p126 = por %p124, %p125
    %p128 = scmp.ne.s32.totalorder %s111, %s127
    %p129 = scmp.eq.s32.totalorder %s15, 0
    %p130 = por %p128, %p129
    %s131 = ssub.s32 %s16, %s42
    %s132 = ssub.s32 %s17, %s38
    %s133 = sor.u32 %s131, %s132
    %s134 = ssub.s32 %s18, %s34
    %s135 = sor.u32 %s133, %s134
    %p136 = scmp.eq.s32.totalorder %s135, 0
    %s138 = sadd.s32 %s137, 1
    %s139 = scalar_select %p136, %s137, %s138
    %p142 = pneg %p136
    %p143 = scmp.eq.s32.totalorder %s9, 2
    %p144 = por %p142, %p143
    %p145 = scmp.ne.s32.totalorder %s137, %s140
    %p146 = scmp.eq.s32.totalorder %s9, 0
    %p147 = por %p145, %p146
    %p148 = scmp.ne.s32.totalorder %s137, %s140
    %p149 = scmp.eq.s32.totalorder %s14, 2
    %p150 = por %p148, %p149
    %p151 = scmp.ne.s32.totalorder %s140, %s141
    %p152 = scmp.eq.s32.totalorder %s14, 0
    %p153 = por %p151, %p152
    %p154 = scmp.ne.s32.totalorder %s140, %s141
    %p155 = scmp.eq.s32.totalorder %s15, 2
    %p156 = por %p154, %p155
    %p158 = scmp.ne.s32.totalorder %s141, %s157
    %p159 = scmp.eq.s32.totalorder %s15, 0
    %p160 = por %p158, %p159
    %p161 = scmp.le.s32.totalorder 1, %s9
    %p162 = scmp.lt.s32.totalorder %s9, 4
    %p163 = pnand %p161, %p162
    %p164 = pneg %p163
    // Predicated region
    $region9: #{forward.8} parent=5 // pred_check
      _
    $region10: #{forward.8} parent=5 // pred_check_branch
      %166 = sbr.rel (%p163) target = $region12
    $region11: #{forward.8} parent=5 // pred_region
      %s167 = ssub.s32 %s9, 1
    $region12: #{forward.8} parent=5 // pred_fallthru
      _
    %p168 = scmp.lt.s32.totalorder %s9, 3
    // Predicated region
    $region13: #{forward.8} parent=5 // pred_check
      %p169 = pneg %p168
    $region14: #{forward.8} parent=5 // pred_check_branch
      %171 = sbr.rel (%p169) target = $region16
    $region15: #{forward.8} parent=5 // pred_region
      // Predicated region
      $region17: #{forward.8} parent=15 // pred_check
        %p172 = pneg %p59
      $region18: #{forward.8} parent=15 // pred_check_branch
        %174 = sbr.rel (%p172) target = $region20
      $region19: #{forward.8} parent=15 // pred_region
        %s175 = smul.u32 13, %s19
        %p176 = scmp.lt.s32.totalorder %s16, 2
        %s177 = scalar_select %p176, %s16, 2
        %p178 = scmp.lt.s32.totalorder %s17, 0
        %s179 = scalar_select %p178, %s17, 0
        %p180 = scmp.lt.s32.totalorder %s175, 12
        %s181 = scalar_select %p180, %s175, 12
        %s182 = smul.addr %s179, 13
        %s183 = sadd.s32 %s181, %s182
        %s184 = smul.addr %s177, 13
        %s185 = sadd.s32 %s183, %s184
        %s186 = smul.addr %s185, 4
        %s187 = scalar_lea.vmem %s0, %s186
        %s188 = smul.u32 13, %s19
      $region20: #{forward.8} parent=15 // pred_fallthru
        _
      // Predicated region
      $region21: #{forward.8} parent=15 // pred_check
        %p189 = pneg %p89
      $region22: #{forward.8} parent=15 // pred_check_branch
        %191 = sbr.rel (%p189) target = $region24
      $region23: #{forward.8} parent=15 // pred_region
        %s192 = smul.u32 208, %s19
        %p193 = scmp.lt.s32.totalorder %s16, 2
        %s194 = scalar_select %p193, %s16, 2
        %p195 = scmp.lt.s32.totalorder %s192, 207
        %s196 = scalar_select %p195, %s192, 207
        %p197 = scmp.lt.s32.totalorder %s18, 0
        %s198 = scalar_select %p197, %s18, 0
        %s199 = sadd.s32 %s198, %s196
        %s200 = smul.addr %s194, 208
        %s201 = sadd.s32 %s199, %s200
        %s202 = smul.addr %s201, 4
        %s203 = scalar_lea.vmem %s1, %s202
        %s204 = smul.u32 208, %s19
      $region24: #{forward.8} parent=15 // pred_fallthru
        _
      // Predicated region
      $region25: #{forward.8} parent=15 // pred_check
        %p205 = pneg %p117
      $region26: #{forward.8} parent=15 // pred_check_branch
        %207 = sbr.rel (%p205) target = $region28
      $region27: #{forward.8} parent=15 // pred_region
        %p208 = scmp.lt.s32.totalorder %s16, 2
        %s209 = scalar_select %p208, %s16, 2
        %p210 = scmp.lt.s32.totalorder %s18, 0
        %s211 = scalar_select %p210, %s18, 0
        %s212 = sadd.s32 %s211, %s209
        %s213 = scalar_lea.vmem %s2, %s212
      $region28: #{forward.8} parent=15 // pred_fallthru
        _
    $region16: #{forward.8} parent=5 // pred_fallthru
      _
    %p214 = scmp.le.s32.totalorder 1, %s9
    %p215 = scmp.lt.s32.totalorder %s9, 4
    %p216 = pnand %p214, %p215
    %p217 = pneg %p216
    // Predicated region
    $region29: #{forward.8} parent=5 // pred_check
      _
    $region30: #{forward.8} parent=5 // pred_check_branch
      %219 = sbr.rel (%p216) target = $region32
    $region31: #{forward.8} parent=5 // pred_region
      %s220 = ssub.s32 %s9, 1
      %s221 = smul.u32 13, %s23
      %p222 = scmp.lt.s32.totalorder %s20, 2
      %s223 = scalar_select %p222, %s20, 2
      %p224 = scmp.lt.s32.totalorder %s21, 0
      %s225 = scalar_select %p224, %s21, 0
      %p226 = scmp.lt.s32.totalorder %s221, 12
      %s227 = scalar_select %p226, %s221, 12
      %s228 = smul.addr %s225, 13
      %s229 = sadd.s32 %s227, %s228
      %s230 = smul.addr %s223, 13
      %s231 = sadd.s32 %s229, %s230
      %s232 = smul.addr %s231, 4
      %s233 = scalar_lea.vmem %s0, %s232
      %p234 = pneg %p65
      %p235 = pneg %p62
      %s236 = smul.u32 208, %s23
      %p237 = scmp.lt.s32.totalorder %s20, 2
      %s238 = scalar_select %p237, %s20, 2
      %p239 = scmp.lt.s32.totalorder %s236, 207
      %s240 = scalar_select %p239, %s236, 207
      %p241 = scmp.lt.s32.totalorder %s22, 0
      %s242 = scalar_select %p241, %s22, 0
      %s243 = sadd.s32 %s242, %s240
      %s244 = smul.addr %s238, 208
      %s245 = sadd.s32 %s243, %s244
      %s246 = smul.addr %s245, 4
      %s247 = scalar_lea.vmem %s1, %s246
      %p248 = pneg %p95
      %p249 = pneg %p92
      %p250 = scmp.lt.s32.totalorder %s20, 2
      %s251 = scalar_select %p250, %s20, 2
      %p252 = scmp.lt.s32.totalorder %s22, 0
      %s253 = scalar_select %p252, %s22, 0
      %s254 = sadd.s32 %s253, %s251
      %s255 = scalar_lea.vmem %s2, %s254
      %p256 = pneg %p123
      %p257 = pneg %p120
      %p258 = pneg %p153
      %p259 = pneg %p150
      %p260 = scmp.lt.s32.totalorder %s20, 2
      %s261 = scalar_select %p260, %s20, 2
      %p262 = scmp.lt.s32.totalorder %s21, 0
      %s263 = scalar_select %p262, %s21, 0
      %p264 = scmp.lt.s32.totalorder %s22, 0
      %s265 = scalar_select %p264, %s22, 0
      %s266 = sadd.s32 %s265, %s263
      %s267 = sadd.s32 %s266, %s261
      %s268 = smul.addr %s267, 4
      %s269 = scalar_lea.vmem %s3, %s268
      %s270 = smul.u32 13, %s23
      %p271 = scmp.lt.s32.totalorder %s20, 2
      %s272 = scalar_select %p271, %s20, 2
      %p273 = scmp.lt.s32.totalorder %s21, 0
      %s274 = scalar_select %p273, %s21, 0
      %p275 = scmp.lt.s32.totalorder %s270, 12
      %s276 = scalar_select %p275, %s270, 12
      %s277 = smul.addr %s274, 13
      %s278 = sadd.s32 %s276, %s277
      %s279 = smul.addr %s272, 13
      %s280 = sadd.s32 %s278, %s279
      %s281 = smul.addr %s280, 4
      %s282 = scalar_lea.vmem %s0, %s281
      %s283 = smul.u32 13, %s23
      %s284 = smul.u32 208, %s23
      %p285 = scmp.lt.s32.totalorder %s20, 2
      %s286 = scalar_select %p285, %s20, 2
      %p287 = scmp.lt.s32.totalorder %s284, 207
      %s288 = scalar_select %p287, %s284, 207
      %p289 = scmp.lt.s32.totalorder %s22, 0
      %s290 = scalar_select %p289, %s22, 0
      %s291 = sadd.s32 %s290, %s288
      %s292 = smul.addr %s286, 208
      %s293 = sadd.s32 %s291, %s292
      %s294 = smul.addr %s293, 4
      %s295 = scalar_lea.vmem %s1, %s294
      %s296 = smul.u32 208, %s23
      %p297 = scmp.lt.s32.totalorder %s20, 2
      %s298 = scalar_select %p297, %s20, 2
      %p299 = scmp.lt.s32.totalorder %s22, 0
      %s300 = scalar_select %p299, %s22, 0
      %s301 = sadd.s32 %s300, %s298
      %s302 = scalar_lea.vmem %s2, %s301
      %p303 = scmp.lt.s32.totalorder %s20, 2
      %s304 = scalar_select %p303, %s20, 2
      %p305 = scmp.lt.s32.totalorder %s21, 0
      %s306 = scalar_select %p305, %s21, 0
      %p307 = scmp.lt.s32.totalorder %s22, 0
      %s308 = scalar_select %p307, %s22, 0
      %s309 = sadd.s32 %s308, %s306
      %s310 = sadd.s32 %s309, %s304
      %s311 = smul.addr %s310, 4
      %s312 = scalar_lea.vmem %s3, %s311
      %p314 = scmp.eq.s32.totalorder %s23, 0
      // Predicated region
      $region33: #{forward.8} parent=31 // pred_check
        %p315 = pneg %p314
      $region34: #{forward.8} parent=31 // pred_check_branch
        %317 = sbr.rel (%p315) target = $region36
      $region35: #{forward.8} parent=31 // pred_region
        %318 = vst [vmem:[#allocation2] sm:$0xff] 0.0
      $region36: #{forward.8} parent=31 // pred_fallthru
        _
      %v319 = vld [vmem:[#allocation2] sm:$0xff]
      %v320 = vld [vmem:[%s282] sm:$0xff]
      %v321 = vld [vmem:[%s282 + $0x8] sm:$0xff]
      %v322 = vld [vmem:[%s282 + $0x10] sm:$0xff]
      %v323 = vld [vmem:[%s282 + $0x18] sm:$0xff]
      %v324 = vld [vmem:[%s282 + $0x20] sm:$0xff]
      %v325 = vld [vmem:[%s282 + $0x28] sm:$0xff]
      %v326 = vld [vmem:[%s282 + $0x30] sm:$0xf]
      %v327 = vld [vmem:[%s295] sm:$0xf]
      %v328 = vld [vmem:[%s295 + $0x4] sm:$0xf]
      %v329 = vld [vmem:[%s295 + $0x8] sm:$0xf]
      %v330 = vld [vmem:[%s295 + $0xc] sm:$0xf]
      %v331 = vld [vmem:[%s295 + $0x10] sm:$0xf]
      %v332 = vld [vmem:[%s295 + $0x14] sm:$0xf]
      %v333 = vld [vmem:[%s295 + $0x18] sm:$0xf]
      %v334 = vld [vmem:[%s295 + $0x1c] sm:$0xf]
      %v335 = vld [vmem:[%s295 + $0x20] sm:$0xf]
      %v336 = vld [vmem:[%s295 + $0x24] sm:$0xf]
      %v337 = vld [vmem:[%s295 + $0x28] sm:$0xf]
      %v338 = vld [vmem:[%s295 + $0x2c] sm:$0xf]
      %v339 = vld [vmem:[%s295 + $0x30] sm:$0xf]
      %v340 = vld [vmem:[%s295 + $0x34] sm:$0xf]
      %v341 = vld [vmem:[%s295 + $0x38] sm:$0xf]
      %v342 = vld [vmem:[%s295 + $0x3c] sm:$0xf]
      %v343 = vld [vmem:[%s295 + $0x40] sm:$0xf]
      %v344 = vld [vmem:[%s295 + $0x44] sm:$0xf]
      %v345 = vld [vmem:[%s295 + $0x48] sm:$0xf]
      %v346 = vld [vmem:[%s295 + $0x4c] sm:$0xf]
      %v347 = vld [vmem:[%s295 + $0x50] sm:$0xf]
      %v348 = vld [vmem:[%s295 + $0x54] sm:$0xf]
      %v349 = vld [vmem:[%s295 + $0x58] sm:$0xf]
      %v350 = vld [vmem:[%s295 + $0x5c] sm:$0xf]
      %v351 = vld [vmem:[%s295 + $0x60] sm:$0xf]
      %v352 = vld [vmem:[%s295 + $0x64] sm:$0xf]
      %v353 = vld [vmem:[%s295 + $0x68] sm:$0xf]
      %v354 = vld [vmem:[%s295 + $0x6c] sm:$0xf]
      %v355 = vld [vmem:[%s295 + $0x70] sm:$0xf]
      %v356 = vld [vmem:[%s295 + $0x74] sm:$0xf]
      %v357 = vld [vmem:[%s295 + $0x78] sm:$0xf]
      %v358 = vld [vmem:[%s295 + $0x7c] sm:$0xf]
      %v359 = vld [vmem:[%s295 + $0x80] sm:$0xf]
      %v360 = vld [vmem:[%s295 + $0x84] sm:$0xf]
      %v361 = vld [vmem:[%s295 + $0x88] sm:$0xf]
      %v362 = vld [vmem:[%s295 + $0x8c] sm:$0xf]
      %v363 = vld [vmem:[%s295 + $0x90] sm:$0xf]
      %v364 = vld [vmem:[%s295 + $0x94] sm:$0xf]
      %v365 = vld [vmem:[%s295 + $0x98] sm:$0xf]
      %v366 = vld [vmem:[%s295 + $0x9c] sm:$0xf]
      %v367 = vld [vmem:[%s295 + $0xa0] sm:$0xf]
      %v368 = vld [vmem:[%s295 + $0xa4] sm:$0xf]
      %v369 = vld [vmem:[%s295 + $0xa8] sm:$0xf]
      %v370 = vld [vmem:[%s295 + $0xac] sm:$0xf]
      %v371 = vld [vmem:[%s295 + $0xb0] sm:$0xf]
      %v372 = vld [vmem:[%s295 + $0xb4] sm:$0xf]
      %v373 = vld [vmem:[%s295 + $0xb8] sm:$0xf]
      %v374 = vld [vmem:[%s295 + $0xbc] sm:$0xf]
      %v375 = vld [vmem:[%s295 + $0xc0] sm:$0xf]
      %v376 = vld [vmem:[%s295 + $0xc4] sm:$0xf]
      %v377 = vld [vmem:[%s295 + $0xc8] sm:$0xf]
      %v378 = vld [vmem:[%s295 + $0xcc] sm:$0xf]
      %v379 = vld [vmem:[%s295 + $0xd0] sm:$0xf]
      %v380 = vld [vmem:[%s295 + $0xd4] sm:$0xf]
      %v381 = vld [vmem:[%s295 + $0xd8] sm:$0xf]
      %v382 = vld [vmem:[%s295 + $0xdc] sm:$0xf]
      %v383 = vld [vmem:[%s295 + $0xe0] sm:$0xf]
      %v384 = vld [vmem:[%s295 + $0xe4] sm:$0xf]
      %v385 = vld [vmem:[%s295 + $0xe8] sm:$0xf]
      %v386 = vld [vmem:[%s295 + $0xec] sm:$0xf]
      %v387 = vld [vmem:[%s295 + $0xf0] sm:$0xf]
      %v388 = vld [vmem:[%s295 + $0xf4] sm:$0xf]
      %v389 = vld [vmem:[%s295 + $0xf8] sm:$0xf]
      %v390 = vld [vmem:[%s295 + $0xfc] sm:$0xf]
      %v391 = vld [vmem:[%s295 + $0x100] sm:$0xf]
      %v392 = vld [vmem:[%s295 + $0x104] sm:$0xf]
      %v393 = vld [vmem:[%s295 + $0x108] sm:$0xf]
      %v394 = vld [vmem:[%s295 + $0x10c] sm:$0xf]
      %v395 = vld [vmem:[%s295 + $0x110] sm:$0xf]
      %v396 = vld [vmem:[%s295 + $0x114] sm:$0xf]
      %v397 = vld [vmem:[%s295 + $0x118] sm:$0xf]
      %v398 = vld [vmem:[%s295 + $0x11c] sm:$0xf]
      %v399 = vld [vmem:[%s295 + $0x120] sm:$0xf]
      %v400 = vld [vmem:[%s295 + $0x124] sm:$0xf]
      %v401 = vld [vmem:[%s295 + $0x128] sm:$0xf]
      %v402 = vld [vmem:[%s295 + $0x12c] sm:$0xf]
      %v403 = vld [vmem:[%s295 + $0x130] sm:$0xf]
      %v404 = vld [vmem:[%s295 + $0x134] sm:$0xf]
      %v405 = vld [vmem:[%s295 + $0x138] sm:$0xf]
      %v406 = vld [vmem:[%s295 + $0x13c] sm:$0xf]
      %v407 = vld [vmem:[%s295 + $0x140] sm:$0xf]
      %v408 = vld [vmem:[%s295 + $0x144] sm:$0xf]
      %v409 = vld [vmem:[%s295 + $0x148] sm:$0xf]
      %v410 = vld [vmem:[%s295 + $0x14c] sm:$0xf]
      %v411 = vld [vmem:[%s295 + $0x150] sm:$0xf]
      %v412 = vld [vmem:[%s295 + $0x154] sm:$0xf]
      %v413 = vld [vmem:[%s295 + $0x158] sm:$0xf]
      %v414 = vld [vmem:[%s295 + $0x15c] sm:$0xf]
      %v415 = vld [vmem:[%s295 + $0x160] sm:$0xf]
      %v416 = vld [vmem:[%s295 + $0x164] sm:$0xf]
      %v417 = vld [vmem:[%s295 + $0x168] sm:$0xf]
      %v418 = vld [vmem:[%s295 + $0x16c] sm:$0xf]
      %v419 = vld [vmem:[%s295 + $0x170] sm:$0xf]
      %v420 = vld [vmem:[%s295 + $0x174] sm:$0xf]
      %v421 = vld [vmem:[%s295 + $0x178] sm:$0xf]
      %v422 = vld [vmem:[%s295 + $0x17c] sm:$0xf]
      %v423 = vld [vmem:[%s295 + $0x180] sm:$0xf]
      %v424 = vld [vmem:[%s295 + $0x184] sm:$0xf]
      %v425 = vld [vmem:[%s295 + $0x188] sm:$0xf]
      %v426 = vld [vmem:[%s295 + $0x18c] sm:$0xf]
      %v427 = vld [vmem:[%s295 + $0x190] sm:$0xf]
      %v428 = vld [vmem:[%s295 + $0x194] sm:$0xf]
      %v429 = vld [vmem:[%s295 + $0x198] sm:$0xf]
      %v430 = vld [vmem:[%s295 + $0x19c] sm:$0xf]
      %v431 = vld [vmem:[%s295 + $0x1a0] sm:$0xf]
      %v432 = vld [vmem:[%s295 + $0x1a4] sm:$0xf]
      %v433 = vld [vmem:[%s295 + $0x1a8] sm:$0xf]
      %v434 = vld [vmem:[%s295 + $0x1ac] sm:$0xf]
      %v435 = vld [vmem:[%s295 + $0x1b0] sm:$0xf]
      %v436 = vld [vmem:[%s295 + $0x1b4] sm:$0xf]
      %v437 = vld [vmem:[%s295 + $0x1b8] sm:$0xf]
      %v438 = vld [vmem:[%s295 + $0x1bc] sm:$0xf]
      %v439 = vld [vmem:[%s295 + $0x1c0] sm:$0xf]
      %v440 = vld [vmem:[%s295 + $0x1c4] sm:$0xf]
      %v441 = vld [vmem:[%s295 + $0x1c8] sm:$0xf]
      %v442 = vld [vmem:[%s295 + $0x1cc] sm:$0xf]
      %v443 = vld [vmem:[%s295 + $0x1d0] sm:$0xf]
      %v444 = vld [vmem:[%s295 + $0x1d4] sm:$0xf]
      %v445 = vld [vmem:[%s295 + $0x1d8] sm:$0xf]
      %v446 = vld [vmem:[%s295 + $0x1dc] sm:$0xf]
      %v447 = vld [vmem:[%s295 + $0x1e0] sm:$0xf]
      %v448 = vld [vmem:[%s295 + $0x1e4] sm:$0xf]
      %v449 = vld [vmem:[%s295 + $0x1e8] sm:$0xf]
      %v450 = vld [vmem:[%s295 + $0x1ec] sm:$0xf]
      %v451 = vld [vmem:[%s295 + $0x1f0] sm:$0xf]
      %v452 = vld [vmem:[%s295 + $0x1f4] sm:$0xf]
      %v453 = vld [vmem:[%s295 + $0x1f8] sm:$0xf]
      %v454 = vld [vmem:[%s295 + $0x1fc] sm:$0xf]
      %v455 = vld [vmem:[%s295 + $0x200] sm:$0xf]
      %v456 = vld [vmem:[%s295 + $0x204] sm:$0xf]
      %v457 = vld [vmem:[%s295 + $0x208] sm:$0xf]
      %v458 = vld [vmem:[%s295 + $0x20c] sm:$0xf]
      %v459 = vld [vmem:[%s295 + $0x210] sm:$0xf]
      %v460 = vld [vmem:[%s295 + $0x214] sm:$0xf]
      %v461 = vld [vmem:[%s295 + $0x218] sm:$0xf]
      %v462 = vld [vmem:[%s295 + $0x21c] sm:$0xf]
      %v463 = vld [vmem:[%s295 + $0x220] sm:$0xf]
      %v464 = vld [vmem:[%s295 + $0x224] sm:$0xf]
      %v465 = vld [vmem:[%s295 + $0x228] sm:$0xf]
      %v466 = vld [vmem:[%s295 + $0x22c] sm:$0xf]
      %v467 = vld [vmem:[%s295 + $0x230] sm:$0xf]
      %v468 = vld [vmem:[%s295 + $0x234] sm:$0xf]
      %v469 = vld [vmem:[%s295 + $0x238] sm:$0xf]
      %v470 = vld [vmem:[%s295 + $0x23c] sm:$0xf]
      %v471 = vld [vmem:[%s295 + $0x240] sm:$0xf]
      %v472 = vld [vmem:[%s295 + $0x244] sm:$0xf]
      %v473 = vld [vmem:[%s295 + $0x248] sm:$0xf]
      %v474 = vld [vmem:[%s295 + $0x24c] sm:$0xf]
      %v475 = vld [vmem:[%s295 + $0x250] sm:$0xf]
      %v476 = vld [vmem:[%s295 + $0x254] sm:$0xf]
      %v477 = vld [vmem:[%s295 + $0x258] sm:$0xf]
      %v478 = vld [vmem:[%s295 + $0x25c] sm:$0xf]
      %v479 = vld [vmem:[%s295 + $0x260] sm:$0xf]
      %v480 = vld [vmem:[%s295 + $0x264] sm:$0xf]
      %v481 = vld [vmem:[%s295 + $0x268] sm:$0xf]
      %v482 = vld [vmem:[%s295 + $0x26c] sm:$0xf]
      %v483 = vld [vmem:[%s295 + $0x270] sm:$0xf]
      %v484 = vld [vmem:[%s295 + $0x274] sm:$0xf]
      %v485 = vld [vmem:[%s295 + $0x278] sm:$0xf]
      %v486 = vld [vmem:[%s295 + $0x27c] sm:$0xf]
      %v487 = vld [vmem:[%s295 + $0x280] sm:$0xf]
      %v488 = vld [vmem:[%s295 + $0x284] sm:$0xf]
      %v489 = vld [vmem:[%s295 + $0x288] sm:$0xf]
      %v490 = vld [vmem:[%s295 + $0x28c] sm:$0xf]
      %v491 = vld [vmem:[%s295 + $0x290] sm:$0xf]
      %v492 = vld [vmem:[%s295 + $0x294] sm:$0xf]
      %v493 = vld [vmem:[%s295 + $0x298] sm:$0xf]
      %v494 = vld [vmem:[%s295 + $0x29c] sm:$0xf]
      %v495 = vld [vmem:[%s295 + $0x2a0] sm:$0xf]
      %v496 = vld [vmem:[%s295 + $0x2a4] sm:$0xf]
      %v497 = vld [vmem:[%s295 + $0x2a8] sm:$0xf]
      %v498 = vld [vmem:[%s295 + $0x2ac] sm:$0xf]
      %v499 = vld [vmem:[%s295 + $0x2b0] sm:$0xf]
      %v500 = vld [vmem:[%s295 + $0x2b4] sm:$0xf]
      %v501 = vld [vmem:[%s295 + $0x2b8] sm:$0xf]
      %v502 = vld [vmem:[%s295 + $0x2bc] sm:$0xf]
      %v503 = vld [vmem:[%s295 + $0x2c0] sm:$0xf]
      %v504 = vld [vmem:[%s295 + $0x2c4] sm:$0xf]
      %v505 = vld [vmem:[%s295 + $0x2c8] sm:$0xf]
      %v506 = vld [vmem:[%s295 + $0x2cc] sm:$0xf]
      %v507 = vld [vmem:[%s295 + $0x2d0] sm:$0xf]
      %v508 = vld [vmem:[%s295 + $0x2d4] sm:$0xf]
      %v509 = vld [vmem:[%s295 + $0x2d8] sm:$0xf]
      %v510 = vld [vmem:[%s295 + $0x2dc] sm:$0xf]
      %v511 = vld [vmem:[%s295 + $0x2e0] sm:$0xf]
      %v512 = vld [vmem:[%s295 + $0x2e4] sm:$0xf]
      %v513 = vld [vmem:[%s295 + $0x2e8] sm:$0xf]
      %v514 = vld [vmem:[%s295 + $0x2ec] sm:$0xf]
      %v515 = vld [vmem:[%s295 + $0x2f0] sm:$0xf]
      %v516 = vld [vmem:[%s295 + $0x2f4] sm:$0xf]
      %v517 = vld [vmem:[%s295 + $0x2f8] sm:$0xf]
      %v518 = vld [vmem:[%s295 + $0x2fc] sm:$0xf]
      %v519 = vld [vmem:[%s295 + $0x300] sm:$0xf]
      %v520 = vld [vmem:[%s295 + $0x304] sm:$0xf]
      %v521 = vld [vmem:[%s295 + $0x308] sm:$0xf]
      %v522 = vld [vmem:[%s295 + $0x30c] sm:$0xf]
      %v523 = vld [vmem:[%s295 + $0x310] sm:$0xf]
      %v524 = vld [vmem:[%s295 + $0x314] sm:$0xf]
      %v525 = vld [vmem:[%s295 + $0x318] sm:$0xf]
      %v526 = vld [vmem:[%s295 + $0x31c] sm:$0xf]
      %v527 = vld [vmem:[%s295 + $0x320] sm:$0xf]
      %v528 = vld [vmem:[%s295 + $0x324] sm:$0xf]
      %v529 = vld [vmem:[%s295 + $0x328] sm:$0xf]
      %v530 = vld [vmem:[%s295 + $0x32c] sm:$0xf]
      %v531 = vld [vmem:[%s295 + $0x330] sm:$0xf]
      %v532 = vld [vmem:[%s295 + $0x334] sm:$0xf]
      %v533 = vld [vmem:[%s295 + $0x338] sm:$0xf]
      %v534 = vld [vmem:[%s295 + $0x33c] sm:$0xf]
      %v542 = vunpack.c.l.b16 %v320
      %v543 = vunpack.c.h.b16 %v320
      %v544 = vunpack.c.l.b16 %v321
      %v545 = vunpack.c.h.b16 %v321
      %v546 = vunpack.c.l.b16 %v322
      %v547 = vunpack.c.h.b16 %v322
      %v548 = vunpack.c.l.b16 %v323
      %v549 = vunpack.c.h.b16 %v323
      %v550 = vunpack.c.l.b16 %v324
      %v551 = vunpack.c.h.b16 %v324
      %v552 = vunpack.c.l.b16 %v325
      %v553 = vunpack.c.h.b16 %v325
      %v554 = vunpack.c.l.b16 %v326
      %v555 = vpack.c.b16 %v542, %v542
      %v556 = vpack.c.b16 %v543, %v543
      %v557 = vpack.c.b16 %v544, %v544
      %v558 = vpack.c.b16 %v545, %v545
      %v559 = vpack.c.b16 %v546, %v546
      %v560 = vpack.c.b16 %v547, %v547
      %v561 = vpack.c.b16 %v548, %v548
      %v562 = vpack.c.b16 %v549, %v549
      %v563 = vpack.c.b16 %v550, %v550
      %v564 = vpack.c.b16 %v551, %v551
      %v565 = vpack.c.b16 %v552, %v552
      %v566 = vpack.c.b16 %v553, %v553
      %v567 = vpack.c.b16 %v554, %v554
      %v789 = vunpack.c.l.b16 %v327
      %v790 = vunpack.c.l.b16 %v328
      %v791 = vunpack.c.l.b16 %v329
      %v792 = vunpack.c.l.b16 %v330
      %v793 = vunpack.c.l.b16 %v331
      %v794 = vunpack.c.l.b16 %v332
      %v795 = vunpack.c.l.b16 %v333
      %v796 = vunpack.c.l.b16 %v334
      %v797 = vunpack.c.l.b16 %v335
      %v798 = vunpack.c.l.b16 %v336
      %v799 = vunpack.c.l.b16 %v337
      %v800 = vunpack.c.l.b16 %v338
      %v801 = vunpack.c.l.b16 %v339
      %v802 = vunpack.c.l.b16 %v340
      %v803 = vunpack.c.l.b16 %v341
      %v804 = vunpack.c.l.b16 %v342
      %v805 = vunpack.c.l.b16 %v343
      %v806 = vunpack.c.l.b16 %v344
      %v807 = vunpack.c.l.b16 %v345
      %v808 = vunpack.c.l.b16 %v346
      %v809 = vunpack.c.l.b16 %v347
      %v810 = vunpack.c.l.b16 %v348
      %v811 = vunpack.c.l.b16 %v349
      %v812 = vunpack.c.l.b16 %v350
      %v813 = vunpack.c.l.b16 %v351
      %v814 = vunpack.c.l.b16 %v352
      %v815 = vunpack.c.l.b16 %v353
      %v816 = vunpack.c.l.b16 %v354
      %v817 = vunpack.c.l.b16 %v355
      %v818 = vunpack.c.l.b16 %v356
      %v819 = vunpack.c.l.b16 %v357
      %v820 = vunpack.c.l.b16 %v358
      %v821 = vunpack.c.l.b16 %v359
      %v822 = vunpack.c.l.b16 %v360
      %v823 = vunpack.c.l.b16 %v361
      %v824 = vunpack.c.l.b16 %v362
      %v825 = vunpack.c.l.b16 %v363
      %v826 = vunpack.c.l.b16 %v364
      %v827 = vunpack.c.l.b16 %v365
      %v828 = vunpack.c.l.b16 %v366
      %v829 = vunpack.c.l.b16 %v367
      %v830 = vunpack.c.l.b16 %v368
      %v831 = vunpack.c.l.b16 %v369
      %v832 = vunpack.c.l.b16 %v370
      %v833 = vunpack.c.l.b16 %v371
      %v834 = vunpack.c.l.b16 %v372
      %v835 = vunpack.c.l.b16 %v373
      %v836 = vunpack.c.l.b16 %v374
      %v837 = vunpack.c.l.b16 %v375
      %v838 = vunpack.c.l.b16 %v376
      %v839 = vunpack.c.l.b16 %v377
      %v840 = vunpack.c.l.b16 %v378
      %v841 = vunpack.c.l.b16 %v379
      %v842 = vunpack.c.l.b16 %v380
      %v843 = vunpack.c.l.b16 %v381
      %v844 = vunpack.c.l.b16 %v382
      %v845 = vunpack.c.l.b16 %v383
      %v846 = vunpack.c.l.b16 %v384
      %v847 = vunpack.c.l.b16 %v385
      %v848 = vunpack.c.l.b16 %v386
      %v849 = vunpack.c.l.b16 %v387
      %v850 = vunpack.c.l.b16 %v388
      %v851 = vunpack.c.l.b16 %v389
      %v852 = vunpack.c.l.b16 %v390
      %v853 = vunpack.c.l.b16 %v391
      %v854 = vunpack.c.l.b16 %v392
      %v855 = vunpack.c.l.b16 %v393
      %v856 = vunpack.c.l.b16 %v394
      %v857 = vunpack.c.l.b16 %v395
      %v858 = vunpack.c.l.b16 %v396
      %v859 = vunpack.c.l.b16 %v397
      %v860 = vunpack.c.l.b16 %v398
      %v861 = vunpack.c.l.b16 %v399
      %v862 = vunpack.c.l.b16 %v400
      %v863 = vunpack.c.l.b16 %v401
      %v864 = vunpack.c.l.b16 %v402
      %v865 = vunpack.c.l.b16 %v403
      %v866 = vunpack.c.l.b16 %v404
      %v867 = vunpack.c.l.b16 %v405
      %v868 = vunpack.c.l.b16 %v406
      %v869 = vunpack.c.l.b16 %v407
      %v870 = vunpack.c.l.b16 %v408
      %v871 = vunpack.c.l.b16 %v409
      %v872 = vunpack.c.l.b16 %v410
      %v873 = vunpack.c.l.b16 %v411
      %v874 = vunpack.c.l.b16 %v412
      %v875 = vunpack.c.l.b16 %v413
      %v876 = vunpack.c.l.b16 %v414
      %v877 = vunpack.c.l.b16 %v415
      %v878 = vunpack.c.l.b16 %v416
      %v879 = vunpack.c.l.b16 %v417
      %v880 = vunpack.c.l.b16 %v418
      %v881 = vunpack.c.l.b16 %v419
      %v882 = vunpack.c.l.b16 %v420
      %v883 = vunpack.c.l.b16 %v421
      %v884 = vunpack.c.l.b16 %v422
      %v885 = vunpack.c.l.b16 %v423
      %v886 = vunpack.c.l.b16 %v424
      %v887 = vunpack.c.l.b16 %v425
      %v888 = vunpack.c.l.b16 %v426
      %v889 = vunpack.c.l.b16 %v427
      %v890 = vunpack.c.l.b16 %v428
      %v891 = vunpack.c.l.b16 %v429
      %v892 = vunpack.c.l.b16 %v430
      %v893 = vunpack.c.l.b16 %v431
      %v894 = vunpack.c.l.b16 %v432
      %v895 = vunpack.c.l.b16 %v433
      %v896 = vunpack.c.l.b16 %v434
      %v897 = vunpack.c.l.b16 %v435
      %v898 = vunpack.c.l.b16 %v436
      %v899 = vunpack.c.l.b16 %v437
      %v900 = vunpack.c.l.b16 %v438
      %v901 = vunpack.c.l.b16 %v439
      %v902 = vunpack.c.l.b16 %v440
      %v903 = vunpack.c.l.b16 %v441
      %v904 = vunpack.c.l.b16 %v442
      %v905 = vunpack.c.l.b16 %v443
      %v906 = vunpack.c.l.b16 %v444
      %v907 = vunpack.c.l.b16 %v445
      %v908 = vunpack.c.l.b16 %v446
      %v909 = vunpack.c.l.b16 %v447
      %v910 = vunpack.c.l.b16 %v448
      %v911 = vunpack.c.l.b16 %v449
      %v912 = vunpack.c.l.b16 %v450
      %v913 = vunpack.c.l.b16 %v451
      %v914 = vunpack.c.l.b16 %v452
      %v915 = vunpack.c.l.b16 %v453
      %v916 = vunpack.c.l.b16 %v454
      %v917 = vunpack.c.l.b16 %v455
      %v918 = vunpack.c.l.b16 %v456
      %v919 = vunpack.c.l.b16 %v457
      %v920 = vunpack.c.l.b16 %v458
      %v921 = vunpack.c.l.b16 %v459
      %v922 = vunpack.c.l.b16 %v460
      %v923 = vunpack.c.l.b16 %v461
      %v924 = vunpack.c.l.b16 %v462
      %v925 = vunpack.c.l.b16 %v463
      %v926 = vunpack.c.l.b16 %v464
      %v927 = vunpack.c.l.b16 %v465
      %v928 = vunpack.c.l.b16 %v466
      %v929 = vunpack.c.l.b16 %v467
      %v930 = vunpack.c.l.b16 %v468
      %v931 = vunpack.c.l.b16 %v469
      %v932 = vunpack.c.l.b16 %v470
      %v933 = vunpack.c.l.b16 %v471
      %v934 = vunpack.c.l.b16 %v472
      %v935 = vunpack.c.l.b16 %v473
      %v936 = vunpack.c.l.b16 %v474
      %v937 = vunpack.c.l.b16 %v475
      %v938 = vunpack.c.l.b16 %v476
      %v939 = vunpack.c.l.b16 %v477
      %v940 = vunpack.c.l.b16 %v478
      %v941 = vunpack.c.l.b16 %v479
      %v942 = vunpack.c.l.b16 %v480
      %v943 = vunpack.c.l.b16 %v481
      %v944 = vunpack.c.l.b16 %v482
      %v945 = vunpack.c.l.b16 %v483
      %v946 = vunpack.c.l.b16 %v484
      %v947 = vunpack.c.l.b16 %v485
      %v948 = vunpack.c.l.b16 %v486
      %v949 = vunpack.c.l.b16 %v487
      %v950 = vunpack.c.l.b16 %v488
      %v951 = vunpack.c.l.b16 %v489
      %v952 = vunpack.c.l.b16 %v490
      %v953 = vunpack.c.l.b16 %v491
      %v954 = vunpack.c.l.b16 %v492
      %v955 = vunpack.c.l.b16 %v493
      %v956 = vunpack.c.l.b16 %v494
      %v957 = vunpack.c.l.b16 %v495
      %v958 = vunpack.c.l.b16 %v496
      %v959 = vunpack.c.l.b16 %v497
      %v960 = vunpack.c.l.b16 %v498
      %v961 = vunpack.c.l.b16 %v499
      %v962 = vunpack.c.l.b16 %v500
      %v963 = vunpack.c.l.b16 %v501
      %v964 = vunpack.c.l.b16 %v502
      %v965 = vunpack.c.l.b16 %v503
      %v966 = vunpack.c.l.b16 %v504
      %v967 = vunpack.c.l.b16 %v505
      %v968 = vunpack.c.l.b16 %v506
      %v969 = vunpack.c.l.b16 %v507
      %v970 = vunpack.c.l.b16 %v508
      %v971 = vunpack.c.l.b16 %v509
      %v972 = vunpack.c.l.b16 %v510
      %v973 = vunpack.c.l.b16 %v511
      %v974 = vunpack.c.l.b16 %v512
      %v975 = vunpack.c.l.b16 %v513
      %v976 = vunpack.c.l.b16 %v514
      %v977 = vunpack.c.l.b16 %v515
      %v978 = vunpack.c.l.b16 %v516
      %v979 = vunpack.c.l.b16 %v517
      %v980 = vunpack.c.l.b16 %v518
      %v981 = vunpack.c.l.b16 %v519
      %v982 = vunpack.c.l.b16 %v520
      %v983 = vunpack.c.l.b16 %v521
      %v984 = vunpack.c.l.b16 %v522
      %v985 = vunpack.c.l.b16 %v523
      %v986 = vunpack.c.l.b16 %v524
      %v987 = vunpack.c.l.b16 %v525
      %v988 = vunpack.c.l.b16 %v526
      %v989 = vunpack.c.l.b16 %v527
      %v990 = vunpack.c.l.b16 %v528
      %v991 = vunpack.c.l.b16 %v529
      %v992 = vunpack.c.l.b16 %v530
      %v993 = vunpack.c.l.b16 %v531
      %v994 = vunpack.c.l.b16 %v532
      %v995 = vunpack.c.l.b16 %v533
      %v996 = vunpack.c.l.b16 %v534
      %v997 = vpack.c.b16 %v790, %v789
      %v998 = vpack.c.b16 %v792, %v791
      %v999 = vpack.c.b16 %v794, %v793
      %v1000 = vpack.c.b16 %v796, %v795
      %v1001 = vpack.c.b16 %v798, %v797
      %v1002 = vpack.c.b16 %v800, %v799
      %v1003 = vpack.c.b16 %v802, %v801
      %v1004 = vpack.c.b16 %v804, %v803
      %v1005 = vpack.c.b16 %v806, %v805
      %v1006 = vpack.c.b16 %v808, %v807
      %v1007 = vpack.c.b16 %v810, %v809
      %v1008 = vpack.c.b16 %v812, %v811
      %v1009 = vpack.c.b16 %v814, %v813
      %v1010 = vpack.c.b16 %v816, %v815
      %v1011 = vpack.c.b16 %v818, %v817
      %v1012 = vpack.c.b16 %v820, %v819
      %v1013 = vpack.c.b16 %v822, %v821
      %v1014 = vpack.c.b16 %v824, %v823
      %v1015 = vpack.c.b16 %v826, %v825
      %v1016 = vpack.c.b16 %v828, %v827
      %v1017 = vpack.c.b16 %v830, %v829
      %v1018 = vpack.c.b16 %v832, %v831
      %v1019 = vpack.c.b16 %v834, %v833
      %v1020 = vpack.c.b16 %v836, %v835
      %v1021 = vpack.c.b16 %v838, %v837
      %v1022 = vpack.c.b16 %v840, %v839
      %v1023 = vpack.c.b16 %v842, %v841
      %v1024 = vpack.c.b16 %v844, %v843
      %v1025 = vpack.c.b16 %v846, %v845
      %v1026 = vpack.c.b16 %v848, %v847
      %v1027 = vpack.c.b16 %v850, %v849
      %v1028 = vpack.c.b16 %v852, %v851
      %v1029 = vpack.c.b16 %v854, %v853
      %v1030 = vpack.c.b16 %v856, %v855
      %v1031 = vpack.c.b16 %v858, %v857
      %v1032 = vpack.c.b16 %v860, %v859
      %v1033 = vpack.c.b16 %v862, %v861
      %v1034 = vpack.c.b16 %v864, %v863
      %v1035 = vpack.c.b16 %v866, %v865
      %v1036 = vpack.c.b16 %v868, %v867
      %v1037 = vpack.c.b16 %v870, %v869
      %v1038 = vpack.c.b16 %v872, %v871
      %v1039 = vpack.c.b16 %v874, %v873
      %v1040 = vpack.c.b16 %v876, %v875
      %v1041 = vpack.c.b16 %v878, %v877
      %v1042 = vpack.c.b16 %v880, %v879
      %v1043 = vpack.c.b16 %v882, %v881
      %v1044 = vpack.c.b16 %v884, %v883
      %v1045 = vpack.c.b16 %v886, %v885
      %v1046 = vpack.c.b16 %v888, %v887
      %v1047 = vpack.c.b16 %v890, %v889
      %v1048 = vpack.c.b16 %v892, %v891
      %v1049 = vpack.c.b16 %v894, %v893
      %v1050 = vpack.c.b16 %v896, %v895
      %v1051 = vpack.c.b16 %v898, %v897
      %v1052 = vpack.c.b16 %v900, %v899
      %v1053 = vpack.c.b16 %v902, %v901
      %v1054 = vpack.c.b16 %v904, %v903
      %v1055 = vpack.c.b16 %v906, %v905
      %v1056 = vpack.c.b16 %v908, %v907
      %v1057 = vpack.c.b16 %v910, %v909
      %v1058 = vpack.c.b16 %v912, %v911
      %v1059 = vpack.c.b16 %v914, %v913
      %v1060 = vpack.c.b16 %v916, %v915
      %v1061 = vpack.c.b16 %v918, %v917
      %v1062 = vpack.c.b16 %v920, %v919
      %v1063 = vpack.c.b16 %v922, %v921
      %v1064 = vpack.c.b16 %v924, %v923
      %v1065 = vpack.c.b16 %v926, %v925
      %v1066 = vpack.c.b16 %v928, %v927
      %v1067 = vpack.c.b16 %v930, %v929
      %v1068 = vpack.c.b16 %v932, %v931
      %v1069 = vpack.c.b16 %v934, %v933
      %v1070 = vpack.c.b16 %v936, %v935
      %v1071 = vpack.c.b16 %v938, %v937
      %v1072 = vpack.c.b16 %v940, %v939
      %v1073 = vpack.c.b16 %v942, %v941
      %v1074 = vpack.c.b16 %v944, %v943
      %v1075 = vpack.c.b16 %v946, %v945
      %v1076 = vpack.c.b16 %v948, %v947
      %v1077 = vpack.c.b16 %v950, %v949
      %v1078 = vpack.c.b16 %v952, %v951
      %v1079 = vpack.c.b16 %v954, %v953
      %v1080 = vpack.c.b16 %v956, %v955
      %v1081 = vpack.c.b16 %v958, %v957
      %v1082 = vpack.c.b16 %v960, %v959
      %v1083 = vpack.c.b16 %v962, %v961
      %v1084 = vpack.c.b16 %v964, %v963
      %v1085 = vpack.c.b16 %v966, %v965
      %v1086 = vpack.c.b16 %v968, %v967
      %v1087 = vpack.c.b16 %v970, %v969
      %v1088 = vpack.c.b16 %v972, %v971
      %v1089 = vpack.c.b16 %v974, %v973
      %v1090 = vpack.c.b16 %v976, %v975
      %v1091 = vpack.c.b16 %v978, %v977
      %v1092 = vpack.c.b16 %v980, %v979
      %v1093 = vpack.c.b16 %v982, %v981
      %v1094 = vpack.c.b16 %v984, %v983
      %v1095 = vpack.c.b16 %v986, %v985
      %v1096 = vpack.c.b16 %v988, %v987
      %v1097 = vpack.c.b16 %v990, %v989
      %v1098 = vpack.c.b16 %v992, %v991
      %v1099 = vpack.c.b16 %v994, %v993
      %v1100 = vpack.c.b16 %v996, %v995
      %1205 = vmatprep.subr.bf16.mxu0 0
      %1206 = vmatpush1.bf16.msra.mxu0 %v997
      %1207 = vmatprep.subr.bf16.mxu0 0
      %1208 = vmatpush1.bf16.msra.mxu0 %v998
      %1209 = vmatprep.subr.bf16.mxu0 0
      %1210 = vmatpush1.bf16.msra.mxu0 %v999
      %1211 = vmatprep.subr.bf16.mxu0 0
      %1212 = vmatpush1.bf16.msra.mxu0 %v1000
      %1213 = vmatprep.subr.bf16.mxu0 0
      %1214 = vmatpush1.bf16.msra.mxu0 %v1001
      %1215 = vmatprep.subr.bf16.mxu0 0
      %1216 = vmatpush1.bf16.msra.mxu0 %v1002
      %1217 = vmatprep.subr.bf16.mxu0 0
      %1218 = vmatpush1.bf16.msra.mxu0 %v1003
      %1219 = vmatprep.subr.bf16.mxu0 0
      %1220 = vmatpush1.bf16.msra.mxu0 %v1004
      %1221 = vmatprep.subr.bf16.mxu0 0
      %1222 = vmatpush1.bf16.msra.mxu0 %v1005
      %1223 = vmatprep.subr.bf16.mxu0 0
      %1224 = vmatpush1.bf16.msra.mxu0 %v1006
      %1225 = vmatprep.subr.bf16.mxu0 0
      %1226 = vmatpush1.bf16.msra.mxu0 %v1007
      %1227 = vmatprep.subr.bf16.mxu0 0
      %1228 = vmatpush1.bf16.msra.mxu0 %v1008
      %1229 = vmatprep.subr.bf16.mxu0 0
      %1230 = vmatpush1.bf16.msra.mxu0 %v1009
      %1231 = vmatprep.subr.bf16.mxu0 0
      %1232 = vmatpush1.bf16.msra.mxu0 %v1010
      %1233 = vmatprep.subr.bf16.mxu0 0
      %1234 = vmatpush1.bf16.msra.mxu0 %v1011
      %1235 = vmatprep.subr.bf16.mxu0 0
      %1236 = vmatpush1.bf16.msra.mxu0 %v1012
      %1237 = vmatprep.mubr.bf16.mxu0 %v556
      %1238 = vmatmul.mubr.bf16.gmra.mrb[0].mxu0 %v555
      %v1239 = vpop.f32.mrb[0].mxu0
      %v1240 = vadd.f32 0.0, %v1239
      %v1241 = vpop.f32.mrb[0].mxu0
      %v1242 = vpop.f32.mrb[0].mxu0
      %v1243 = vpop.f32.mrb[0].mxu0
      %1244 = vdwg.mxu0
      %1245 = vmatprep.subr.bf16.mxu0 0
      %1246 = vmatpush1.bf16.msra.mxu0 %v1013
      %1247 = vmatprep.subr.bf16.mxu0 0
      %1248 = vmatpush1.bf16.msra.mxu0 %v1014
      %1249 = vmatprep.subr.bf16.mxu0 0
      %1250 = vmatpush1.bf16.msra.mxu0 %v1015
      %1251 = vmatprep.subr.bf16.mxu0 0
      %1252 = vmatpush1.bf16.msra.mxu0 %v1016
      %1253 = vmatprep.subr.bf16.mxu0 0
      %1254 = vmatpush1.bf16.msra.mxu0 %v1017
      %1255 = vmatprep.subr.bf16.mxu0 0
      %1256 = vmatpush1.bf16.msra.mxu0 %v1018
      %1257 = vmatprep.subr.bf16.mxu0 0
      %1258 = vmatpush1.bf16.msra.mxu0 %v1019
      %1259 = vmatprep.subr.bf16.mxu0 0
      %1260 = vmatpush1.bf16.msra.mxu0 %v1020
      %1261 = vmatprep.subr.bf16.mxu0 0
      %1262 = vmatpush1.bf16.msra.mxu0 %v1021
      %1263 = vmatprep.subr.bf16.mxu0 0
      %1264 = vmatpush1.bf16.msra.mxu0 %v1022
      %1265 = vmatprep.subr.bf16.mxu0 0
      %1266 = vmatpush1.bf16.msra.mxu0 %v1023
      %1267 = vmatprep.subr.bf16.mxu0 0
      %1268 = vmatpush1.bf16.msra.mxu0 %v1024
      %1269 = vmatprep.subr.bf16.mxu0 0
      %1270 = vmatpush1.bf16.msra.mxu0 %v1025
      %1271 = vmatprep.subr.bf16.mxu0 0
      %1272 = vmatpush1.bf16.msra.mxu0 %v1026
      %1273 = vmatprep.subr.bf16.mxu0 0
      %1274 = vmatpush1.bf16.msra.mxu0 %v1027
      %1275 = vmatprep.subr.bf16.mxu0 0
      %1276 = vmatpush1.bf16.msra.mxu0 %v1028
      %1277 = vmatprep.mubr.bf16.mxu0 %v558
      %1278 = vmatmul.mubr.bf16.gmra.mrb[0].mxu0 %v557
      %v1279 = vpop.f32.mrb[0].mxu0
      %v1280 = vadd.f32 %v1240, %v1279
      %v1281 = vpop.f32.mrb[0].mxu0
      %v1282 = vpop.f32.mrb[0].mxu0
      %v1283 = vpop.f32.mrb[0].mxu0
      %1284 = vdwg.mxu0
      %1285 = vmatprep.subr.bf16.mxu0 0
      %1286 = vmatpush1.bf16.msra.mxu0 %v1029
      %1287 = vmatprep.subr.bf16.mxu0 0
      %1288 = vmatpush1.bf16.msra.mxu0 %v1030
      %1289 = vmatprep.subr.bf16.mxu0 0
      %1290 = vmatpush1.bf16.msra.mxu0 %v1031
      %1291 = vmatprep.subr.bf16.mxu0 0
      %1292 = vmatpush1.bf16.msra.mxu0 %v1032
      %1293 = vmatprep.subr.bf16.mxu0 0
      %1294 = vmatpush1.bf16.msra.mxu0 %v1033
      %1295 = vmatprep.subr.bf16.mxu0 0
      %1296 = vmatpush1.bf16.msra.mxu0 %v1034
      %1297 = vmatprep.subr.bf16.mxu0 0
      %1298 = vmatpush1.bf16.msra.mxu0 %v1035
      %1299 = vmatprep.subr.bf16.mxu0 0
      %1300 = vmatpush1.bf16.msra.mxu0 %v1036
      %1301 = vmatprep.subr.bf16.mxu0 0
      %1302 = vmatpush1.bf16.msra.mxu0 %v1037
      %1303 = vmatprep.subr.bf16.mxu0 0
      %1304 = vmatpush1.bf16.msra.mxu0 %v1038
      %1305 = vmatprep.subr.bf16.mxu0 0
      %1306 = vmatpush1.bf16.msra.mxu0 %v1039
      %1307 = vmatprep.subr.bf16.mxu0 0
      %1308 = vmatpush1.bf16.msra.mxu0 %v1040
      %1309 = vmatprep.subr.bf16.mxu0 0
      %1310 = vmatpush1.bf16.msra.mxu0 %v1041
      %1311 = vmatprep.subr.bf16.mxu0 0
      %1312 = vmatpush1.bf16.msra.mxu0 %v1042
      %1313 = vmatprep.subr.bf16.mxu0 0
      %1314 = vmatpush1.bf16.msra.mxu0 %v1043
      %1315 = vmatprep.subr.bf16.mxu0 0
      %1316 = vmatpush1.bf16.msra.mxu0 %v1044
      %1317 = vmatprep.mubr.bf16.mxu0 %v560
      %1318 = vmatmul.mubr.bf16.gmra.mrb[0].mxu0 %v559
      %v1319 = vpop.f32.mrb[0].mxu0
      %v1320 = vadd.f32 %v1280, %v1319
      %v1321 = vpop.f32.mrb[0].mxu0
      %v1322 = vpop.f32.mrb[0].mxu0
      %v1323 = vpop.f32.mrb[0].mxu0
      %1324 = vdwg.mxu0
      %1325 = vmatprep.subr.bf16.mxu0 0
      %1326 = vmatpush1.bf16.msra.mxu0 %v1045
      %1327 = vmatprep.subr.bf16.mxu0 0
      %1328 = vmatpush1.bf16.msra.mxu0 %v1046
      %1329 = vmatprep.subr.bf16.mxu0 0
      %1330 = vmatpush1.bf16.msra.mxu0 %v1047
      %1331 = vmatprep.subr.bf16.mxu0 0
      %1332 = vmatpush1.bf16.msra.mxu0 %v1048
      %1333 = vmatprep.subr.bf16.mxu0 0
      %1334 = vmatpush1.bf16.msra.mxu0 %v1049
      %1335 = vmatprep.subr.bf16.mxu0 0
      %1336 = vmatpush1.bf16.msra.mxu0 %v1050
      %1337 = vmatprep.subr.bf16.mxu0 0
      %1338 = vmatpush1.bf16.msra.mxu0 %v1051
      %1339 = vmatprep.subr.bf16.mxu0 0
      %1340 = vmatpush1.bf16.msra.mxu0 %v1052
      %1341 = vmatprep.subr.bf16.mxu0 0
      %1342 = vmatpush1.bf16.msra.mxu0 %v1053
      %1343 = vmatprep.subr.bf16.mxu0 0
      %1344 = vmatpush1.bf16.msra.mxu0 %v1054
      %1345 = vmatprep.subr.bf16.mxu0 0
      %1346 = vmatpush1.bf16.msra.mxu0 %v1055
      %1347 = vmatprep.subr.bf16.mxu0 0
      %1348 = vmatpush1.bf16.msra.mxu0 %v1056
      %1349 = vmatprep.subr.bf16.mxu0 0
      %1350 = vmatpush1.bf16.msra.mxu0 %v1057
      %1351 = vmatprep.subr.bf16.mxu0 0
      %1352 = vmatpush1.bf16.msra.mxu0 %v1058
      %1353 = vmatprep.subr.bf16.mxu0 0
      %1354 = vmatpush1.bf16.msra.mxu0 %v1059
      %1355 = vmatprep.subr.bf16.mxu0 0
      %1356 = vmatpush1.bf16.msra.mxu0 %v1060
      %1357 = vmatprep.mubr.bf16.mxu0 %v562
      %1358 = vmatmul.mubr.bf16.gmra.mrb[0].mxu0 %v561
      %v1359 = vpop.f32.mrb[0].mxu0
      %v1360 = vadd.f32 %v1320, %v1359
      %v1361 = vpop.f32.mrb[0].mxu0
      %v1362 = vpop.f32.mrb[0].mxu0
      %v1363 = vpop.f32.mrb[0].mxu0
      %1364 = vdwg.mxu0
      %1365 = vmatprep.subr.bf16.mxu0 0
      %1366 = vmatpush1.bf16.msra.mxu0 %v1061
      %1367 = vmatprep.subr.bf16.mxu0 0
      %1368 = vmatpush1.bf16.msra.mxu0 %v1062
      %1369 = vmatprep.subr.bf16.mxu0 0
      %1370 = vmatpush1.bf16.msra.mxu0 %v1063
      %1371 = vmatprep.subr.bf16.mxu0 0
      %1372 = vmatpush1.bf16.msra.mxu0 %v1064
      %1373 = vmatprep.subr.bf16.mxu0 0
      %1374 = vmatpush1.bf16.msra.mxu0 %v1065
      %1375 = vmatprep.subr.bf16.mxu0 0
      %1376 = vmatpush1.bf16.msra.mxu0 %v1066
      %1377 = vmatprep.subr.bf16.mxu0 0
      %1378 = vmatpush1.bf16.msra.mxu0 %v1067
      %1379 = vmatprep.subr.bf16.mxu0 0
      %1380 = vmatpush1.bf16.msra.mxu0 %v1068
      %1381 = vmatprep.subr.bf16.mxu0 0
      %1382 = vmatpush1.bf16.msra.mxu0 %v1069
      %1383 = vmatprep.subr.bf16.mxu0 0
      %1384 = vmatpush1.bf16.msra.mxu0 %v1070
      %1385 = vmatprep.subr.bf16.mxu0 0
      %1386 = vmatpush1.bf16.msra.mxu0 %v1071
      %1387 = vmatprep.subr.bf16.mxu0 0
      %1388 = vmatpush1.bf16.msra.mxu0 %v1072
      %1389 = vmatprep.subr.bf16.mxu0 0
      %1390 = vmatpush1.bf16.msra.mxu0 %v1073
      %1391 = vmatprep.subr.bf16.mxu0 0
      %1392 = vmatpush1.bf16.msra.mxu0 %v1074
      %1393 = vmatprep.subr.bf16.mxu0 0
      %1394 = vmatpush1.bf16.msra.mxu0 %v1075
      %1395 = vmatprep.subr.bf16.mxu0 0
      %1396 = vmatpush1.bf16.msra.mxu0 %v1076
      %1397 = vmatprep.mubr.bf16.mxu0 %v564
      %1398 = vmatmul.mubr.bf16.gmra.mrb[0].mxu0 %v563
      %v1399 = vpop.f32.mrb[0].mxu0
      %v1400 = vadd.f32 %v1360, %v1399
      %v1401 = vpop.f32.mrb[0].mxu0
      %v1402 = vpop.f32.mrb[0].mxu0
      %v1403 = vpop.f32.mrb[0].mxu0
      %1404 = vdwg.mxu0
      %1405 = vmatprep.subr.bf16.mxu0 0
      %1406 = vmatpush1.bf16.msra.mxu0 %v1077
      %1407 = vmatprep.subr.bf16.mxu0 0
      %1408 = vmatpush1.bf16.msra.mxu0 %v1078
      %1409 = vmatprep.subr.bf16.mxu0 0
      %1410 = vmatpush1.bf16.msra.mxu0 %v1079
      %1411 = vmatprep.subr.bf16.mxu0 0
      %1412 = vmatpush1.bf16.msra.mxu0 %v1080
      %1413 = vmatprep.subr.bf16.mxu0 0
      %1414 = vmatpush1.bf16.msra.mxu0 %v1081
      %1415 = vmatprep.subr.bf16.mxu0 0
      %1416 = vmatpush1.bf16.msra.mxu0 %v1082
      %1417 = vmatprep.subr.bf16.mxu0 0
      %1418 = vmatpush1.bf16.msra.mxu0 %v1083
      %1419 = vmatprep.subr.bf16.mxu0 0
      %1420 = vmatpush1.bf16.msra.mxu0 %v1084
      %1421 = vmatprep.subr.bf16.mxu0 0
      %1422 = vmatpush1.bf16.msra.mxu0 %v1085
      %1423 = vmatprep.subr.bf16.mxu0 0
      %1424 = vmatpush1.bf16.msra.mxu0 %v1086
      %1425 = vmatprep.subr.bf16.mxu0 0
      %1426 = vmatpush1.bf16.msra.mxu0 %v1087
      %1427 = vmatprep.subr.bf16.mxu0 0
      %1428 = vmatpush1.bf16.msra.mxu0 %v1088
      %1429 = vmatprep.subr.bf16.mxu0 0
      %1430 = vmatpush1.bf16.msra.mxu0 %v1089
      %1431 = vmatprep.subr.bf16.mxu0 0
      %1432 = vmatpush1.bf16.msra.mxu0 %v1090
      %1433 = vmatprep.subr.bf16.mxu0 0
      %1434 = vmatpush1.bf16.msra.mxu0 %v1091
      %1435 = vmatprep.subr.bf16.mxu0 0
      %1436 = vmatpush1.bf16.msra.mxu0 %v1092
      %1437 = vmatprep.mubr.bf16.mxu0 %v566
      %1438 = vmatmul.mubr.bf16.gmra.mrb[0].mxu0 %v565
      %v1439 = vpop.f32.mrb[0].mxu0
      %v1440 = vadd.f32 %v1400, %v1439
      %v1441 = vpop.f32.mrb[0].mxu0
      %v1442 = vpop.f32.mrb[0].mxu0
      %v1443 = vpop.f32.mrb[0].mxu0
      %1444 = vdwg.mxu0
      %1445 = vmatprep.subr.bf16.mxu0 0
      %1446 = vmatpush1.bf16.msra.mxu0 %v1093
      %1447 = vmatprep.subr.bf16.mxu0 0
      %1448 = vmatpush1.bf16.msra.mxu0 %v1094
      %1449 = vmatprep.subr.bf16.mxu0 0
      %1450 = vmatpush1.bf16.msra.mxu0 %v1095
      %1451 = vmatprep.subr.bf16.mxu0 0
      %1452 = vmatpush1.bf16.msra.mxu0 %v1096
      %1453 = vmatprep.subr.bf16.mxu0 0
      %1454 = vmatpush1.bf16.msra.mxu0 %v1097
      %1455 = vmatprep.subr.bf16.mxu0 0
      %1456 = vmatpush1.bf16.msra.mxu0 %v1098
      %1457 = vmatprep.subr.bf16.mxu0 0
      %1458 = vmatpush1.bf16.msra.mxu0 %v1099
      %1459 = vmatprep.subr.bf16.mxu0 0
      %1460 = vmatpush1.bf16.msra.mxu0 %v1100
      %1461 = vmatprep.subr.bf16.mxu0 0
      %1462 = vmatpush1.bf16.msra.mxu0 0
      %1463 = vmatprep.subr.bf16.mxu0 0
      %1464 = vmatpush1.bf16.msra.mxu0 0
      %1465 = vmatprep.subr.bf16.mxu0 0
      %1466 = vmatpush1.bf16.msra.mxu0 0
      %1467 = vmatprep.subr.bf16.mxu0 0
      %1468 = vmatpush1.bf16.msra.mxu0 0
      %1469 = vmatprep.subr.bf16.mxu0 0
      %1470 = vmatpush1.bf16.msra.mxu0 0
      %1471 = vmatprep.subr.bf16.mxu0 0
      %1472 = vmatpush1.bf16.msra.mxu0 0
      %1473 = vmatprep.subr.bf16.mxu0 0
      %1474 = vmatpush1.bf16.msra.mxu0 0
      %1475 = vmatprep.subr.bf16.mxu0 0
      %1476 = vmatpush1.bf16.msra.mxu0 0
      %1477 = vmatprep.mubr.bf16.mxu0 0
      %1478 = vmatmul.mubr.bf16.gmra.mrb[0].mxu0 %v567
      %v1479 = vpop.f32.mrb[0].mxu0
      %v1480 = vadd.f32 %v1440, %v1479
      %v1481 = vpop.f32.mrb[0].mxu0
      %v1482 = vpop.f32.mrb[0].mxu0
      %v1483 = vpop.f32.mrb[0].mxu0
      %1484 = vdwg.mxu0
      %v1485 = vadd.f32 %v319, %v1480
      %1486 = vst [vmem:[#allocation2] sm:$0xff] %v1485
      // Predicated region
      $region37: #{forward.8} parent=31 // pred_check
        %p1487 = pneg %p314
      $region38: #{forward.8} parent=31 // pred_check_branch
        %1489 = sbr.rel (%p1487) target = $region40
      $region39: #{forward.8} parent=31 // pred_region
        %v1490 = vld [vmem:[#allocation2] sm:$0xff]
        %v1491 = vld [vmem:[%s302] sm:$0x1]
        %v1493 = vlaneseq
        %v1494 = vshrl.u32 %v1493, 7
        %v1495 = vsub.s32 0, %v1494
        %v1496 = vrot.slane %v1491, %v1495
        %v1498 = vadd.f32 %v1490, %v1496
        %v1499 = vmax.f32 %v1498, 0.0
        %v1500 = vpack.c.bf16 %v1499, %v1499
        %1501 = vst [vmem:[%s312] sm:$0xf] %v1500
      $region40: #{forward.8} parent=31 // pred_fallthru
        _
      %p1502 = scmp.lt.s32.totalorder %s20, 2
      %s1503 = scalar_select %p1502, %s20, 2
      %p1504 = scmp.lt.s32.totalorder %s21, 0
      %s1505 = scalar_select %p1504, %s21, 0
      %p1506 = scmp.lt.s32.totalorder %s22, 0
      %s1507 = scalar_select %p1506, %s22, 0
      %s1508 = sadd.s32 %s1507, %s1505
      %s1509 = sadd.s32 %s1508, %s1503
      %s1510 = smul.addr %s1509, 4
      %s1511 = scalar_lea.vmem %s3, %s1510
      // Predicated region
      $region41: #{forward.8} parent=31 // pred_check
        %p1512 = pneg %p150
      $region42: #{forward.8} parent=31 // pred_check_branch
        %1514 = sbr.rel (%p1512) target = $region44
      $region43: #{forward.8} parent=31 // pred_region
        _
      $region44: #{forward.8} parent=31 // pred_fallthru
        _
    $region32: #{forward.8} parent=5 // pred_fallthru
      _
    %p1515 = scmp.le.s32.totalorder 2, %s9
    // Predicated region
    $region45: #{forward.8} parent=5 // pred_check
      %p1516 = pneg %p1515
    $region46: #{forward.8} parent=5 // pred_check_branch
      %1518 = sbr.rel (%p1516) target = $region48
    $region47: #{forward.8} parent=5 // pred_region
      %s1519 = ssub.s32 %s9, 2
      // Predicated region
      $region49: #{forward.8} parent=47 // pred_check
        %p1520 = pneg %p156
      $region50: #{forward.8} parent=47 // pred_check_branch
        %1522 = sbr.rel (%p1520) target = $region52
      $region51: #{forward.8} parent=47 // pred_region
        %p1523 = scmp.lt.s32.totalorder %s24, 2
        %s1524 = scalar_select %p1523, %s24, 2
        %p1525 = scmp.lt.s32.totalorder %s25, 0
        %s1526 = scalar_select %p1525, %s25, 0
        %p1527 = scmp.lt.s32.totalorder %s26, 0
        %s1528 = scalar_select %p1527, %s26, 0
        %s1529 = sadd.s32 %s1528, %s1526
        %s1530 = sadd.s32 %s1529, %s1524
        %s1531 = smul.addr %s1530, 4
        %s1532 = scalar_lea.vmem %s3, %s1531
      $region52: #{forward.8} parent=47 // pred_fallthru
        _
    $region48: #{forward.8} parent=5 // pred_fallthru
      _
  $region6: #{forward.8} parent=0 // loop_footer
    %s13 = sadd.s32 1, %s9
  $region7: #{forward.8} parent=0 // loop_footer_branch
    %8 = sbr.rel target = $region3
  $region8: #{forward.8} parent=0 // loop_exit
    _

// kernel: forward.9
$region0: #{forward.9}
  #allocation0 [shape = 'u32[]', space=smem, size = 0x4, offset = 0x4, fixed_abs, tag = 'smem constant byte address 0x4 - core index']
  #allocation1 [shape = 'u32[144,128]{1,0:T(1,128)}', space=vmem, size = 0x12000, scoped, tag = 'internal scratch']
  #allocation2 [shape = 'f32[8,256]{1,0:T(8,128)}', space=vmem, size = 0x2000, scoped, tag = 'scratch operand']
  %s0 = inlined_call_operand.vmem [shape: bf16[3,8,1152], index: 0, kind: input, shape index: {}]
  %s1 = inlined_call_operand.vmem [shape: bf16[3,1152,256], index: 1, kind: input, shape index: {}]
  %s2 = inlined_call_operand.vmem [shape: f32[3,1,256], index: 2, kind: input, shape index: {}]
  %s3 = inlined_call_operand.vmem [shape: bf16[3,8,256], index: 3, kind: output, shape index: {}]
  %s4 = sld [smem:[#allocation0]]
  $region53: #{forward.9} parent=0
    _
  %s6 = ssub.s32 1, %s4
  %s7 = scalar_select 0, %s6, %s4
  loop: start=0, step=1, limit=5
  $region2: #{forward.9} parent=0 // loop_pre_header
    _
  $region3: #{forward.9} parent=0 // loop_header
    %s9 = sphi 0, %s13
    %p10 = scmp.ge.s32.totalorder %s9, 5
    %s16 = sphi 0, %s42
    %s17 = sphi 0, %s38
    %s18 = sphi 0, %s34
    %s19 = sphi 0, %s30
    %s20 = sphi 0, %s16
    %s21 = sphi 0, %s17
    %s22 = sphi 0, %s18
    %s23 = sphi 0, %s19
    %s24 = sphi 0, %s20
    %s25 = sphi 0, %s21
    %s26 = sphi 0, %s22
    %s27 = sphi 0, %s23
    %s49 = sphi 0, %s51
    %s52 = sphi 0, %s49
    %s53 = sphi 0, %s52
    %s69 = sphi 0, %s53
    %s79 = sphi 0, %s81
    %s82 = sphi 0, %s79
    %s83 = sphi 0, %s82
    %s99 = sphi 0, %s83
    %s107 = sphi 0, %s109
    %s110 = sphi 0, %s107
    %s111 = sphi 0, %s110
    %s127 = sphi 0, %s111
    %s137 = sphi 0, %s139
    %s140 = sphi 0, %s137
    %s141 = sphi 0, %s140
    %s157 = sphi 0, %s141
  $region4: #{forward.9} parent=0 // loop_header_branch
    %12 = sbr.rel (%p10) target = $region8
  $region5: #{forward.9} parent=0 // loop_body
    %s14 = ssub.s32 %s9, 1
    %s15 = ssub.s32 %s9, 2
    %s28 = sadd.s32 1, %s19
    %p29 = scmp.ge.s32.totalorder %s28, 1
    %s30 = scalar_select %p29, 0, %s28
    %s31 = sadd.s32 1, %s18
    %s32 = scalar_select %p29, %s31, %s18
    %p33 = scmp.ge.s32.totalorder %s32, 1
    %s34 = scalar_select %p33, 0, %s32
    %s35 = sadd.s32 1, %s17
    %s36 = scalar_select %p33, %s35, %s17
    %p37 = scmp.ge.s32.totalorder %s36, 1
    %s38 = scalar_select %p37, 0, %s36
    %s39 = sadd.s32 1, %s16
    %s40 = scalar_select %p37, %s39, %s16
    %p41 = scmp.ge.s32.totalorder %s40, 3
    %s42 = scalar_select %p41, 0, %s40
    %s43 = ssub.s32 %s16, %s42
    %s44 = ssub.s32 %s17, %s38
    %s45 = sor.u32 %s43, %s44
    %s46 = ssub.s32 %s19, %s30
    %s47 = sor.u32 %s45, %s46
    %p48 = scmp.eq.s32.totalorder %s47, 0
    %s50 = sadd.s32 %s49, 1
    %s51 = scalar_select %p48, %s49, %s50
    %p54 = pneg %p48
    %p55 = scmp.eq.s32.totalorder %s9, 2
    %p56 = por %p54, %p55
    %p57 = scmp.ne.s32.totalorder %s49, %s52
    %p58 = scmp.eq.s32.totalorder %s9, 0
    %p59 = por %p57, %p58
    %p60 = scmp.ne.s32.totalorder %s49, %s52
    %p61 = scmp.eq.s32.totalorder %s14, 2
    %p62 = por %p60, %p61
    %p63 = scmp.ne.s32.totalorder %s52, %s53
    %p64 = scmp.eq.s32.totalorder %s14, 0
    %p65 = por %p63, %p64
    %p66 = scmp.ne.s32.totalorder %s52, %s53
    %p67 = scmp.eq.s32.totalorder %s15, 2
    %p68 = por %p66, %p67
    %p70 = scmp.ne.s32.totalorder %s53, %s69
    %p71 = scmp.eq.s32.totalorder %s15, 0
    %p72 = por %p70, %p71
    %s73 = ssub.s32 %s16, %s42
    %s74 = ssub.s32 %s19, %s30
    %s75 = sor.u32 %s73, %s74
    %s76 = ssub.s32 %s18, %s34
    %s77 = sor.u32 %s75, %s76
    %p78 = scmp.eq.s32.totalorder %s77, 0
    %s80 = sadd.s32 %s79, 1
    %s81 = scalar_select %p78, %s79, %s80
    %p84 = pneg %p78
    %p85 = scmp.eq.s32.totalorder %s9, 2
    %p86 = por %p84, %p85
    %p87 = scmp.ne.s32.totalorder %s79, %s82
    %p88 = scmp.eq.s32.totalorder %s9, 0
    %p89 = por %p87, %p88
    %p90 = scmp.ne.s32.totalorder %s79, %s82
    %p91 = scmp.eq.s32.totalorder %s14, 2
    %p92 = por %p90, %p91
    %p93 = scmp.ne.s32.totalorder %s82, %s83
    %p94 = scmp.eq.s32.totalorder %s14, 0
    %p95 = por %p93, %p94
    %p96 = scmp.ne.s32.totalorder %s82, %s83
    %p97 = scmp.eq.s32.totalorder %s15, 2
    %p98 = por %p96, %p97
    %p100 = scmp.ne.s32.totalorder %s83, %s99
    %p101 = scmp.eq.s32.totalorder %s15, 0
    %p102 = por %p100, %p101
    %s103 = ssub.s32 %s16, %s42
    %s104 = ssub.s32 %s18, %s34
    %s105 = sor.u32 %s103, %s104
    %p106 = scmp.eq.s32.totalorder %s105, 0
    %s108 = sadd.s32 %s107, 1
    %s109 = scalar_select %p106, %s107, %s108
    %p112 = pneg %p106
    %p113 = scmp.eq.s32.totalorder %s9, 2
    %p114 = por %p112, %p113
    %p115 = scmp.ne.s32.totalorder %s107, %s110
    %p116 = scmp.eq.s32.totalorder %s9, 0
    %p117 = por %p115, %p116
    %p118 = scmp.ne.s32.totalorder %s107, %s110
    %p119 = scmp.eq.s32.totalorder %s14, 2
    %p120 = por %p118, %p119
    %p121 = scmp.ne.s32.totalorder %s110, %s111
    %p122 = scmp.eq.s32.totalorder %s14, 0
    %p123 = por %p121, %p122
    %p124 = scmp.ne.s32.totalorder %s110, %s111
    %p125 = scmp.eq.s32.totalorder %s15, 2
    %p126 = por %p124, %p125
    %p128 = scmp.ne.s32.totalorder %s111, %s127
    %p129 = scmp.eq.s32.totalorder %s15, 0
    %p130 = por %p128, %p129
    %s131 = ssub.s32 %s16, %s42
    %s132 = ssub.s32 %s17, %s38
    %s133 = sor.u32 %s131, %s132
    %s134 = ssub.s32 %s18, %s34
    %s135 = sor.u32 %s133, %s134
    %p136 = scmp.eq.s32.totalorder %s135, 0
    %s138 = sadd.s32 %s137, 1
    %s139 = scalar_select %p136, %s137, %s138
    %p142 = pneg %p136
    %p143 = scmp.eq.s32.totalorder %s9, 2
    %p144 = por %p142, %p143
    %p145 = scmp.ne.s32.totalorder %s137, %s140
    %p146 = scmp.eq.s32.totalorder %s9, 0
    %p147 = por %p145, %p146
    %p148 = scmp.ne.s32.totalorder %s137, %s140
    %p149 = scmp.eq.s32.totalorder %s14, 2
    %p150 = por %p148, %p149
    %p151 = scmp.ne.s32.totalorder %s140, %s141
    %p152 = scmp.eq.s32.totalorder %s14, 0
    %p153 = por %p151, %p152
    %p154 = scmp.ne.s32.totalorder %s140, %s141
    %p155 = scmp.eq.s32.totalorder %s15, 2
    %p156 = por %p154, %p155
    %p158 = scmp.ne.s32.totalorder %s141, %s157
    %p159 = scmp.eq.s32.totalorder %s15, 0
    %p160 = por %p158, %p159
    %p161 = scmp.le.s32.totalorder 1, %s9
    %p162 = scmp.lt.s32.totalorder %s9, 4
    %p163 = pnand %p161, %p162
    %p164 = pneg %p163
    // Predicated region
    $region9: #{forward.9} parent=5 // pred_check
      _
    $region10: #{forward.9} parent=5 // pred_check_branch
      %166 = sbr.rel (%p163) target = $region12
    $region11: #{forward.9} parent=5 // pred_region
      %s167 = ssub.s32 %s9, 1
    $region12: #{forward.9} parent=5 // pred_fallthru
      _
    %p168 = scmp.lt.s32.totalorder %s9, 3
    // Predicated region
    $region13: #{forward.9} parent=5 // pred_check
      %p169 = pneg %p168
    $region14: #{forward.9} parent=5 // pred_check_branch
      %171 = sbr.rel (%p169) target = $region16
    $region15: #{forward.9} parent=5 // pred_region
      // Predicated region
      $region17: #{forward.9} parent=15 // pred_check
        %p172 = pneg %p59
      $region18: #{forward.9} parent=15 // pred_check_branch
        %174 = sbr.rel (%p172) target = $region20
      $region19: #{forward.9} parent=15 // pred_region
        %s175 = smul.u32 9, %s19
        %p176 = scmp.lt.s32.totalorder %s16, 2
        %s177 = scalar_select %p176, %s16, 2
        %p178 = scmp.lt.s32.totalorder %s17, 0
        %s179 = scalar_select %p178, %s17, 0
        %p180 = scmp.lt.s32.totalorder %s175, 8
        %s181 = scalar_select %p180, %s175, 8
        %s182 = smul.addr %s179, 9
        %s183 = sadd.s32 %s181, %s182
        %s184 = smul.addr %s177, 9
        %s185 = sadd.s32 %s183, %s184
        %s186 = smul.addr %s185, 4
        %s187 = scalar_lea.vmem %s0, %s186
        %s188 = smul.u32 9, %s19
      $region20: #{forward.9} parent=15 // pred_fallthru
        _
      // Predicated region
      $region21: #{forward.9} parent=15 // pred_check
        %p189 = pneg %p89
      $region22: #{forward.9} parent=15 // pred_check_branch
        %191 = sbr.rel (%p189) target = $region24
      $region23: #{forward.9} parent=15 // pred_region
        %s192 = smul.u32 144, %s19
        %s193 = smul.u32 2, %s18
        %p194 = scmp.lt.s32.totalorder %s16, 2
        %s195 = scalar_select %p194, %s16, 2
        %p196 = scmp.lt.s32.totalorder %s192, 143
        %s197 = scalar_select %p196, %s192, 143
        %p198 = scmp.lt.s32.totalorder %s193, 1
        %s199 = scalar_select %p198, %s193, 1
        %s200 = smul.addr %s197, 2
        %s201 = sadd.s32 %s199, %s200
        %s202 = smul.addr %s195, 288
        %s203 = sadd.s32 %s201, %s202
        %s204 = smul.addr %s203, 4
        %s205 = scalar_lea.vmem %s1, %s204
        %s206 = smul.u32 144, %s19
        %s207 = smul.u32 2, %s18
      $region24: #{forward.9} parent=15 // pred_fallthru
        _
      // Predicated region
      $region25: #{forward.9} parent=15 // pred_check
        %p208 = pneg %p117
      $region26: #{forward.9} parent=15 // pred_check_branch
        %210 = sbr.rel (%p208) target = $region28
      $region27: #{forward.9} parent=15 // pred_region
        %s211 = smul.u32 2, %s18
        %p212 = scmp.lt.s32.totalorder %s16, 2
        %s213 = scalar_select %p212, %s16, 2
        %p214 = scmp.lt.s32.totalorder %s211, 1
        %s215 = scalar_select %p214, %s211, 1
        %s216 = smul.addr %s213, 2
        %s217 = sadd.s32 %s215, %s216
        %s218 = scalar_lea.vmem %s2, %s217
        %s219 = smul.u32 2, %s18
      $region28: #{forward.9} parent=15 // pred_fallthru
        _
    $region16: #{forward.9} parent=5 // pred_fallthru
      _
    %p220 = scmp.le.s32.totalorder 1, %s9
    %p221 = scmp.lt.s32.totalorder %s9, 4
    %p222 = pnand %p220, %p221
    %p223 = pneg %p222
    // Predicated region
    $region29: #{forward.9} parent=5 // pred_check
      _
    $region30: #{forward.9} parent=5 // pred_check_branch
      %225 = sbr.rel (%p222) target = $region32
    $region31: #{forward.9} parent=5 // pred_region
      %s226 = ssub.s32 %s9, 1
      %s227 = smul.u32 9, %s23
      %p228 = scmp.lt.s32.totalorder %s20, 2
      %s229 = scalar_select %p228, %s20, 2
      %p230 = scmp.lt.s32.totalorder %s21, 0
      %s231 = scalar_select %p230, %s21, 0
      %p232 = scmp.lt.s32.totalorder %s227, 8
      %s233 = scalar_select %p232, %s227, 8
      %s234 = smul.addr %s231, 9
      %s235 = sadd.s32 %s233, %s234
      %s236 = smul.addr %s229, 9
      %s237 = sadd.s32 %s235, %s236
      %s238 = smul.addr %s237, 4
      %s239 = scalar_lea.vmem %s0, %s238
      %p240 = pneg %p65
      %p241 = pneg %p62
      %s242 = smul.u32 144, %s23
      %s243 = smul.u32 2, %s22
      %p244 = scmp.lt.s32.totalorder %s20, 2
      %s245 = scalar_select %p244, %s20, 2
      %p246 = scmp.lt.s32.totalorder %s242, 143
      %s247 = scalar_select %p246, %s242, 143
      %p248 = scmp.lt.s32.totalorder %s243, 1
      %s249 = scalar_select %p248, %s243, 1
      %s250 = smul.addr %s247, 2
      %s251 = sadd.s32 %s249, %s250
      %s252 = smul.addr %s245, 288
      %s253 = sadd.s32 %s251, %s252
      %s254 = smul.addr %s253, 4
      %s255 = scalar_lea.vmem %s1, %s254
      %p256 = pneg %p95
      %p257 = pneg %p92
      %s258 = smul.u32 2, %s22
      %p259 = scmp.lt.s32.totalorder %s20, 2
      %s260 = scalar_select %p259, %s20, 2
      %p261 = scmp.lt.s32.totalorder %s258, 1
      %s262 = scalar_select %p261, %s258, 1
      %s263 = smul.addr %s260, 2
      %s264 = sadd.s32 %s262, %s263
      %s265 = scalar_lea.vmem %s2, %s264
      %p266 = pneg %p123
      %p267 = pneg %p120
      %p268 = pneg %p153
      %p269 = pneg %p150
      %s270 = smul.u32 2, %s22
      %p271 = scmp.lt.s32.totalorder %s20, 2
      %s272 = scalar_select %p271, %s20, 2
      %p273 = scmp.lt.s32.totalorder %s21, 0
      %s274 = scalar_select %p273, %s21, 0
      %p275 = scmp.lt.s32.totalorder %s270, 1
      %s276 = scalar_select %p275, %s270, 1
      %s277 = smul.addr %s274, 2
      %s278 = sadd.s32 %s276, %s277
      %s279 = smul.addr %s272, 2
      %s280 = sadd.s32 %s278, %s279
      %s281 = smul.addr %s280, 4
      %s282 = scalar_lea.vmem %s3, %s281
      %s283 = smul.u32 9, %s23
      %p284 = scmp.lt.s32.totalorder %s20, 2
      %s285 = scalar_select %p284, %s20, 2
      %p286 = scmp.lt.s32.totalorder %s21, 0
      %s287 = scalar_select %p286, %s21, 0
      %p288 = scmp.lt.s32.totalorder %s283, 8
      %s289 = scalar_select %p288, %s283, 8
      %s290 = smul.addr %s287, 9
      %s291 = sadd.s32 %s289, %s290
      %s292 = smul.addr %s285, 9
      %s293 = sadd.s32 %s291, %s292
      %s294 = smul.addr %s293, 4
      %s295 = scalar_lea.vmem %s0, %s294
      %s296 = smul.u32 9, %s23
      %s297 = smul.u32 144, %s23
      %s298 = smul.u32 2, %s22
      %p299 = scmp.lt.s32.totalorder %s20, 2
      %s300 = scalar_select %p299, %s20, 2
      %p301 = scmp.lt.s32.totalorder %s297, 143
      %s302 = scalar_select %p301, %s297, 143
      %p303 = scmp.lt.s32.totalorder %s298, 1
      %s304 = scalar_select %p303, %s298, 1
      %s305 = smul.addr %s302, 2
      %s306 = sadd.s32 %s304, %s305
      %s307 = smul.addr %s300, 288
      %s308 = sadd.s32 %s306, %s307
      %s309 = smul.addr %s308, 4
      %s310 = scalar_lea.vmem %s1, %s309
      %s311 = smul.u32 144, %s23
      %s312 = smul.u32 2, %s22
      %s313 = smul.u32 2, %s22
      %p314 = scmp.lt.s32.totalorder %s20, 2
      %s315 = scalar_select %p314, %s20, 2
      %p316 = scmp.lt.s32.totalorder %s313, 1
      %s317 = scalar_select %p316, %s313, 1
      %s318 = smul.addr %s315, 2
      %s319 = sadd.s32 %s317, %s318
      %s320 = scalar_lea.vmem %s2, %s319
      %s321 = smul.u32 2, %s22
      %s322 = smul.u32 2, %s22
      %p323 = scmp.lt.s32.totalorder %s20, 2
      %s324 = scalar_select %p323, %s20, 2
      %p325 = scmp.lt.s32.totalorder %s21, 0
      %s326 = scalar_select %p325, %s21, 0
      %p327 = scmp.lt.s32.totalorder %s322, 1
      %s328 = scalar_select %p327, %s322, 1
      %s329 = smul.addr %s326, 2
      %s330 = sadd.s32 %s328, %s329
      %s331 = smul.addr %s324, 2
      %s332 = sadd.s32 %s330, %s331
      %s333 = smul.addr %s332, 4
      %s334 = scalar_lea.vmem %s3, %s333
      %s335 = smul.u32 2, %s22
      %p337 = scmp.eq.s32.totalorder %s23, 0
      // Predicated region
      $region33: #{forward.9} parent=31 // pred_check
        %p338 = pneg %p337
      $region34: #{forward.9} parent=31 // pred_check_branch
        %340 = sbr.rel (%p338) target = $region36
      $region35: #{forward.9} parent=31 // pred_region
        %341 = vst [vmem:[#allocation2] sm:$0xff] 0.0
        %342 = vst [vmem:[#allocation2 + $0x8] sm:$0xff] 0.0
      $region36: #{forward.9} parent=31 // pred_fallthru
        _
      %v343 = vld [vmem:[#allocation2] sm:$0xff]
      %v344 = vld [vmem:[#allocation2 + $0x8] sm:$0xff]
      %v345 = vld [vmem:[%s295] sm:$0xff]
      %v346 = vld [vmem:[%s295 + $0x8] sm:$0xff]
      %v347 = vld [vmem:[%s295 + $0x10] sm:$0xff]
      %v348 = vld [vmem:[%s295 + $0x18] sm:$0xff]
      %v349 = vld [vmem:[%s295 + $0x20] sm:$0xf]
      %v350 = vld [vmem:[%s310] sm:$0xff]
      %v351 = vld [vmem:[%s310 + $0x8] sm:$0xff]
      %v352 = vld [vmem:[%s310 + $0x10] sm:$0xff]
      %v353 = vld [vmem:[%s310 + $0x18] sm:$0xff]
      %v354 = vld [vmem:[%s310 + $0x20] sm:$0xff]
      %v355 = vld [vmem:[%s310 + $0x28] sm:$0xff]
      %v356 = vld [vmem:[%s310 + $0x30] sm:$0xff]
      %v357 = vld [vmem:[%s310 + $0x38] sm:$0xff]
      %v358 = vld [vmem:[%s310 + $0x40] sm:$0xff]
      %v359 = vld [vmem:[%s310 + $0x48] sm:$0xff]
      %v360 = vld [vmem:[%s310 + $0x50] sm:$0xff]
      %v361 = vld [vmem:[%s310 + $0x58] sm:$0xff]
      %v362 = vld [vmem:[%s310 + $0x60] sm:$0xff]
      %v363 = vld [vmem:[%s310 + $0x68] sm:$0xff]
      %v364 = vld [vmem:[%s310 + $0x70] sm:$0xff]
      %v365 = vld [vmem:[%s310 + $0x78] sm:$0xff]
      %v366 = vld [vmem:[%s310 + $0x80] sm:$0xff]
      %v367 = vld [vmem:[%s310 + $0x88] sm:$0xff]
      %v368 = vld [vmem:[%s310 + $0x90] sm:$0xff]
      %v369 = vld [vmem:[%s310 + $0x98] sm:$0xff]
      %v370 = vld [vmem:[%s310 + $0xa0] sm:$0xff]
      %v371 = vld [vmem:[%s310 + $0xa8] sm:$0xff]
      %v372 = vld [vmem:[%s310 + $0xb0] sm:$0xff]
      %v373 = vld [vmem:[%s310 + $0xb8] sm:$0xff]
      %v374 = vld [vmem:[%s310 + $0xc0] sm:$0xff]
      %v375 = vld [vmem:[%s310 + $0xc8] sm:$0xff]
      %v376 = vld [vmem:[%s310 + $0xd0] sm:$0xff]
      %v377 = vld [vmem:[%s310 + $0xd8] sm:$0xff]
      %v378 = vld [vmem:[%s310 + $0xe0] sm:$0xff]
      %v379 = vld [vmem:[%s310 + $0xe8] sm:$0xff]
      %v380 = vld [vmem:[%s310 + $0xf0] sm:$0xff]
      %v381 = vld [vmem:[%s310 + $0xf8] sm:$0xff]
      %v382 = vld [vmem:[%s310 + $0x100] sm:$0xff]
      %v383 = vld [vmem:[%s310 + $0x108] sm:$0xff]
      %v384 = vld [vmem:[%s310 + $0x110] sm:$0xff]
      %v385 = vld [vmem:[%s310 + $0x118] sm:$0xff]
      %v386 = vld [vmem:[%s310 + $0x120] sm:$0xff]
      %v387 = vld [vmem:[%s310 + $0x128] sm:$0xff]
      %v388 = vld [vmem:[%s310 + $0x130] sm:$0xff]
      %v389 = vld [vmem:[%s310 + $0x138] sm:$0xff]
      %v390 = vld [vmem:[%s310 + $0x140] sm:$0xff]
      %v391 = vld [vmem:[%s310 + $0x148] sm:$0xff]
      %v392 = vld [vmem:[%s310 + $0x150] sm:$0xff]
      %v393 = vld [vmem:[%s310 + $0x158] sm:$0xff]
      %v394 = vld [vmem:[%s310 + $0x160] sm:$0xff]
      %v395 = vld [vmem:[%s310 + $0x168] sm:$0xff]
      %v396 = vld [vmem:[%s310 + $0x170] sm:$0xff]
      %v397 = vld [vmem:[%s310 + $0x178] sm:$0xff]
      %v398 = vld [vmem:[%s310 + $0x180] sm:$0xff]
      %v399 = vld [vmem:[%s310 + $0x188] sm:$0xff]
      %v400 = vld [vmem:[%s310 + $0x190] sm:$0xff]
      %v401 = vld [vmem:[%s310 + $0x198] sm:$0xff]
      %v402 = vld [vmem:[%s310 + $0x1a0] sm:$0xff]
      %v403 = vld [vmem:[%s310 + $0x1a8] sm:$0xff]
      %v404 = vld [vmem:[%s310 + $0x1b0] sm:$0xff]
      %v405 = vld [vmem:[%s310 + $0x1b8] sm:$0xff]
      %v406 = vld [vmem:[%s310 + $0x1c0] sm:$0xff]
      %v407 = vld [vmem:[%s310 + $0x1c8] sm:$0xff]
      %v408 = vld [vmem:[%s310 + $0x1d0] sm:$0xff]
      %v409 = vld [vmem:[%s310 + $0x1d8] sm:$0xff]
      %v410 = vld [vmem:[%s310 + $0x1e0] sm:$0xff]
      %v411 = vld [vmem:[%s310 + $0x1e8] sm:$0xff]
      %v412 = vld [vmem:[%s310 + $0x1f0] sm:$0xff]
      %v413 = vld [vmem:[%s310 + $0x1f8] sm:$0xff]
      %v414 = vld [vmem:[%s310 + $0x200] sm:$0xff]
      %v415 = vld [vmem:[%s310 + $0x208] sm:$0xff]
      %v416 = vld [vmem:[%s310 + $0x210] sm:$0xff]
      %v417 = vld [vmem:[%s310 + $0x218] sm:$0xff]
      %v418 = vld [vmem:[%s310 + $0x220] sm:$0xff]
      %v419 = vld [vmem:[%s310 + $0x228] sm:$0xff]
      %v420 = vld [vmem:[%s310 + $0x230] sm:$0xff]
      %v421 = vld [vmem:[%s310 + $0x238] sm:$0xff]
      %v422 = vld [vmem:[%s310 + $0x240] sm:$0xff]
      %v423 = vld [vmem:[%s310 + $0x248] sm:$0xff]
      %v424 = vld [vmem:[%s310 + $0x250] sm:$0xff]
      %v425 = vld [vmem:[%s310 + $0x258] sm:$0xff]
      %v426 = vld [vmem:[%s310 + $0x260] sm:$0xff]
      %v427 = vld [vmem:[%s310 + $0x268] sm:$0xff]
      %v428 = vld [vmem:[%s310 + $0x270] sm:$0xff]
      %v429 = vld [vmem:[%s310 + $0x278] sm:$0xff]
      %v430 = vld [vmem:[%s310 + $0x280] sm:$0xff]
      %v431 = vld [vmem:[%s310 + $0x288] sm:$0xff]
      %v432 = vld [vmem:[%s310 + $0x290] sm:$0xff]
      %v433 = vld [vmem:[%s310 + $0x298] sm:$0xff]
      %v434 = vld [vmem:[%s310 + $0x2a0] sm:$0xff]
      %v435 = vld [vmem:[%s310 + $0x2a8] sm:$0xff]
      %v436 = vld [vmem:[%s310 + $0x2b0] sm:$0xff]
      %v437 = vld [vmem:[%s310 + $0x2b8] sm:$0xff]
      %v438 = vld [vmem:[%s310 + $0x2c0] sm:$0xff]
      %v439 = vld [vmem:[%s310 + $0x2c8] sm:$0xff]
      %v440 = vld [vmem:[%s310 + $0x2d0] sm:$0xff]
      %v441 = vld [vmem:[%s310 + $0x2d8] sm:$0xff]
      %v442 = vld [vmem:[%s310 + $0x2e0] sm:$0xff]
      %v443 = vld [vmem:[%s310 + $0x2e8] sm:$0xff]
      %v444 = vld [vmem:[%s310 + $0x2f0] sm:$0xff]
      %v445 = vld [vmem:[%s310 + $0x2f8] sm:$0xff]
      %v446 = vld [vmem:[%s310 + $0x300] sm:$0xff]
      %v447 = vld [vmem:[%s310 + $0x308] sm:$0xff]
      %v448 = vld [vmem:[%s310 + $0x310] sm:$0xff]
      %v449 = vld [vmem:[%s310 + $0x318] sm:$0xff]
      %v450 = vld [vmem:[%s310 + $0x320] sm:$0xff]
      %v451 = vld [vmem:[%s310 + $0x328] sm:$0xff]
      %v452 = vld [vmem:[%s310 + $0x330] sm:$0xff]
      %v453 = vld [vmem:[%s310 + $0x338] sm:$0xff]
      %v454 = vld [vmem:[%s310 + $0x340] sm:$0xff]
      %v455 = vld [vmem:[%s310 + $0x348] sm:$0xff]
      %v456 = vld [vmem:[%s310 + $0x350] sm:$0xff]
      %v457 = vld [vmem:[%s310 + $0x358] sm:$0xff]
      %v458 = vld [vmem:[%s310 + $0x360] sm:$0xff]
      %v459 = vld [vmem:[%s310 + $0x368] sm:$0xff]
      %v460 = vld [vmem:[%s310 + $0x370] sm:$0xff]
      %v461 = vld [vmem:[%s310 + $0x378] sm:$0xff]
      %v462 = vld [vmem:[%s310 + $0x380] sm:$0xff]
      %v463 = vld [vmem:[%s310 + $0x388] sm:$0xff]
      %v464 = vld [vmem:[%s310 + $0x390] sm:$0xff]
      %v465 = vld [vmem:[%s310 + $0x398] sm:$0xff]
      %v466 = vld [vmem:[%s310 + $0x3a0] sm:$0xff]
      %v467 = vld [vmem:[%s310 + $0x3a8] sm:$0xff]
      %v468 = vld [vmem:[%s310 + $0x3b0] sm:$0xff]
      %v469 = vld [vmem:[%s310 + $0x3b8] sm:$0xff]
      %v470 = vld [vmem:[%s310 + $0x3c0] sm:$0xff]
      %v471 = vld [vmem:[%s310 + $0x3c8] sm:$0xff]
      %v472 = vld [vmem:[%s310 + $0x3d0] sm:$0xff]
      %v473 = vld [vmem:[%s310 + $0x3d8] sm:$0xff]
      %v474 = vld [vmem:[%s310 + $0x3e0] sm:$0xff]
      %v475 = vld [vmem:[%s310 + $0x3e8] sm:$0xff]
      %v476 = vld [vmem:[%s310 + $0x3f0] sm:$0xff]
      %v477 = vld [vmem:[%s310 + $0x3f8] sm:$0xff]
      %v478 = vld [vmem:[%s310 + $0x400] sm:$0xff]
      %v479 = vld [vmem:[%s310 + $0x408] sm:$0xff]
      %v480 = vld [vmem:[%s310 + $0x410] sm:$0xff]
      %v481 = vld [vmem:[%s310 + $0x418] sm:$0xff]
      %v482 = vld [vmem:[%s310 + $0x420] sm:$0xff]
      %v483 = vld [vmem:[%s310 + $0x428] sm:$0xff]
      %v484 = vld [vmem:[%s310 + $0x430] sm:$0xff]
      %v485 = vld [vmem:[%s310 + $0x438] sm:$0xff]
      %v486 = vld [vmem:[%s310 + $0x440] sm:$0xff]
      %v487 = vld [vmem:[%s310 + $0x448] sm:$0xff]
      %v488 = vld [vmem:[%s310 + $0x450] sm:$0xff]
      %v489 = vld [vmem:[%s310 + $0x458] sm:$0xff]
      %v490 = vld [vmem:[%s310 + $0x460] sm:$0xff]
      %v491 = vld [vmem:[%s310 + $0x468] sm:$0xff]
      %v492 = vld [vmem:[%s310 + $0x470] sm:$0xff]
      %v493 = vld [vmem:[%s310 + $0x478] sm:$0xff]
      %v499 = vunpack.c.l.b16 %v345
      %v500 = vunpack.c.h.b16 %v345
      %v501 = vunpack.c.l.b16 %v346
      %v502 = vunpack.c.h.b16 %v346
      %v503 = vunpack.c.l.b16 %v347
      %v504 = vunpack.c.h.b16 %v347
      %v505 = vunpack.c.l.b16 %v348
      %v506 = vunpack.c.h.b16 %v348
      %v507 = vunpack.c.l.b16 %v349
      %v508 = vpack.c.b16 %v499, %v499
      %v509 = vpack.c.b16 %v500, %v500
      %v510 = vpack.c.b16 %v501, %v501
      %v511 = vpack.c.b16 %v502, %v502
      %v512 = vpack.c.b16 %v503, %v503
      %v513 = vpack.c.b16 %v504, %v504
      %v514 = vpack.c.b16 %v505, %v505
      %v515 = vpack.c.b16 %v506, %v506
      %v516 = vpack.c.b16 %v507, %v507
      %v670 = vunpack.c.l.b16 %v350
      %v671 = vunpack.c.h.b16 %v350
      %v672 = vunpack.c.l.b16 %v351
      %v673 = vunpack.c.h.b16 %v351
      %v674 = vunpack.c.l.b16 %v352
      %v675 = vunpack.c.h.b16 %v352
      %v676 = vunpack.c.l.b16 %v353
      %v677 = vunpack.c.h.b16 %v353
      %v678 = vunpack.c.l.b16 %v354
      %v679 = vunpack.c.h.b16 %v354
      %v680 = vunpack.c.l.b16 %v355
      %v681 = vunpack.c.h.b16 %v355
      %v682 = vunpack.c.l.b16 %v356
      %v683 = vunpack.c.h.b16 %v356
      %v684 = vunpack.c.l.b16 %v357
      %v685 = vunpack.c.h.b16 %v357
      %v686 = vunpack.c.l.b16 %v358
      %v687 = vunpack.c.h.b16 %v358
      %v688 = vunpack.c.l.b16 %v359
      %v689 = vunpack.c.h.b16 %v359
      %v690 = vunpack.c.l.b16 %v360
      %v691 = vunpack.c.h.b16 %v360
      %v692 = vunpack.c.l.b16 %v361
      %v693 = vunpack.c.h.b16 %v361
      %v694 = vunpack.c.l.b16 %v362
      %v695 = vunpack.c.h.b16 %v362
      %v696 = vunpack.c.l.b16 %v363
      %v697 = vunpack.c.h.b16 %v363
      %v698 = vunpack.c.l.b16 %v364
      %v699 = vunpack.c.h.b16 %v364
      %v700 = vunpack.c.l.b16 %v365
      %v701 = vunpack.c.h.b16 %v365
      %v702 = vunpack.c.l.b16 %v366
      %v703 = vunpack.c.h.b16 %v366
      %v704 = vunpack.c.l.b16 %v367
      %v705 = vunpack.c.h.b16 %v367
      %v706 = vunpack.c.l.b16 %v368
      %v707 = vunpack.c.h.b16 %v368
      %v708 = vunpack.c.l.b16 %v369
      %v709 = vunpack.c.h.b16 %v369
      %v710 = vunpack.c.l.b16 %v370
      %v711 = vunpack.c.h.b16 %v370
      %v712 = vunpack.c.l.b16 %v371
      %v713 = vunpack.c.h.b16 %v371
      %v714 = vunpack.c.l.b16 %v372
      %v715 = vunpack.c.h.b16 %v372
      %v716 = vunpack.c.l.b16 %v373
      %v717 = vunpack.c.h.b16 %v373
      %v718 = vunpack.c.l.b16 %v374
      %v719 = vunpack.c.h.b16 %v374
      %v720 = vunpack.c.l.b16 %v375
      %v721 = vunpack.c.h.b16 %v375
      %v722 = vunpack.c.l.b16 %v376
      %v723 = vunpack.c.h.b16 %v376
      %v724 = vunpack.c.l.b16 %v377
      %v725 = vunpack.c.h.b16 %v377
      %v726 = vunpack.c.l.b16 %v378
      %v727 = vunpack.c.h.b16 %v378
      %v728 = vunpack.c.l.b16 %v379
      %v729 = vunpack.c.h.b16 %v379
      %v730 = vunpack.c.l.b16 %v380
      %v731 = vunpack.c.h.b16 %v380
      %v732 = vunpack.c.l.b16 %v381
      %v733 = vunpack.c.h.b16 %v381
      %v734 = vunpack.c.l.b16 %v382
      %v735 = vunpack.c.h.b16 %v382
      %v736 = vunpack.c.l.b16 %v383
      %v737 = vunpack.c.h.b16 %v383
      %v738 = vunpack.c.l.b16 %v384
      %v739 = vunpack.c.h.b16 %v384
      %v740 = vunpack.c.l.b16 %v385
      %v741 = vunpack.c.h.b16 %v385
      %v742 = vunpack.c.l.b16 %v386
      %v743 = vunpack.c.h.b16 %v386
      %v744 = vunpack.c.l.b16 %v387
      %v745 = vunpack.c.h.b16 %v387
      %v746 = vunpack.c.l.b16 %v388
      %v747 = vunpack.c.h.b16 %v388
      %v748 = vunpack.c.l.b16 %v389
      %v749 = vunpack.c.h.b16 %v389
      %v750 = vunpack.c.l.b16 %v390
      %v751 = vunpack.c.h.b16 %v390
      %v752 = vunpack.c.l.b16 %v391
      %v753 = vunpack.c.h.b16 %v391
      %v754 = vunpack.c.l.b16 %v392
      %v755 = vunpack.c.h.b16 %v392
      %v756 = vunpack.c.l.b16 %v393
      %v757 = vunpack.c.h.b16 %v393
      %v758 = vunpack.c.l.b16 %v394
      %v759 = vunpack.c.h.b16 %v394
      %v760 = vunpack.c.l.b16 %v395
      %v761 = vunpack.c.h.b16 %v395
      %v762 = vunpack.c.l.b16 %v396
      %v763 = vunpack.c.h.b16 %v396
      %v764 = vunpack.c.l.b16 %v397
      %v765 = vunpack.c.h.b16 %v397
      %v766 = vunpack.c.l.b16 %v398
      %v767 = vunpack.c.h.b16 %v398
      %v768 = vunpack.c.l.b16 %v399
      %v769 = vunpack.c.h.b16 %v399
      %v770 = vunpack.c.l.b16 %v400
      %v771 = vunpack.c.h.b16 %v400
      %v772 = vunpack.c.l.b16 %v401
      %v773 = vunpack.c.h.b16 %v401
      %v774 = vunpack.c.l.b16 %v402
      %v775 = vunpack.c.h.b16 %v402
      %v776 = vunpack.c.l.b16 %v403
      %v777 = vunpack.c.h.b16 %v403
      %v778 = vunpack.c.l.b16 %v404
      %v779 = vunpack.c.h.b16 %v404
      %v780 = vunpack.c.l.b16 %v405
      %v781 = vunpack.c.h.b16 %v405
      %v782 = vunpack.c.l.b16 %v406
      %v783 = vunpack.c.h.b16 %v406
      %v784 = vunpack.c.l.b16 %v407
      %v785 = vunpack.c.h.b16 %v407
      %v786 = vunpack.c.l.b16 %v408
      %v787 = vunpack.c.h.b16 %v408
      %v788 = vunpack.c.l.b16 %v409
      %v789 = vunpack.c.h.b16 %v409
      %v790 = vunpack.c.l.b16 %v410
      %v791 = vunpack.c.h.b16 %v410
      %v792 = vunpack.c.l.b16 %v411
      %v793 = vunpack.c.h.b16 %v411
      %v794 = vunpack.c.l.b16 %v412
      %v795 = vunpack.c.h.b16 %v412
      %v796 = vunpack.c.l.b16 %v413
      %v797 = vunpack.c.h.b16 %v413
      %v798 = vunpack.c.l.b16 %v414
      %v799 = vunpack.c.h.b16 %v414
      %v800 = vunpack.c.l.b16 %v415
      %v801 = vunpack.c.h.b16 %v415
      %v802 = vunpack.c.l.b16 %v416
      %v803 = vunpack.c.h.b16 %v416
      %v804 = vunpack.c.l.b16 %v417
      %v805 = vunpack.c.h.b16 %v417
      %v806 = vunpack.c.l.b16 %v418
      %v807 = vunpack.c.h.b16 %v418
      %v808 = vunpack.c.l.b16 %v419
      %v809 = vunpack.c.h.b16 %v419
      %v810 = vunpack.c.l.b16 %v420
      %v811 = vunpack.c.h.b16 %v420
      %v812 = vunpack.c.l.b16 %v421
      %v813 = vunpack.c.h.b16 %v421
      %v814 = vunpack.c.l.b16 %v422
      %v815 = vunpack.c.h.b16 %v422
      %v816 = vunpack.c.l.b16 %v423
      %v817 = vunpack.c.h.b16 %v423
      %v818 = vunpack.c.l.b16 %v424
      %v819 = vunpack.c.h.b16 %v424
      %v820 = vunpack.c.l.b16 %v425
      %v821 = vunpack.c.h.b16 %v425
      %v822 = vunpack.c.l.b16 %v426
      %v823 = vunpack.c.h.b16 %v426
      %v824 = vunpack.c.l.b16 %v427
      %v825 = vunpack.c.h.b16 %v427
      %v826 = vunpack.c.l.b16 %v428
      %v827 = vunpack.c.h.b16 %v428
      %v828 = vunpack.c.l.b16 %v429
      %v829 = vunpack.c.h.b16 %v429
      %v830 = vunpack.c.l.b16 %v430
      %v831 = vunpack.c.h.b16 %v430
      %v832 = vunpack.c.l.b16 %v431
      %v833 = vunpack.c.h.b16 %v431
      %v834 = vunpack.c.l.b16 %v432
      %v835 = vunpack.c.h.b16 %v432
      %v836 = vunpack.c.l.b16 %v433
      %v837 = vunpack.c.h.b16 %v433
      %v838 = vunpack.c.l.b16 %v434
      %v839 = vunpack.c.h.b16 %v434
      %v840 = vunpack.c.l.b16 %v435
      %v841 = vunpack.c.h.b16 %v435
      %v842 = vunpack.c.l.b16 %v436
      %v843 = vunpack.c.h.b16 %v436
      %v844 = vunpack.c.l.b16 %v437
      %v845 = vunpack.c.h.b16 %v437
      %v846 = vunpack.c.l.b16 %v438
      %v847 = vunpack.c.h.b16 %v438
      %v848 = vunpack.c.l.b16 %v439
      %v849 = vunpack.c.h.b16 %v439
      %v850 = vunpack.c.l.b16 %v440
      %v851 = vunpack.c.h.b16 %v440
      %v852 = vunpack.c.l.b16 %v441
      %v853 = vunpack.c.h.b16 %v441
      %v854 = vunpack.c.l.b16 %v442
      %v855 = vunpack.c.h.b16 %v442
      %v856 = vunpack.c.l.b16 %v443
      %v857 = vunpack.c.h.b16 %v443
      %v858 = vunpack.c.l.b16 %v444
      %v859 = vunpack.c.h.b16 %v444
      %v860 = vunpack.c.l.b16 %v445
      %v861 = vunpack.c.h.b16 %v445
      %v862 = vunpack.c.l.b16 %v446
      %v863 = vunpack.c.h.b16 %v446
      %v864 = vunpack.c.l.b16 %v447
      %v865 = vunpack.c.h.b16 %v447
      %v866 = vunpack.c.l.b16 %v448
      %v867 = vunpack.c.h.b16 %v448
      %v868 = vunpack.c.l.b16 %v449
      %v869 = vunpack.c.h.b16 %v449
      %v870 = vunpack.c.l.b16 %v450
      %v871 = vunpack.c.h.b16 %v450
      %v872 = vunpack.c.l.b16 %v451
      %v873 = vunpack.c.h.b16 %v451
      %v874 = vunpack.c.l.b16 %v452
      %v875 = vunpack.c.h.b16 %v452
      %v876 = vunpack.c.l.b16 %v453
      %v877 = vunpack.c.h.b16 %v453
      %v878 = vunpack.c.l.b16 %v454
      %v879 = vunpack.c.h.b16 %v454
      %v880 = vunpack.c.l.b16 %v455
      %v881 = vunpack.c.h.b16 %v455
      %v882 = vunpack.c.l.b16 %v456
      %v883 = vunpack.c.h.b16 %v456
      %v884 = vunpack.c.l.b16 %v457
      %v885 = vunpack.c.h.b16 %v457
      %v886 = vunpack.c.l.b16 %v458
      %v887 = vunpack.c.h.b16 %v458
      %v888 = vunpack.c.l.b16 %v459
      %v889 = vunpack.c.h.b16 %v459
      %v890 = vunpack.c.l.b16 %v460
      %v891 = vunpack.c.h.b16 %v460
      %v892 = vunpack.c.l.b16 %v461
      %v893 = vunpack.c.h.b16 %v461
      %v894 = vunpack.c.l.b16 %v462
      %v895 = vunpack.c.h.b16 %v462
      %v896 = vunpack.c.l.b16 %v463
      %v897 = vunpack.c.h.b16 %v463
      %v898 = vunpack.c.l.b16 %v464
      %v899 = vunpack.c.h.b16 %v464
      %v900 = vunpack.c.l.b16 %v465
      %v901 = vunpack.c.h.b16 %v465
      %v902 = vunpack.c.l.b16 %v466
      %v903 = vunpack.c.h.b16 %v466
      %v904 = vunpack.c.l.b16 %v467
      %v905 = vunpack.c.h.b16 %v467
      %v906 = vunpack.c.l.b16 %v468
      %v907 = vunpack.c.h.b16 %v468
      %v908 = vunpack.c.l.b16 %v469
      %v909 = vunpack.c.h.b16 %v469
      %v910 = vunpack.c.l.b16 %v470
      %v911 = vunpack.c.h.b16 %v470
      %v912 = vunpack.c.l.b16 %v471
      %v913 = vunpack.c.h.b16 %v471
      %v914 = vunpack.c.l.b16 %v472
      %v915 = vunpack.c.h.b16 %v472
      %v916 = vunpack.c.l.b16 %v473
      %v917 = vunpack.c.h.b16 %v473
      %v918 = vunpack.c.l.b16 %v474
      %v919 = vunpack.c.h.b16 %v474
      %v920 = vunpack.c.l.b16 %v475
      %v921 = vunpack.c.h.b16 %v475
      %v922 = vunpack.c.l.b16 %v476
      %v923 = vunpack.c.h.b16 %v476
      %v924 = vunpack.c.l.b16 %v477
      %v925 = vunpack.c.h.b16 %v477
      %v926 = vunpack.c.l.b16 %v478
      %v927 = vunpack.c.h.b16 %v478
      %v928 = vunpack.c.l.b16 %v479
      %v929 = vunpack.c.h.b16 %v479
      %v930 = vunpack.c.l.b16 %v480
      %v931 = vunpack.c.h.b16 %v480
      %v932 = vunpack.c.l.b16 %v481
      %v933 = vunpack.c.h.b16 %v481
      %v934 = vunpack.c.l.b16 %v482
      %v935 = vunpack.c.h.b16 %v482
      %v936 = vunpack.c.l.b16 %v483
      %v937 = vunpack.c.h.b16 %v483
      %v938 = vunpack.c.l.b16 %v484
      %v939 = vunpack.c.h.b16 %v484
      %v940 = vunpack.c.l.b16 %v485
      %v941 = vunpack.c.h.b16 %v485
      %v942 = vunpack.c.l.b16 %v486
      %v943 = vunpack.c.h.b16 %v486
      %v944 = vunpack.c.l.b16 %v487
      %v945 = vunpack.c.h.b16 %v487
      %v946 = vunpack.c.l.b16 %v488
      %v947 = vunpack.c.h.b16 %v488
      %v948 = vunpack.c.l.b16 %v489
      %v949 = vunpack.c.h.b16 %v489
      %v950 = vunpack.c.l.b16 %v490
      %v951 = vunpack.c.h.b16 %v490
      %v952 = vunpack.c.l.b16 %v491
      %v953 = vunpack.c.h.b16 %v491
      %v954 = vunpack.c.l.b16 %v492
      %v955 = vunpack.c.h.b16 %v492
      %v956 = vunpack.c.l.b16 %v493
      %v957 = vunpack.c.h.b16 %v493
      %v958 = vpack.c.b16 %v672, %v670
      %v959 = vpack.c.b16 %v673, %v671
      %v960 = vpack.c.b16 %v676, %v674
      %v961 = vpack.c.b16 %v677, %v675
      %v962 = vpack.c.b16 %v680, %v678
      %v963 = vpack.c.b16 %v681, %v679
      %v964 = vpack.c.b16 %v684, %v682
      %v965 = vpack.c.b16 %v685, %v683
      %v966 = vpack.c.b16 %v688, %v686
      %v967 = vpack.c.b16 %v689, %v687
      %v968 = vpack.c.b16 %v692, %v690
      %v969 = vpack.c.b16 %v693, %v691
      %v970 = vpack.c.b16 %v696, %v694
      %v971 = vpack.c.b16 %v697, %v695
      %v972 = vpack.c.b16 %v700, %v698
      %v973 = vpack.c.b16 %v701, %v699
      %v974 = vpack.c.b16 %v704, %v702
      %v975 = vpack.c.b16 %v705, %v703
      %v976 = vpack.c.b16 %v708, %v706
      %v977 = vpack.c.b16 %v709, %v707
      %v978 = vpack.c.b16 %v712, %v710
      %v979 = vpack.c.b16 %v713, %v711
      %v980 = vpack.c.b16 %v716, %v714
      %v981 = vpack.c.b16 %v717, %v715
      %v982 = vpack.c.b16 %v720, %v718
      %v983 = vpack.c.b16 %v721, %v719
      %v984 = vpack.c.b16 %v724, %v722
      %v985 = vpack.c.b16 %v725, %v723
      %v986 = vpack.c.b16 %v728, %v726
      %v987 = vpack.c.b16 %v729, %v727
      %v988 = vpack.c.b16 %v732, %v730
      %v989 = vpack.c.b16 %v733, %v731
      %v990 = vpack.c.b16 %v736, %v734
      %v991 = vpack.c.b16 %v737, %v735
      %v992 = vpack.c.b16 %v740, %v738
      %v993 = vpack.c.b16 %v741, %v739
      %v994 = vpack.c.b16 %v744, %v742
      %v995 = vpack.c.b16 %v745, %v743
      %v996 = vpack.c.b16 %v748, %v746
      %v997 = vpack.c.b16 %v749, %v747
      %v998 = vpack.c.b16 %v752, %v750
      %v999 = vpack.c.b16 %v753, %v751
      %v1000 = vpack.c.b16 %v756, %v754
      %v1001 = vpack.c.b16 %v757, %v755
      %v1002 = vpack.c.b16 %v760, %v758
      %v1003 = vpack.c.b16 %v761, %v759
      %v1004 = vpack.c.b16 %v764, %v762
      %v1005 = vpack.c.b16 %v765, %v763
      %v1006 = vpack.c.b16 %v768, %v766
      %v1007 = vpack.c.b16 %v769, %v767
      %v1008 = vpack.c.b16 %v772, %v770
      %v1009 = vpack.c.b16 %v773, %v771
      %v1010 = vpack.c.b16 %v776, %v774
      %v1011 = vpack.c.b16 %v777, %v775
      %v1012 = vpack.c.b16 %v780, %v778
      %v1013 = vpack.c.b16 %v781, %v779
      %v1014 = vpack.c.b16 %v784, %v782
      %v1015 = vpack.c.b16 %v785, %v783
      %v1016 = vpack.c.b16 %v788, %v786
      %v1017 = vpack.c.b16 %v789, %v787
      %v1018 = vpack.c.b16 %v792, %v790
      %v1019 = vpack.c.b16 %v793, %v791
      %v1020 = vpack.c.b16 %v796, %v794
      %v1021 = vpack.c.b16 %v797, %v795
      %v1022 = vpack.c.b16 %v800, %v798
      %v1023 = vpack.c.b16 %v801, %v799
      %v1024 = vpack.c.b16 %v804, %v802
      %v1025 = vpack.c.b16 %v805, %v803
      %v1026 = vpack.c.b16 %v808, %v806
      %v1027 = vpack.c.b16 %v809, %v807
      %v1028 = vpack.c.b16 %v812, %v810
      %v1029 = vpack.c.b16 %v813, %v811
      %v1030 = vpack.c.b16 %v816, %v814
      %v1031 = vpack.c.b16 %v817, %v815
      %v1032 = vpack.c.b16 %v820, %v818
      %v1033 = vpack.c.b16 %v821, %v819
      %v1034 = vpack.c.b16 %v824, %v822
      %v1035 = vpack.c.b16 %v825, %v823
      %v1036 = vpack.c.b16 %v828, %v826
      %v1037 = vpack.c.b16 %v829, %v827
      %v1038 = vpack.c.b16 %v832, %v830
      %v1039 = vpack.c.b16 %v833, %v831
      %v1040 = vpack.c.b16 %v836, %v834
      %v1041 = vpack.c.b16 %v837, %v835
      %v1042 = vpack.c.b16 %v840, %v838
      %v1043 = vpack.c.b16 %v841, %v839
      %v1044 = vpack.c.b16 %v844, %v842
      %v1045 = vpack.c.b16 %v845, %v843
      %v1046 = vpack.c.b16 %v848, %v846
      %v1047 = vpack.c.b16 %v849, %v847
      %v1048 = vpack.c.b16 %v852, %v850
      %v1049 = vpack.c.b16 %v853, %v851
      %v1050 = vpack.c.b16 %v856, %v854
      %v1051 = vpack.c.b16 %v857, %v855
      %v1052 = vpack.c.b16 %v860, %v858
      %v1053 = vpack.c.b16 %v861, %v859
      %v1054 = vpack.c.b16 %v864, %v862
      %v1055 = vpack.c.b16 %v865, %v863
      %v1056 = vpack.c.b16 %v868, %v866
      %v1057 = vpack.c.b16 %v869, %v867
      %v1058 = vpack.c.b16 %v872, %v870
      %v1059 = vpack.c.b16 %v873, %v871
      %v1060 = vpack.c.b16 %v876, %v874
      %v1061 = vpack.c.b16 %v877, %v875
      %v1062 = vpack.c.b16 %v880, %v878
      %v1063 = vpack.c.b16 %v881, %v879
      %v1064 = vpack.c.b16 %v884, %v882
      %v1065 = vpack.c.b16 %v885, %v883
      %v1066 = vpack.c.b16 %v888, %v886
      %v1067 = vpack.c.b16 %v889, %v887
      %v1068 = vpack.c.b16 %v892, %v890
      %v1069 = vpack.c.b16 %v893, %v891
      %v1070 = vpack.c.b16 %v896, %v894
      %v1071 = vpack.c.b16 %v897, %v895
      %v1072 = vpack.c.b16 %v900, %v898
      %v1073 = vpack.c.b16 %v901, %v899
      %v1074 = vpack.c.b16 %v904, %v902
      %v1075 = vpack.c.b16 %v905, %v903
      %v1076 = vpack.c.b16 %v908, %v906
      %v1077 = vpack.c.b16 %v909, %v907
      %v1078 = vpack.c.b16 %v912, %v910
      %v1079 = vpack.c.b16 %v913, %v911
      %v1080 = vpack.c.b16 %v916, %v914
      %v1081 = vpack.c.b16 %v917, %v915
      %v1082 = vpack.c.b16 %v920, %v918
      %v1083 = vpack.c.b16 %v921, %v919
      %v1084 = vpack.c.b16 %v924, %v922
      %v1085 = vpack.c.b16 %v925, %v923
      %v1086 = vpack.c.b16 %v928, %v926
      %v1087 = vpack.c.b16 %v929, %v927
      %v1088 = vpack.c.b16 %v932, %v930
      %v1089 = vpack.c.b16 %v933, %v931
      %v1090 = vpack.c.b16 %v936, %v934
      %v1091 = vpack.c.b16 %v937, %v935
      %v1092 = vpack.c.b16 %v940, %v938
      %v1093 = vpack.c.b16 %v941, %v939
      %v1094 = vpack.c.b16 %v944, %v942
      %v1095 = vpack.c.b16 %v945, %v943
      %v1096 = vpack.c.b16 %v948, %v946
      %v1097 = vpack.c.b16 %v949, %v947
      %v1098 = vpack.c.b16 %v952, %v950
      %v1099 = vpack.c.b16 %v953, %v951
      %v1100 = vpack.c.b16 %v956, %v954
      %v1101 = vpack.c.b16 %v957, %v955
      %1246 = vmatprep.subr.bf16.mxu0 %v959
      %1247 = vmatpush1.bf16.msra.mxu0 %v958
      %1248 = vmatprep.subr.bf16.mxu0 %v961
      %1249 = vmatpush1.bf16.msra.mxu0 %v960
      %1250 = vmatprep.subr.bf16.mxu0 %v963
      %1251 = vmatpush1.bf16.msra.mxu0 %v962
      %1252 = vmatprep.subr.bf16.mxu0 %v965
      %1253 = vmatpush1.bf16.msra.mxu0 %v964
      %1254 = vmatprep.subr.bf16.mxu0 %v967
      %1255 = vmatpush1.bf16.msra.mxu0 %v966
      %1256 = vmatprep.subr.bf16.mxu0 %v969
      %1257 = vmatpush1.bf16.msra.mxu0 %v968
      %1258 = vmatprep.subr.bf16.mxu0 %v971
      %1259 = vmatpush1.bf16.msra.mxu0 %v970
      %1260 = vmatprep.subr.bf16.mxu0 %v973
      %1261 = vmatpush1.bf16.msra.mxu0 %v972
      %1262 = vmatprep.subr.bf16.mxu0 %v975
      %1263 = vmatpush1.bf16.msra.mxu0 %v974
      %1264 = vmatprep.subr.bf16.mxu0 %v977
      %1265 = vmatpush1.bf16.msra.mxu0 %v976
      %1266 = vmatprep.subr.bf16.mxu0 %v979
      %1267 = vmatpush1.bf16.msra.mxu0 %v978
      %1268 = vmatprep.subr.bf16.mxu0 %v981
      %1269 = vmatpush1.bf16.msra.mxu0 %v980
      %1270 = vmatprep.subr.bf16.mxu0 %v983
      %1271 = vmatpush1.bf16.msra.mxu0 %v982
      %1272 = vmatprep.subr.bf16.mxu0 %v985
      %1273 = vmatpush1.bf16.msra.mxu0 %v984
      %1274 = vmatprep.subr.bf16.mxu0 %v987
      %1275 = vmatpush1.bf16.msra.mxu0 %v986
      %1276 = vmatprep.subr.bf16.mxu0 %v989
      %1277 = vmatpush1.bf16.msra.mxu0 %v988
      %1278 = vmatprep.mubr.bf16.mxu0 %v509
      %1279 = vmatmul.mubr.bf16.gmra.mrb[0].mxu0 %v508
      %v1280 = vpop.f32.mrb[0].mxu0
      %v1281 = vadd.f32 0.0, %v1280
      %v1282 = vpop.f32.mrb[0].mxu0
      %v1283 = vadd.f32 0.0, %v1282
      %v1284 = vpop.f32.mrb[0].mxu0
      %v1285 = vpop.f32.mrb[0].mxu0
      %1286 = vdwg.mxu0
      %1287 = vmatprep.subr.bf16.mxu0 %v991
      %1288 = vmatpush1.bf16.msra.mxu0 %v990
      %1289 = vmatprep.subr.bf16.mxu0 %v993
      %1290 = vmatpush1.bf16.msra.mxu0 %v992
      %1291 = vmatprep.subr.bf16.mxu0 %v995
      %1292 = vmatpush1.bf16.msra.mxu0 %v994
      %1293 = vmatprep.subr.bf16.mxu0 %v997
      %1294 = vmatpush1.bf16.msra.mxu0 %v996
      %1295 = vmatprep.subr.bf16.mxu0 %v999
      %1296 = vmatpush1.bf16.msra.mxu0 %v998
      %1297 = vmatprep.subr.bf16.mxu0 %v1001
      %1298 = vmatpush1.bf16.msra.mxu0 %v1000
      %1299 = vmatprep.subr.bf16.mxu0 %v1003
      %1300 = vmatpush1.bf16.msra.mxu0 %v1002
      %1301 = vmatprep.subr.bf16.mxu0 %v1005
      %1302 = vmatpush1.bf16.msra.mxu0 %v1004
      %1303 = vmatprep.subr.bf16.mxu0 %v1007
      %1304 = vmatpush1.bf16.msra.mxu0 %v1006
      %1305 = vmatprep.subr.bf16.mxu0 %v1009
      %1306 = vmatpush1.bf16.msra.mxu0 %v1008
      %1307 = vmatprep.subr.bf16.mxu0 %v1011
      %1308 = vmatpush1.bf16.msra.mxu0 %v1010
      %1309 = vmatprep.subr.bf16.mxu0 %v1013
      %1310 = vmatpush1.bf16.msra.mxu0 %v1012
      %1311 = vmatprep.subr.bf16.mxu0 %v1015
      %1312 = vmatpush1.bf16.msra.mxu0 %v1014
      %1313 = vmatprep.subr.bf16.mxu0 %v1017
      %1314 = vmatpush1.bf16.msra.mxu0 %v1016
      %1315 = vmatprep.subr.bf16.mxu0 %v1019
      %1316 = vmatpush1.bf16.msra.mxu0 %v1018
      %1317 = vmatprep.subr.bf16.mxu0 %v1021
      %1318 = vmatpush1.bf16.msra.mxu0 %v1020
      %1319 = vmatprep.mubr.bf16.mxu0 %v511
      %1320 = vmatmul.mubr.bf16.gmra.mrb[0].mxu0 %v510
      %v1321 = vpop.f32.mrb[0].mxu0
      %v1322 = vadd.f32 %v1281, %v1321
      %v1323 = vpop.f32.mrb[0].mxu0
      %v1324 = vadd.f32 %v1283, %v1323
      %v1325 = vpop.f32.mrb[0].mxu0
      %v1326 = vpop.f32.mrb[0].mxu0
      %1327 = vdwg.mxu0
      %1328 = vmatprep.subr.bf16.mxu0 %v1023
      %1329 = vmatpush1.bf16.msra.mxu0 %v1022
      %1330 = vmatprep.subr.bf16.mxu0 %v1025
      %1331 = vmatpush1.bf16.msra.mxu0 %v1024
      %1332 = vmatprep.subr.bf16.mxu0 %v1027
      %1333 = vmatpush1.bf16.msra.mxu0 %v1026
      %1334 = vmatprep.subr.bf16.mxu0 %v1029
      %1335 = vmatpush1.bf16.msra.mxu0 %v1028
      %1336 = vmatprep.subr.bf16.mxu0 %v1031
      %1337 = vmatpush1.bf16.msra.mxu0 %v1030
      %1338 = vmatprep.subr.bf16.mxu0 %v1033
      %1339 = vmatpush1.bf16.msra.mxu0 %v1032
      %1340 = vmatprep.subr.bf16.mxu0 %v1035
      %1341 = vmatpush1.bf16.msra.mxu0 %v1034
      %1342 = vmatprep.subr.bf16.mxu0 %v1037
      %1343 = vmatpush1.bf16.msra.mxu0 %v1036
      %1344 = vmatprep.subr.bf16.mxu0 %v1039
      %1345 = vmatpush1.bf16.msra.mxu0 %v1038
      %1346 = vmatprep.subr.bf16.mxu0 %v1041
      %1347 = vmatpush1.bf16.msra.mxu0 %v1040
      %1348 = vmatprep.subr.bf16.mxu0 %v1043
      %1349 = vmatpush1.bf16.msra.mxu0 %v1042
      %1350 = vmatprep.subr.bf16.mxu0 %v1045
      %1351 = vmatpush1.bf16.msra.mxu0 %v1044
      %1352 = vmatprep.subr.bf16.mxu0 %v1047
      %1353 = vmatpush1.bf16.msra.mxu0 %v1046
      %1354 = vmatprep.subr.bf16.mxu0 %v1049
      %1355 = vmatpush1.bf16.msra.mxu0 %v1048
      %1356 = vmatprep.subr.bf16.mxu0 %v1051
      %1357 = vmatpush1.bf16.msra.mxu0 %v1050
      %1358 = vmatprep.subr.bf16.mxu0 %v1053
      %1359 = vmatpush1.bf16.msra.mxu0 %v1052
      %1360 = vmatprep.mubr.bf16.mxu0 %v513
      %1361 = vmatmul.mubr.bf16.gmra.mrb[0].mxu0 %v512
      %v1362 = vpop.f32.mrb[0].mxu0
      %v1363 = vadd.f32 %v1322, %v1362
      %v1364 = vpop.f32.mrb[0].mxu0
      %v1365 = vadd.f32 %v1324, %v1364
      %v1366 = vpop.f32.mrb[0].mxu0
      %v1367 = vpop.f32.mrb[0].mxu0
      %1368 = vdwg.mxu0
      %1369 = vmatprep.subr.bf16.mxu0 %v1055
      %1370 = vmatpush1.bf16.msra.mxu0 %v1054
      %1371 = vmatprep.subr.bf16.mxu0 %v1057
      %1372 = vmatpush1.bf16.msra.mxu0 %v1056
      %1373 = vmatprep.subr.bf16.mxu0 %v1059
      %1374 = vmatpush1.bf16.msra.mxu0 %v1058
      %1375 = vmatprep.subr.bf16.mxu0 %v1061
      %1376 = vmatpush1.bf16.msra.mxu0 %v1060
      %1377 = vmatprep.subr.bf16.mxu0 %v1063
      %1378 = vmatpush1.bf16.msra.mxu0 %v1062
      %1379 = vmatprep.subr.bf16.mxu0 %v1065
      %1380 = vmatpush1.bf16.msra.mxu0 %v1064
      %1381 = vmatprep.subr.bf16.mxu0 %v1067
      %1382 = vmatpush1.bf16.msra.mxu0 %v1066
      %1383 = vmatprep.subr.bf16.mxu0 %v1069
      %1384 = vmatpush1.bf16.msra.mxu0 %v1068
      %1385 = vmatprep.subr.bf16.mxu0 %v1071
      %1386 = vmatpush1.bf16.msra.mxu0 %v1070
      %1387 = vmatprep.subr.bf16.mxu0 %v1073
      %1388 = vmatpush1.bf16.msra.mxu0 %v1072
      %1389 = vmatprep.subr.bf16.mxu0 %v1075
      %1390 = vmatpush1.bf16.msra.mxu0 %v1074
      %1391 = vmatprep.subr.bf16.mxu0 %v1077
      %1392 = vmatpush1.bf16.msra.mxu0 %v1076
      %1393 = vmatprep.subr.bf16.mxu0 %v1079
      %1394 = vmatpush1.bf16.msra.mxu0 %v1078
      %1395 = vmatprep.subr.bf16.mxu0 %v1081
      %1396 = vmatpush1.bf16.msra.mxu0 %v1080
      %1397 = vmatprep.subr.bf16.mxu0 %v1083
      %1398 = vmatpush1.bf16.msra.mxu0 %v1082
      %1399 = vmatprep.subr.bf16.mxu0 %v1085
      %1400 = vmatpush1.bf16.msra.mxu0 %v1084
      %1401 = vmatprep.mubr.bf16.mxu0 %v515
      %1402 = vmatmul.mubr.bf16.gmra.mrb[0].mxu0 %v514
      %v1403 = vpop.f32.mrb[0].mxu0
      %v1404 = vadd.f32 %v1363, %v1403
      %v1405 = vpop.f32.mrb[0].mxu0
      %v1406 = vadd.f32 %v1365, %v1405
      %v1407 = vpop.f32.mrb[0].mxu0
      %v1408 = vpop.f32.mrb[0].mxu0
      %1409 = vdwg.mxu0
      %1410 = vmatprep.subr.bf16.mxu0 %v1087
      %1411 = vmatpush1.bf16.msra.mxu0 %v1086
      %1412 = vmatprep.subr.bf16.mxu0 %v1089
      %1413 = vmatpush1.bf16.msra.mxu0 %v1088
      %1414 = vmatprep.subr.bf16.mxu0 %v1091
      %1415 = vmatpush1.bf16.msra.mxu0 %v1090
      %1416 = vmatprep.subr.bf16.mxu0 %v1093
      %1417 = vmatpush1.bf16.msra.mxu0 %v1092
      %1418 = vmatprep.subr.bf16.mxu0 %v1095
      %1419 = vmatpush1.bf16.msra.mxu0 %v1094
      %1420 = vmatprep.subr.bf16.mxu0 %v1097
      %1421 = vmatpush1.bf16.msra.mxu0 %v1096
      %1422 = vmatprep.subr.bf16.mxu0 %v1099
      %1423 = vmatpush1.bf16.msra.mxu0 %v1098
      %1424 = vmatprep.subr.bf16.mxu0 %v1101
      %1425 = vmatpush1.bf16.msra.mxu0 %v1100
      %1426 = vmatprep.subr.bf16.mxu0 0
      %1427 = vmatpush1.bf16.msra.mxu0 0
      %1428 = vmatprep.subr.bf16.mxu0 0
      %1429 = vmatpush1.bf16.msra.mxu0 0
      %1430 = vmatprep.subr.bf16.mxu0 0
      %1431 = vmatpush1.bf16.msra.mxu0 0
      %1432 = vmatprep.subr.bf16.mxu0 0
      %1433 = vmatpush1.bf16.msra.mxu0 0
      %1434 = vmatprep.subr.bf16.mxu0 0
      %1435 = vmatpush1.bf16.msra.mxu0 0
      %1436 = vmatprep.subr.bf16.mxu0 0
      %1437 = vmatpush1.bf16.msra.mxu0 0
      %1438 = vmatprep.subr.bf16.mxu0 0
      %1439 = vmatpush1.bf16.msra.mxu0 0
      %1440 = vmatprep.subr.bf16.mxu0 0
      %1441 = vmatpush1.bf16.msra.mxu0 0
      %1442 = vmatprep.mubr.bf16.mxu0 0
      %1443 = vmatmul.mubr.bf16.gmra.mrb[0].mxu0 %v516
      %v1444 = vpop.f32.mrb[0].mxu0
      %v1445 = vadd.f32 %v1404, %v1444
      %v1446 = vpop.f32.mrb[0].mxu0
      %v1447 = vadd.f32 %v1406, %v1446
      %v1448 = vpop.f32.mrb[0].mxu0
      %v1449 = vpop.f32.mrb[0].mxu0
      %1450 = vdwg.mxu0
      %v1451 = vadd.f32 %v343, %v1445
      %v1452 = vadd.f32 %v344, %v1447
      %1453 = vst [vmem:[#allocation2] sm:$0xff] %v1451
      %1454 = vst [vmem:[#allocation2 + $0x8] sm:$0xff] %v1452
      // Predicated region
      $region37: #{forward.9} parent=31 // pred_check
        %p1455 = pneg %p337
      $region38: #{forward.9} parent=31 // pred_check_branch
        %1457 = sbr.rel (%p1455) target = $region40
      $region39: #{forward.9} parent=31 // pred_region
        %v1458 = vld [vmem:[#allocation2] sm:$0xff]
        %v1459 = vld [vmem:[#allocation2 + $0x8] sm:$0xff]
        %v1460 = vld [vmem:[%s320] sm:$0x3]
        %v1462 = vlaneseq
        %v1463 = vshrl.u32 %v1462, 7
        %v1464 = vsub.s32 0, %v1463
        %v1465 = vrot.slane %v1460, %v1464
        %v1466 = vlaneseq
        %v1467 = vshrl.u32 %v1466, 7
        %v1468 = vsub.s32 1, %v1467
        %v1469 = vrot.slane %v1460, %v1468
        %v1472 = vadd.f32 %v1458, %v1465
        %v1473 = vadd.f32 %v1459, %v1469
        %v1474 = vmax.f32 %v1472, 0.0
        %v1475 = vmax.f32 %v1473, 0.0
        %v1476 = vpack.c.bf16 %v1474, %v1474
        %v1477 = vpack.c.bf16 %v1475, %v1475
        %v1480 = vunpack.c.l.b16 %v1476
        %v1481 = vunpack.c.l.b16 %v1477
        %v1482 = vpack.c.b16 %v1481, %v1480
        %1484 = vst [vmem:[%s334] sm:$0xff] %v1482
      $region40: #{forward.9} parent=31 // pred_fallthru
        _
      %s1485 = smul.u32 2, %s22
      %p1486 = scmp.lt.s32.totalorder %s20, 2
      %s1487 = scalar_select %p1486, %s20, 2
      %p1488 = scmp.lt.s32.totalorder %s21, 0
      %s1489 = scalar_select %p1488, %s21, 0
      %p1490 = scmp.lt.s32.totalorder %s1485, 1
      %s1491 = scalar_select %p1490, %s1485, 1
      %s1492 = smul.addr %s1489, 2
      %s1493 = sadd.s32 %s1491, %s1492
      %s1494 = smul.addr %s1487, 2
      %s1495 = sadd.s32 %s1493, %s1494
      %s1496 = smul.addr %s1495, 4
      %s1497 = scalar_lea.vmem %s3, %s1496
      // Predicated region
      $region41: #{forward.9} parent=31 // pred_check
        %p1498 = pneg %p150
      $region42: #{forward.9} parent=31 // pred_check_branch
        %1500 = sbr.rel (%p1498) target = $region44
      $region43: #{forward.9} parent=31 // pred_region
        %s1501 = smul.u32 2, %s22
      $region44: #{forward.9} parent=31 // pred_fallthru
        _
    $region32: #{forward.9} parent=5 // pred_fallthru
      _
    %p1502 = scmp.le.s32.totalorder 2, %s9
    // Predicated region
    $region45: #{forward.9} parent=5 // pred_check
      %p1503 = pneg %p1502
    $region46: #{forward.9} parent=5 // pred_check_branch
      %1505 = sbr.rel (%p1503) target = $region48
    $region47: #{forward.9} parent=5 // pred_region
      %s1506 = ssub.s32 %s9, 2
      // Predicated region
      $region49: #{forward.9} parent=47 // pred_check
        %p1507 = pneg %p156
      $region50: #{forward.9} parent=47 // pred_check_branch
        %1509 = sbr.rel (%p1507) target = $region52
      $region51: #{forward.9} parent=47 // pred_region
        %s1510 = smul.u32 2, %s26
        %p1511 = scmp.lt.s32.totalorder %s24, 2
        %s1512 = scalar_select %p1511, %s24, 2
        %p1513 = scmp.lt.s32.totalorder %s25, 0
        %s1514 = scalar_select %p1513, %s25, 0
        %p1515 = scmp.lt.s32.totalorder %s1510, 1
        %s1516 = scalar_select %p1515, %s1510, 1
        %s1517 = smul.addr %s1514, 2
        %s1518 = sadd.s32 %s1516, %s1517
        %s1519 = smul.addr %s1512, 2
        %s1520 = sadd.s32 %s1518, %s1519
        %s1521 = smul.addr %s1520, 4
        %s1522 = scalar_lea.vmem %s3, %s1521
      $region52: #{forward.9} parent=47 // pred_fallthru
        _
    $region48: #{forward.9} parent=5 // pred_fallthru
      _
  $region6: #{forward.9} parent=0 // loop_footer
    %s13 = sadd.s32 1, %s9
  $region7: #{forward.9} parent=0 // loop_footer_branch
    %8 = sbr.rel target = $region3
  $region8: #{forward.9} parent=0 // loop_exit
    _

// kernel: forward.10
$region0: #{forward.10}
  #allocation0 [shape = 'u32[]', space=smem, size = 0x4, offset = 0x4, fixed_abs, tag = 'smem constant byte address 0x4 - core index']
  #allocation1 [shape = 'u32[144,128]{1,0:T(1,128)}', space=vmem, size = 0x12000, scoped, tag = 'internal scratch']
  #allocation2 [shape = 'f32[8,256]{1,0:T(8,128)}', space=vmem, size = 0x2000, scoped, tag = 'scratch operand']
  %s0 = inlined_call_operand.vmem [shape: bf16[1,8,768], index: 0, kind: input, shape index: {}]
  %s1 = inlined_call_operand.vmem [shape: bf16[1,768,512], index: 1, kind: input, shape index: {}]
  %s2 = inlined_call_operand.vmem [shape: f32[1,1,512], index: 2, kind: input, shape index: {}]
  %s3 = inlined_call_operand.vmem [shape: bf16[1,8,512], index: 3, kind: output, shape index: {}]
  %s4 = sld [smem:[#allocation0]]
  $region91: #{forward.10} parent=0
    _
  %s6 = ssub.s32 1, %s4
  %s7 = scalar_select 0, %s6, %s4
  $region1: #{forward.10} parent=0
    #allocation3 [shape = 'u8[786432]{0}', space=vmem, size = 0xc0000, scoped, tag = 'input window, operand 1']
    loop: start=0, step=1, limit=4
    $region2: #{forward.10} parent=1 // loop_pre_header
      _
    $region3: #{forward.10} parent=1 // loop_header
      %s9 = sphi 0, %s13
      %p10 = scmp.ge.s32.totalorder %s9, 4
      %s16 = sphi 0, %s42
      %s17 = sphi 0, %s38
      %s18 = sphi 0, %s34
      %s19 = sphi 0, %s30
      %s20 = sphi 0, %s16
      %s21 = sphi 0, %s17
      %s22 = sphi 0, %s18
      %s23 = sphi 0, %s19
      %s24 = sphi 0, %s20
      %s25 = sphi 0, %s21
      %s26 = sphi 0, %s22
      %s27 = sphi 0, %s23
      %s49 = sphi 0, %s51
      %s52 = sphi 0, %s49
      %s53 = sphi 0, %s52
      %s69 = sphi 0, %s53
      %s79 = sphi 0, %s81
      %s82 = sphi 0, %s79
      %s83 = sphi 0, %s82
      %s99 = sphi 0, %s83
      %s107 = sphi 0, %s109
      %s110 = sphi 0, %s107
      %s111 = sphi 0, %s110
      %s127 = sphi 0, %s111
      %s137 = sphi 0, %s139
      %s140 = sphi 0, %s137
      %s141 = sphi 0, %s140
      %s157 = sphi 0, %s141
    $region4: #{forward.10} parent=1 // loop_header_branch
      %12 = sbr.rel (%p10) target = $region8
    $region5: #{forward.10} parent=1 // loop_body
      %s14 = ssub.s32 %s9, 1
      %s15 = ssub.s32 %s9, 2
      %s28 = sadd.s32 1, %s19
      %p29 = scmp.ge.s32.totalorder %s28, 1
      %s30 = scalar_select %p29, 0, %s28
      %s31 = sadd.s32 1, %s18
      %s32 = scalar_select %p29, %s31, %s18
      %p33 = scmp.ge.s32.totalorder %s32, 2
      %s34 = scalar_select %p33, 0, %s32
      %s35 = sadd.s32 1, %s17
      %s36 = scalar_select %p33, %s35, %s17
      %p37 = scmp.ge.s32.totalorder %s36, 1
      %s38 = scalar_select %p37, 0, %s36
      %s39 = sadd.s32 1, %s16
      %s40 = scalar_select %p37, %s39, %s16
      %p41 = scmp.ge.s32.totalorder %s40, 1
      %s42 = scalar_select %p41, 0, %s40
      %s43 = ssub.s32 %s16, %s42
      %s44 = ssub.s32 %s17, %s38
      %s45 = sor.u32 %s43, %s44
      %s46 = ssub.s32 %s19, %s30
      %s47 = sor.u32 %s45, %s46
      %p48 = scmp.eq.s32.totalorder %s47, 0
      %s50 = sadd.s32 %s49, 1
      %s51 = scalar_select %p48, %s49, %s50
      %p54 = pneg %p48
      %p55 = scmp.eq.s32.totalorder %s9, 1
      %p56 = por %p54, %p55
      %p57 = scmp.ne.s32.totalorder %s49, %s52
      %p58 = scmp.eq.s32.totalorder %s9, 0
      %p59 = por %p57, %p58
      %p60 = scmp.ne.s32.totalorder %s49, %s52
      %p61 = scmp.eq.s32.totalorder %s14, 1
      %p62 = por %p60, %p61
      %p63 = scmp.ne.s32.totalorder %s52, %s53
      %p64 = scmp.eq.s32.totalorder %s14, 0
      %p65 = por %p63, %p64
      %p66 = scmp.ne.s32.totalorder %s52, %s53
      %p67 = scmp.eq.s32.totalorder %s15, 1
      %p68 = por %p66, %p67
      %p70 = scmp.ne.s32.totalorder %s53, %s69
      %p71 = scmp.eq.s32.totalorder %s15, 0
      %p72 = por %p70, %p71
      %s73 = ssub.s32 %s16, %s42
      %s74 = ssub.s32 %s19, %s30
      %s75 = sor.u32 %s73, %s74
      %s76 = ssub.s32 %s18, %s34
      %s77 = sor.u32 %s75, %s76
      %p78 = scmp.eq.s32.totalorder %s77, 0
      %s80 = sadd.s32 %s79, 1
      %s81 = scalar_select %p78, %s79, %s80
      %p84 = pneg %p78
      %p85 = scmp.eq.s32.totalorder %s9, 1
      %p86 = por %p84, %p85
      %p87 = scmp.ne.s32.totalorder %s79, %s82
      %p88 = scmp.eq.s32.totalorder %s9, 0
      %p89 = por %p87, %p88
      %p90 = scmp.ne.s32.totalorder %s79, %s82
      %p91 = scmp.eq.s32.totalorder %s14, 1
      %p92 = por %p90, %p91
      %p93 = scmp.ne.s32.totalorder %s82, %s83
      %p94 = scmp.eq.s32.totalorder %s14, 0
      %p95 = por %p93, %p94
      %p96 = scmp.ne.s32.totalorder %s82, %s83
      %p97 = scmp.eq.s32.totalorder %s15, 1
      %p98 = por %p96, %p97
      %p100 = scmp.ne.s32.totalorder %s83, %s99
      %p101 = scmp.eq.s32.totalorder %s15, 0
      %p102 = por %p100, %p101
      %s103 = ssub.s32 %s16, %s42
      %s104 = ssub.s32 %s18, %s34
      %s105 = sor.u32 %s103, %s104
      %p106 = scmp.eq.s32.totalorder %s105, 0
      %s108 = sadd.s32 %s107, 1
      %s109 = scalar_select %p106, %s107, %s108
      %p112 = pneg %p106
      %p113 = scmp.eq.s32.totalorder %s9, 1
      %p114 = por %p112, %p113
      %p115 = scmp.ne.s32.totalorder %s107, %s110
      %p116 = scmp.eq.s32.totalorder %s9, 0
      %p117 = por %p115, %p116
      %p118 = scmp.ne.s32.totalorder %s107, %s110
      %p119 = scmp.eq.s32.totalorder %s14, 1
      %p120 = por %p118, %p119
      %p121 = scmp.ne.s32.totalorder %s110, %s111
      %p122 = scmp.eq.s32.totalorder %s14, 0
      %p123 = por %p121, %p122
      %p124 = scmp.ne.s32.totalorder %s110, %s111
      %p125 = scmp.eq.s32.totalorder %s15, 1
      %p126 = por %p124, %p125
      %p128 = scmp.ne.s32.totalorder %s111, %s127
      %p129 = scmp.eq.s32.totalorder %s15, 0
      %p130 = por %p128, %p129
      %s131 = ssub.s32 %s16, %s42
      %s132 = ssub.s32 %s17, %s38
      %s133 = sor.u32 %s131, %s132
      %s134 = ssub.s32 %s18, %s34
      %s135 = sor.u32 %s133, %s134
      %p136 = scmp.eq.s32.totalorder %s135, 0
      %s138 = sadd.s32 %s137, 1
      %s139 = scalar_select %p136, %s137, %s138
      %p142 = pneg %p136
      %p143 = scmp.eq.s32.totalorder %s9, 1
      %p144 = por %p142, %p143
      %p145 = scmp.ne.s32.totalorder %s137, %s140
      %p146 = scmp.eq.s32.totalorder %s9, 0
      %p147 = por %p145, %p146
      %p148 = scmp.ne.s32.totalorder %s137, %s140
      %p149 = scmp.eq.s32.totalorder %s14, 1
      %p150 = por %p148, %p149
      %p151 = scmp.ne.s32.totalorder %s140, %s141
      %p152 = scmp.eq.s32.totalorder %s14, 0
      %p153 = por %p151, %p152
      %p154 = scmp.ne.s32.totalorder %s140, %s141
      %p155 = scmp.eq.s32.totalorder %s15, 1
      %p156 = por %p154, %p155
      %p158 = scmp.ne.s32.totalorder %s141, %s157
      %p159 = scmp.eq.s32.totalorder %s15, 0
      %p160 = por %p158, %p159
      %p161 = scmp.le.s32.totalorder 1, %s9
      %p162 = scmp.lt.s32.totalorder %s9, 3
      %p163 = pnand %p161, %p162
      %p164 = pneg %p163
      // Predicated region
      $region9: #{forward.10} parent=5 // pred_check
        _
      $region10: #{forward.10} parent=5 // pred_check_branch
        %166 = sbr.rel (%p163) target = $region12
      $region11: #{forward.10} parent=5 // pred_region
        %s167 = ssub.s32 %s9, 1
        // Predicated region
        $region13: #{forward.10} parent=11 // pred_check
          %p168 = pneg %p65
        $region14: #{forward.10} parent=11 // pred_check_branch
          %170 = sbr.rel (%p168) target = $region16
        $region15: #{forward.10} parent=11 // pred_region
          %s171 = smul.u32 6, %s23
          %p172 = scmp.lt.s32.totalorder %s20, 0
          %s173 = scalar_select %p172, %s20, 0
          %p174 = scmp.lt.s32.totalorder %s21, 0
          %s175 = scalar_select %p174, %s21, 0
          %p176 = scmp.lt.s32.totalorder %s171, 5
          %s177 = scalar_select %p176, %s171, 5
          %s178 = smul.addr %s175, 6
          %s179 = sadd.s32 %s177, %s178
          %s180 = smul.addr %s173, 6
          %s181 = sadd.s32 %s179, %s180
          %s182 = smul.addr %s181, 4
          %s183 = scalar_lea.vmem %s0, %s182
          %s184 = smul.u32 6, %s23
        $region16: #{forward.10} parent=11 // pred_fallthru
          _
      $region12: #{forward.10} parent=5 // pred_fallthru
        _
      %p185 = scmp.lt.s32.totalorder %s9, 2
      // Predicated region
      $region17: #{forward.10} parent=5 // pred_check
        %p186 = pneg %p185
      $region18: #{forward.10} parent=5 // pred_check_branch
        %188 = sbr.rel (%p186) target = $region20
      $region19: #{forward.10} parent=5 // pred_region
        // Predicated region
        $region21: #{forward.10} parent=19 // pred_check
          %p189 = pneg %p89
        $region22: #{forward.10} parent=19 // pred_check_branch
          %191 = sbr.rel (%p189) target = $region24
        $region23: #{forward.10} parent=19 // pred_region
          %s192 = sand.u32 %s79, 1
          %s193 = sand.u32 %s79, 1
          %s194 = smul.addr %s193, 768
          %s195 = scalar_lea.vmem [#allocation3], %s194
          %s196 = smul.u32 96, %s19
          %s197 = smul.u32 2, %s18
          %s198 = smul.addr %s196, 4
          %s199 = sadd.s32 %s197, %s198
          %s200 = smul.addr %s16, 384
          %s201 = sadd.s32 %s199, %s200
          %s202 = smul.addr %s201, 4
          %s203 = scalar_lea.vmem %s1, %s202
          // Predicated region
          $region25: #{forward.10} parent=23 // pred_check
            _
          $region26: #{forward.10} parent=23 // pred_check_branch
            %205 = sbr.rel (0) target = $region28
          $region27: #{forward.10} parent=23 // pred_region
            // Predicated region
            $region29: #{forward.10} parent=27 // pred_check
              _
            $region30: #{forward.10} parent=27 // pred_check_branch
              %207 = sbr.rel (0) target = $region32
            $region31: #{forward.10} parent=27 // pred_region
              // Predicated region
              $region44: #{forward.10} parent=31 // pred_check
                _
              $region45: #{forward.10} parent=31 // pred_check_branch
                %412 = sbr.rel (0) target = $region47
              $region46: #{forward.10} parent=31 // pred_region
                loop: start=0, step=1, limit=1
                $region48: #{forward.10} parent=46 // loop_pre_header
                  _
                $region49: #{forward.10} parent=46 // loop_header
                  %s414 = sphi 0, %s418
                  %p415 = scmp.ge.s32.totalorder %s414, 1
                  %s419 = sphi %s203, %s203
                  %s420 = sphi %s195, %s195
                $region50: #{forward.10} parent=46 // loop_header_branch
                  %417 = sbr.rel (%p415) target = $region54
                $region51: #{forward.10} parent=46 // loop_body
                  %v421 = vld [vmem:[%s419] sm:$0xff]
                  %422 = vst [vmem:[%s420] sm:$0xff] %v421
                  %v423 = vld [vmem:[%s419 + $0x10] sm:$0xff]
                  %424 = vst [vmem:[%s420 + $0x8] sm:$0xff] %v423
                  %v425 = vld [vmem:[%s419 + $0x20] sm:$0xff]
                  %426 = vst [vmem:[%s420 + $0x10] sm:$0xff] %v425
                  %v427 = vld [vmem:[%s419 + $0x30] sm:$0xff]
                  %428 = vst [vmem:[%s420 + $0x18] sm:$0xff] %v427
                  %v429 = vld [vmem:[%s419 + $0x40] sm:$0xff]
                  %430 = vst [vmem:[%s420 + $0x20] sm:$0xff] %v429
                  %v431 = vld [vmem:[%s419 + $0x50] sm:$0xff]
                  %432 = vst [vmem:[%s420 + $0x28] sm:$0xff] %v431
                  %v433 = vld [vmem:[%s419 + $0x60] sm:$0xff]
                  %434 = vst [vmem:[%s420 + $0x30] sm:$0xff] %v433
                  %v435 = vld [vmem:[%s419 + $0x70] sm:$0xff]
                  %436 = vst [vmem:[%s420 + $0x38] sm:$0xff] %v435
                  %v437 = vld [vmem:[%s419 + $0x80] sm:$0xff]
                  %438 = vst [vmem:[%s420 + $0x40] sm:$0xff] %v437
                  %v439 = vld [vmem:[%s419 + $0x90] sm:$0xff]
                  %440 = vst [vmem:[%s420 + $0x48] sm:$0xff] %v439
                  %v441 = vld [vmem:[%s419 + $0xa0] sm:$0xff]
                  %442 = vst [vmem:[%s420 + $0x50] sm:$0xff] %v441
                  %v443 = vld [vmem:[%s419 + $0xb0] sm:$0xff]
                  %444 = vst [vmem:[%s420 + $0x58] sm:$0xff] %v443
                  %v445 = vld [vmem:[%s419 + $0xc0] sm:$0xff]
                  %446 = vst [vmem:[%s420 + $0x60] sm:$0xff] %v445
                  %v447 = vld [vmem:[%s419 + $0xd0] sm:$0xff]
                  %448 = vst [vmem:[%s420 + $0x68] sm:$0xff] %v447
                  %v449 = vld [vmem:[%s419 + $0xe0] sm:$0xff]
                  %450 = vst [vmem:[%s420 + $0x70] sm:$0xff] %v449
                  %v451 = vld [vmem:[%s419 + $0xf0] sm:$0xff]
                  %452 = vst [vmem:[%s420 + $0x78] sm:$0xff] %v451
                  %v453 = vld [vmem:[%s419 + $0x100] sm:$0xff]
                  %454 = vst [vmem:[%s420 + $0x80] sm:$0xff] %v453
                  %v455 = vld [vmem:[%s419 + $0x110] sm:$0xff]
                  %456 = vst [vmem:[%s420 + $0x88] sm:$0xff] %v455
                  %v457 = vld [vmem:[%s419 + $0x120] sm:$0xff]
                  %458 = vst [vmem:[%s420 + $0x90] sm:$0xff] %v457
                  %v459 = vld [vmem:[%s419 + $0x130] sm:$0xff]
                  %460 = vst [vmem:[%s420 + $0x98] sm:$0xff] %v459
                  %v461 = vld [vmem:[%s419 + $0x140] sm:$0xff]
                  %462 = vst [vmem:[%s420 + $0xa0] sm:$0xff] %v461
                  %v463 = vld [vmem:[%s419 + $0x150] sm:$0xff]
                  %464 = vst [vmem:[%s420 + $0xa8] sm:$0xff] %v463
                  %v465 = vld [vmem:[%s419 + $0x160] sm:$0xff]
                  %466 = vst [vmem:[%s420 + $0xb0] sm:$0xff] %v465
                  %v467 = vld [vmem:[%s419 + $0x170] sm:$0xff]
                  %468 = vst [vmem:[%s420 + $0xb8] sm:$0xff] %v467
                  %v469 = vld [vmem:[%s419 + $0x180] sm:$0xff]
                  %470 = vst [vmem:[%s420 + $0xc0] sm:$0xff] %v469
                  %v471 = vld [vmem:[%s419 + $0x190] sm:$0xff]
                  %472 = vst [vmem:[%s420 + $0xc8] sm:$0xff] %v471
                  %v473 = vld [vmem:[%s419 + $0x1a0] sm:$0xff]
                  %474 = vst [vmem:[%s420 + $0xd0] sm:$0xff] %v473
                  %v475 = vld [vmem:[%s419 + $0x1b0] sm:$0xff]
                  %476 = vst [vmem:[%s420 + $0xd8] sm:$0xff] %v475
                  %v477 = vld [vmem:[%s419 + $0x1c0] sm:$0xff]
                  %478 = vst [vmem:[%s420 + $0xe0] sm:$0xff] %v477
                  %v479 = vld [vmem:[%s419 + $0x1d0] sm:$0xff]
                  %480 = vst [vmem:[%s420 + $0xe8] sm:$0xff] %v479
                  %v481 = vld [vmem:[%s419 + $0x1e0] sm:$0xff]
                  %482 = vst [vmem:[%s420 + $0xf0] sm:$0xff] %v481
                  %v483 = vld [vmem:[%s419 + $0x1f0] sm:$0xff]
                  %484 = vst [vmem:[%s420 + $0xf8] sm:$0xff] %v483
                  %v485 = vld [vmem:[%s419 + $0x200] sm:$0xff]
                  %486 = vst [vmem:[%s420 + $0x100] sm:$0xff] %v485
                  %v487 = vld [vmem:[%s419 + $0x210] sm:$0xff]
                  %488 = vst [vmem:[%s420 + $0x108] sm:$0xff] %v487
                  %v489 = vld [vmem:[%s419 + $0x220] sm:$0xff]
                  %490 = vst [vmem:[%s420 + $0x110] sm:$0xff] %v489
                  %v491 = vld [vmem:[%s419 + $0x230] sm:$0xff]
                  %492 = vst [vmem:[%s420 + $0x118] sm:$0xff] %v491
                  %v493 = vld [vmem:[%s419 + $0x240] sm:$0xff]
                  %494 = vst [vmem:[%s420 + $0x120] sm:$0xff] %v493
                  %v495 = vld [vmem:[%s419 + $0x250] sm:$0xff]
                  %496 = vst [vmem:[%s420 + $0x128] sm:$0xff] %v495
                  %v497 = vld [vmem:[%s419 + $0x260] sm:$0xff]
                  %498 = vst [vmem:[%s420 + $0x130] sm:$0xff] %v497
                  %v499 = vld [vmem:[%s419 + $0x270] sm:$0xff]
                  %500 = vst [vmem:[%s420 + $0x138] sm:$0xff] %v499
                  %v501 = vld [vmem:[%s419 + $0x280] sm:$0xff]
                  %502 = vst [vmem:[%s420 + $0x140] sm:$0xff] %v501
                  %v503 = vld [vmem:[%s419 + $0x290] sm:$0xff]
                  %504 = vst [vmem:[%s420 + $0x148] sm:$0xff] %v503
                  %v505 = vld [vmem:[%s419 + $0x2a0] sm:$0xff]
                  %506 = vst [vmem:[%s420 + $0x150] sm:$0xff] %v505
                  %v507 = vld [vmem:[%s419 + $0x2b0] sm:$0xff]
                  %508 = vst [vmem:[%s420 + $0x158] sm:$0xff] %v507
                  %v509 = vld [vmem:[%s419 + $0x2c0] sm:$0xff]
                  %510 = vst [vmem:[%s420 + $0x160] sm:$0xff] %v509
                  %v511 = vld [vmem:[%s419 + $0x2d0] sm:$0xff]
                  %512 = vst [vmem:[%s420 + $0x168] sm:$0xff] %v511
                  %v513 = vld [vmem:[%s419 + $0x2e0] sm:$0xff]
                  %514 = vst [vmem:[%s420 + $0x170] sm:$0xff] %v513
                  %v515 = vld [vmem:[%s419 + $0x2f0] sm:$0xff]
                  %516 = vst [vmem:[%s420 + $0x178] sm:$0xff] %v515
                  %v517 = vld [vmem:[%s419 + $0x300] sm:$0xff]
                  %518 = vst [vmem:[%s420 + $0x180] sm:$0xff] %v517
                  %v519 = vld [vmem:[%s419 + $0x310] sm:$0xff]
                  %520 = vst [vmem:[%s420 + $0x188] sm:$0xff] %v519
                  %v521 = vld [vmem:[%s419 + $0x320] sm:$0xff]
                  %522 = vst [vmem:[%s420 + $0x190] sm:$0xff] %v521
                  %v523 = vld [vmem:[%s419 + $0x330] sm:$0xff]
                  %524 = vst [vmem:[%s420 + $0x198] sm:$0xff] %v523
                  %v525 = vld [vmem:[%s419 + $0x340] sm:$0xff]
                  %526 = vst [vmem:[%s420 + $0x1a0] sm:$0xff] %v525
                  %v527 = vld [vmem:[%s419 + $0x350] sm:$0xff]
                  %528 = vst [vmem:[%s420 + $0x1a8] sm:$0xff] %v527
                  %v529 = vld [vmem:[%s419 + $0x360] sm:$0xff]
                  %530 = vst [vmem:[%s420 + $0x1b0] sm:$0xff] %v529
                  %v531 = vld [vmem:[%s419 + $0x370] sm:$0xff]
                  %532 = vst [vmem:[%s420 + $0x1b8] sm:$0xff] %v531
                  %v533 = vld [vmem:[%s419 + $0x380] sm:$0xff]
                  %534 = vst [vmem:[%s420 + $0x1c0] sm:$0xff] %v533
                  %v535 = vld [vmem:[%s419 + $0x390] sm:$0xff]
                  %536 = vst [vmem:[%s420 + $0x1c8] sm:$0xff] %v535
                  %v537 = vld [vmem:[%s419 + $0x3a0] sm:$0xff]
                  %538 = vst [vmem:[%s420 + $0x1d0] sm:$0xff] %v537
                  %v539 = vld [vmem:[%s419 + $0x3b0] sm:$0xff]
                  %540 = vst [vmem:[%s420 + $0x1d8] sm:$0xff] %v539
                  %v541 = vld [vmem:[%s419 + $0x3c0] sm:$0xff]
                  %542 = vst [vmem:[%s420 + $0x1e0] sm:$0xff] %v541
                  %v543 = vld [vmem:[%s419 + $0x3d0] sm:$0xff]
                  %544 = vst [vmem:[%s420 + $0x1e8] sm:$0xff] %v543
                  %v545 = vld [vmem:[%s419 + $0x3e0] sm:$0xff]
                  %546 = vst [vmem:[%s420 + $0x1f0] sm:$0xff] %v545
                  %v547 = vld [vmem:[%s419 + $0x3f0] sm:$0xff]
                  %548 = vst [vmem:[%s420 + $0x1f8] sm:$0xff] %v547
                  %v549 = vld [vmem:[%s419 + $0x400] sm:$0xff]
                  %550 = vst [vmem:[%s420 + $0x200] sm:$0xff] %v549
                  %v551 = vld [vmem:[%s419 + $0x410] sm:$0xff]
                  %552 = vst [vmem:[%s420 + $0x208] sm:$0xff] %v551
                  %v553 = vld [vmem:[%s419 + $0x420] sm:$0xff]
                  %554 = vst [vmem:[%s420 + $0x210] sm:$0xff] %v553
                  %v555 = vld [vmem:[%s419 + $0x430] sm:$0xff]
                  %556 = vst [vmem:[%s420 + $0x218] sm:$0xff] %v555
                  %v557 = vld [vmem:[%s419 + $0x440] sm:$0xff]
                  %558 = vst [vmem:[%s420 + $0x220] sm:$0xff] %v557
                  %v559 = vld [vmem:[%s419 + $0x450] sm:$0xff]
                  %560 = vst [vmem:[%s420 + $0x228] sm:$0xff] %v559
                  %v561 = vld [vmem:[%s419 + $0x460] sm:$0xff]
                  %562 = vst [vmem:[%s420 + $0x230] sm:$0xff] %v561
                  %v563 = vld [vmem:[%s419 + $0x470] sm:$0xff]
                  %564 = vst [vmem:[%s420 + $0x238] sm:$0xff] %v563
                  %v565 = vld [vmem:[%s419 + $0x480] sm:$0xff]
                  %566 = vst [vmem:[%s420 + $0x240] sm:$0xff] %v565
                  %v567 = vld [vmem:[%s419 + $0x490] sm:$0xff]
                  %568 = vst [vmem:[%s420 + $0x248] sm:$0xff] %v567
                  %v569 = vld [vmem:[%s419 + $0x4a0] sm:$0xff]
                  %570 = vst [vmem:[%s420 + $0x250] sm:$0xff] %v569
                  %v571 = vld [vmem:[%s419 + $0x4b0] sm:$0xff]
                  %572 = vst [vmem:[%s420 + $0x258] sm:$0xff] %v571
                  %v573 = vld [vmem:[%s419 + $0x4c0] sm:$0xff]
                  %574 = vst [vmem:[%s420 + $0x260] sm:$0xff] %v573
                  %v575 = vld [vmem:[%s419 + $0x4d0] sm:$0xff]
                  %576 = vst [vmem:[%s420 + $0x268] sm:$0xff] %v575
                  %v577 = vld [vmem:[%s419 + $0x4e0] sm:$0xff]
                  %578 = vst [vmem:[%s420 + $0x270] sm:$0xff] %v577
                  %v579 = vld [vmem:[%s419 + $0x4f0] sm:$0xff]
                  %580 = vst [vmem:[%s420 + $0x278] sm:$0xff] %v579
                  %v581 = vld [vmem:[%s419 + $0x500] sm:$0xff]
                  %582 = vst [vmem:[%s420 + $0x280] sm:$0xff] %v581
                  %v583 = vld [vmem:[%s419 + $0x510] sm:$0xff]
                  %584 = vst [vmem:[%s420 + $0x288] sm:$0xff] %v583
                  %v585 = vld [vmem:[%s419 + $0x520] sm:$0xff]
                  %586 = vst [vmem:[%s420 + $0x290] sm:$0xff] %v585
                  %v587 = vld [vmem:[%s419 + $0x530] sm:$0xff]
                  %588 = vst [vmem:[%s420 + $0x298] sm:$0xff] %v587
                  %v589 = vld [vmem:[%s419 + $0x540] sm:$0xff]
                  %590 = vst [vmem:[%s420 + $0x2a0] sm:$0xff] %v589
                  %v591 = vld [vmem:[%s419 + $0x550] sm:$0xff]
                  %592 = vst [vmem:[%s420 + $0x2a8] sm:$0xff] %v591
                  %v593 = vld [vmem:[%s419 + $0x560] sm:$0xff]
                  %594 = vst [vmem:[%s420 + $0x2b0] sm:$0xff] %v593
                  %v595 = vld [vmem:[%s419 + $0x570] sm:$0xff]
                  %596 = vst [vmem:[%s420 + $0x2b8] sm:$0xff] %v595
                  %v597 = vld [vmem:[%s419 + $0x580] sm:$0xff]
                  %598 = vst [vmem:[%s420 + $0x2c0] sm:$0xff] %v597
                  %v599 = vld [vmem:[%s419 + $0x590] sm:$0xff]
                  %600 = vst [vmem:[%s420 + $0x2c8] sm:$0xff] %v599
                  %v601 = vld [vmem:[%s419 + $0x5a0] sm:$0xff]
                  %602 = vst [vmem:[%s420 + $0x2d0] sm:$0xff] %v601
                  %v603 = vld [vmem:[%s419 + $0x5b0] sm:$0xff]
                  %604 = vst [vmem:[%s420 + $0x2d8] sm:$0xff] %v603
                  %v605 = vld [vmem:[%s419 + $0x5c0] sm:$0xff]
                  %606 = vst [vmem:[%s420 + $0x2e0] sm:$0xff] %v605
                  %v607 = vld [vmem:[%s419 + $0x5d0] sm:$0xff]
                  %608 = vst [vmem:[%s420 + $0x2e8] sm:$0xff] %v607
                  %v609 = vld [vmem:[%s419 + $0x5e0] sm:$0xff]
                  %610 = vst [vmem:[%s420 + $0x2f0] sm:$0xff] %v609
                  %v611 = vld [vmem:[%s419 + $0x5f0] sm:$0xff]
                  %612 = vst [vmem:[%s420 + $0x2f8] sm:$0xff] %v611
                $region52: #{forward.10} parent=46 // loop_footer
                  %s418 = sadd.s32 1, %s414
                $region53: #{forward.10} parent=46 // loop_footer_branch
                  %413 = sbr.rel target = $region49
                $region54: #{forward.10} parent=46 // loop_exit
                  _
              $region47: #{forward.10} parent=31 // pred_fallthru
                _
              // Predicated region
              $region55: #{forward.10} parent=31 // pred_check
                _
              $region56: #{forward.10} parent=31 // pred_check_branch
                %614 = sbr.rel target = $region58
              $region57: #{forward.10} parent=31 // pred_region
                _
              $region58: #{forward.10} parent=31 // pred_fallthru
                _
            $region32: #{forward.10} parent=27 // pred_fallthru
              _
            // Predicated region
            $region33: #{forward.10} parent=27 // pred_check
              _
            $region34: #{forward.10} parent=27 // pred_check_branch
              %209 = sbr.rel target = $region36
            $region35: #{forward.10} parent=27 // pred_region
              loop: start=0, step=1, limit=1
              $region37: #{forward.10} parent=35 // loop_pre_header
                _
              $region38: #{forward.10} parent=35 // loop_header
                %s212 = sphi 0, %s216
                %p213 = scmp.ge.s32.totalorder %s212, 1
                %s217 = sphi %s203, %s203
                %s218 = sphi %s195, %s195
              $region39: #{forward.10} parent=35 // loop_header_branch
                %215 = sbr.rel (%p213) target = $region43
              $region40: #{forward.10} parent=35 // loop_body
                %v219 = vld [vmem:[%s217] sm:$0xff]
                %220 = vst [vmem:[%s218] sm:$0xff] %v219
                %v221 = vld [vmem:[%s217 + $0x10] sm:$0xff]
                %222 = vst [vmem:[%s218 + $0x8] sm:$0xff] %v221
                %v223 = vld [vmem:[%s217 + $0x20] sm:$0xff]
                %224 = vst [vmem:[%s218 + $0x10] sm:$0xff] %v223
                %v225 = vld [vmem:[%s217 + $0x30] sm:$0xff]
                %226 = vst [vmem:[%s218 + $0x18] sm:$0xff] %v225
                %v227 = vld [vmem:[%s217 + $0x40] sm:$0xff]
                %228 = vst [vmem:[%s218 + $0x20] sm:$0xff] %v227
                %v229 = vld [vmem:[%s217 + $0x50] sm:$0xff]
                %230 = vst [vmem:[%s218 + $0x28] sm:$0xff] %v229
                %v231 = vld [vmem:[%s217 + $0x60] sm:$0xff]
                %232 = vst [vmem:[%s218 + $0x30] sm:$0xff] %v231
                %v233 = vld [vmem:[%s217 + $0x70] sm:$0xff]
                %234 = vst [vmem:[%s218 + $0x38] sm:$0xff] %v233
                %v235 = vld [vmem:[%s217 + $0x80] sm:$0xff]
                %236 = vst [vmem:[%s218 + $0x40] sm:$0xff] %v235
                %v237 = vld [vmem:[%s217 + $0x90] sm:$0xff]
                %238 = vst [vmem:[%s218 + $0x48] sm:$0xff] %v237
                %v239 = vld [vmem:[%s217 + $0xa0] sm:$0xff]
                %240 = vst [vmem:[%s218 + $0x50] sm:$0xff] %v239
                %v241 = vld [vmem:[%s217 + $0xb0] sm:$0xff]
                %242 = vst [vmem:[%s218 + $0x58] sm:$0xff] %v241
                %v243 = vld [vmem:[%s217 + $0xc0] sm:$0xff]
                %244 = vst [vmem:[%s218 + $0x60] sm:$0xff] %v243
                %v245 = vld [vmem:[%s217 + $0xd0] sm:$0xff]
                %246 = vst [vmem:[%s218 + $0x68] sm:$0xff] %v245
                %v247 = vld [vmem:[%s217 + $0xe0] sm:$0xff]
                %248 = vst [vmem:[%s218 + $0x70] sm:$0xff] %v247
                %v249 = vld [vmem:[%s217 + $0xf0] sm:$0xff]
                %250 = vst [vmem:[%s218 + $0x78] sm:$0xff] %v249
                %v251 = vld [vmem:[%s217 + $0x100] sm:$0xff]
                %252 = vst [vmem:[%s218 + $0x80] sm:$0xff] %v251
                %v253 = vld [vmem:[%s217 + $0x110] sm:$0xff]
                %254 = vst [vmem:[%s218 + $0x88] sm:$0xff] %v253
                %v255 = vld [vmem:[%s217 + $0x120] sm:$0xff]
                %256 = vst [vmem:[%s218 + $0x90] sm:$0xff] %v255
                %v257 = vld [vmem:[%s217 + $0x130] sm:$0xff]
                %258 = vst [vmem:[%s218 + $0x98] sm:$0xff] %v257
                %v259 = vld [vmem:[%s217 + $0x140] sm:$0xff]
                %260 = vst [vmem:[%s218 + $0xa0] sm:$0xff] %v259
                %v261 = vld [vmem:[%s217 + $0x150] sm:$0xff]
                %262 = vst [vmem:[%s218 + $0xa8] sm:$0xff] %v261
                %v263 = vld [vmem:[%s217 + $0x160] sm:$0xff]
                %264 = vst [vmem:[%s218 + $0xb0] sm:$0xff] %v263
                %v265 = vld [vmem:[%s217 + $0x170] sm:$0xff]
                %266 = vst [vmem:[%s218 + $0xb8] sm:$0xff] %v265
                %v267 = vld [vmem:[%s217 + $0x180] sm:$0xff]
                %268 = vst [vmem:[%s218 + $0xc0] sm:$0xff] %v267
                %v269 = vld [vmem:[%s217 + $0x190] sm:$0xff]
                %270 = vst [vmem:[%s218 + $0xc8] sm:$0xff] %v269
                %v271 = vld [vmem:[%s217 + $0x1a0] sm:$0xff]
                %272 = vst [vmem:[%s218 + $0xd0] sm:$0xff] %v271
                %v273 = vld [vmem:[%s217 + $0x1b0] sm:$0xff]
                %274 = vst [vmem:[%s218 + $0xd8] sm:$0xff] %v273
                %v275 = vld [vmem:[%s217 + $0x1c0] sm:$0xff]
                %276 = vst [vmem:[%s218 + $0xe0] sm:$0xff] %v275
                %v277 = vld [vmem:[%s217 + $0x1d0] sm:$0xff]
                %278 = vst [vmem:[%s218 + $0xe8] sm:$0xff] %v277
                %v279 = vld [vmem:[%s217 + $0x1e0] sm:$0xff]
                %280 = vst [vmem:[%s218 + $0xf0] sm:$0xff] %v279
                %v281 = vld [vmem:[%s217 + $0x1f0] sm:$0xff]
                %282 = vst [vmem:[%s218 + $0xf8] sm:$0xff] %v281
                %v283 = vld [vmem:[%s217 + $0x200] sm:$0xff]
                %284 = vst [vmem:[%s218 + $0x100] sm:$0xff] %v283
                %v285 = vld [vmem:[%s217 + $0x210] sm:$0xff]
                %286 = vst [vmem:[%s218 + $0x108] sm:$0xff] %v285
                %v287 = vld [vmem:[%s217 + $0x220] sm:$0xff]
                %288 = vst [vmem:[%s218 + $0x110] sm:$0xff] %v287
                %v289 = vld [vmem:[%s217 + $0x230] sm:$0xff]
                %290 = vst [vmem:[%s218 + $0x118] sm:$0xff] %v289
                %v291 = vld [vmem:[%s217 + $0x240] sm:$0xff]
                %292 = vst [vmem:[%s218 + $0x120] sm:$0xff] %v291
                %v293 = vld [vmem:[%s217 + $0x250] sm:$0xff]
                %294 = vst [vmem:[%s218 + $0x128] sm:$0xff] %v293
                %v295 = vld [vmem:[%s217 + $0x260] sm:$0xff]
                %296 = vst [vmem:[%s218 + $0x130] sm:$0xff] %v295
                %v297 = vld [vmem:[%s217 + $0x270] sm:$0xff]
                %298 = vst [vmem:[%s218 + $0x138] sm:$0xff] %v297
                %v299 = vld [vmem:[%s217 + $0x280] sm:$0xff]
                %300 = vst [vmem:[%s218 + $0x140] sm:$0xff] %v299
                %v301 = vld [vmem:[%s217 + $0x290] sm:$0xff]
                %302 = vst [vmem:[%s218 + $0x148] sm:$0xff] %v301
                %v303 = vld [vmem:[%s217 + $0x2a0] sm:$0xff]
                %304 = vst [vmem:[%s218 + $0x150] sm:$0xff] %v303
                %v305 = vld [vmem:[%s217 + $0x2b0] sm:$0xff]
                %306 = vst [vmem:[%s218 + $0x158] sm:$0xff] %v305
                %v307 = vld [vmem:[%s217 + $0x2c0] sm:$0xff]
                %308 = vst [vmem:[%s218 + $0x160] sm:$0xff] %v307
                %v309 = vld [vmem:[%s217 + $0x2d0] sm:$0xff]
                %310 = vst [vmem:[%s218 + $0x168] sm:$0xff] %v309
                %v311 = vld [vmem:[%s217 + $0x2e0] sm:$0xff]
                %312 = vst [vmem:[%s218 + $0x170] sm:$0xff] %v311
                %v313 = vld [vmem:[%s217 + $0x2f0] sm:$0xff]
                %314 = vst [vmem:[%s218 + $0x178] sm:$0xff] %v313
                %v315 = vld [vmem:[%s217 + $0x300] sm:$0xff]
                %316 = vst [vmem:[%s218 + $0x180] sm:$0xff] %v315
                %v317 = vld [vmem:[%s217 + $0x310] sm:$0xff]
                %318 = vst [vmem:[%s218 + $0x188] sm:$0xff] %v317
                %v319 = vld [vmem:[%s217 + $0x320] sm:$0xff]
                %320 = vst [vmem:[%s218 + $0x190] sm:$0xff] %v319
                %v321 = vld [vmem:[%s217 + $0x330] sm:$0xff]
                %322 = vst [vmem:[%s218 + $0x198] sm:$0xff] %v321
                %v323 = vld [vmem:[%s217 + $0x340] sm:$0xff]
                %324 = vst [vmem:[%s218 + $0x1a0] sm:$0xff] %v323
                %v325 = vld [vmem:[%s217 + $0x350] sm:$0xff]
                %326 = vst [vmem:[%s218 + $0x1a8] sm:$0xff] %v325
                %v327 = vld [vmem:[%s217 + $0x360] sm:$0xff]
                %328 = vst [vmem:[%s218 + $0x1b0] sm:$0xff] %v327
                %v329 = vld [vmem:[%s217 + $0x370] sm:$0xff]
                %330 = vst [vmem:[%s218 + $0x1b8] sm:$0xff] %v329
                %v331 = vld [vmem:[%s217 + $0x380] sm:$0xff]
                %332 = vst [vmem:[%s218 + $0x1c0] sm:$0xff] %v331
                %v333 = vld [vmem:[%s217 + $0x390] sm:$0xff]
                %334 = vst [vmem:[%s218 + $0x1c8] sm:$0xff] %v333
                %v335 = vld [vmem:[%s217 + $0x3a0] sm:$0xff]
                %336 = vst [vmem:[%s218 + $0x1d0] sm:$0xff] %v335
                %v337 = vld [vmem:[%s217 + $0x3b0] sm:$0xff]
                %338 = vst [vmem:[%s218 + $0x1d8] sm:$0xff] %v337
                %v339 = vld [vmem:[%s217 + $0x3c0] sm:$0xff]
                %340 = vst [vmem:[%s218 + $0x1e0] sm:$0xff] %v339
                %v341 = vld [vmem:[%s217 + $0x3d0] sm:$0xff]
                %342 = vst [vmem:[%s218 + $0x1e8] sm:$0xff] %v341
                %v343 = vld [vmem:[%s217 + $0x3e0] sm:$0xff]
                %344 = vst [vmem:[%s218 + $0x1f0] sm:$0xff] %v343
                %v345 = vld [vmem:[%s217 + $0x3f0] sm:$0xff]
                %346 = vst [vmem:[%s218 + $0x1f8] sm:$0xff] %v345
                %v347 = vld [vmem:[%s217 + $0x400] sm:$0xff]
                %348 = vst [vmem:[%s218 + $0x200] sm:$0xff] %v347
                %v349 = vld [vmem:[%s217 + $0x410] sm:$0xff]
                %350 = vst [vmem:[%s218 + $0x208] sm:$0xff] %v349
                %v351 = vld [vmem:[%s217 + $0x420] sm:$0xff]
                %352 = vst [vmem:[%s218 + $0x210] sm:$0xff] %v351
                %v353 = vld [vmem:[%s217 + $0x430] sm:$0xff]
                %354 = vst [vmem:[%s218 + $0x218] sm:$0xff] %v353
                %v355 = vld [vmem:[%s217 + $0x440] sm:$0xff]
                %356 = vst [vmem:[%s218 + $0x220] sm:$0xff] %v355
                %v357 = vld [vmem:[%s217 + $0x450] sm:$0xff]
                %358 = vst [vmem:[%s218 + $0x228] sm:$0xff] %v357
                %v359 = vld [vmem:[%s217 + $0x460] sm:$0xff]
                %360 = vst [vmem:[%s218 + $0x230] sm:$0xff] %v359
                %v361 = vld [vmem:[%s217 + $0x470] sm:$0xff]
                %362 = vst [vmem:[%s218 + $0x238] sm:$0xff] %v361
                %v363 = vld [vmem:[%s217 + $0x480] sm:$0xff]
                %364 = vst [vmem:[%s218 + $0x240] sm:$0xff] %v363
                %v365 = vld [vmem:[%s217 + $0x490] sm:$0xff]
                %366 = vst [vmem:[%s218 + $0x248] sm:$0xff] %v365
                %v367 = vld [vmem:[%s217 + $0x4a0] sm:$0xff]
                %368 = vst [vmem:[%s218 + $0x250] sm:$0xff] %v367
                %v369 = vld [vmem:[%s217 + $0x4b0] sm:$0xff]
                %370 = vst [vmem:[%s218 + $0x258] sm:$0xff] %v369
                %v371 = vld [vmem:[%s217 + $0x4c0] sm:$0xff]
                %372 = vst [vmem:[%s218 + $0x260] sm:$0xff] %v371
                %v373 = vld [vmem:[%s217 + $0x4d0] sm:$0xff]
                %374 = vst [vmem:[%s218 + $0x268] sm:$0xff] %v373
                %v375 = vld [vmem:[%s217 + $0x4e0] sm:$0xff]
                %376 = vst [vmem:[%s218 + $0x270] sm:$0xff] %v375
                %v377 = vld [vmem:[%s217 + $0x4f0] sm:$0xff]
                %378 = vst [vmem:[%s218 + $0x278] sm:$0xff] %v377
                %v379 = vld [vmem:[%s217 + $0x500] sm:$0xff]
                %380 = vst [vmem:[%s218 + $0x280] sm:$0xff] %v379
                %v381 = vld [vmem:[%s217 + $0x510] sm:$0xff]
                %382 = vst [vmem:[%s218 + $0x288] sm:$0xff] %v381
                %v383 = vld [vmem:[%s217 + $0x520] sm:$0xff]
                %384 = vst [vmem:[%s218 + $0x290] sm:$0xff] %v383
                %v385 = vld [vmem:[%s217 + $0x530] sm:$0xff]
                %386 = vst [vmem:[%s218 + $0x298] sm:$0xff] %v385
                %v387 = vld [vmem:[%s217 + $0x540] sm:$0xff]
                %388 = vst [vmem:[%s218 + $0x2a0] sm:$0xff] %v387
                %v389 = vld [vmem:[%s217 + $0x550] sm:$0xff]
                %390 = vst [vmem:[%s218 + $0x2a8] sm:$0xff] %v389
                %v391 = vld [vmem:[%s217 + $0x560] sm:$0xff]
                %392 = vst [vmem:[%s218 + $0x2b0] sm:$0xff] %v391
                %v393 = vld [vmem:[%s217 + $0x570] sm:$0xff]
                %394 = vst [vmem:[%s218 + $0x2b8] sm:$0xff] %v393
                %v395 = vld [vmem:[%s217 + $0x580] sm:$0xff]
                %396 = vst [vmem:[%s218 + $0x2c0] sm:$0xff] %v395
                %v397 = vld [vmem:[%s217 + $0x590] sm:$0xff]
                %398 = vst [vmem:[%s218 + $0x2c8] sm:$0xff] %v397
                %v399 = vld [vmem:[%s217 + $0x5a0] sm:$0xff]
                %400 = vst [vmem:[%s218 + $0x2d0] sm:$0xff] %v399
                %v401 = vld [vmem:[%s217 + $0x5b0] sm:$0xff]
                %402 = vst [vmem:[%s218 + $0x2d8] sm:$0xff] %v401
                %v403 = vld [vmem:[%s217 + $0x5c0] sm:$0xff]
                %404 = vst [vmem:[%s218 + $0x2e0] sm:$0xff] %v403
                %v405 = vld [vmem:[%s217 + $0x5d0] sm:$0xff]
                %406 = vst [vmem:[%s218 + $0x2e8] sm:$0xff] %v405
                %v407 = vld [vmem:[%s217 + $0x5e0] sm:$0xff]
                %408 = vst [vmem:[%s218 + $0x2f0] sm:$0xff] %v407
                %v409 = vld [vmem:[%s217 + $0x5f0] sm:$0xff]
                %410 = vst [vmem:[%s218 + $0x2f8] sm:$0xff] %v409
              $region41: #{forward.10} parent=35 // loop_footer
                %s216 = sadd.s32 1, %s212
              $region42: #{forward.10} parent=35 // loop_footer_branch
                %211 = sbr.rel target = $region38
              $region43: #{forward.10} parent=35 // loop_exit
                _
            $region36: #{forward.10} parent=27 // pred_fallthru
              _
          $region28: #{forward.10} parent=23 // pred_fallthru
            _
          %615 = vnop
        $region24: #{forward.10} parent=19 // pred_fallthru
          _
        // Predicated region
        $region59: #{forward.10} parent=19 // pred_check
          %p616 = pneg %p117
        $region60: #{forward.10} parent=19 // pred_check_branch
          %618 = sbr.rel (%p616) target = $region62
        $region61: #{forward.10} parent=19 // pred_region
          %s619 = smul.u32 2, %s18
          %p620 = scmp.lt.s32.totalorder %s16, 0
          %s621 = scalar_select %p620, %s16, 0
          %p622 = scmp.lt.s32.totalorder %s619, 3
          %s623 = scalar_select %p622, %s619, 3
          %s624 = smul.addr %s621, 4
          %s625 = sadd.s32 %s623, %s624
          %s626 = scalar_lea.vmem %s2, %s625
          %s627 = smul.u32 2, %s18
        $region62: #{forward.10} parent=19 // pred_fallthru
          _
      $region20: #{forward.10} parent=5 // pred_fallthru
        _
      %p628 = scmp.le.s32.totalorder 1, %s9
      %p629 = scmp.lt.s32.totalorder %s9, 3
      %p630 = pnand %p628, %p629
      %p631 = pneg %p630
      // Predicated region
      $region63: #{forward.10} parent=5 // pred_check
        _
      $region64: #{forward.10} parent=5 // pred_check_branch
        %633 = sbr.rel (%p630) target = $region66
      $region65: #{forward.10} parent=5 // pred_region
        %s634 = ssub.s32 %s9, 1
        %s635 = sand.u32 %s82, 1
        %s636 = sand.u32 %s82, 1
        %s637 = smul.addr %s636, 768
        %s638 = scalar_lea.vmem [#allocation3], %s637
        // Predicated region
        $region67: #{forward.10} parent=65 // pred_check
          %p639 = pneg %p95
        $region68: #{forward.10} parent=65 // pred_check_branch
          %641 = sbr.rel (%p639) target = $region70
        $region69: #{forward.10} parent=65 // pred_region
          _
        $region70: #{forward.10} parent=65 // pred_fallthru
          _
        %s642 = smul.u32 6, %s23
        %p643 = scmp.lt.s32.totalorder %s20, 0
        %s644 = scalar_select %p643, %s20, 0
        %p645 = scmp.lt.s32.totalorder %s21, 0
        %s646 = scalar_select %p645, %s21, 0
        %p647 = scmp.lt.s32.totalorder %s642, 5
        %s648 = scalar_select %p647, %s642, 5
        %s649 = smul.addr %s646, 6
        %s650 = sadd.s32 %s648, %s649
        %s651 = smul.addr %s644, 6
        %s652 = sadd.s32 %s650, %s651
        %s653 = smul.addr %s652, 4
        %s654 = scalar_lea.vmem %s0, %s653
        %p655 = pneg %p65
        %p656 = pneg %p62
        %s657 = sand.u32 %s82, 1
        %s658 = sand.u32 %s82, 1
        %s659 = smul.addr %s658, 768
        %s660 = scalar_lea.vmem [#allocation3], %s659
        %p661 = pneg %p95
        %p662 = pneg %p92
        %s663 = smul.u32 2, %s22
        %p664 = scmp.lt.s32.totalorder %s20, 0
        %s665 = scalar_select %p664, %s20, 0
        %p666 = scmp.lt.s32.totalorder %s663, 3
        %s667 = scalar_select %p666, %s663, 3
        %s668 = smul.addr %s665, 4
        %s669 = sadd.s32 %s667, %s668
        %s670 = scalar_lea.vmem %s2, %s669
        %p671 = pneg %p123
        %p672 = pneg %p120
        %p673 = pneg %p153
        %p674 = pneg %p150
        %s675 = smul.u32 2, %s22
        %p676 = scmp.lt.s32.totalorder %s20, 0
        %s677 = scalar_select %p676, %s20, 0
        %p678 = scmp.lt.s32.totalorder %s21, 0
        %s679 = scalar_select %p678, %s21, 0
        %p680 = scmp.lt.s32.totalorder %s675, 3
        %s681 = scalar_select %p680, %s675, 3
        %s682 = smul.addr %s679, 4
        %s683 = sadd.s32 %s681, %s682
        %s684 = smul.addr %s677, 4
        %s685 = sadd.s32 %s683, %s684
        %s686 = smul.addr %s685, 4
        %s687 = scalar_lea.vmem %s3, %s686
        %s688 = smul.u32 6, %s23
        %p689 = scmp.lt.s32.totalorder %s20, 0
        %s690 = scalar_select %p689, %s20, 0
        %p691 = scmp.lt.s32.totalorder %s21, 0
        %s692 = scalar_select %p691, %s21, 0
        %p693 = scmp.lt.s32.totalorder %s688, 5
        %s694 = scalar_select %p693, %s688, 5
        %s695 = smul.addr %s692, 6
        %s696 = sadd.s32 %s694, %s695
        %s697 = smul.addr %s690, 6
        %s698 = sadd.s32 %s696, %s697
        %s699 = smul.addr %s698, 4
        %s700 = scalar_lea.vmem %s0, %s699
        %s701 = smul.u32 6, %s23
        %s702 = smul.u32 96, %s23
        %s703 = smul.u32 2, %s22
        %s704 = smul.u32 2, %s22
        %p705 = scmp.lt.s32.totalorder %s20, 0
        %s706 = scalar_select %p705, %s20, 0
        %p707 = scmp.lt.s32.totalorder %s704, 3
        %s708 = scalar_select %p707, %s704, 3
        %s709 = smul.addr %s706, 4
        %s710 = sadd.s32 %s708, %s709
        %s711 = scalar_lea.vmem %s2, %s710
        %s712 = smul.u32 2, %s22
        %s713 = smul.u32 2, %s22
        %p714 = scmp.lt.s32.totalorder %s20, 0
        %s715 = scalar_select %p714, %s20, 0
        %p716 = scmp.lt.s32.totalorder %s21, 0
        %s717 = scalar_select %p716, %s21, 0
        %p718 = scmp.lt.s32.totalorder %s713, 3
        %s719 = scalar_select %p718, %s713, 3
        %s720 = smul.addr %s717, 4
        %s721 = sadd.s32 %s719, %s720
        %s722 = smul.addr %s715, 4
        %s723 = sadd.s32 %s721, %s722
        %s724 = smul.addr %s723, 4
        %s725 = scalar_lea.vmem %s3, %s724
        %s726 = smul.u32 2, %s22
        %p727 = scmp.eq.s32.totalorder %s23, 0
        // Predicated region
        $region71: #{forward.10} parent=65 // pred_check
          %p728 = pneg %p727
        $region72: #{forward.10} parent=65 // pred_check_branch
          %730 = sbr.rel (%p728) target = $region74
        $region73: #{forward.10} parent=65 // pred_region
          %731 = vst [vmem:[#allocation2] sm:$0xff] 0.0
          %732 = vst [vmem:[#allocation2 + $0x8] sm:$0xff] 0.0
        $region74: #{forward.10} parent=65 // pred_fallthru
          _
        %v733 = vld [vmem:[#allocation2] sm:$0xff]
        %v734 = vld [vmem:[#allocation2 + $0x8] sm:$0xff]
        %v735 = vld [vmem:[%s700] sm:$0xff]
        %v736 = vld [vmem:[%s700 + $0x8] sm:$0xff]
        %v737 = vld [vmem:[%s700 + $0x10] sm:$0xff]
        %v738 = vld [vmem:[%s638] sm:$0xff]
        %v739 = vld [vmem:[%s638 + $0x8] sm:$0xff]
        %v740 = vld [vmem:[%s638 + $0x10] sm:$0xff]
        %v741 = vld [vmem:[%s638 + $0x18] sm:$0xff]
        %v742 = vld [vmem:[%s638 + $0x20] sm:$0xff]
        %v743 = vld [vmem:[%s638 + $0x28] sm:$0xff]
        %v744 = vld [vmem:[%s638 + $0x30] sm:$0xff]
        %v745 = vld [vmem:[%s638 + $0x38] sm:$0xff]
        %v746 = vld [vmem:[%s638 + $0x40] sm:$0xff]
        %v747 = vld [vmem:[%s638 + $0x48] sm:$0xff]
        %v748 = vld [vmem:[%s638 + $0x50] sm:$0xff]
        %v749 = vld [vmem:[%s638 + $0x58] sm:$0xff]
        %v750 = vld [vmem:[%s638 + $0x60] sm:$0xff]
        %v751 = vld [vmem:[%s638 + $0x68] sm:$0xff]
        %v752 = vld [vmem:[%s638 + $0x70] sm:$0xff]
        %v753 = vld [vmem:[%s638 + $0x78] sm:$0xff]
        %v754 = vld [vmem:[%s638 + $0x80] sm:$0xff]
        %v755 = vld [vmem:[%s638 + $0x88] sm:$0xff]
        %v756 = vld [vmem:[%s638 + $0x90] sm:$0xff]
        %v757 = vld [vmem:[%s638 + $0x98] sm:$0xff]
        %v758 = vld [vmem:[%s638 + $0xa0] sm:$0xff]
        %v759 = vld [vmem:[%s638 + $0xa8] sm:$0xff]
        %v760 = vld [vmem:[%s638 + $0xb0] sm:$0xff]
        %v761 = vld [vmem:[%s638 + $0xb8] sm:$0xff]
        %v762 = vld [vmem:[%s638 + $0xc0] sm:$0xff]
        %v763 = vld [vmem:[%s638 + $0xc8] sm:$0xff]
        %v764 = vld [vmem:[%s638 + $0xd0] sm:$0xff]
        %v765 = vld [vmem:[%s638 + $0xd8] sm:$0xff]
        %v766 = vld [vmem:[%s638 + $0xe0] sm:$0xff]
        %v767 = vld [vmem:[%s638 + $0xe8] sm:$0xff]
        %v768 = vld [vmem:[%s638 + $0xf0] sm:$0xff]
        %v769 = vld [vmem:[%s638 + $0xf8] sm:$0xff]
        %v770 = vld [vmem:[%s638 + $0x100] sm:$0xff]
        %v771 = vld [vmem:[%s638 + $0x108] sm:$0xff]
        %v772 = vld [vmem:[%s638 + $0x110] sm:$0xff]
        %v773 = vld [vmem:[%s638 + $0x118] sm:$0xff]
        %v774 = vld [vmem:[%s638 + $0x120] sm:$0xff]
        %v775 = vld [vmem:[%s638 + $0x128] sm:$0xff]
        %v776 = vld [vmem:[%s638 + $0x130] sm:$0xff]
        %v777 = vld [vmem:[%s638 + $0x138] sm:$0xff]
        %v778 = vld [vmem:[%s638 + $0x140] sm:$0xff]
        %v779 = vld [vmem:[%s638 + $0x148] sm:$0xff]
        %v780 = vld [vmem:[%s638 + $0x150] sm:$0xff]
        %v781 = vld [vmem:[%s638 + $0x158] sm:$0xff]
        %v782 = vld [vmem:[%s638 + $0x160] sm:$0xff]
        %v783 = vld [vmem:[%s638 + $0x168] sm:$0xff]
        %v784 = vld [vmem:[%s638 + $0x170] sm:$0xff]
        %v785 = vld [vmem:[%s638 + $0x178] sm:$0xff]
        %v786 = vld [vmem:[%s638 + $0x180] sm:$0xff]
        %v787 = vld [vmem:[%s638 + $0x188] sm:$0xff]
        %v788 = vld [vmem:[%s638 + $0x190] sm:$0xff]
        %v789 = vld [vmem:[%s638 + $0x198] sm:$0xff]
        %v790 = vld [vmem:[%s638 + $0x1a0] sm:$0xff]
        %v791 = vld [vmem:[%s638 + $0x1a8] sm:$0xff]
        %v792 = vld [vmem:[%s638 + $0x1b0] sm:$0xff]
        %v793 = vld [vmem:[%s638 + $0x1b8] sm:$0xff]
        %v794 = vld [vmem:[%s638 + $0x1c0] sm:$0xff]
        %v795 = vld [vmem:[%s638 + $0x1c8] sm:$0xff]
        %v796 = vld [vmem:[%s638 + $0x1d0] sm:$0xff]
        %v797 = vld [vmem:[%s638 + $0x1d8] sm:$0xff]
        %v798 = vld [vmem:[%s638 + $0x1e0] sm:$0xff]
        %v799 = vld [vmem:[%s638 + $0x1e8] sm:$0xff]
        %v800 = vld [vmem:[%s638 + $0x1f0] sm:$0xff]
        %v801 = vld [vmem:[%s638 + $0x1f8] sm:$0xff]
        %v802 = vld [vmem:[%s638 + $0x200] sm:$0xff]
        %v803 = vld [vmem:[%s638 + $0x208] sm:$0xff]
        %v804 = vld [vmem:[%s638 + $0x210] sm:$0xff]
        %v805 = vld [vmem:[%s638 + $0x218] sm:$0xff]
        %v806 = vld [vmem:[%s638 + $0x220] sm:$0xff]
        %v807 = vld [vmem:[%s638 + $0x228] sm:$0xff]
        %v808 = vld [vmem:[%s638 + $0x230] sm:$0xff]
        %v809 = vld [vmem:[%s638 + $0x238] sm:$0xff]
        %v810 = vld [vmem:[%s638 + $0x240] sm:$0xff]
        %v811 = vld [vmem:[%s638 + $0x248] sm:$0xff]
        %v812 = vld [vmem:[%s638 + $0x250] sm:$0xff]
        %v813 = vld [vmem:[%s638 + $0x258] sm:$0xff]
        %v814 = vld [vmem:[%s638 + $0x260] sm:$0xff]
        %v815 = vld [vmem:[%s638 + $0x268] sm:$0xff]
        %v816 = vld [vmem:[%s638 + $0x270] sm:$0xff]
        %v817 = vld [vmem:[%s638 + $0x278] sm:$0xff]
        %v818 = vld [vmem:[%s638 + $0x280] sm:$0xff]
        %v819 = vld [vmem:[%s638 + $0x288] sm:$0xff]
        %v820 = vld [vmem:[%s638 + $0x290] sm:$0xff]
        %v821 = vld [vmem:[%s638 + $0x298] sm:$0xff]
        %v822 = vld [vmem:[%s638 + $0x2a0] sm:$0xff]
        %v823 = vld [vmem:[%s638 + $0x2a8] sm:$0xff]
        %v824 = vld [vmem:[%s638 + $0x2b0] sm:$0xff]
        %v825 = vld [vmem:[%s638 + $0x2b8] sm:$0xff]
        %v826 = vld [vmem:[%s638 + $0x2c0] sm:$0xff]
        %v827 = vld [vmem:[%s638 + $0x2c8] sm:$0xff]
        %v828 = vld [vmem:[%s638 + $0x2d0] sm:$0xff]
        %v829 = vld [vmem:[%s638 + $0x2d8] sm:$0xff]
        %v830 = vld [vmem:[%s638 + $0x2e0] sm:$0xff]
        %v831 = vld [vmem:[%s638 + $0x2e8] sm:$0xff]
        %v832 = vld [vmem:[%s638 + $0x2f0] sm:$0xff]
        %v833 = vld [vmem:[%s638 + $0x2f8] sm:$0xff]
        %v837 = vunpack.c.l.b16 %v735
        %v838 = vunpack.c.h.b16 %v735
        %v839 = vunpack.c.l.b16 %v736
        %v840 = vunpack.c.h.b16 %v736
        %v841 = vunpack.c.l.b16 %v737
        %v842 = vunpack.c.h.b16 %v737
        %v843 = vpack.c.b16 %v837, %v837
        %v844 = vpack.c.b16 %v838, %v838
        %v845 = vpack.c.b16 %v839, %v839
        %v846 = vpack.c.b16 %v840, %v840
        %v847 = vpack.c.b16 %v841, %v841
        %v848 = vpack.c.b16 %v842, %v842
        %v951 = vunpack.c.l.b16 %v738
        %v952 = vunpack.c.h.b16 %v738
        %v953 = vunpack.c.l.b16 %v739
        %v954 = vunpack.c.h.b16 %v739
        %v955 = vunpack.c.l.b16 %v740
        %v956 = vunpack.c.h.b16 %v740
        %v957 = vunpack.c.l.b16 %v741
        %v958 = vunpack.c.h.b16 %v741
        %v959 = vunpack.c.l.b16 %v742
        %v960 = vunpack.c.h.b16 %v742
        %v961 = vunpack.c.l.b16 %v743
        %v962 = vunpack.c.h.b16 %v743
        %v963 = vunpack.c.l.b16 %v744
        %v964 = vunpack.c.h.b16 %v744
        %v965 = vunpack.c.l.b16 %v745
        %v966 = vunpack.c.h.b16 %v745
        %v967 = vunpack.c.l.b16 %v746
        %v968 = vunpack.c.h.b16 %v746
        %v969 = vunpack.c.l.b16 %v747
        %v970 = vunpack.c.h.b16 %v747
        %v971 = vunpack.c.l.b16 %v748
        %v972 = vunpack.c.h.b16 %v748
        %v973 = vunpack.c.l.b16 %v749
        %v974 = vunpack.c.h.b16 %v749
        %v975 = vunpack.c.l.b16 %v750
        %v976 = vunpack.c.h.b16 %v750
        %v977 = vunpack.c.l.b16 %v751
        %v978 = vunpack.c.h.b16 %v751
        %v979 = vunpack.c.l.b16 %v752
        %v980 = vunpack.c.h.b16 %v752
        %v981 = vunpack.c.l.b16 %v753
        %v982 = vunpack.c.h.b16 %v753
        %v983 = vunpack.c.l.b16 %v754
        %v984 = vunpack.c.h.b16 %v754
        %v985 = vunpack.c.l.b16 %v755
        %v986 = vunpack.c.h.b16 %v755
        %v987 = vunpack.c.l.b16 %v756
        %v988 = vunpack.c.h.b16 %v756
        %v989 = vunpack.c.l.b16 %v757
        %v990 = vunpack.c.h.b16 %v757
        %v991 = vunpack.c.l.b16 %v758
        %v992 = vunpack.c.h.b16 %v758
        %v993 = vunpack.c.l.b16 %v759
        %v994 = vunpack.c.h.b16 %v759
        %v995 = vunpack.c.l.b16 %v760
        %v996 = vunpack.c.h.b16 %v760
        %v997 = vunpack.c.l.b16 %v761
        %v998 = vunpack.c.h.b16 %v761
        %v999 = vunpack.c.l.b16 %v762
        %v1000 = vunpack.c.h.b16 %v762
        %v1001 = vunpack.c.l.b16 %v763
        %v1002 = vunpack.c.h.b16 %v763
        %v1003 = vunpack.c.l.b16 %v764
        %v1004 = vunpack.c.h.b16 %v764
        %v1005 = vunpack.c.l.b16 %v765
        %v1006 = vunpack.c.h.b16 %v765
        %v1007 = vunpack.c.l.b16 %v766
        %v1008 = vunpack.c.h.b16 %v766
        %v1009 = vunpack.c.l.b16 %v767
        %v1010 = vunpack.c.h.b16 %v767
        %v1011 = vunpack.c.l.b16 %v768
        %v1012 = vunpack.c.h.b16 %v768
        %v1013 = vunpack.c.l.b16 %v769
        %v1014 = vunpack.c.h.b16 %v769
        %v1015 = vunpack.c.l.b16 %v770
        %v1016 = vunpack.c.h.b16 %v770
        %v1017 = vunpack.c.l.b16 %v771
        %v1018 = vunpack.c.h.b16 %v771
        %v1019 = vunpack.c.l.b16 %v772
        %v1020 = vunpack.c.h.b16 %v772
        %v1021 = vunpack.c.l.b16 %v773
        %v1022 = vunpack.c.h.b16 %v773
        %v1023 = vunpack.c.l.b16 %v774
        %v1024 = vunpack.c.h.b16 %v774
        %v1025 = vunpack.c.l.b16 %v775
        %v1026 = vunpack.c.h.b16 %v775
        %v1027 = vunpack.c.l.b16 %v776
        %v1028 = vunpack.c.h.b16 %v776
        %v1029 = vunpack.c.l.b16 %v777
        %v1030 = vunpack.c.h.b16 %v777
        %v1031 = vunpack.c.l.b16 %v778
        %v1032 = vunpack.c.h.b16 %v778
        %v1033 = vunpack.c.l.b16 %v779
        %v1034 = vunpack.c.h.b16 %v779
        %v1035 = vunpack.c.l.b16 %v780
        %v1036 = vunpack.c.h.b16 %v780
        %v1037 = vunpack.c.l.b16 %v781
        %v1038 = vunpack.c.h.b16 %v781
        %v1039 = vunpack.c.l.b16 %v782
        %v1040 = vunpack.c.h.b16 %v782
        %v1041 = vunpack.c.l.b16 %v783
        %v1042 = vunpack.c.h.b16 %v783
        %v1043 = vunpack.c.l.b16 %v784
        %v1044 = vunpack.c.h.b16 %v784
        %v1045 = vunpack.c.l.b16 %v785
        %v1046 = vunpack.c.h.b16 %v785
        %v1047 = vunpack.c.l.b16 %v786
        %v1048 = vunpack.c.h.b16 %v786
        %v1049 = vunpack.c.l.b16 %v787
        %v1050 = vunpack.c.h.b16 %v787
        %v1051 = vunpack.c.l.b16 %v788
        %v1052 = vunpack.c.h.b16 %v788
        %v1053 = vunpack.c.l.b16 %v789
        %v1054 = vunpack.c.h.b16 %v789
        %v1055 = vunpack.c.l.b16 %v790
        %v1056 = vunpack.c.h.b16 %v790
        %v1057 = vunpack.c.l.b16 %v791
        %v1058 = vunpack.c.h.b16 %v791
        %v1059 = vunpack.c.l.b16 %v792
        %v1060 = vunpack.c.h.b16 %v792
        %v1061 = vunpack.c.l.b16 %v793
        %v1062 = vunpack.c.h.b16 %v793
        %v1063 = vunpack.c.l.b16 %v794
        %v1064 = vunpack.c.h.b16 %v794
        %v1065 = vunpack.c.l.b16 %v795
        %v1066 = vunpack.c.h.b16 %v795
        %v1067 = vunpack.c.l.b16 %v796
        %v1068 = vunpack.c.h.b16 %v796
        %v1069 = vunpack.c.l.b16 %v797
        %v1070 = vunpack.c.h.b16 %v797
        %v1071 = vunpack.c.l.b16 %v798
        %v1072 = vunpack.c.h.b16 %v798
        %v1073 = vunpack.c.l.b16 %v799
        %v1074 = vunpack.c.h.b16 %v799
        %v1075 = vunpack.c.l.b16 %v800
        %v1076 = vunpack.c.h.b16 %v800
        %v1077 = vunpack.c.l.b16 %v801
        %v1078 = vunpack.c.h.b16 %v801
        %v1079 = vunpack.c.l.b16 %v802
        %v1080 = vunpack.c.h.b16 %v802
        %v1081 = vunpack.c.l.b16 %v803
        %v1082 = vunpack.c.h.b16 %v803
        %v1083 = vunpack.c.l.b16 %v804
        %v1084 = vunpack.c.h.b16 %v804
        %v1085 = vunpack.c.l.b16 %v805
        %v1086 = vunpack.c.h.b16 %v805
        %v1087 = vunpack.c.l.b16 %v806
        %v1088 = vunpack.c.h.b16 %v806
        %v1089 = vunpack.c.l.b16 %v807
        %v1090 = vunpack.c.h.b16 %v807
        %v1091 = vunpack.c.l.b16 %v808
        %v1092 = vunpack.c.h.b16 %v808
        %v1093 = vunpack.c.l.b16 %v809
        %v1094 = vunpack.c.h.b16 %v809
        %v1095 = vunpack.c.l.b16 %v810
        %v1096 = vunpack.c.h.b16 %v810
        %v1097 = vunpack.c.l.b16 %v811
        %v1098 = vunpack.c.h.b16 %v811
        %v1099 = vunpack.c.l.b16 %v812
        %v1100 = vunpack.c.h.b16 %v812
        %v1101 = vunpack.c.l.b16 %v813
        %v1102 = vunpack.c.h.b16 %v813
        %v1103 = vunpack.c.l.b16 %v814
        %v1104 = vunpack.c.h.b16 %v814
        %v1105 = vunpack.c.l.b16 %v815
        %v1106 = vunpack.c.h.b16 %v815
        %v1107 = vunpack.c.l.b16 %v816
        %v1108 = vunpack.c.h.b16 %v816
        %v1109 = vunpack.c.l.b16 %v817
        %v1110 = vunpack.c.h.b16 %v817
        %v1111 = vunpack.c.l.b16 %v818
        %v1112 = vunpack.c.h.b16 %v818
        %v1113 = vunpack.c.l.b16 %v819
        %v1114 = vunpack.c.h.b16 %v819
        %v1115 = vunpack.c.l.b16 %v820
        %v1116 = vunpack.c.h.b16 %v820
        %v1117 = vunpack.c.l.b16 %v821
        %v1118 = vunpack.c.h.b16 %v821
        %v1119 = vunpack.c.l.b16 %v822
        %v1120 = vunpack.c.h.b16 %v822
        %v1121 = vunpack.c.l.b16 %v823
        %v1122 = vunpack.c.h.b16 %v823
        %v1123 = vunpack.c.l.b16 %v824
        %v1124 = vunpack.c.h.b16 %v824
        %v1125 = vunpack.c.l.b16 %v825
        %v1126 = vunpack.c.h.b16 %v825
        %v1127 = vunpack.c.l.b16 %v826
        %v1128 = vunpack.c.h.b16 %v826
        %v1129 = vunpack.c.l.b16 %v827
        %v1130 = vunpack.c.h.b16 %v827
        %v1131 = vunpack.c.l.b16 %v828
        %v1132 = vunpack.c.h.b16 %v828
        %v1133 = vunpack.c.l.b16 %v829
        %v1134 = vunpack.c.h.b16 %v829
        %v1135 = vunpack.c.l.b16 %v830
        %v1136 = vunpack.c.h.b16 %v830
        %v1137 = vunpack.c.l.b16 %v831
        %v1138 = vunpack.c.h.b16 %v831
        %v1139 = vunpack.c.l.b16 %v832
        %v1140 = vunpack.c.h.b16 %v832
        %v1141 = vunpack.c.l.b16 %v833
        %v1142 = vunpack.c.h.b16 %v833
        %v1143 = vpack.c.b16 %v953, %v951
        %v1144 = vpack.c.b16 %v954, %v952
        %v1145 = vpack.c.b16 %v957, %v955
        %v1146 = vpack.c.b16 %v958, %v956
        %v1147 = vpack.c.b16 %v961, %v959
        %v1148 = vpack.c.b16 %v962, %v960
        %v1149 = vpack.c.b16 %v965, %v963
        %v1150 = vpack.c.b16 %v966, %v964
        %v1151 = vpack.c.b16 %v969, %v967
        %v1152 = vpack.c.b16 %v970, %v968
        %v1153 = vpack.c.b16 %v973, %v971
        %v1154 = vpack.c.b16 %v974, %v972
        %v1155 = vpack.c.b16 %v977, %v975
        %v1156 = vpack.c.b16 %v978, %v976
        %v1157 = vpack.c.b16 %v981, %v979
        %v1158 = vpack.c.b16 %v982, %v980
        %v1159 = vpack.c.b16 %v985, %v983
        %v1160 = vpack.c.b16 %v986, %v984
        %v1161 = vpack.c.b16 %v989, %v987
        %v1162 = vpack.c.b16 %v990, %v988
        %v1163 = vpack.c.b16 %v993, %v991
        %v1164 = vpack.c.b16 %v994, %v992
        %v1165 = vpack.c.b16 %v997, %v995
        %v1166 = vpack.c.b16 %v998, %v996
        %v1167 = vpack.c.b16 %v1001, %v999
        %v1168 = vpack.c.b16 %v1002, %v1000
        %v1169 = vpack.c.b16 %v1005, %v1003
        %v1170 = vpack.c.b16 %v1006, %v1004
        %v1171 = vpack.c.b16 %v1009, %v1007
        %v1172 = vpack.c.b16 %v1010, %v1008
        %v1173 = vpack.c.b16 %v1013, %v1011
        %v1174 = vpack.c.b16 %v1014, %v1012
        %v1175 = vpack.c.b16 %v1017, %v1015
        %v1176 = vpack.c.b16 %v1018, %v1016
        %v1177 = vpack.c.b16 %v1021, %v1019
        %v1178 = vpack.c.b16 %v1022, %v1020
        %v1179 = vpack.c.b16 %v1025, %v1023
        %v1180 = vpack.c.b16 %v1026, %v1024
        %v1181 = vpack.c.b16 %v1029, %v1027
        %v1182 = vpack.c.b16 %v1030, %v1028
        %v1183 = vpack.c.b16 %v1033, %v1031
        %v1184 = vpack.c.b16 %v1034, %v1032
        %v1185 = vpack.c.b16 %v1037, %v1035
        %v1186 = vpack.c.b16 %v1038, %v1036
        %v1187 = vpack.c.b16 %v1041, %v1039
        %v1188 = vpack.c.b16 %v1042, %v1040
        %v1189 = vpack.c.b16 %v1045, %v1043
        %v1190 = vpack.c.b16 %v1046, %v1044
        %v1191 = vpack.c.b16 %v1049, %v1047
        %v1192 = vpack.c.b16 %v1050, %v1048
        %v1193 = vpack.c.b16 %v1053, %v1051
        %v1194 = vpack.c.b16 %v1054, %v1052
        %v1195 = vpack.c.b16 %v1057, %v1055
        %v1196 = vpack.c.b16 %v1058, %v1056
        %v1197 = vpack.c.b16 %v1061, %v1059
        %v1198 = vpack.c.b16 %v1062, %v1060
        %v1199 = vpack.c.b16 %v1065, %v1063
        %v1200 = vpack.c.b16 %v1066, %v1064
        %v1201 = vpack.c.b16 %v1069, %v1067
        %v1202 = vpack.c.b16 %v1070, %v1068
        %v1203 = vpack.c.b16 %v1073, %v1071
        %v1204 = vpack.c.b16 %v1074, %v1072
        %v1205 = vpack.c.b16 %v1077, %v1075
        %v1206 = vpack.c.b16 %v1078, %v1076
        %v1207 = vpack.c.b16 %v1081, %v1079
        %v1208 = vpack.c.b16 %v1082, %v1080
        %v1209 = vpack.c.b16 %v1085, %v1083
        %v1210 = vpack.c.b16 %v1086, %v1084
        %v1211 = vpack.c.b16 %v1089, %v1087
        %v1212 = vpack.c.b16 %v1090, %v1088
        %v1213 = vpack.c.b16 %v1093, %v1091
        %v1214 = vpack.c.b16 %v1094, %v1092
        %v1215 = vpack.c.b16 %v1097, %v1095
        %v1216 = vpack.c.b16 %v1098, %v1096
        %v1217 = vpack.c.b16 %v1101, %v1099
        %v1218 = vpack.c.b16 %v1102, %v1100
        %v1219 = vpack.c.b16 %v1105, %v1103
        %v1220 = vpack.c.b16 %v1106, %v1104
        %v1221 = vpack.c.b16 %v1109, %v1107
        %v1222 = vpack.c.b16 %v1110, %v1108
        %v1223 = vpack.c.b16 %v1113, %v1111
        %v1224 = vpack.c.b16 %v1114, %v1112
        %v1225 = vpack.c.b16 %v1117, %v1115
        %v1226 = vpack.c.b16 %v1118, %v1116
        %v1227 = vpack.c.b16 %v1121, %v1119
        %v1228 = vpack.c.b16 %v1122, %v1120
        %v1229 = vpack.c.b16 %v1125, %v1123
        %v1230 = vpack.c.b16 %v1126, %v1124
        %v1231 = vpack.c.b16 %v1129, %v1127
        %v1232 = vpack.c.b16 %v1130, %v1128
        %v1233 = vpack.c.b16 %v1133, %v1131
        %v1234 = vpack.c.b16 %v1134, %v1132
        %v1235 = vpack.c.b16 %v1137, %v1135
        %v1236 = vpack.c.b16 %v1138, %v1136
        %v1237 = vpack.c.b16 %v1141, %v1139
        %v1238 = vpack.c.b16 %v1142, %v1140
        %1335 = vmatprep.subr.bf16.mxu0 %v1144
        %1336 = vmatpush1.bf16.msra.mxu0 %v1143
        %1337 = vmatprep.subr.bf16.mxu0 %v1146
        %1338 = vmatpush1.bf16.msra.mxu0 %v1145
        %1339 = vmatprep.subr.bf16.mxu0 %v1148
        %1340 = vmatpush1.bf16.msra.mxu0 %v1147
        %1341 = vmatprep.subr.bf16.mxu0 %v1150
        %1342 = vmatpush1.bf16.msra.mxu0 %v1149
        %1343 = vmatprep.subr.bf16.mxu0 %v1152
        %1344 = vmatpush1.bf16.msra.mxu0 %v1151
        %1345 = vmatprep.subr.bf16.mxu0 %v1154
        %1346 = vmatpush1.bf16.msra.mxu0 %v1153
        %1347 = vmatprep.subr.bf16.mxu0 %v1156
        %1348 = vmatpush1.bf16.msra.mxu0 %v1155
        %1349 = vmatprep.subr.bf16.mxu0 %v1158
        %1350 = vmatpush1.bf16.msra.mxu0 %v1157
        %1351 = vmatprep.subr.bf16.mxu0 %v1160
        %1352 = vmatpush1.bf16.msra.mxu0 %v1159
        %1353 = vmatprep.subr.bf16.mxu0 %v1162
        %1354 = vmatpush1.bf16.msra.mxu0 %v1161
        %1355 = vmatprep.subr.bf16.mxu0 %v1164
        %1356 = vmatpush1.bf16.msra.mxu0 %v1163
        %1357 = vmatprep.subr.bf16.mxu0 %v1166
        %1358 = vmatpush1.bf16.msra.mxu0 %v1165
        %1359 = vmatprep.subr.bf16.mxu0 %v1168
        %1360 = vmatpush1.bf16.msra.mxu0 %v1167
        %1361 = vmatprep.subr.bf16.mxu0 %v1170
        %1362 = vmatpush1.bf16.msra.mxu0 %v1169
        %1363 = vmatprep.subr.bf16.mxu0 %v1172
        %1364 = vmatpush1.bf16.msra.mxu0 %v1171
        %1365 = vmatprep.subr.bf16.mxu0 %v1174
        %1366 = vmatpush1.bf16.msra.mxu0 %v1173
        %1367 = vmatprep.mubr.bf16.mxu0 %v844
        %1368 = vmatmul.mubr.bf16.gmra.mrb[0].mxu0 %v843
        %v1369 = vpop.f32.mrb[0].mxu0
        %v1370 = vadd.f32 0.0, %v1369
        %v1371 = vpop.f32.mrb[0].mxu0
        %v1372 = vadd.f32 0.0, %v1371
        %v1373 = vpop.f32.mrb[0].mxu0
        %v1374 = vpop.f32.mrb[0].mxu0
        %1375 = vdwg.mxu0
        %1376 = vmatprep.subr.bf16.mxu0 %v1176
        %1377 = vmatpush1.bf16.msra.mxu0 %v1175
        %1378 = vmatprep.subr.bf16.mxu0 %v1178
        %1379 = vmatpush1.bf16.msra.mxu0 %v1177
        %1380 = vmatprep.subr.bf16.mxu0 %v1180
        %1381 = vmatpush1.bf16.msra.mxu0 %v1179
        %1382 = vmatprep.subr.bf16.mxu0 %v1182
        %1383 = vmatpush1.bf16.msra.mxu0 %v1181
        %1384 = vmatprep.subr.bf16.mxu0 %v1184
        %1385 = vmatpush1.bf16.msra.mxu0 %v1183
        %1386 = vmatprep.subr.bf16.mxu0 %v1186
        %1387 = vmatpush1.bf16.msra.mxu0 %v1185
        %1388 = vmatprep.subr.bf16.mxu0 %v1188
        %1389 = vmatpush1.bf16.msra.mxu0 %v1187
        %1390 = vmatprep.subr.bf16.mxu0 %v1190
        %1391 = vmatpush1.bf16.msra.mxu0 %v1189
        %1392 = vmatprep.subr.bf16.mxu0 %v1192
        %1393 = vmatpush1.bf16.msra.mxu0 %v1191
        %1394 = vmatprep.subr.bf16.mxu0 %v1194
        %1395 = vmatpush1.bf16.msra.mxu0 %v1193
        %1396 = vmatprep.subr.bf16.mxu0 %v1196
        %1397 = vmatpush1.bf16.msra.mxu0 %v1195
        %1398 = vmatprep.subr.bf16.mxu0 %v1198
        %1399 = vmatpush1.bf16.msra.mxu0 %v1197
        %1400 = vmatprep.subr.bf16.mxu0 %v1200
        %1401 = vmatpush1.bf16.msra.mxu0 %v1199
        %1402 = vmatprep.subr.bf16.mxu0 %v1202
        %1403 = vmatpush1.bf16.msra.mxu0 %v1201
        %1404 = vmatprep.subr.bf16.mxu0 %v1204
        %1405 = vmatpush1.bf16.msra.mxu0 %v1203
        %1406 = vmatprep.subr.bf16.mxu0 %v1206
        %1407 = vmatpush1.bf16.msra.mxu0 %v1205
        %1408 = vmatprep.mubr.bf16.mxu0 %v846
        %1409 = vmatmul.mubr.bf16.gmra.mrb[0].mxu0 %v845
        %v1410 = vpop.f32.mrb[0].mxu0
        %v1411 = vadd.f32 %v1370, %v1410
        %v1412 = vpop.f32.mrb[0].mxu0
        %v1413 = vadd.f32 %v1372, %v1412
        %v1414 = vpop.f32.mrb[0].mxu0
        %v1415 = vpop.f32.mrb[0].mxu0
        %1416 = vdwg.mxu0
        %1417 = vmatprep.subr.bf16.mxu0 %v1208
        %1418 = vmatpush1.bf16.msra.mxu0 %v1207
        %1419 = vmatprep.subr.bf16.mxu0 %v1210
        %1420 = vmatpush1.bf16.msra.mxu0 %v1209
        %1421 = vmatprep.subr.bf16.mxu0 %v1212
        %1422 = vmatpush1.bf16.msra.mxu0 %v1211
        %1423 = vmatprep.subr.bf16.mxu0 %v1214
        %1424 = vmatpush1.bf16.msra.mxu0 %v1213
        %1425 = vmatprep.subr.bf16.mxu0 %v1216
        %1426 = vmatpush1.bf16.msra.mxu0 %v1215
        %1427 = vmatprep.subr.bf16.mxu0 %v1218
        %1428 = vmatpush1.bf16.msra.mxu0 %v1217
        %1429 = vmatprep.subr.bf16.mxu0 %v1220
        %1430 = vmatpush1.bf16.msra.mxu0 %v1219
        %1431 = vmatprep.subr.bf16.mxu0 %v1222
        %1432 = vmatpush1.bf16.msra.mxu0 %v1221
        %1433 = vmatprep.subr.bf16.mxu0 %v1224
        %1434 = vmatpush1.bf16.msra.mxu0 %v1223
        %1435 = vmatprep.subr.bf16.mxu0 %v1226
        %1436 = vmatpush1.bf16.msra.mxu0 %v1225
        %1437 = vmatprep.subr.bf16.mxu0 %v1228
        %1438 = vmatpush1.bf16.msra.mxu0 %v1227
        %1439 = vmatprep.subr.bf16.mxu0 %v1230
        %1440 = vmatpush1.bf16.msra.mxu0 %v1229
        %1441 = vmatprep.subr.bf16.mxu0 %v1232
        %1442 = vmatpush1.bf16.msra.mxu0 %v1231
        %1443 = vmatprep.subr.bf16.mxu0 %v1234
        %1444 = vmatpush1.bf16.msra.mxu0 %v1233
        %1445 = vmatprep.subr.bf16.mxu0 %v1236
        %1446 = vmatpush1.bf16.msra.mxu0 %v1235
        %1447 = vmatprep.subr.bf16.mxu0 %v1238
        %1448 = vmatpush1.bf16.msra.mxu0 %v1237
        %1449 = vmatprep.mubr.bf16.mxu0 %v848
        %1450 = vmatmul.mubr.bf16.gmra.mrb[0].mxu0 %v847
        %v1451 = vpop.f32.mrb[0].mxu0
        %v1452 = vadd.f32 %v1411, %v1451
        %v1453 = vpop.f32.mrb[0].mxu0
        %v1454 = vadd.f32 %v1413, %v1453
        %v1455 = vpop.f32.mrb[0].mxu0
        %v1456 = vpop.f32.mrb[0].mxu0
        %1457 = vdwg.mxu0
        %v1458 = vadd.f32 %v733, %v1452
        %v1459 = vadd.f32 %v734, %v1454
        %1460 = vst [vmem:[#allocation2] sm:$0xff] %v1458
        %1461 = vst [vmem:[#allocation2 + $0x8] sm:$0xff] %v1459
        // Predicated region
        $region75: #{forward.10} parent=65 // pred_check
          %p1462 = pneg %p727
        $region76: #{forward.10} parent=65 // pred_check_branch
          %1464 = sbr.rel (%p1462) target = $region78
        $region77: #{forward.10} parent=65 // pred_region
          %v1465 = vld [vmem:[#allocation2] sm:$0xff]
          %v1466 = vld [vmem:[#allocation2 + $0x8] sm:$0xff]
          %v1467 = vld [vmem:[%s711] sm:$0x3]
          %v1469 = vlaneseq
          %v1470 = vshrl.u32 %v1469, 7
          %v1471 = vsub.s32 0, %v1470
          %v1472 = vrot.slane %v1467, %v1471
          %v1473 = vlaneseq
          %v1474 = vshrl.u32 %v1473, 7
          %v1475 = vsub.s32 1, %v1474
          %v1476 = vrot.slane %v1467, %v1475
          %v1479 = vadd.f32 %v1465, %v1472
          %v1480 = vadd.f32 %v1466, %v1476
          %v1481 = vmax.f32 %v1479, 0.0
          %v1482 = vmax.f32 %v1480, 0.0
          %v1483 = vpack.c.bf16 %v1481, %v1481
          %v1484 = vpack.c.bf16 %v1482, %v1482
          %v1487 = vunpack.c.l.b16 %v1483
          %v1488 = vunpack.c.l.b16 %v1484
          %v1489 = vpack.c.b16 %v1488, %v1487
          %1491 = vst [vmem:[%s725] sm:$0xff] %v1489
        $region78: #{forward.10} parent=65 // pred_fallthru
          _
        %s1492 = smul.u32 2, %s22
        %p1493 = scmp.lt.s32.totalorder %s20, 0
        %s1494 = scalar_select %p1493, %s20, 0
        %p1495 = scmp.lt.s32.totalorder %s21, 0
        %s1496 = scalar_select %p1495, %s21, 0
        %p1497 = scmp.lt.s32.totalorder %s1492, 3
        %s1498 = scalar_select %p1497, %s1492, 3
        %s1499 = smul.addr %s1496, 4
        %s1500 = sadd.s32 %s1498, %s1499
        %s1501 = smul.addr %s1494, 4
        %s1502 = sadd.s32 %s1500, %s1501
        %s1503 = smul.addr %s1502, 4
        %s1504 = scalar_lea.vmem %s3, %s1503
        // Predicated region
        $region79: #{forward.10} parent=65 // pred_check
          %p1505 = pneg %p150
        $region80: #{forward.10} parent=65 // pred_check_branch
          %1507 = sbr.rel (%p1505) target = $region82
        $region81: #{forward.10} parent=65 // pred_region
          %s1508 = smul.u32 2, %s22
        $region82: #{forward.10} parent=65 // pred_fallthru
          _
      $region66: #{forward.10} parent=5 // pred_fallthru
        _
      %p1509 = scmp.le.s32.totalorder 2, %s9
      // Predicated region
      $region83: #{forward.10} parent=5 // pred_check
        %p1510 = pneg %p1509
      $region84: #{forward.10} parent=5 // pred_check_branch
        %1512 = sbr.rel (%p1510) target = $region86
      $region85: #{forward.10} parent=5 // pred_region
        %s1513 = ssub.s32 %s9, 2
        // Predicated region
        $region87: #{forward.10} parent=85 // pred_check
          %p1514 = pneg %p156
        $region88: #{forward.10} parent=85 // pred_check_branch
          %1516 = sbr.rel (%p1514) target = $region90
        $region89: #{forward.10} parent=85 // pred_region
          %s1517 = smul.u32 2, %s26
          %p1518 = scmp.lt.s32.totalorder %s24, 0
          %s1519 = scalar_select %p1518, %s24, 0
          %p1520 = scmp.lt.s32.totalorder %s25, 0
          %s1521 = scalar_select %p1520, %s25, 0
          %p1522 = scmp.lt.s32.totalorder %s1517, 3
          %s1523 = scalar_select %p1522, %s1517, 3
          %s1524 = smul.addr %s1521, 4
          %s1525 = sadd.s32 %s1523, %s1524
          %s1526 = smul.addr %s1519, 4
          %s1527 = sadd.s32 %s1525, %s1526
          %s1528 = smul.addr %s1527, 4
          %s1529 = scalar_lea.vmem %s3, %s1528
        $region90: #{forward.10} parent=85 // pred_fallthru
          _
      $region86: #{forward.10} parent=5 // pred_fallthru
        _
    $region6: #{forward.10} parent=1 // loop_footer
      %s13 = sadd.s32 1, %s9
    $region7: #{forward.10} parent=1 // loop_footer_branch
      %8 = sbr.rel target = $region3
    $region8: #{forward.10} parent=1 // loop_exit
      _

// kernel: forward.11
$region0: #{forward.11}
  #allocation0 [shape = 'u32[]', space=smem, size = 0x4, offset = 0x4, fixed_abs, tag = 'smem constant byte address 0x4 - core index']
  #allocation1 [shape = 'u32[144,128]{1,0:T(1,128)}', space=vmem, size = 0x12000, scoped, tag = 'internal scratch']
  #allocation2 [shape = 'f32[8,256]{1,0:T(8,128)}', space=vmem, size = 0x2000, scoped, tag = 'scratch operand']
  %s0 = inlined_call_operand.vmem [shape: bf16[1,8,512], index: 0, kind: input, shape index: {}]
  %s1 = inlined_call_operand.vmem [shape: bf16[1,512,256], index: 1, kind: input, shape index: {}]
  %s2 = inlined_call_operand.vmem [shape: f32[1,1,256], index: 2, kind: input, shape index: {}]
  %s3 = inlined_call_operand.vmem [shape: bf16[1,8,256], index: 3, kind: output, shape index: {}]
  %s4 = sld [smem:[#allocation0]]
  $region30: #{forward.11} parent=0
    _
  %s6 = ssub.s32 1, %s4
  %s7 = scalar_select 0, %s6, %s4
  // Predicated region
  $region2: #{forward.11} parent=0 // pred_check
    _
  $region3: #{forward.11} parent=0 // pred_check_branch
    %9 = sbr.rel (0) target = $region5
  $region4: #{forward.11} parent=0 // pred_region
    _
  $region5: #{forward.11} parent=0 // pred_fallthru
    _
  // Predicated region
  $region6: #{forward.11} parent=0 // pred_check
    _
  $region7: #{forward.11} parent=0 // pred_check_branch
    %11 = sbr.rel (0) target = $region9
  $region8: #{forward.11} parent=0 // pred_region
    _
  $region9: #{forward.11} parent=0 // pred_fallthru
    _
  // Predicated region
  $region10: #{forward.11} parent=0 // pred_check
    _
  $region11: #{forward.11} parent=0 // pred_check_branch
    %13 = sbr.rel (0) target = $region13
  $region12: #{forward.11} parent=0 // pred_region
    _
  $region13: #{forward.11} parent=0 // pred_fallthru
    _
  %p14 = scmp.eq.s32.totalorder 0, 0
  // Predicated region
  $region14: #{forward.11} parent=0 // pred_check
    %p15 = pneg %p14
  $region15: #{forward.11} parent=0 // pred_check_branch
    %17 = sbr.rel (%p15) target = $region17
  $region16: #{forward.11} parent=0 // pred_region
    %18 = vst [vmem:[#allocation2] sm:$0xff] 0.0
    %19 = vst [vmem:[#allocation2 + $0x8] sm:$0xff] 0.0
  $region17: #{forward.11} parent=0 // pred_fallthru
    _
  %v20 = vld [vmem:[#allocation2] sm:$0xff]
  %v21 = vld [vmem:[#allocation2 + $0x8] sm:$0xff]
  %v22 = vld [vmem:[%s0] sm:$0xff]
  %v23 = vld [vmem:[%s0 + $0x8] sm:$0xff]
  %v24 = vld [vmem:[%s1] sm:$0xff]
  %v25 = vld [vmem:[%s1 + $0x8] sm:$0xff]
  %v26 = vld [vmem:[%s1 + $0x10] sm:$0xff]
  %v27 = vld [vmem:[%s1 + $0x18] sm:$0xff]
  %v28 = vld [vmem:[%s1 + $0x20] sm:$0xff]
  %v29 = vld [vmem:[%s1 + $0x28] sm:$0xff]
  %v30 = vld [vmem:[%s1 + $0x30] sm:$0xff]
  %v31 = vld [vmem:[%s1 + $0x38] sm:$0xff]
  %v32 = vld [vmem:[%s1 + $0x40] sm:$0xff]
  %v33 = vld [vmem:[%s1 + $0x48] sm:$0xff]
  %v34 = vld [vmem:[%s1 + $0x50] sm:$0xff]
  %v35 = vld [vmem:[%s1 + $0x58] sm:$0xff]
  %v36 = vld [vmem:[%s1 + $0x60] sm:$0xff]
  %v37 = vld [vmem:[%s1 + $0x68] sm:$0xff]
  %v38 = vld [vmem:[%s1 + $0x70] sm:$0xff]
  %v39 = vld [vmem:[%s1 + $0x78] sm:$0xff]
  %v40 = vld [vmem:[%s1 + $0x80] sm:$0xff]
  %v41 = vld [vmem:[%s1 + $0x88] sm:$0xff]
  %v42 = vld [vmem:[%s1 + $0x90] sm:$0xff]
  %v43 = vld [vmem:[%s1 + $0x98] sm:$0xff]
  %v44 = vld [vmem:[%s1 + $0xa0] sm:$0xff]
  %v45 = vld [vmem:[%s1 + $0xa8] sm:$0xff]
  %v46 = vld [vmem:[%s1 + $0xb0] sm:$0xff]
  %v47 = vld [vmem:[%s1 + $0xb8] sm:$0xff]
  %v48 = vld [vmem:[%s1 + $0xc0] sm:$0xff]
  %v49 = vld [vmem:[%s1 + $0xc8] sm:$0xff]
  %v50 = vld [vmem:[%s1 + $0xd0] sm:$0xff]
  %v51 = vld [vmem:[%s1 + $0xd8] sm:$0xff]
  %v52 = vld [vmem:[%s1 + $0xe0] sm:$0xff]
  %v53 = vld [vmem:[%s1 + $0xe8] sm:$0xff]
  %v54 = vld [vmem:[%s1 + $0xf0] sm:$0xff]
  %v55 = vld [vmem:[%s1 + $0xf8] sm:$0xff]
  %v56 = vld [vmem:[%s1 + $0x100] sm:$0xff]
  %v57 = vld [vmem:[%s1 + $0x108] sm:$0xff]
  %v58 = vld [vmem:[%s1 + $0x110] sm:$0xff]
  %v59 = vld [vmem:[%s1 + $0x118] sm:$0xff]
  %v60 = vld [vmem:[%s1 + $0x120] sm:$0xff]
  %v61 = vld [vmem:[%s1 + $0x128] sm:$0xff]
  %v62 = vld [vmem:[%s1 + $0x130] sm:$0xff]
  %v63 = vld [vmem:[%s1 + $0x138] sm:$0xff]
  %v64 = vld [vmem:[%s1 + $0x140] sm:$0xff]
  %v65 = vld [vmem:[%s1 + $0x148] sm:$0xff]
  %v66 = vld [vmem:[%s1 + $0x150] sm:$0xff]
  %v67 = vld [vmem:[%s1 + $0x158] sm:$0xff]
  %v68 = vld [vmem:[%s1 + $0x160] sm:$0xff]
  %v69 = vld [vmem:[%s1 + $0x168] sm:$0xff]
  %v70 = vld [vmem:[%s1 + $0x170] sm:$0xff]
  %v71 = vld [vmem:[%s1 + $0x178] sm:$0xff]
  %v72 = vld [vmem:[%s1 + $0x180] sm:$0xff]
  %v73 = vld [vmem:[%s1 + $0x188] sm:$0xff]
  %v74 = vld [vmem:[%s1 + $0x190] sm:$0xff]
  %v75 = vld [vmem:[%s1 + $0x198] sm:$0xff]
  %v76 = vld [vmem:[%s1 + $0x1a0] sm:$0xff]
  %v77 = vld [vmem:[%s1 + $0x1a8] sm:$0xff]
  %v78 = vld [vmem:[%s1 + $0x1b0] sm:$0xff]
  %v79 = vld [vmem:[%s1 + $0x1b8] sm:$0xff]
  %v80 = vld [vmem:[%s1 + $0x1c0] sm:$0xff]
  %v81 = vld [vmem:[%s1 + $0x1c8] sm:$0xff]
  %v82 = vld [vmem:[%s1 + $0x1d0] sm:$0xff]
  %v83 = vld [vmem:[%s1 + $0x1d8] sm:$0xff]
  %v84 = vld [vmem:[%s1 + $0x1e0] sm:$0xff]
  %v85 = vld [vmem:[%s1 + $0x1e8] sm:$0xff]
  %v86 = vld [vmem:[%s1 + $0x1f0] sm:$0xff]
  %v87 = vld [vmem:[%s1 + $0x1f8] sm:$0xff]
  %v90 = vunpack.c.l.b16 %v22
  %v91 = vunpack.c.h.b16 %v22
  %v92 = vunpack.c.l.b16 %v23
  %v93 = vunpack.c.h.b16 %v23
  %v94 = vpack.c.b16 %v90, %v90
  %v95 = vpack.c.b16 %v91, %v91
  %v96 = vpack.c.b16 %v92, %v92
  %v97 = vpack.c.b16 %v93, %v93
  %v166 = vunpack.c.l.b16 %v24
  %v167 = vunpack.c.h.b16 %v24
  %v168 = vunpack.c.l.b16 %v25
  %v169 = vunpack.c.h.b16 %v25
  %v170 = vunpack.c.l.b16 %v26
  %v171 = vunpack.c.h.b16 %v26
  %v172 = vunpack.c.l.b16 %v27
  %v173 = vunpack.c.h.b16 %v27
  %v174 = vunpack.c.l.b16 %v28
  %v175 = vunpack.c.h.b16 %v28
  %v176 = vunpack.c.l.b16 %v29
  %v177 = vunpack.c.h.b16 %v29
  %v178 = vunpack.c.l.b16 %v30
  %v179 = vunpack.c.h.b16 %v30
  %v180 = vunpack.c.l.b16 %v31
  %v181 = vunpack.c.h.b16 %v31
  %v182 = vunpack.c.l.b16 %v32
  %v183 = vunpack.c.h.b16 %v32
  %v184 = vunpack.c.l.b16 %v33
  %v185 = vunpack.c.h.b16 %v33
  %v186 = vunpack.c.l.b16 %v34
  %v187 = vunpack.c.h.b16 %v34
  %v188 = vunpack.c.l.b16 %v35
  %v189 = vunpack.c.h.b16 %v35
  %v190 = vunpack.c.l.b16 %v36
  %v191 = vunpack.c.h.b16 %v36
  %v192 = vunpack.c.l.b16 %v37
  %v193 = vunpack.c.h.b16 %v37
  %v194 = vunpack.c.l.b16 %v38
  %v195 = vunpack.c.h.b16 %v38
  %v196 = vunpack.c.l.b16 %v39
  %v197 = vunpack.c.h.b16 %v39
  %v198 = vunpack.c.l.b16 %v40
  %v199 = vunpack.c.h.b16 %v40
  %v200 = vunpack.c.l.b16 %v41
  %v201 = vunpack.c.h.b16 %v41
  %v202 = vunpack.c.l.b16 %v42
  %v203 = vunpack.c.h.b16 %v42
  %v204 = vunpack.c.l.b16 %v43
  %v205 = vunpack.c.h.b16 %v43
  %v206 = vunpack.c.l.b16 %v44
  %v207 = vunpack.c.h.b16 %v44
  %v208 = vunpack.c.l.b16 %v45
  %v209 = vunpack.c.h.b16 %v45
  %v210 = vunpack.c.l.b16 %v46
  %v211 = vunpack.c.h.b16 %v46
  %v212 = vunpack.c.l.b16 %v47
  %v213 = vunpack.c.h.b16 %v47
  %v214 = vunpack.c.l.b16 %v48
  %v215 = vunpack.c.h.b16 %v48
  %v216 = vunpack.c.l.b16 %v49
  %v217 = vunpack.c.h.b16 %v49
  %v218 = vunpack.c.l.b16 %v50
  %v219 = vunpack.c.h.b16 %v50
  %v220 = vunpack.c.l.b16 %v51
  %v221 = vunpack.c.h.b16 %v51
  %v222 = vunpack.c.l.b16 %v52
  %v223 = vunpack.c.h.b16 %v52
  %v224 = vunpack.c.l.b16 %v53
  %v225 = vunpack.c.h.b16 %v53
  %v226 = vunpack.c.l.b16 %v54
  %v227 = vunpack.c.h.b16 %v54
  %v228 = vunpack.c.l.b16 %v55
  %v229 = vunpack.c.h.b16 %v55
  %v230 = vunpack.c.l.b16 %v56
  %v231 = vunpack.c.h.b16 %v56
  %v232 = vunpack.c.l.b16 %v57
  %v233 = vunpack.c.h.b16 %v57
  %v234 = vunpack.c.l.b16 %v58
  %v235 = vunpack.c.h.b16 %v58
  %v236 = vunpack.c.l.b16 %v59
  %v237 = vunpack.c.h.b16 %v59
  %v238 = vunpack.c.l.b16 %v60
  %v239 = vunpack.c.h.b16 %v60
  %v240 = vunpack.c.l.b16 %v61
  %v241 = vunpack.c.h.b16 %v61
  %v242 = vunpack.c.l.b16 %v62
  %v243 = vunpack.c.h.b16 %v62
  %v244 = vunpack.c.l.b16 %v63
  %v245 = vunpack.c.h.b16 %v63
  %v246 = vunpack.c.l.b16 %v64
  %v247 = vunpack.c.h.b16 %v64
  %v248 = vunpack.c.l.b16 %v65
  %v249 = vunpack.c.h.b16 %v65
  %v250 = vunpack.c.l.b16 %v66
  %v251 = vunpack.c.h.b16 %v66
  %v252 = vunpack.c.l.b16 %v67
  %v253 = vunpack.c.h.b16 %v67
  %v254 = vunpack.c.l.b16 %v68
  %v255 = vunpack.c.h.b16 %v68
  %v256 = vunpack.c.l.b16 %v69
  %v257 = vunpack.c.h.b16 %v69
  %v258 = vunpack.c.l.b16 %v70
  %v259 = vunpack.c.h.b16 %v70
  %v260 = vunpack.c.l.b16 %v71
  %v261 = vunpack.c.h.b16 %v71
  %v262 = vunpack.c.l.b16 %v72
  %v263 = vunpack.c.h.b16 %v72
  %v264 = vunpack.c.l.b16 %v73
  %v265 = vunpack.c.h.b16 %v73
  %v266 = vunpack.c.l.b16 %v74
  %v267 = vunpack.c.h.b16 %v74
  %v268 = vunpack.c.l.b16 %v75
  %v269 = vunpack.c.h.b16 %v75
  %v270 = vunpack.c.l.b16 %v76
  %v271 = vunpack.c.h.b16 %v76
  %v272 = vunpack.c.l.b16 %v77
  %v273 = vunpack.c.h.b16 %v77
  %v274 = vunpack.c.l.b16 %v78
  %v275 = vunpack.c.h.b16 %v78
  %v276 = vunpack.c.l.b16 %v79
  %v277 = vunpack.c.h.b16 %v79
  %v278 = vunpack.c.l.b16 %v80
  %v279 = vunpack.c.h.b16 %v80
  %v280 = vunpack.c.l.b16 %v81
  %v281 = vunpack.c.h.b16 %v81
  %v282 = vunpack.c.l.b16 %v82
  %v283 = vunpack.c.h.b16 %v82
  %v284 = vunpack.c.l.b16 %v83
  %v285 = vunpack.c.h.b16 %v83
  %v286 = vunpack.c.l.b16 %v84
  %v287 = vunpack.c.h.b16 %v84
  %v288 = vunpack.c.l.b16 %v85
  %v289 = vunpack.c.h.b16 %v85
  %v290 = vunpack.c.l.b16 %v86
  %v291 = vunpack.c.h.b16 %v86
  %v292 = vunpack.c.l.b16 %v87
  %v293 = vunpack.c.h.b16 %v87
  %v294 = vpack.c.b16 %v168, %v166
  %v295 = vpack.c.b16 %v169, %v167
  %v296 = vpack.c.b16 %v172, %v170
  %v297 = vpack.c.b16 %v173, %v171
  %v298 = vpack.c.b16 %v176, %v174
  %v299 = vpack.c.b16 %v177, %v175
  %v300 = vpack.c.b16 %v180, %v178
  %v301 = vpack.c.b16 %v181, %v179
  %v302 = vpack.c.b16 %v184, %v182
  %v303 = vpack.c.b16 %v185, %v183
  %v304 = vpack.c.b16 %v188, %v186
  %v305 = vpack.c.b16 %v189, %v187
  %v306 = vpack.c.b16 %v192, %v190
  %v307 = vpack.c.b16 %v193, %v191
  %v308 = vpack.c.b16 %v196, %v194
  %v309 = vpack.c.b16 %v197, %v195
  %v310 = vpack.c.b16 %v200, %v198
  %v311 = vpack.c.b16 %v201, %v199
  %v312 = vpack.c.b16 %v204, %v202
  %v313 = vpack.c.b16 %v205, %v203
  %v314 = vpack.c.b16 %v208, %v206
  %v315 = vpack.c.b16 %v209, %v207
  %v316 = vpack.c.b16 %v212, %v210
  %v317 = vpack.c.b16 %v213, %v211
  %v318 = vpack.c.b16 %v216, %v214
  %v319 = vpack.c.b16 %v217, %v215
  %v320 = vpack.c.b16 %v220, %v218
  %v321 = vpack.c.b16 %v221, %v219
  %v322 = vpack.c.b16 %v224, %v222
  %v323 = vpack.c.b16 %v225, %v223
  %v324 = vpack.c.b16 %v228, %v226
  %v325 = vpack.c.b16 %v229, %v227
  %v326 = vpack.c.b16 %v232, %v230
  %v327 = vpack.c.b16 %v233, %v231
  %v328 = vpack.c.b16 %v236, %v234
  %v329 = vpack.c.b16 %v237, %v235
  %v330 = vpack.c.b16 %v240, %v238
  %v331 = vpack.c.b16 %v241, %v239
  %v332 = vpack.c.b16 %v244, %v242
  %v333 = vpack.c.b16 %v245, %v243
  %v334 = vpack.c.b16 %v248, %v246
  %v335 = vpack.c.b16 %v249, %v247
  %v336 = vpack.c.b16 %v252, %v250
  %v337 = vpack.c.b16 %v253, %v251
  %v338 = vpack.c.b16 %v256, %v254
  %v339 = vpack.c.b16 %v257, %v255
  %v340 = vpack.c.b16 %v260, %v258
  %v341 = vpack.c.b16 %v261, %v259
  %v342 = vpack.c.b16 %v264, %v262
  %v343 = vpack.c.b16 %v265, %v263
  %v344 = vpack.c.b16 %v268, %v266
  %v345 = vpack.c.b16 %v269, %v267
  %v346 = vpack.c.b16 %v272, %v270
  %v347 = vpack.c.b16 %v273, %v271
  %v348 = vpack.c.b16 %v276, %v274
  %v349 = vpack.c.b16 %v277, %v275
  %v350 = vpack.c.b16 %v280, %v278
  %v351 = vpack.c.b16 %v281, %v279
  %v352 = vpack.c.b16 %v284, %v282
  %v353 = vpack.c.b16 %v285, %v283
  %v354 = vpack.c.b16 %v288, %v286
  %v355 = vpack.c.b16 %v289, %v287
  %v356 = vpack.c.b16 %v292, %v290
  %v357 = vpack.c.b16 %v293, %v291
  %422 = vmatprep.subr.bf16.mxu0 %v295
  %423 = vmatpush1.bf16.msra.mxu0 %v294
  %424 = vmatprep.subr.bf16.mxu0 %v297
  %425 = vmatpush1.bf16.msra.mxu0 %v296
  %426 = vmatprep.subr.bf16.mxu0 %v299
  %427 = vmatpush1.bf16.msra.mxu0 %v298
  %428 = vmatprep.subr.bf16.mxu0 %v301
  %429 = vmatpush1.bf16.msra.mxu0 %v300
  %430 = vmatprep.subr.bf16.mxu0 %v303
  %431 = vmatpush1.bf16.msra.mxu0 %v302
  %432 = vmatprep.subr.bf16.mxu0 %v305
  %433 = vmatpush1.bf16.msra.mxu0 %v304
  %434 = vmatprep.subr.bf16.mxu0 %v307
  %435 = vmatpush1.bf16.msra.mxu0 %v306
  %436 = vmatprep.subr.bf16.mxu0 %v309
  %437 = vmatpush1.bf16.msra.mxu0 %v308
  %438 = vmatprep.subr.bf16.mxu0 %v311
  %439 = vmatpush1.bf16.msra.mxu0 %v310
  %440 = vmatprep.subr.bf16.mxu0 %v313
  %441 = vmatpush1.bf16.msra.mxu0 %v312
  %442 = vmatprep.subr.bf16.mxu0 %v315
  %443 = vmatpush1.bf16.msra.mxu0 %v314
  %444 = vmatprep.subr.bf16.mxu0 %v317
  %445 = vmatpush1.bf16.msra.mxu0 %v316
  %446 = vmatprep.subr.bf16.mxu0 %v319
  %447 = vmatpush1.bf16.msra.mxu0 %v318
  %448 = vmatprep.subr.bf16.mxu0 %v321
  %449 = vmatpush1.bf16.msra.mxu0 %v320
  %450 = vmatprep.subr.bf16.mxu0 %v323
  %451 = vmatpush1.bf16.msra.mxu0 %v322
  %452 = vmatprep.subr.bf16.mxu0 %v325
  %453 = vmatpush1.bf16.msra.mxu0 %v324
  %454 = vmatprep.mubr.bf16.mxu0 %v95
  %455 = vmatmul.mubr.bf16.gmra.mrb[0].mxu0 %v94
  %v456 = vpop.f32.mrb[0].mxu0
  %v457 = vadd.f32 0.0, %v456
  %v458 = vpop.f32.mrb[0].mxu0
  %v459 = vadd.f32 0.0, %v458
  %v460 = vpop.f32.mrb[0].mxu0
  %v461 = vpop.f32.mrb[0].mxu0
  %462 = vdwg.mxu0
  %463 = vmatprep.subr.bf16.mxu0 %v327
  %464 = vmatpush1.bf16.msra.mxu0 %v326
  %465 = vmatprep.subr.bf16.mxu0 %v329
  %466 = vmatpush1.bf16.msra.mxu0 %v328
  %467 = vmatprep.subr.bf16.mxu0 %v331
  %468 = vmatpush1.bf16.msra.mxu0 %v330
  %469 = vmatprep.subr.bf16.mxu0 %v333
  %470 = vmatpush1.bf16.msra.mxu0 %v332
  %471 = vmatprep.subr.bf16.mxu0 %v335
  %472 = vmatpush1.bf16.msra.mxu0 %v334
  %473 = vmatprep.subr.bf16.mxu0 %v337
  %474 = vmatpush1.bf16.msra.mxu0 %v336
  %475 = vmatprep.subr.bf16.mxu0 %v339
  %476 = vmatpush1.bf16.msra.mxu0 %v338
  %477 = vmatprep.subr.bf16.mxu0 %v341
  %478 = vmatpush1.bf16.msra.mxu0 %v340
  %479 = vmatprep.subr.bf16.mxu0 %v343
  %480 = vmatpush1.bf16.msra.mxu0 %v342
  %481 = vmatprep.subr.bf16.mxu0 %v345
  %482 = vmatpush1.bf16.msra.mxu0 %v344
  %483 = vmatprep.subr.bf16.mxu0 %v347
  %484 = vmatpush1.bf16.msra.mxu0 %v346
  %485 = vmatprep.subr.bf16.mxu0 %v349
  %486 = vmatpush1.bf16.msra.mxu0 %v348
  %487 = vmatprep.subr.bf16.mxu0 %v351
  %488 = vmatpush1.bf16.msra.mxu0 %v350
  %489 = vmatprep.subr.bf16.mxu0 %v353
  %490 = vmatpush1.bf16.msra.mxu0 %v352
  %491 = vmatprep.subr.bf16.mxu0 %v355
  %492 = vmatpush1.bf16.msra.mxu0 %v354
  %493 = vmatprep.subr.bf16.mxu0 %v357
  %494 = vmatpush1.bf16.msra.mxu0 %v356
  %495 = vmatprep.mubr.bf16.mxu0 %v97
  %496 = vmatmul.mubr.bf16.gmra.mrb[0].mxu0 %v96
  %v497 = vpop.f32.mrb[0].mxu0
  %v498 = vadd.f32 %v457, %v497
  %v499 = vpop.f32.mrb[0].mxu0
  %v500 = vadd.f32 %v459, %v499
  %v501 = vpop.f32.mrb[0].mxu0
  %v502 = vpop.f32.mrb[0].mxu0
  %503 = vdwg.mxu0
  %v504 = vadd.f32 %v20, %v498
  %v505 = vadd.f32 %v21, %v500
  %506 = vst [vmem:[#allocation2] sm:$0xff] %v504
  %507 = vst [vmem:[#allocation2 + $0x8] sm:$0xff] %v505
  // Predicated region
  $region18: #{forward.11} parent=0 // pred_check
    %p508 = pneg %p14
  $region19: #{forward.11} parent=0 // pred_check_branch
    %510 = sbr.rel (%p508) target = $region21
  $region20: #{forward.11} parent=0 // pred_region
    %v511 = vld [vmem:[#allocation2] sm:$0xff]
    %v512 = vld [vmem:[#allocation2 + $0x8] sm:$0xff]
    %v513 = vld [vmem:[%s2] sm:$0x3]
    %v515 = vlaneseq
    %v516 = vshrl.u32 %v515, 7
    %v517 = vsub.s32 0, %v516
    %v518 = vrot.slane %v513, %v517
    %v519 = vlaneseq
    %v520 = vshrl.u32 %v519, 7
    %v521 = vsub.s32 1, %v520
    %v522 = vrot.slane %v513, %v521
    %v525 = vadd.f32 %v511, %v518
    %v526 = vadd.f32 %v512, %v522
    %v527 = vmax.f32 %v525, 0.0
    %v528 = vmax.f32 %v526, 0.0
    %v529 = vpack.c.bf16 %v527, %v527
    %v530 = vpack.c.bf16 %v528, %v528
    %v533 = vunpack.c.l.b16 %v529
    %v534 = vunpack.c.l.b16 %v530
    %v535 = vpack.c.b16 %v534, %v533
    %537 = vst [vmem:[%s3] sm:$0xff] %v535
  $region21: #{forward.11} parent=0 // pred_fallthru
    _
  // Predicated region
  $region22: #{forward.11} parent=0 // pred_check
    _
  $region23: #{forward.11} parent=0 // pred_check_branch
    %539 = sbr.rel (0) target = $region25
  $region24: #{forward.11} parent=0 // pred_region
    _
  $region25: #{forward.11} parent=0 // pred_fallthru
    _
  // Predicated region
  $region26: #{forward.11} parent=0 // pred_check
    _
  $region27: #{forward.11} parent=0 // pred_check_branch
    %541 = sbr.rel (0) target = $region29
  $region28: #{forward.11} parent=0 // pred_region
    _
  $region29: #{forward.11} parent=0 // pred_fallthru
    _

</llo_original>
